<compile_context>
chip_gen: v7x
topology: tpu7x:2x2x1
jax: 0.10.0
libtpu: 0.0.40
codegen_flags: <defaults>
</compile_context>

<pallas_src>
import functools

import jax
import jax.numpy as jnp
from jax.experimental import pallas as pl
from jax.experimental.pallas import tpu as pltpu


def _full_spec(shape):
    """Whole-array block; index_map takes (grid_i, ids_prefetch_ref)."""
    zeros = (0,) * len(shape)
    return pl.BlockSpec(shape, lambda i, ids, _z=zeros: _z)


def _make_fused_kernel(S, B, E, H, C, vocab, num_layers, num_direc):
    def kernel(ids_ref, emb_ref, *refs):
        # ------------------------------ unpack refs ------------------------------
        idx = 0
        layers = []
        for _l in range(num_layers):
            dirs = []
            for _e in range(num_direc):
                dirs.append(tuple(refs[idx:idx + 4]))   # (wih, whh, bih, bhh)
                idx += 4
            layers.append(dirs)
        w1_ref, b1_ref, w2_ref, b2_ref = refs[idx:idx + 4]
        out_ref = refs[idx + 4]

        # --------------- embedding gather (one-hot matmul, MXU) ------------------
        # ids live in SMEM (scalar prefetch); build (S*B, vocab) one-hot rows.
        lane_iota = jax.lax.broadcasted_iota(jnp.int32, (1, vocab), 1)
        onehot_rows = []
        for t in range(S):
            for b in range(B):
                tok = ids_ref[t, b]
                onehot_rows.append((lane_iota == tok).astype(jnp.float32))
        onehot = jnp.concatenate(onehot_rows, axis=0)                    # (S*B, V)
        x_flat = jnp.dot(onehot, emb_ref[...],
                         preferred_element_type=jnp.float32)            # (S*B, E)

        def hoist_gi(wih_ref, bih_ref, bhh_ref, x):
            """Time-invariant input projections; bhh folded in for r and z gates."""
            gi_r = (jnp.dot(x, wih_ref[0], preferred_element_type=jnp.float32)
                    + bih_ref[0] + bhh_ref[0]).reshape(S, B, H)
            gi_z = (jnp.dot(x, wih_ref[1], preferred_element_type=jnp.float32)
                    + bih_ref[1] + bhh_ref[1]).reshape(S, B, H)
            gi_n = (jnp.dot(x, wih_ref[2], preferred_element_type=jnp.float32)
                    + bih_ref[2]).reshape(S, B, H)
            return gi_r, gi_z, gi_n

        # ---- intermediate layers: full per-timestep outputs feed the next layer ----
        for l in range(num_layers - 1):
            gi = []
            for e in range(num_direc):
                wih_ref, _, bih_ref, bhh_ref = layers[l][e]
                gi.append(hoist_gi(wih_ref, bih_ref, bhh_ref, x_flat))

            h = [None] * num_direc
            outs = [[None] * S for _ in range(num_direc)]
            for t in range(S):
                for e in range(num_direc):
                    src_t = t if e == 0 else S - 1 - t
                    gi_r, gi_z, gi_n = gi[e]
                    _, whh_ref, _, bhh_ref = layers[l][e]
                    if t == 0:
                        # h0 == 0: skip the three hidden matmuls on the first step.
                        r = jax.nn.sigmoid(gi_r[src_t])
                        z = jax.nn.sigmoid(gi_z[src_t])
                        n = jnp.tanh(gi_n[src_t] + r * bhh_ref[2])
                        h_new = (1.0 - z) * n
                    else:
                        gh_r = jnp.dot(h[e], whh_ref[0],
                                       preferred_element_type=jnp.float32)
                        gh_z = jnp.dot(h[e], whh_ref[1],
                                       preferred_element_type=jnp.float32)
                        gh_n = jnp.dot(h[e], whh_ref[2],
                                       preferred_element_type=jnp.float32) + bhh_ref[2]
                        r = jax.nn.sigmoid(gi_r[src_t] + gh_r)
                        z = jax.nn.sigmoid(gi_z[src_t] + gh_z)
                        n = jnp.tanh(gi_n[src_t] + r * gh_n)
                        h_new = (1.0 - z) * n + z * h[e]
                    h[e] = h_new
                    outs[e][src_t] = h_new

            # Next layer input (inter-layer dropout is identity at inference).
            rows = [jnp.concatenate([outs[e][t] for e in range(num_direc)], axis=-1)
                    for t in range(S)]
            x_flat = jnp.concatenate(rows, axis=0)                      # (S*B, H*ndir)

        # ---- top layer: only out[:, -1, :] (time S-1) is consumed downstream ----
        l = num_layers - 1

        # Forward direction: full recurrence, keep only the final hidden state.
        wih_ref, whh_ref, bih_ref, bhh_ref = layers[l][0]
        gi_r, gi_z, gi_n = hoist_gi(wih_ref, bih_ref, bhh_ref, x_flat)
        h_f = None
        for t in range(S):
            if t == 0:
                r = jax.nn.sigmoid(gi_r[t])
                z = jax.nn.sigmoid(gi_z[t])
                n = jnp.tanh(gi_n[t] + r * bhh_ref[2])
                h_f = (1.0 - z) * n
            else:
                gh_r = jnp.dot(h_f, whh_ref[0], preferred_element_type=jnp.float32)
                gh_z = jnp.dot(h_f, whh_ref[1], preferred_element_type=jnp.float32)
                gh_n = jnp.dot(h_f, whh_ref[2],
                               preferred_element_type=jnp.float32) + bhh_ref[2]
                r = jax.nn.sigmoid(gi_r[t] + gh_r)
                z = jax.nn.sigmoid(gi_z[t] + gh_z)
                n = jnp.tanh(gi_n[t] + r * gh_n)
                h_f = (1.0 - z) * n + z * h_f

        parts = [h_f]
        if num_direc == 2:
            # Backward direction at time S-1 is its FIRST step from h0 == 0:
            # no hidden-state matmuls, and only the last-timestep input rows.
            x_last = x_flat[(S - 1) * B:S * B]                          # (B, Din)
            wih_b, _, bih_b, bhh_b = layers[l][1]
            r = jax.nn.sigmoid(
                jnp.dot(x_last, wih_b[0], preferred_element_type=jnp.float32)
                + bih_b[0] + bhh_b[0])
            z = jax.nn.sigmoid(
                jnp.dot(x_last, wih_b[1], preferred_element_type=jnp.float32)
                + bih_b[1] + bhh_b[1])
            n = jnp.tanh(
                jnp.dot(x_last, wih_b[2], preferred_element_type=jnp.float32)
                + bih_b[2] + r * bhh_b[2])
            parts.append((1.0 - z) * n)

        last = parts[0] if len(parts) == 1 else jnp.concatenate(parts, axis=-1)

        # ------------------------- dense head + softmax --------------------------
        hd = jnp.dot(last, w1_ref[...], preferred_element_type=jnp.float32) + b1_ref[...]
        hd = jnp.maximum(hd, 0.0)                                     # ReLU (Dropout = id)
        logits = jnp.dot(hd, w2_ref[...], preferred_element_type=jnp.float32) + b2_ref[...]
        m = jnp.max(logits, axis=-1, keepdims=True)
        ex = jnp.exp(logits - m)
        out_ref[...] = ex / jnp.sum(ex, axis=-1, keepdims=True)        # exact divide

    return kernel


def cls_model_forward(inputs, params, num_layers, num_direc):
    """inputs: (S, B) int32 token ids. Returns (B, n_class) softmax probs."""
    S, B = inputs.shape
    emb = params["emb"]
    vocab, E = emb.shape
    H = params["gru"][0][0]["whh"].shape[-1]
    d = params["dense"]
    C = d["w2"].shape[-1]

    flat_args, in_specs = [emb], [_full_spec(emb.shape)]
    for l in range(num_layers):
        for e in range(num_direc):
            p = params["gru"][l][e]
            for name in ("wih", "whh", "bih", "bhh"):
                flat_args.append(p[name])
                in_specs.append(_full_spec(p[name].shape))
    for name in ("w1", "b1", "w2", "b2"):
        flat_args.append(d[name])
        in_specs.append(_full_spec(d[name].shape))

    kernel = _make_fused_kernel(S, B, E, H, C, vocab, num_layers, num_direc)

    return pl.pallas_call(
        kernel,
        out_shape=jax.ShapeDtypeStruct((B, C), jnp.float32),
        grid_spec=pltpu.PrefetchScalarGridSpec(
            num_scalar_prefetch=1,                 # token ids -> SMEM
            grid=(1,),
            in_specs=in_specs,
            out_specs=pl.BlockSpec((B, C), lambda i, ids: (0, 0)),
        ),
        compiler_params=pltpu.CompilerParams(
            dimension_semantics=("arbitrary",),
        ),
    )(inputs.astype(jnp.int32), *flat_args)


# ------------------------------ parameter init --------------------------------
def init_params(key, emb_dim, vocab_size, input_dim, hidden_dim,
                num_layers, num_direc, n_class):
    def uniform(k, shape, bound):
        return jax.random.uniform(k, shape, jnp.float32, -bound, bound)

    n_keys = 1 + num_layers * num_direc * 4 + 4
    keys = iter(jax.random.split(key, n_keys))

    params = {"emb": jax.random.normal(next(keys), (vocab_size, emb_dim), jnp.float32)}

    gb = 1.0 / float(hidden_dim) ** 0.5
    gru = []
    for layer in range(num_layers):
        in_dim = input_dim if layer == 0 else hidden_dim * num_direc
        dirs = []
        for _ in range(num_direc):
            dirs.append({
                # gate-major layout (3, D, H): [r, z, n], no lane slicing in-kernel
                "wih": uniform(next(keys), (3, in_dim, hidden_dim), gb),
                "whh": uniform(next(keys), (3, hidden_dim, hidden_dim), gb),
                "bih": uniform(next(keys), (3, 1, hidden_dim), gb),
                "bhh": uniform(next(keys), (3, 1, hidden_dim), gb),
            })
        gru.append(dirs)
    params["gru"] = gru

    f1 = hidden_dim * num_direc
    b1b = 1.0 / float(f1) ** 0.5
    b2b = 1.0 / float(hidden_dim) ** 0.5
    params["dense"] = {
        "w1": uniform(next(keys), (f1, hidden_dim), b1b),
        "b1": uniform(next(keys), (1, hidden_dim), b1b),
        "w2": uniform(next(keys), (hidden_dim, n_class), b2b),
        "b2": uniform(next(keys), (1, n_class), b2b),
    }
    return params


if __name__ == "__main__":
    EMB_DIM = 16
    VOCAB_SIZE = 50
    INPUT_DIM = 16          # must equal EMB_DIM (as in the PyTorch forward)
    HIDDEN_DIM = 32
    BIDIRECTIONAL = True
    NUM_LAYERS = 2
    N_CLASS = 4
    NUM_DIREC = 2 if BIDIRECTIONAL else 1

    SEQ_LEN = 8
    BATCH = 2

    key = jax.random.PRNGKey(0)
    k_tok, k_par = jax.random.split(key)

    # token ids, shape (seq, batch) — PyTorch default GRU layout (batch_first=False)
    inputs = jax.random.randint(k_tok, (SEQ_LEN, BATCH), 0, VOCAB_SIZE, dtype=jnp.int32)

    params = init_params(k_par, EMB_DIM, VOCAB_SIZE, INPUT_DIM, HIDDEN_DIM,
                         NUM_LAYERS, NUM_DIREC, N_CLASS)

    fwd = jax.jit(functools.partial(cls_model_forward,
                                    num_layers=NUM_LAYERS, num_direc=NUM_DIREC))
    probs = fwd(inputs, params)
    jax.block_until_ready(probs)

    assert probs.shape == (BATCH, N_CLASS)
    assert bool(jnp.all(jnp.isfinite(probs)))
    assert bool(jnp.allclose(jnp.sum(probs, axis=-1), 1.0, atol=1e-5))
    print("KERNEL_OK")
</pallas_src>

<mosaic_0001>
module attributes {stable_mosaic.version = 11 : i64} {
  func.func @kernel(%arg0: i32, %arg1: memref<8x2xi32, #tpu.memory_space<smem>>, %arg2: memref<50x16xf32, #tpu.memory_space<vmem>>, %arg3: memref<3x16x32xf32, #tpu.memory_space<vmem>>, %arg4: memref<3x32x32xf32, #tpu.memory_space<vmem>>, %arg5: memref<3x1x32xf32, #tpu.memory_space<vmem>>, %arg6: memref<3x1x32xf32, #tpu.memory_space<vmem>>, %arg7: memref<3x16x32xf32, #tpu.memory_space<vmem>>, %arg8: memref<3x32x32xf32, #tpu.memory_space<vmem>>, %arg9: memref<3x1x32xf32, #tpu.memory_space<vmem>>, %arg10: memref<3x1x32xf32, #tpu.memory_space<vmem>>, %arg11: memref<3x64x32xf32, #tpu.memory_space<vmem>>, %arg12: memref<3x32x32xf32, #tpu.memory_space<vmem>>, %arg13: memref<3x1x32xf32, #tpu.memory_space<vmem>>, %arg14: memref<3x1x32xf32, #tpu.memory_space<vmem>>, %arg15: memref<3x64x32xf32, #tpu.memory_space<vmem>>, %arg16: memref<3x32x32xf32, #tpu.memory_space<vmem>>, %arg17: memref<3x1x32xf32, #tpu.memory_space<vmem>>, %arg18: memref<3x1x32xf32, #tpu.memory_space<vmem>>, %arg19: memref<64x32xf32, #tpu.memory_space<vmem>>, %arg20: memref<1x32xf32, #tpu.memory_space<vmem>>, %arg21: memref<32x4xf32, #tpu.memory_space<vmem>>, %arg22: memref<1x4xf32, #tpu.memory_space<vmem>>, %arg23: memref<2x4xf32, #tpu.memory_space<vmem>>) attributes {dimension_semantics = [#tpu.dimension_semantics<arbitrary>], iteration_bounds = array<i64: 1>, scalar_prefetch = 1 : i64, scratch_operands = 0 : i64, tpu.core_type = #tpu.core_type<tc>, window_params = [{pipeline_mode = #tpu.pipeline_mode<synchronous>, transform_indices = @transform_0, window_bounds = array<i64: 50, 16>}, {pipeline_mode = #tpu.pipeline_mode<synchronous>, transform_indices = @transform_1, window_bounds = array<i64: 3, 16, 32>}, {pipeline_mode = #tpu.pipeline_mode<synchronous>, transform_indices = @transform_2, window_bounds = array<i64: 3, 32, 32>}, {pipeline_mode = #tpu.pipeline_mode<synchronous>, transform_indices = @transform_3, window_bounds = array<i64: 3, 1, 32>}, {pipeline_mode = #tpu.pipeline_mode<synchronous>, transform_indices = @transform_4, window_bounds = array<i64: 3, 1, 32>}, {pipeline_mode = #tpu.pipeline_mode<synchronous>, transform_indices = @transform_5, window_bounds = array<i64: 3, 16, 32>}, {pipeline_mode = #tpu.pipeline_mode<synchronous>, transform_indices = @transform_6, window_bounds = array<i64: 3, 32, 32>}, {pipeline_mode = #tpu.pipeline_mode<synchronous>, transform_indices = @transform_7, window_bounds = array<i64: 3, 1, 32>}, {pipeline_mode = #tpu.pipeline_mode<synchronous>, transform_indices = @transform_8, window_bounds = array<i64: 3, 1, 32>}, {pipeline_mode = #tpu.pipeline_mode<synchronous>, transform_indices = @transform_9, window_bounds = array<i64: 3, 64, 32>}, {pipeline_mode = #tpu.pipeline_mode<synchronous>, transform_indices = @transform_10, window_bounds = array<i64: 3, 32, 32>}, {pipeline_mode = #tpu.pipeline_mode<synchronous>, transform_indices = @transform_11, window_bounds = array<i64: 3, 1, 32>}, {pipeline_mode = #tpu.pipeline_mode<synchronous>, transform_indices = @transform_12, window_bounds = array<i64: 3, 1, 32>}, {pipeline_mode = #tpu.pipeline_mode<synchronous>, transform_indices = @transform_13, window_bounds = array<i64: 3, 64, 32>}, {pipeline_mode = #tpu.pipeline_mode<synchronous>, transform_indices = @transform_14, window_bounds = array<i64: 3, 32, 32>}, {pipeline_mode = #tpu.pipeline_mode<synchronous>, transform_indices = @transform_15, window_bounds = array<i64: 3, 1, 32>}, {pipeline_mode = #tpu.pipeline_mode<synchronous>, transform_indices = @transform_16, window_bounds = array<i64: 3, 1, 32>}, {pipeline_mode = #tpu.pipeline_mode<synchronous>, transform_indices = @transform_17, window_bounds = array<i64: 64, 32>}, {pipeline_mode = #tpu.pipeline_mode<synchronous>, transform_indices = @transform_18, window_bounds = array<i64: 1, 32>}, {pipeline_mode = #tpu.pipeline_mode<synchronous>, transform_indices = @transform_19, window_bounds = array<i64: 32, 4>}, {pipeline_mode = #tpu.pipeline_mode<synchronous>, transform_indices = @transform_20, window_bounds = array<i64: 1, 4>}, {pipeline_mode = #tpu.pipeline_mode<synchronous>, transform_indices = @transform_21, window_bounds = array<i64: 2, 4>}]} {
    %0 = tpu.iota {dimensions = array<i32: 1>} : vector<1x50xi32>
    %c0 = arith.constant 0 : index
    %c0_0 = arith.constant 0 : index
    %1 = memref.load %arg1[%c0, %c0_0] : memref<8x2xi32, #tpu.memory_space<smem>>
    %2 = vector.broadcast %1 : i32 to vector<1x50xi32>
    %3 = arith.cmpi eq, %0, %2 : vector<1x50xi32>
    %4 = arith.extui %3 : vector<1x50xi1> to vector<1x50xi32>
    %5 = arith.sitofp %4 : vector<1x50xi32> to vector<1x50xf32>
    %c0_1 = arith.constant 0 : index
    %c1 = arith.constant 1 : index
    %6 = memref.load %arg1[%c0_1, %c1] : memref<8x2xi32, #tpu.memory_space<smem>>
    %7 = vector.broadcast %6 : i32 to vector<1x50xi32>
    %8 = arith.cmpi eq, %0, %7 : vector<1x50xi32>
    %9 = arith.extui %8 : vector<1x50xi1> to vector<1x50xi32>
    %10 = arith.sitofp %9 : vector<1x50xi32> to vector<1x50xf32>
    %c1_2 = arith.constant 1 : index
    %c0_3 = arith.constant 0 : index
    %11 = memref.load %arg1[%c1_2, %c0_3] : memref<8x2xi32, #tpu.memory_space<smem>>
    %12 = vector.broadcast %11 : i32 to vector<1x50xi32>
    %13 = arith.cmpi eq, %0, %12 : vector<1x50xi32>
    %14 = arith.extui %13 : vector<1x50xi1> to vector<1x50xi32>
    %15 = arith.sitofp %14 : vector<1x50xi32> to vector<1x50xf32>
    %c1_4 = arith.constant 1 : index
    %c1_5 = arith.constant 1 : index
    %16 = memref.load %arg1[%c1_4, %c1_5] : memref<8x2xi32, #tpu.memory_space<smem>>
    %17 = vector.broadcast %16 : i32 to vector<1x50xi32>
    %18 = arith.cmpi eq, %0, %17 : vector<1x50xi32>
    %19 = arith.extui %18 : vector<1x50xi1> to vector<1x50xi32>
    %20 = arith.sitofp %19 : vector<1x50xi32> to vector<1x50xf32>
    %c2 = arith.constant 2 : index
    %c0_6 = arith.constant 0 : index
    %21 = memref.load %arg1[%c2, %c0_6] : memref<8x2xi32, #tpu.memory_space<smem>>
    %22 = vector.broadcast %21 : i32 to vector<1x50xi32>
    %23 = arith.cmpi eq, %0, %22 : vector<1x50xi32>
    %24 = arith.extui %23 : vector<1x50xi1> to vector<1x50xi32>
    %25 = arith.sitofp %24 : vector<1x50xi32> to vector<1x50xf32>
    %c2_7 = arith.constant 2 : index
    %c1_8 = arith.constant 1 : index
    %26 = memref.load %arg1[%c2_7, %c1_8] : memref<8x2xi32, #tpu.memory_space<smem>>
    %27 = vector.broadcast %26 : i32 to vector<1x50xi32>
    %28 = arith.cmpi eq, %0, %27 : vector<1x50xi32>
    %29 = arith.extui %28 : vector<1x50xi1> to vector<1x50xi32>
    %30 = arith.sitofp %29 : vector<1x50xi32> to vector<1x50xf32>
    %c3 = arith.constant 3 : index
    %c0_9 = arith.constant 0 : index
    %31 = memref.load %arg1[%c3, %c0_9] : memref<8x2xi32, #tpu.memory_space<smem>>
    %32 = vector.broadcast %31 : i32 to vector<1x50xi32>
    %33 = arith.cmpi eq, %0, %32 : vector<1x50xi32>
    %34 = arith.extui %33 : vector<1x50xi1> to vector<1x50xi32>
    %35 = arith.sitofp %34 : vector<1x50xi32> to vector<1x50xf32>
    %c3_10 = arith.constant 3 : index
    %c1_11 = arith.constant 1 : index
    %36 = memref.load %arg1[%c3_10, %c1_11] : memref<8x2xi32, #tpu.memory_space<smem>>
    %37 = vector.broadcast %36 : i32 to vector<1x50xi32>
    %38 = arith.cmpi eq, %0, %37 : vector<1x50xi32>
    %39 = arith.extui %38 : vector<1x50xi1> to vector<1x50xi32>
    %40 = arith.sitofp %39 : vector<1x50xi32> to vector<1x50xf32>
    %c4 = arith.constant 4 : index
    %c0_12 = arith.constant 0 : index
    %41 = memref.load %arg1[%c4, %c0_12] : memref<8x2xi32, #tpu.memory_space<smem>>
    %42 = vector.broadcast %41 : i32 to vector<1x50xi32>
    %43 = arith.cmpi eq, %0, %42 : vector<1x50xi32>
    %44 = arith.extui %43 : vector<1x50xi1> to vector<1x50xi32>
    %45 = arith.sitofp %44 : vector<1x50xi32> to vector<1x50xf32>
    %c4_13 = arith.constant 4 : index
    %c1_14 = arith.constant 1 : index
    %46 = memref.load %arg1[%c4_13, %c1_14] : memref<8x2xi32, #tpu.memory_space<smem>>
    %47 = vector.broadcast %46 : i32 to vector<1x50xi32>
    %48 = arith.cmpi eq, %0, %47 : vector<1x50xi32>
    %49 = arith.extui %48 : vector<1x50xi1> to vector<1x50xi32>
    %50 = arith.sitofp %49 : vector<1x50xi32> to vector<1x50xf32>
    %c5 = arith.constant 5 : index
    %c0_15 = arith.constant 0 : index
    %51 = memref.load %arg1[%c5, %c0_15] : memref<8x2xi32, #tpu.memory_space<smem>>
    %52 = vector.broadcast %51 : i32 to vector<1x50xi32>
    %53 = arith.cmpi eq, %0, %52 : vector<1x50xi32>
    %54 = arith.extui %53 : vector<1x50xi1> to vector<1x50xi32>
    %55 = arith.sitofp %54 : vector<1x50xi32> to vector<1x50xf32>
    %c5_16 = arith.constant 5 : index
    %c1_17 = arith.constant 1 : index
    %56 = memref.load %arg1[%c5_16, %c1_17] : memref<8x2xi32, #tpu.memory_space<smem>>
    %57 = vector.broadcast %56 : i32 to vector<1x50xi32>
    %58 = arith.cmpi eq, %0, %57 : vector<1x50xi32>
    %59 = arith.extui %58 : vector<1x50xi1> to vector<1x50xi32>
    %60 = arith.sitofp %59 : vector<1x50xi32> to vector<1x50xf32>
    %c6 = arith.constant 6 : index
    %c0_18 = arith.constant 0 : index
    %61 = memref.load %arg1[%c6, %c0_18] : memref<8x2xi32, #tpu.memory_space<smem>>
    %62 = vector.broadcast %61 : i32 to vector<1x50xi32>
    %63 = arith.cmpi eq, %0, %62 : vector<1x50xi32>
    %64 = arith.extui %63 : vector<1x50xi1> to vector<1x50xi32>
    %65 = arith.sitofp %64 : vector<1x50xi32> to vector<1x50xf32>
    %c6_19 = arith.constant 6 : index
    %c1_20 = arith.constant 1 : index
    %66 = memref.load %arg1[%c6_19, %c1_20] : memref<8x2xi32, #tpu.memory_space<smem>>
    %67 = vector.broadcast %66 : i32 to vector<1x50xi32>
    %68 = arith.cmpi eq, %0, %67 : vector<1x50xi32>
    %69 = arith.extui %68 : vector<1x50xi1> to vector<1x50xi32>
    %70 = arith.sitofp %69 : vector<1x50xi32> to vector<1x50xf32>
    %c7 = arith.constant 7 : index
    %c0_21 = arith.constant 0 : index
    %71 = memref.load %arg1[%c7, %c0_21] : memref<8x2xi32, #tpu.memory_space<smem>>
    %72 = vector.broadcast %71 : i32 to vector<1x50xi32>
    %73 = arith.cmpi eq, %0, %72 : vector<1x50xi32>
    %74 = arith.extui %73 : vector<1x50xi1> to vector<1x50xi32>
    %75 = arith.sitofp %74 : vector<1x50xi32> to vector<1x50xf32>
    %c7_22 = arith.constant 7 : index
    %c1_23 = arith.constant 1 : index
    %76 = memref.load %arg1[%c7_22, %c1_23] : memref<8x2xi32, #tpu.memory_space<smem>>
    %77 = vector.broadcast %76 : i32 to vector<1x50xi32>
    %78 = arith.cmpi eq, %0, %77 : vector<1x50xi32>
    %79 = arith.extui %78 : vector<1x50xi1> to vector<1x50xi32>
    %80 = arith.sitofp %79 : vector<1x50xi32> to vector<1x50xf32>
    %81 = tpu.concatenate %5, %10, %15, %20, %25, %30, %35, %40, %45, %50, %55, %60, %65, %70, %75, %80 in 0 : vector<1x50xf32>, vector<1x50xf32>, vector<1x50xf32>, vector<1x50xf32>, vector<1x50xf32>, vector<1x50xf32>, vector<1x50xf32>, vector<1x50xf32>, vector<1x50xf32>, vector<1x50xf32>, vector<1x50xf32>, vector<1x50xf32>, vector<1x50xf32>, vector<1x50xf32>, vector<1x50xf32>, vector<1x50xf32> -> vector<16x50xf32>
    %c0_24 = arith.constant 0 : index
    %c0_25 = arith.constant 0 : index
    %82 = vector.load %arg2[%c0_24, %c0_25] : memref<50x16xf32, #tpu.memory_space<vmem>>, vector<50x16xf32>
    %cst = arith.constant dense<0.000000e+00> : vector<16x16xf32>
    %83 = tpu.matmul %81, %82, %cst {dimension_numbers = #tpu.dot_dimension_numbers<[1], [0], [0], [1], [0, 0, 1, 1], [], []>} : vector<16x50xf32>, vector<50x16xf32>, vector<16x16xf32> -> vector<16x16xf32>
    %c0_26 = arith.constant 0 : index
    %c0_27 = arith.constant 0 : index
    %c0_28 = arith.constant 0 : index
    %84 = vector.load %arg3[%c0_26, %c0_27, %c0_28] : memref<3x16x32xf32, #tpu.memory_space<vmem>>, vector<1x16x32xf32>
    %85 = vector.shape_cast %84 : vector<1x16x32xf32> to vector<16x32xf32>
    %cst_29 = arith.constant dense<0.000000e+00> : vector<16x32xf32>
    %86 = tpu.matmul %83, %85, %cst_29 {dimension_numbers = #tpu.dot_dimension_numbers<[1], [0], [0], [1], [0, 0, 1, 1], [], []>} : vector<16x16xf32>, vector<16x32xf32>, vector<16x32xf32> -> vector<16x32xf32>
    %c0_30 = arith.constant 0 : index
    %c0_31 = arith.constant 0 : index
    %c0_32 = arith.constant 0 : index
    %87 = vector.load %arg5[%c0_30, %c0_31, %c0_32] : memref<3x1x32xf32, #tpu.memory_space<vmem>>, vector<1x1x32xf32>
    %88 = vector.shape_cast %87 : vector<1x1x32xf32> to vector<1x32xf32>
    %89 = vector.broadcast %88 : vector<1x32xf32> to vector<16x32xf32>
    %90 = arith.addf %86, %89 : vector<16x32xf32>
    %c0_33 = arith.constant 0 : index
    %c0_34 = arith.constant 0 : index
    %c0_35 = arith.constant 0 : index
    %91 = vector.load %arg6[%c0_33, %c0_34, %c0_35] : memref<3x1x32xf32, #tpu.memory_space<vmem>>, vector<1x1x32xf32>
    %92 = vector.shape_cast %91 : vector<1x1x32xf32> to vector<1x32xf32>
    %93 = vector.broadcast %92 : vector<1x32xf32> to vector<16x32xf32>
    %94 = arith.addf %90, %93 : vector<16x32xf32>
    %95 = vector.shape_cast %94 : vector<16x32xf32> to vector<8x2x32xf32>
    %c1_36 = arith.constant 1 : index
    %c0_37 = arith.constant 0 : index
    %c0_38 = arith.constant 0 : index
    %96 = vector.load %arg3[%c1_36, %c0_37, %c0_38] : memref<3x16x32xf32, #tpu.memory_space<vmem>>, vector<1x16x32xf32>
    %97 = vector.shape_cast %96 : vector<1x16x32xf32> to vector<16x32xf32>
    %cst_39 = arith.constant dense<0.000000e+00> : vector<16x32xf32>
    %98 = tpu.matmul %83, %97, %cst_39 {dimension_numbers = #tpu.dot_dimension_numbers<[1], [0], [0], [1], [0, 0, 1, 1], [], []>} : vector<16x16xf32>, vector<16x32xf32>, vector<16x32xf32> -> vector<16x32xf32>
    %c1_40 = arith.constant 1 : index
    %c0_41 = arith.constant 0 : index
    %c0_42 = arith.constant 0 : index
    %99 = vector.load %arg5[%c1_40, %c0_41, %c0_42] : memref<3x1x32xf32, #tpu.memory_space<vmem>>, vector<1x1x32xf32>
    %100 = vector.shape_cast %99 : vector<1x1x32xf32> to vector<1x32xf32>
    %101 = vector.broadcast %100 : vector<1x32xf32> to vector<16x32xf32>
    %102 = arith.addf %98, %101 : vector<16x32xf32>
    %c1_43 = arith.constant 1 : index
    %c0_44 = arith.constant 0 : index
    %c0_45 = arith.constant 0 : index
    %103 = vector.load %arg6[%c1_43, %c0_44, %c0_45] : memref<3x1x32xf32, #tpu.memory_space<vmem>>, vector<1x1x32xf32>
    %104 = vector.shape_cast %103 : vector<1x1x32xf32> to vector<1x32xf32>
    %105 = vector.broadcast %104 : vector<1x32xf32> to vector<16x32xf32>
    %106 = arith.addf %102, %105 : vector<16x32xf32>
    %107 = vector.shape_cast %106 : vector<16x32xf32> to vector<8x2x32xf32>
    %c2_46 = arith.constant 2 : index
    %c0_47 = arith.constant 0 : index
    %c0_48 = arith.constant 0 : index
    %108 = vector.load %arg3[%c2_46, %c0_47, %c0_48] : memref<3x16x32xf32, #tpu.memory_space<vmem>>, vector<1x16x32xf32>
    %109 = vector.shape_cast %108 : vector<1x16x32xf32> to vector<16x32xf32>
    %cst_49 = arith.constant dense<0.000000e+00> : vector<16x32xf32>
    %110 = tpu.matmul %83, %109, %cst_49 {dimension_numbers = #tpu.dot_dimension_numbers<[1], [0], [0], [1], [0, 0, 1, 1], [], []>} : vector<16x16xf32>, vector<16x32xf32>, vector<16x32xf32> -> vector<16x32xf32>
    %c2_50 = arith.constant 2 : index
    %c0_51 = arith.constant 0 : index
    %c0_52 = arith.constant 0 : index
    %111 = vector.load %arg5[%c2_50, %c0_51, %c0_52] : memref<3x1x32xf32, #tpu.memory_space<vmem>>, vector<1x1x32xf32>
    %112 = vector.shape_cast %111 : vector<1x1x32xf32> to vector<1x32xf32>
    %113 = vector.broadcast %112 : vector<1x32xf32> to vector<16x32xf32>
    %114 = arith.addf %110, %113 : vector<16x32xf32>
    %115 = vector.shape_cast %114 : vector<16x32xf32> to vector<8x2x32xf32>
    %c0_53 = arith.constant 0 : index
    %c0_54 = arith.constant 0 : index
    %c0_55 = arith.constant 0 : index
    %116 = vector.load %arg7[%c0_53, %c0_54, %c0_55] : memref<3x16x32xf32, #tpu.memory_space<vmem>>, vector<1x16x32xf32>
    %117 = vector.shape_cast %116 : vector<1x16x32xf32> to vector<16x32xf32>
    %cst_56 = arith.constant dense<0.000000e+00> : vector<16x32xf32>
    %118 = tpu.matmul %83, %117, %cst_56 {dimension_numbers = #tpu.dot_dimension_numbers<[1], [0], [0], [1], [0, 0, 1, 1], [], []>} : vector<16x16xf32>, vector<16x32xf32>, vector<16x32xf32> -> vector<16x32xf32>
    %c0_57 = arith.constant 0 : index
    %c0_58 = arith.constant 0 : index
    %c0_59 = arith.constant 0 : index
    %119 = vector.load %arg9[%c0_57, %c0_58, %c0_59] : memref<3x1x32xf32, #tpu.memory_space<vmem>>, vector<1x1x32xf32>
    %120 = vector.shape_cast %119 : vector<1x1x32xf32> to vector<1x32xf32>
    %121 = vector.broadcast %120 : vector<1x32xf32> to vector<16x32xf32>
    %122 = arith.addf %118, %121 : vector<16x32xf32>
    %c0_60 = arith.constant 0 : index
    %c0_61 = arith.constant 0 : index
    %c0_62 = arith.constant 0 : index
    %123 = vector.load %arg10[%c0_60, %c0_61, %c0_62] : memref<3x1x32xf32, #tpu.memory_space<vmem>>, vector<1x1x32xf32>
    %124 = vector.shape_cast %123 : vector<1x1x32xf32> to vector<1x32xf32>
    %125 = vector.broadcast %124 : vector<1x32xf32> to vector<16x32xf32>
    %126 = arith.addf %122, %125 : vector<16x32xf32>
    %127 = vector.shape_cast %126 : vector<16x32xf32> to vector<8x2x32xf32>
    %c1_63 = arith.constant 1 : index
    %c0_64 = arith.constant 0 : index
    %c0_65 = arith.constant 0 : index
    %128 = vector.load %arg7[%c1_63, %c0_64, %c0_65] : memref<3x16x32xf32, #tpu.memory_space<vmem>>, vector<1x16x32xf32>
    %129 = vector.shape_cast %128 : vector<1x16x32xf32> to vector<16x32xf32>
    %cst_66 = arith.constant dense<0.000000e+00> : vector<16x32xf32>
    %130 = tpu.matmul %83, %129, %cst_66 {dimension_numbers = #tpu.dot_dimension_numbers<[1], [0], [0], [1], [0, 0, 1, 1], [], []>} : vector<16x16xf32>, vector<16x32xf32>, vector<16x32xf32> -> vector<16x32xf32>
    %c1_67 = arith.constant 1 : index
    %c0_68 = arith.constant 0 : index
    %c0_69 = arith.constant 0 : index
    %131 = vector.load %arg9[%c1_67, %c0_68, %c0_69] : memref<3x1x32xf32, #tpu.memory_space<vmem>>, vector<1x1x32xf32>
    %132 = vector.shape_cast %131 : vector<1x1x32xf32> to vector<1x32xf32>
    %133 = vector.broadcast %132 : vector<1x32xf32> to vector<16x32xf32>
    %134 = arith.addf %130, %133 : vector<16x32xf32>
    %c1_70 = arith.constant 1 : index
    %c0_71 = arith.constant 0 : index
    %c0_72 = arith.constant 0 : index
    %135 = vector.load %arg10[%c1_70, %c0_71, %c0_72] : memref<3x1x32xf32, #tpu.memory_space<vmem>>, vector<1x1x32xf32>
    %136 = vector.shape_cast %135 : vector<1x1x32xf32> to vector<1x32xf32>
    %137 = vector.broadcast %136 : vector<1x32xf32> to vector<16x32xf32>
    %138 = arith.addf %134, %137 : vector<16x32xf32>
    %139 = vector.shape_cast %138 : vector<16x32xf32> to vector<8x2x32xf32>
    %c2_73 = arith.constant 2 : index
    %c0_74 = arith.constant 0 : index
    %c0_75 = arith.constant 0 : index
    %140 = vector.load %arg7[%c2_73, %c0_74, %c0_75] : memref<3x16x32xf32, #tpu.memory_space<vmem>>, vector<1x16x32xf32>
    %141 = vector.shape_cast %140 : vector<1x16x32xf32> to vector<16x32xf32>
    %cst_76 = arith.constant dense<0.000000e+00> : vector<16x32xf32>
    %142 = tpu.matmul %83, %141, %cst_76 {dimension_numbers = #tpu.dot_dimension_numbers<[1], [0], [0], [1], [0, 0, 1, 1], [], []>} : vector<16x16xf32>, vector<16x32xf32>, vector<16x32xf32> -> vector<16x32xf32>
    %c2_77 = arith.constant 2 : index
    %c0_78 = arith.constant 0 : index
    %c0_79 = arith.constant 0 : index
    %143 = vector.load %arg9[%c2_77, %c0_78, %c0_79] : memref<3x1x32xf32, #tpu.memory_space<vmem>>, vector<1x1x32xf32>
    %144 = vector.shape_cast %143 : vector<1x1x32xf32> to vector<1x32xf32>
    %145 = vector.broadcast %144 : vector<1x32xf32> to vector<16x32xf32>
    %146 = arith.addf %142, %145 : vector<16x32xf32>
    %147 = vector.shape_cast %146 : vector<16x32xf32> to vector<8x2x32xf32>
    %148 = vector.extract_strided_slice %95 {offsets = [0, 0, 0], sizes = [1, 2, 32], strides = [1, 1, 1]} : vector<8x2x32xf32> to vector<1x2x32xf32>
    %149 = vector.shape_cast %148 : vector<1x2x32xf32> to vector<2x32xf32>
    %150 = arith.negf %149 : vector<2x32xf32>
    %151 = math.exp %150 : vector<2x32xf32>
    %cst_80 = arith.constant 1.000000e+00 : f32
    %152 = vector.broadcast %cst_80 : f32 to vector<2x32xf32>
    %153 = arith.addf %152, %151 : vector<2x32xf32>
    %154 = arith.divf %152, %153 : vector<2x32xf32>
    %155 = vector.extract_strided_slice %107 {offsets = [0, 0, 0], sizes = [1, 2, 32], strides = [1, 1, 1]} : vector<8x2x32xf32> to vector<1x2x32xf32>
    %156 = vector.shape_cast %155 : vector<1x2x32xf32> to vector<2x32xf32>
    %157 = arith.negf %156 : vector<2x32xf32>
    %158 = math.exp %157 : vector<2x32xf32>
    %cst_81 = arith.constant 1.000000e+00 : f32
    %159 = vector.broadcast %cst_81 : f32 to vector<2x32xf32>
    %160 = arith.addf %159, %158 : vector<2x32xf32>
    %161 = arith.divf %159, %160 : vector<2x32xf32>
    %162 = vector.extract_strided_slice %115 {offsets = [0, 0, 0], sizes = [1, 2, 32], strides = [1, 1, 1]} : vector<8x2x32xf32> to vector<1x2x32xf32>
    %163 = vector.shape_cast %162 : vector<1x2x32xf32> to vector<2x32xf32>
    %c2_82 = arith.constant 2 : index
    %c0_83 = arith.constant 0 : index
    %c0_84 = arith.constant 0 : index
    %164 = vector.load %arg6[%c2_82, %c0_83, %c0_84] : memref<3x1x32xf32, #tpu.memory_space<vmem>>, vector<1x1x32xf32>
    %165 = vector.shape_cast %164 : vector<1x1x32xf32> to vector<1x32xf32>
    %166 = vector.broadcast %165 : vector<1x32xf32> to vector<2x32xf32>
    %167 = arith.mulf %154, %166 : vector<2x32xf32>
    %168 = arith.addf %163, %167 : vector<2x32xf32>
    %169 = math.tanh %168 : vector<2x32xf32>
    %cst_85 = arith.constant 1.000000e+00 : f32
    %170 = vector.broadcast %cst_85 : f32 to vector<2x32xf32>
    %171 = arith.subf %170, %161 : vector<2x32xf32>
    %172 = arith.mulf %171, %169 : vector<2x32xf32>
    %173 = vector.extract_strided_slice %127 {offsets = [7, 0, 0], sizes = [1, 2, 32], strides = [1, 1, 1]} : vector<8x2x32xf32> to vector<1x2x32xf32>
    %174 = vector.shape_cast %173 : vector<1x2x32xf32> to vector<2x32xf32>
    %175 = arith.negf %174 : vector<2x32xf32>
    %176 = math.exp %175 : vector<2x32xf32>
    %cst_86 = arith.constant 1.000000e+00 : f32
    %177 = vector.broadcast %cst_86 : f32 to vector<2x32xf32>
    %178 = arith.addf %177, %176 : vector<2x32xf32>
    %179 = arith.divf %177, %178 : vector<2x32xf32>
    %180 = vector.extract_strided_slice %139 {offsets = [7, 0, 0], sizes = [1, 2, 32], strides = [1, 1, 1]} : vector<8x2x32xf32> to vector<1x2x32xf32>
    %181 = vector.shape_cast %180 : vector<1x2x32xf32> to vector<2x32xf32>
    %182 = arith.negf %181 : vector<2x32xf32>
    %183 = math.exp %182 : vector<2x32xf32>
    %cst_87 = arith.constant 1.000000e+00 : f32
    %184 = vector.broadcast %cst_87 : f32 to vector<2x32xf32>
    %185 = arith.addf %184, %183 : vector<2x32xf32>
    %186 = arith.divf %184, %185 : vector<2x32xf32>
    %187 = vector.extract_strided_slice %147 {offsets = [7, 0, 0], sizes = [1, 2, 32], strides = [1, 1, 1]} : vector<8x2x32xf32> to vector<1x2x32xf32>
    %188 = vector.shape_cast %187 : vector<1x2x32xf32> to vector<2x32xf32>
    %c2_88 = arith.constant 2 : index
    %c0_89 = arith.constant 0 : index
    %c0_90 = arith.constant 0 : index
    %189 = vector.load %arg10[%c2_88, %c0_89, %c0_90] : memref<3x1x32xf32, #tpu.memory_space<vmem>>, vector<1x1x32xf32>
    %190 = vector.shape_cast %189 : vector<1x1x32xf32> to vector<1x32xf32>
    %191 = vector.broadcast %190 : vector<1x32xf32> to vector<2x32xf32>
    %192 = arith.mulf %179, %191 : vector<2x32xf32>
    %193 = arith.addf %188, %192 : vector<2x32xf32>
    %194 = math.tanh %193 : vector<2x32xf32>
    %cst_91 = arith.constant 1.000000e+00 : f32
    %195 = vector.broadcast %cst_91 : f32 to vector<2x32xf32>
    %196 = arith.subf %195, %186 : vector<2x32xf32>
    %197 = arith.mulf %196, %194 : vector<2x32xf32>
    %c0_92 = arith.constant 0 : index
    %c0_93 = arith.constant 0 : index
    %c0_94 = arith.constant 0 : index
    %198 = vector.load %arg4[%c0_92, %c0_93, %c0_94] : memref<3x32x32xf32, #tpu.memory_space<vmem>>, vector<1x32x32xf32>
    %199 = vector.shape_cast %198 : vector<1x32x32xf32> to vector<32x32xf32>
    %cst_95 = arith.constant dense<0.000000e+00> : vector<2x32xf32>
    %200 = tpu.matmul %172, %199, %cst_95 {dimension_numbers = #tpu.dot_dimension_numbers<[1], [0], [0], [1], [0, 0, 1, 1], [], []>} : vector<2x32xf32>, vector<32x32xf32>, vector<2x32xf32> -> vector<2x32xf32>
    %c1_96 = arith.constant 1 : index
    %c0_97 = arith.constant 0 : index
    %c0_98 = arith.constant 0 : index
    %201 = vector.load %arg4[%c1_96, %c0_97, %c0_98] : memref<3x32x32xf32, #tpu.memory_space<vmem>>, vector<1x32x32xf32>
    %202 = vector.shape_cast %201 : vector<1x32x32xf32> to vector<32x32xf32>
    %cst_99 = arith.constant dense<0.000000e+00> : vector<2x32xf32>
    %203 = tpu.matmul %172, %202, %cst_99 {dimension_numbers = #tpu.dot_dimension_numbers<[1], [0], [0], [1], [0, 0, 1, 1], [], []>} : vector<2x32xf32>, vector<32x32xf32>, vector<2x32xf32> -> vector<2x32xf32>
    %c2_100 = arith.constant 2 : index
    %c0_101 = arith.constant 0 : index
    %c0_102 = arith.constant 0 : index
    %204 = vector.load %arg4[%c2_100, %c0_101, %c0_102] : memref<3x32x32xf32, #tpu.memory_space<vmem>>, vector<1x32x32xf32>
    %205 = vector.shape_cast %204 : vector<1x32x32xf32> to vector<32x32xf32>
    %cst_103 = arith.constant dense<0.000000e+00> : vector<2x32xf32>
    %206 = tpu.matmul %172, %205, %cst_103 {dimension_numbers = #tpu.dot_dimension_numbers<[1], [0], [0], [1], [0, 0, 1, 1], [], []>} : vector<2x32xf32>, vector<32x32xf32>, vector<2x32xf32> -> vector<2x32xf32>
    %c2_104 = arith.constant 2 : index
    %c0_105 = arith.constant 0 : index
    %c0_106 = arith.constant 0 : index
    %207 = vector.load %arg6[%c2_104, %c0_105, %c0_106] : memref<3x1x32xf32, #tpu.memory_space<vmem>>, vector<1x1x32xf32>
    %208 = vector.shape_cast %207 : vector<1x1x32xf32> to vector<1x32xf32>
    %209 = vector.broadcast %208 : vector<1x32xf32> to vector<2x32xf32>
    %210 = arith.addf %206, %209 : vector<2x32xf32>
    %211 = vector.extract_strided_slice %95 {offsets = [1, 0, 0], sizes = [1, 2, 32], strides = [1, 1, 1]} : vector<8x2x32xf32> to vector<1x2x32xf32>
    %212 = vector.shape_cast %211 : vector<1x2x32xf32> to vector<2x32xf32>
    %213 = arith.addf %212, %200 : vector<2x32xf32>
    %214 = arith.negf %213 : vector<2x32xf32>
    %215 = math.exp %214 : vector<2x32xf32>
    %cst_107 = arith.constant 1.000000e+00 : f32
    %216 = vector.broadcast %cst_107 : f32 to vector<2x32xf32>
    %217 = arith.addf %216, %215 : vector<2x32xf32>
    %218 = arith.divf %216, %217 : vector<2x32xf32>
    %219 = vector.extract_strided_slice %107 {offsets = [1, 0, 0], sizes = [1, 2, 32], strides = [1, 1, 1]} : vector<8x2x32xf32> to vector<1x2x32xf32>
    %220 = vector.shape_cast %219 : vector<1x2x32xf32> to vector<2x32xf32>
    %221 = arith.addf %220, %203 : vector<2x32xf32>
    %222 = arith.negf %221 : vector<2x32xf32>
    %223 = math.exp %222 : vector<2x32xf32>
    %cst_108 = arith.constant 1.000000e+00 : f32
    %224 = vector.broadcast %cst_108 : f32 to vector<2x32xf32>
    %225 = arith.addf %224, %223 : vector<2x32xf32>
    %226 = arith.divf %224, %225 : vector<2x32xf32>
    %227 = vector.extract_strided_slice %115 {offsets = [1, 0, 0], sizes = [1, 2, 32], strides = [1, 1, 1]} : vector<8x2x32xf32> to vector<1x2x32xf32>
    %228 = vector.shape_cast %227 : vector<1x2x32xf32> to vector<2x32xf32>
    %229 = arith.mulf %218, %210 : vector<2x32xf32>
    %230 = arith.addf %228, %229 : vector<2x32xf32>
    %231 = math.tanh %230 : vector<2x32xf32>
    %cst_109 = arith.constant 1.000000e+00 : f32
    %232 = vector.broadcast %cst_109 : f32 to vector<2x32xf32>
    %233 = arith.subf %232, %226 : vector<2x32xf32>
    %234 = arith.mulf %233, %231 : vector<2x32xf32>
    %235 = arith.mulf %226, %172 : vector<2x32xf32>
    %236 = arith.addf %234, %235 : vector<2x32xf32>
    %c0_110 = arith.constant 0 : index
    %c0_111 = arith.constant 0 : index
    %c0_112 = arith.constant 0 : index
    %237 = vector.load %arg8[%c0_110, %c0_111, %c0_112] : memref<3x32x32xf32, #tpu.memory_space<vmem>>, vector<1x32x32xf32>
    %238 = vector.shape_cast %237 : vector<1x32x32xf32> to vector<32x32xf32>
    %cst_113 = arith.constant dense<0.000000e+00> : vector<2x32xf32>
    %239 = tpu.matmul %197, %238, %cst_113 {dimension_numbers = #tpu.dot_dimension_numbers<[1], [0], [0], [1], [0, 0, 1, 1], [], []>} : vector<2x32xf32>, vector<32x32xf32>, vector<2x32xf32> -> vector<2x32xf32>
    %c1_114 = arith.constant 1 : index
    %c0_115 = arith.constant 0 : index
    %c0_116 = arith.constant 0 : index
    %240 = vector.load %arg8[%c1_114, %c0_115, %c0_116] : memref<3x32x32xf32, #tpu.memory_space<vmem>>, vector<1x32x32xf32>
    %241 = vector.shape_cast %240 : vector<1x32x32xf32> to vector<32x32xf32>
    %cst_117 = arith.constant dense<0.000000e+00> : vector<2x32xf32>
    %242 = tpu.matmul %197, %241, %cst_117 {dimension_numbers = #tpu.dot_dimension_numbers<[1], [0], [0], [1], [0, 0, 1, 1], [], []>} : vector<2x32xf32>, vector<32x32xf32>, vector<2x32xf32> -> vector<2x32xf32>
    %c2_118 = arith.constant 2 : index
    %c0_119 = arith.constant 0 : index
    %c0_120 = arith.constant 0 : index
    %243 = vector.load %arg8[%c2_118, %c0_119, %c0_120] : memref<3x32x32xf32, #tpu.memory_space<vmem>>, vector<1x32x32xf32>
    %244 = vector.shape_cast %243 : vector<1x32x32xf32> to vector<32x32xf32>
    %cst_121 = arith.constant dense<0.000000e+00> : vector<2x32xf32>
    %245 = tpu.matmul %197, %244, %cst_121 {dimension_numbers = #tpu.dot_dimension_numbers<[1], [0], [0], [1], [0, 0, 1, 1], [], []>} : vector<2x32xf32>, vector<32x32xf32>, vector<2x32xf32> -> vector<2x32xf32>
    %c2_122 = arith.constant 2 : index
    %c0_123 = arith.constant 0 : index
    %c0_124 = arith.constant 0 : index
    %246 = vector.load %arg10[%c2_122, %c0_123, %c0_124] : memref<3x1x32xf32, #tpu.memory_space<vmem>>, vector<1x1x32xf32>
    %247 = vector.shape_cast %246 : vector<1x1x32xf32> to vector<1x32xf32>
    %248 = vector.broadcast %247 : vector<1x32xf32> to vector<2x32xf32>
    %249 = arith.addf %245, %248 : vector<2x32xf32>
    %250 = vector.extract_strided_slice %127 {offsets = [6, 0, 0], sizes = [1, 2, 32], strides = [1, 1, 1]} : vector<8x2x32xf32> to vector<1x2x32xf32>
    %251 = vector.shape_cast %250 : vector<1x2x32xf32> to vector<2x32xf32>
    %252 = arith.addf %251, %239 : vector<2x32xf32>
    %253 = arith.negf %252 : vector<2x32xf32>
    %254 = math.exp %253 : vector<2x32xf32>
    %cst_125 = arith.constant 1.000000e+00 : f32
    %255 = vector.broadcast %cst_125 : f32 to vector<2x32xf32>
    %256 = arith.addf %255, %254 : vector<2x32xf32>
    %257 = arith.divf %255, %256 : vector<2x32xf32>
    %258 = vector.extract_strided_slice %139 {offsets = [6, 0, 0], sizes = [1, 2, 32], strides = [1, 1, 1]} : vector<8x2x32xf32> to vector<1x2x32xf32>
    %259 = vector.shape_cast %258 : vector<1x2x32xf32> to vector<2x32xf32>
    %260 = arith.addf %259, %242 : vector<2x32xf32>
    %261 = arith.negf %260 : vector<2x32xf32>
    %262 = math.exp %261 : vector<2x32xf32>
    %cst_126 = arith.constant 1.000000e+00 : f32
    %263 = vector.broadcast %cst_126 : f32 to vector<2x32xf32>
    %264 = arith.addf %263, %262 : vector<2x32xf32>
    %265 = arith.divf %263, %264 : vector<2x32xf32>
    %266 = vector.extract_strided_slice %147 {offsets = [6, 0, 0], sizes = [1, 2, 32], strides = [1, 1, 1]} : vector<8x2x32xf32> to vector<1x2x32xf32>
    %267 = vector.shape_cast %266 : vector<1x2x32xf32> to vector<2x32xf32>
    %268 = arith.mulf %257, %249 : vector<2x32xf32>
    %269 = arith.addf %267, %268 : vector<2x32xf32>
    %270 = math.tanh %269 : vector<2x32xf32>
    %cst_127 = arith.constant 1.000000e+00 : f32
    %271 = vector.broadcast %cst_127 : f32 to vector<2x32xf32>
    %272 = arith.subf %271, %265 : vector<2x32xf32>
    %273 = arith.mulf %272, %270 : vector<2x32xf32>
    %274 = arith.mulf %265, %197 : vector<2x32xf32>
    %275 = arith.addf %273, %274 : vector<2x32xf32>
    %c0_128 = arith.constant 0 : index
    %c0_129 = arith.constant 0 : index
    %c0_130 = arith.constant 0 : index
    %276 = vector.load %arg4[%c0_128, %c0_129, %c0_130] : memref<3x32x32xf32, #tpu.memory_space<vmem>>, vector<1x32x32xf32>
    %277 = vector.shape_cast %276 : vector<1x32x32xf32> to vector<32x32xf32>
    %cst_131 = arith.constant dense<0.000000e+00> : vector<2x32xf32>
    %278 = tpu.matmul %236, %277, %cst_131 {dimension_numbers = #tpu.dot_dimension_numbers<[1], [0], [0], [1], [0, 0, 1, 1], [], []>} : vector<2x32xf32>, vector<32x32xf32>, vector<2x32xf32> -> vector<2x32xf32>
    %c1_132 = arith.constant 1 : index
    %c0_133 = arith.constant 0 : index
    %c0_134 = arith.constant 0 : index
    %279 = vector.load %arg4[%c1_132, %c0_133, %c0_134] : memref<3x32x32xf32, #tpu.memory_space<vmem>>, vector<1x32x32xf32>
    %280 = vector.shape_cast %279 : vector<1x32x32xf32> to vector<32x32xf32>
    %cst_135 = arith.constant dense<0.000000e+00> : vector<2x32xf32>
    %281 = tpu.matmul %236, %280, %cst_135 {dimension_numbers = #tpu.dot_dimension_numbers<[1], [0], [0], [1], [0, 0, 1, 1], [], []>} : vector<2x32xf32>, vector<32x32xf32>, vector<2x32xf32> -> vector<2x32xf32>
    %c2_136 = arith.constant 2 : index
    %c0_137 = arith.constant 0 : index
    %c0_138 = arith.constant 0 : index
    %282 = vector.load %arg4[%c2_136, %c0_137, %c0_138] : memref<3x32x32xf32, #tpu.memory_space<vmem>>, vector<1x32x32xf32>
    %283 = vector.shape_cast %282 : vector<1x32x32xf32> to vector<32x32xf32>
    %cst_139 = arith.constant dense<0.000000e+00> : vector<2x32xf32>
    %284 = tpu.matmul %236, %283, %cst_139 {dimension_numbers = #tpu.dot_dimension_numbers<[1], [0], [0], [1], [0, 0, 1, 1], [], []>} : vector<2x32xf32>, vector<32x32xf32>, vector<2x32xf32> -> vector<2x32xf32>
    %c2_140 = arith.constant 2 : index
    %c0_141 = arith.constant 0 : index
    %c0_142 = arith.constant 0 : index
    %285 = vector.load %arg6[%c2_140, %c0_141, %c0_142] : memref<3x1x32xf32, #tpu.memory_space<vmem>>, vector<1x1x32xf32>
    %286 = vector.shape_cast %285 : vector<1x1x32xf32> to vector<1x32xf32>
    %287 = vector.broadcast %286 : vector<1x32xf32> to vector<2x32xf32>
    %288 = arith.addf %284, %287 : vector<2x32xf32>
    %289 = vector.extract_strided_slice %95 {offsets = [2, 0, 0], sizes = [1, 2, 32], strides = [1, 1, 1]} : vector<8x2x32xf32> to vector<1x2x32xf32>
    %290 = vector.shape_cast %289 : vector<1x2x32xf32> to vector<2x32xf32>
    %291 = arith.addf %290, %278 : vector<2x32xf32>
    %292 = arith.negf %291 : vector<2x32xf32>
    %293 = math.exp %292 : vector<2x32xf32>
    %cst_143 = arith.constant 1.000000e+00 : f32
    %294 = vector.broadcast %cst_143 : f32 to vector<2x32xf32>
    %295 = arith.addf %294, %293 : vector<2x32xf32>
    %296 = arith.divf %294, %295 : vector<2x32xf32>
    %297 = vector.extract_strided_slice %107 {offsets = [2, 0, 0], sizes = [1, 2, 32], strides = [1, 1, 1]} : vector<8x2x32xf32> to vector<1x2x32xf32>
    %298 = vector.shape_cast %297 : vector<1x2x32xf32> to vector<2x32xf32>
    %299 = arith.addf %298, %281 : vector<2x32xf32>
    %300 = arith.negf %299 : vector<2x32xf32>
    %301 = math.exp %300 : vector<2x32xf32>
    %cst_144 = arith.constant 1.000000e+00 : f32
    %302 = vector.broadcast %cst_144 : f32 to vector<2x32xf32>
    %303 = arith.addf %302, %301 : vector<2x32xf32>
    %304 = arith.divf %302, %303 : vector<2x32xf32>
    %305 = vector.extract_strided_slice %115 {offsets = [2, 0, 0], sizes = [1, 2, 32], strides = [1, 1, 1]} : vector<8x2x32xf32> to vector<1x2x32xf32>
    %306 = vector.shape_cast %305 : vector<1x2x32xf32> to vector<2x32xf32>
    %307 = arith.mulf %296, %288 : vector<2x32xf32>
    %308 = arith.addf %306, %307 : vector<2x32xf32>
    %309 = math.tanh %308 : vector<2x32xf32>
    %cst_145 = arith.constant 1.000000e+00 : f32
    %310 = vector.broadcast %cst_145 : f32 to vector<2x32xf32>
    %311 = arith.subf %310, %304 : vector<2x32xf32>
    %312 = arith.mulf %311, %309 : vector<2x32xf32>
    %313 = arith.mulf %304, %236 : vector<2x32xf32>
    %314 = arith.addf %312, %313 : vector<2x32xf32>
    %c0_146 = arith.constant 0 : index
    %c0_147 = arith.constant 0 : index
    %c0_148 = arith.constant 0 : index
    %315 = vector.load %arg8[%c0_146, %c0_147, %c0_148] : memref<3x32x32xf32, #tpu.memory_space<vmem>>, vector<1x32x32xf32>
    %316 = vector.shape_cast %315 : vector<1x32x32xf32> to vector<32x32xf32>
    %cst_149 = arith.constant dense<0.000000e+00> : vector<2x32xf32>
    %317 = tpu.matmul %275, %316, %cst_149 {dimension_numbers = #tpu.dot_dimension_numbers<[1], [0], [0], [1], [0, 0, 1, 1], [], []>} : vector<2x32xf32>, vector<32x32xf32>, vector<2x32xf32> -> vector<2x32xf32>
    %c1_150 = arith.constant 1 : index
    %c0_151 = arith.constant 0 : index
    %c0_152 = arith.constant 0 : index
    %318 = vector.load %arg8[%c1_150, %c0_151, %c0_152] : memref<3x32x32xf32, #tpu.memory_space<vmem>>, vector<1x32x32xf32>
    %319 = vector.shape_cast %318 : vector<1x32x32xf32> to vector<32x32xf32>
    %cst_153 = arith.constant dense<0.000000e+00> : vector<2x32xf32>
    %320 = tpu.matmul %275, %319, %cst_153 {dimension_numbers = #tpu.dot_dimension_numbers<[1], [0], [0], [1], [0, 0, 1, 1], [], []>} : vector<2x32xf32>, vector<32x32xf32>, vector<2x32xf32> -> vector<2x32xf32>
    %c2_154 = arith.constant 2 : index
    %c0_155 = arith.constant 0 : index
    %c0_156 = arith.constant 0 : index
    %321 = vector.load %arg8[%c2_154, %c0_155, %c0_156] : memref<3x32x32xf32, #tpu.memory_space<vmem>>, vector<1x32x32xf32>
    %322 = vector.shape_cast %321 : vector<1x32x32xf32> to vector<32x32xf32>
    %cst_157 = arith.constant dense<0.000000e+00> : vector<2x32xf32>
    %323 = tpu.matmul %275, %322, %cst_157 {dimension_numbers = #tpu.dot_dimension_numbers<[1], [0], [0], [1], [0, 0, 1, 1], [], []>} : vector<2x32xf32>, vector<32x32xf32>, vector<2x32xf32> -> vector<2x32xf32>
    %c2_158 = arith.constant 2 : index
    %c0_159 = arith.constant 0 : index
    %c0_160 = arith.constant 0 : index
    %324 = vector.load %arg10[%c2_158, %c0_159, %c0_160] : memref<3x1x32xf32, #tpu.memory_space<vmem>>, vector<1x1x32xf32>
    %325 = vector.shape_cast %324 : vector<1x1x32xf32> to vector<1x32xf32>
    %326 = vector.broadcast %325 : vector<1x32xf32> to vector<2x32xf32>
    %327 = arith.addf %323, %326 : vector<2x32xf32>
    %328 = vector.extract_strided_slice %127 {offsets = [5, 0, 0], sizes = [1, 2, 32], strides = [1, 1, 1]} : vector<8x2x32xf32> to vector<1x2x32xf32>
    %329 = vector.shape_cast %328 : vector<1x2x32xf32> to vector<2x32xf32>
    %330 = arith.addf %329, %317 : vector<2x32xf32>
    %331 = arith.negf %330 : vector<2x32xf32>
    %332 = math.exp %331 : vector<2x32xf32>
    %cst_161 = arith.constant 1.000000e+00 : f32
    %333 = vector.broadcast %cst_161 : f32 to vector<2x32xf32>
    %334 = arith.addf %333, %332 : vector<2x32xf32>
    %335 = arith.divf %333, %334 : vector<2x32xf32>
    %336 = vector.extract_strided_slice %139 {offsets = [5, 0, 0], sizes = [1, 2, 32], strides = [1, 1, 1]} : vector<8x2x32xf32> to vector<1x2x32xf32>
    %337 = vector.shape_cast %336 : vector<1x2x32xf32> to vector<2x32xf32>
    %338 = arith.addf %337, %320 : vector<2x32xf32>
    %339 = arith.negf %338 : vector<2x32xf32>
    %340 = math.exp %339 : vector<2x32xf32>
    %cst_162 = arith.constant 1.000000e+00 : f32
    %341 = vector.broadcast %cst_162 : f32 to vector<2x32xf32>
    %342 = arith.addf %341, %340 : vector<2x32xf32>
    %343 = arith.divf %341, %342 : vector<2x32xf32>
    %344 = vector.extract_strided_slice %147 {offsets = [5, 0, 0], sizes = [1, 2, 32], strides = [1, 1, 1]} : vector<8x2x32xf32> to vector<1x2x32xf32>
    %345 = vector.shape_cast %344 : vector<1x2x32xf32> to vector<2x32xf32>
    %346 = arith.mulf %335, %327 : vector<2x32xf32>
    %347 = arith.addf %345, %346 : vector<2x32xf32>
    %348 = math.tanh %347 : vector<2x32xf32>
    %cst_163 = arith.constant 1.000000e+00 : f32
    %349 = vector.broadcast %cst_163 : f32 to vector<2x32xf32>
    %350 = arith.subf %349, %343 : vector<2x32xf32>
    %351 = arith.mulf %350, %348 : vector<2x32xf32>
    %352 = arith.mulf %343, %275 : vector<2x32xf32>
    %353 = arith.addf %351, %352 : vector<2x32xf32>
    %c0_164 = arith.constant 0 : index
    %c0_165 = arith.constant 0 : index
    %c0_166 = arith.constant 0 : index
    %354 = vector.load %arg4[%c0_164, %c0_165, %c0_166] : memref<3x32x32xf32, #tpu.memory_space<vmem>>, vector<1x32x32xf32>
    %355 = vector.shape_cast %354 : vector<1x32x32xf32> to vector<32x32xf32>
    %cst_167 = arith.constant dense<0.000000e+00> : vector<2x32xf32>
    %356 = tpu.matmul %314, %355, %cst_167 {dimension_numbers = #tpu.dot_dimension_numbers<[1], [0], [0], [1], [0, 0, 1, 1], [], []>} : vector<2x32xf32>, vector<32x32xf32>, vector<2x32xf32> -> vector<2x32xf32>
    %c1_168 = arith.constant 1 : index
    %c0_169 = arith.constant 0 : index
    %c0_170 = arith.constant 0 : index
    %357 = vector.load %arg4[%c1_168, %c0_169, %c0_170] : memref<3x32x32xf32, #tpu.memory_space<vmem>>, vector<1x32x32xf32>
    %358 = vector.shape_cast %357 : vector<1x32x32xf32> to vector<32x32xf32>
    %cst_171 = arith.constant dense<0.000000e+00> : vector<2x32xf32>
    %359 = tpu.matmul %314, %358, %cst_171 {dimension_numbers = #tpu.dot_dimension_numbers<[1], [0], [0], [1], [0, 0, 1, 1], [], []>} : vector<2x32xf32>, vector<32x32xf32>, vector<2x32xf32> -> vector<2x32xf32>
    %c2_172 = arith.constant 2 : index
    %c0_173 = arith.constant 0 : index
    %c0_174 = arith.constant 0 : index
    %360 = vector.load %arg4[%c2_172, %c0_173, %c0_174] : memref<3x32x32xf32, #tpu.memory_space<vmem>>, vector<1x32x32xf32>
    %361 = vector.shape_cast %360 : vector<1x32x32xf32> to vector<32x32xf32>
    %cst_175 = arith.constant dense<0.000000e+00> : vector<2x32xf32>
    %362 = tpu.matmul %314, %361, %cst_175 {dimension_numbers = #tpu.dot_dimension_numbers<[1], [0], [0], [1], [0, 0, 1, 1], [], []>} : vector<2x32xf32>, vector<32x32xf32>, vector<2x32xf32> -> vector<2x32xf32>
    %c2_176 = arith.constant 2 : index
    %c0_177 = arith.constant 0 : index
    %c0_178 = arith.constant 0 : index
    %363 = vector.load %arg6[%c2_176, %c0_177, %c0_178] : memref<3x1x32xf32, #tpu.memory_space<vmem>>, vector<1x1x32xf32>
    %364 = vector.shape_cast %363 : vector<1x1x32xf32> to vector<1x32xf32>
    %365 = vector.broadcast %364 : vector<1x32xf32> to vector<2x32xf32>
    %366 = arith.addf %362, %365 : vector<2x32xf32>
    %367 = vector.extract_strided_slice %95 {offsets = [3, 0, 0], sizes = [1, 2, 32], strides = [1, 1, 1]} : vector<8x2x32xf32> to vector<1x2x32xf32>
    %368 = vector.shape_cast %367 : vector<1x2x32xf32> to vector<2x32xf32>
    %369 = arith.addf %368, %356 : vector<2x32xf32>
    %370 = arith.negf %369 : vector<2x32xf32>
    %371 = math.exp %370 : vector<2x32xf32>
    %cst_179 = arith.constant 1.000000e+00 : f32
    %372 = vector.broadcast %cst_179 : f32 to vector<2x32xf32>
    %373 = arith.addf %372, %371 : vector<2x32xf32>
    %374 = arith.divf %372, %373 : vector<2x32xf32>
    %375 = vector.extract_strided_slice %107 {offsets = [3, 0, 0], sizes = [1, 2, 32], strides = [1, 1, 1]} : vector<8x2x32xf32> to vector<1x2x32xf32>
    %376 = vector.shape_cast %375 : vector<1x2x32xf32> to vector<2x32xf32>
    %377 = arith.addf %376, %359 : vector<2x32xf32>
    %378 = arith.negf %377 : vector<2x32xf32>
    %379 = math.exp %378 : vector<2x32xf32>
    %cst_180 = arith.constant 1.000000e+00 : f32
    %380 = vector.broadcast %cst_180 : f32 to vector<2x32xf32>
    %381 = arith.addf %380, %379 : vector<2x32xf32>
    %382 = arith.divf %380, %381 : vector<2x32xf32>
    %383 = vector.extract_strided_slice %115 {offsets = [3, 0, 0], sizes = [1, 2, 32], strides = [1, 1, 1]} : vector<8x2x32xf32> to vector<1x2x32xf32>
    %384 = vector.shape_cast %383 : vector<1x2x32xf32> to vector<2x32xf32>
    %385 = arith.mulf %374, %366 : vector<2x32xf32>
    %386 = arith.addf %384, %385 : vector<2x32xf32>
    %387 = math.tanh %386 : vector<2x32xf32>
    %cst_181 = arith.constant 1.000000e+00 : f32
    %388 = vector.broadcast %cst_181 : f32 to vector<2x32xf32>
    %389 = arith.subf %388, %382 : vector<2x32xf32>
    %390 = arith.mulf %389, %387 : vector<2x32xf32>
    %391 = arith.mulf %382, %314 : vector<2x32xf32>
    %392 = arith.addf %390, %391 : vector<2x32xf32>
    %c0_182 = arith.constant 0 : index
    %c0_183 = arith.constant 0 : index
    %c0_184 = arith.constant 0 : index
    %393 = vector.load %arg8[%c0_182, %c0_183, %c0_184] : memref<3x32x32xf32, #tpu.memory_space<vmem>>, vector<1x32x32xf32>
    %394 = vector.shape_cast %393 : vector<1x32x32xf32> to vector<32x32xf32>
    %cst_185 = arith.constant dense<0.000000e+00> : vector<2x32xf32>
    %395 = tpu.matmul %353, %394, %cst_185 {dimension_numbers = #tpu.dot_dimension_numbers<[1], [0], [0], [1], [0, 0, 1, 1], [], []>} : vector<2x32xf32>, vector<32x32xf32>, vector<2x32xf32> -> vector<2x32xf32>
    %c1_186 = arith.constant 1 : index
    %c0_187 = arith.constant 0 : index
    %c0_188 = arith.constant 0 : index
    %396 = vector.load %arg8[%c1_186, %c0_187, %c0_188] : memref<3x32x32xf32, #tpu.memory_space<vmem>>, vector<1x32x32xf32>
    %397 = vector.shape_cast %396 : vector<1x32x32xf32> to vector<32x32xf32>
    %cst_189 = arith.constant dense<0.000000e+00> : vector<2x32xf32>
    %398 = tpu.matmul %353, %397, %cst_189 {dimension_numbers = #tpu.dot_dimension_numbers<[1], [0], [0], [1], [0, 0, 1, 1], [], []>} : vector<2x32xf32>, vector<32x32xf32>, vector<2x32xf32> -> vector<2x32xf32>
    %c2_190 = arith.constant 2 : index
    %c0_191 = arith.constant 0 : index
    %c0_192 = arith.constant 0 : index
    %399 = vector.load %arg8[%c2_190, %c0_191, %c0_192] : memref<3x32x32xf32, #tpu.memory_space<vmem>>, vector<1x32x32xf32>
    %400 = vector.shape_cast %399 : vector<1x32x32xf32> to vector<32x32xf32>
    %cst_193 = arith.constant dense<0.000000e+00> : vector<2x32xf32>
    %401 = tpu.matmul %353, %400, %cst_193 {dimension_numbers = #tpu.dot_dimension_numbers<[1], [0], [0], [1], [0, 0, 1, 1], [], []>} : vector<2x32xf32>, vector<32x32xf32>, vector<2x32xf32> -> vector<2x32xf32>
    %c2_194 = arith.constant 2 : index
    %c0_195 = arith.constant 0 : index
    %c0_196 = arith.constant 0 : index
    %402 = vector.load %arg10[%c2_194, %c0_195, %c0_196] : memref<3x1x32xf32, #tpu.memory_space<vmem>>, vector<1x1x32xf32>
    %403 = vector.shape_cast %402 : vector<1x1x32xf32> to vector<1x32xf32>
    %404 = vector.broadcast %403 : vector<1x32xf32> to vector<2x32xf32>
    %405 = arith.addf %401, %404 : vector<2x32xf32>
    %406 = vector.extract_strided_slice %127 {offsets = [4, 0, 0], sizes = [1, 2, 32], strides = [1, 1, 1]} : vector<8x2x32xf32> to vector<1x2x32xf32>
    %407 = vector.shape_cast %406 : vector<1x2x32xf32> to vector<2x32xf32>
    %408 = arith.addf %407, %395 : vector<2x32xf32>
    %409 = arith.negf %408 : vector<2x32xf32>
    %410 = math.exp %409 : vector<2x32xf32>
    %cst_197 = arith.constant 1.000000e+00 : f32
    %411 = vector.broadcast %cst_197 : f32 to vector<2x32xf32>
    %412 = arith.addf %411, %410 : vector<2x32xf32>
    %413 = arith.divf %411, %412 : vector<2x32xf32>
    %414 = vector.extract_strided_slice %139 {offsets = [4, 0, 0], sizes = [1, 2, 32], strides = [1, 1, 1]} : vector<8x2x32xf32> to vector<1x2x32xf32>
    %415 = vector.shape_cast %414 : vector<1x2x32xf32> to vector<2x32xf32>
    %416 = arith.addf %415, %398 : vector<2x32xf32>
    %417 = arith.negf %416 : vector<2x32xf32>
    %418 = math.exp %417 : vector<2x32xf32>
    %cst_198 = arith.constant 1.000000e+00 : f32
    %419 = vector.broadcast %cst_198 : f32 to vector<2x32xf32>
    %420 = arith.addf %419, %418 : vector<2x32xf32>
    %421 = arith.divf %419, %420 : vector<2x32xf32>
    %422 = vector.extract_strided_slice %147 {offsets = [4, 0, 0], sizes = [1, 2, 32], strides = [1, 1, 1]} : vector<8x2x32xf32> to vector<1x2x32xf32>
    %423 = vector.shape_cast %422 : vector<1x2x32xf32> to vector<2x32xf32>
    %424 = arith.mulf %413, %405 : vector<2x32xf32>
    %425 = arith.addf %423, %424 : vector<2x32xf32>
    %426 = math.tanh %425 : vector<2x32xf32>
    %cst_199 = arith.constant 1.000000e+00 : f32
    %427 = vector.broadcast %cst_199 : f32 to vector<2x32xf32>
    %428 = arith.subf %427, %421 : vector<2x32xf32>
    %429 = arith.mulf %428, %426 : vector<2x32xf32>
    %430 = arith.mulf %421, %353 : vector<2x32xf32>
    %431 = arith.addf %429, %430 : vector<2x32xf32>
    %c0_200 = arith.constant 0 : index
    %c0_201 = arith.constant 0 : index
    %c0_202 = arith.constant 0 : index
    %432 = vector.load %arg4[%c0_200, %c0_201, %c0_202] : memref<3x32x32xf32, #tpu.memory_space<vmem>>, vector<1x32x32xf32>
    %433 = vector.shape_cast %432 : vector<1x32x32xf32> to vector<32x32xf32>
    %cst_203 = arith.constant dense<0.000000e+00> : vector<2x32xf32>
    %434 = tpu.matmul %392, %433, %cst_203 {dimension_numbers = #tpu.dot_dimension_numbers<[1], [0], [0], [1], [0, 0, 1, 1], [], []>} : vector<2x32xf32>, vector<32x32xf32>, vector<2x32xf32> -> vector<2x32xf32>
    %c1_204 = arith.constant 1 : index
    %c0_205 = arith.constant 0 : index
    %c0_206 = arith.constant 0 : index
    %435 = vector.load %arg4[%c1_204, %c0_205, %c0_206] : memref<3x32x32xf32, #tpu.memory_space<vmem>>, vector<1x32x32xf32>
    %436 = vector.shape_cast %435 : vector<1x32x32xf32> to vector<32x32xf32>
    %cst_207 = arith.constant dense<0.000000e+00> : vector<2x32xf32>
    %437 = tpu.matmul %392, %436, %cst_207 {dimension_numbers = #tpu.dot_dimension_numbers<[1], [0], [0], [1], [0, 0, 1, 1], [], []>} : vector<2x32xf32>, vector<32x32xf32>, vector<2x32xf32> -> vector<2x32xf32>
    %c2_208 = arith.constant 2 : index
    %c0_209 = arith.constant 0 : index
    %c0_210 = arith.constant 0 : index
    %438 = vector.load %arg4[%c2_208, %c0_209, %c0_210] : memref<3x32x32xf32, #tpu.memory_space<vmem>>, vector<1x32x32xf32>
    %439 = vector.shape_cast %438 : vector<1x32x32xf32> to vector<32x32xf32>
    %cst_211 = arith.constant dense<0.000000e+00> : vector<2x32xf32>
    %440 = tpu.matmul %392, %439, %cst_211 {dimension_numbers = #tpu.dot_dimension_numbers<[1], [0], [0], [1], [0, 0, 1, 1], [], []>} : vector<2x32xf32>, vector<32x32xf32>, vector<2x32xf32> -> vector<2x32xf32>
    %c2_212 = arith.constant 2 : index
    %c0_213 = arith.constant 0 : index
    %c0_214 = arith.constant 0 : index
    %441 = vector.load %arg6[%c2_212, %c0_213, %c0_214] : memref<3x1x32xf32, #tpu.memory_space<vmem>>, vector<1x1x32xf32>
    %442 = vector.shape_cast %441 : vector<1x1x32xf32> to vector<1x32xf32>
    %443 = vector.broadcast %442 : vector<1x32xf32> to vector<2x32xf32>
    %444 = arith.addf %440, %443 : vector<2x32xf32>
    %445 = vector.extract_strided_slice %95 {offsets = [4, 0, 0], sizes = [1, 2, 32], strides = [1, 1, 1]} : vector<8x2x32xf32> to vector<1x2x32xf32>
    %446 = vector.shape_cast %445 : vector<1x2x32xf32> to vector<2x32xf32>
    %447 = arith.addf %446, %434 : vector<2x32xf32>
    %448 = arith.negf %447 : vector<2x32xf32>
    %449 = math.exp %448 : vector<2x32xf32>
    %cst_215 = arith.constant 1.000000e+00 : f32
    %450 = vector.broadcast %cst_215 : f32 to vector<2x32xf32>
    %451 = arith.addf %450, %449 : vector<2x32xf32>
    %452 = arith.divf %450, %451 : vector<2x32xf32>
    %453 = vector.extract_strided_slice %107 {offsets = [4, 0, 0], sizes = [1, 2, 32], strides = [1, 1, 1]} : vector<8x2x32xf32> to vector<1x2x32xf32>
    %454 = vector.shape_cast %453 : vector<1x2x32xf32> to vector<2x32xf32>
    %455 = arith.addf %454, %437 : vector<2x32xf32>
    %456 = arith.negf %455 : vector<2x32xf32>
    %457 = math.exp %456 : vector<2x32xf32>
    %cst_216 = arith.constant 1.000000e+00 : f32
    %458 = vector.broadcast %cst_216 : f32 to vector<2x32xf32>
    %459 = arith.addf %458, %457 : vector<2x32xf32>
    %460 = arith.divf %458, %459 : vector<2x32xf32>
    %461 = vector.extract_strided_slice %115 {offsets = [4, 0, 0], sizes = [1, 2, 32], strides = [1, 1, 1]} : vector<8x2x32xf32> to vector<1x2x32xf32>
    %462 = vector.shape_cast %461 : vector<1x2x32xf32> to vector<2x32xf32>
    %463 = arith.mulf %452, %444 : vector<2x32xf32>
    %464 = arith.addf %462, %463 : vector<2x32xf32>
    %465 = math.tanh %464 : vector<2x32xf32>
    %cst_217 = arith.constant 1.000000e+00 : f32
    %466 = vector.broadcast %cst_217 : f32 to vector<2x32xf32>
    %467 = arith.subf %466, %460 : vector<2x32xf32>
    %468 = arith.mulf %467, %465 : vector<2x32xf32>
    %469 = arith.mulf %460, %392 : vector<2x32xf32>
    %470 = arith.addf %468, %469 : vector<2x32xf32>
    %c0_218 = arith.constant 0 : index
    %c0_219 = arith.constant 0 : index
    %c0_220 = arith.constant 0 : index
    %471 = vector.load %arg8[%c0_218, %c0_219, %c0_220] : memref<3x32x32xf32, #tpu.memory_space<vmem>>, vector<1x32x32xf32>
    %472 = vector.shape_cast %471 : vector<1x32x32xf32> to vector<32x32xf32>
    %cst_221 = arith.constant dense<0.000000e+00> : vector<2x32xf32>
    %473 = tpu.matmul %431, %472, %cst_221 {dimension_numbers = #tpu.dot_dimension_numbers<[1], [0], [0], [1], [0, 0, 1, 1], [], []>} : vector<2x32xf32>, vector<32x32xf32>, vector<2x32xf32> -> vector<2x32xf32>
    %c1_222 = arith.constant 1 : index
    %c0_223 = arith.constant 0 : index
    %c0_224 = arith.constant 0 : index
    %474 = vector.load %arg8[%c1_222, %c0_223, %c0_224] : memref<3x32x32xf32, #tpu.memory_space<vmem>>, vector<1x32x32xf32>
    %475 = vector.shape_cast %474 : vector<1x32x32xf32> to vector<32x32xf32>
    %cst_225 = arith.constant dense<0.000000e+00> : vector<2x32xf32>
    %476 = tpu.matmul %431, %475, %cst_225 {dimension_numbers = #tpu.dot_dimension_numbers<[1], [0], [0], [1], [0, 0, 1, 1], [], []>} : vector<2x32xf32>, vector<32x32xf32>, vector<2x32xf32> -> vector<2x32xf32>
    %c2_226 = arith.constant 2 : index
    %c0_227 = arith.constant 0 : index
    %c0_228 = arith.constant 0 : index
    %477 = vector.load %arg8[%c2_226, %c0_227, %c0_228] : memref<3x32x32xf32, #tpu.memory_space<vmem>>, vector<1x32x32xf32>
    %478 = vector.shape_cast %477 : vector<1x32x32xf32> to vector<32x32xf32>
    %cst_229 = arith.constant dense<0.000000e+00> : vector<2x32xf32>
    %479 = tpu.matmul %431, %478, %cst_229 {dimension_numbers = #tpu.dot_dimension_numbers<[1], [0], [0], [1], [0, 0, 1, 1], [], []>} : vector<2x32xf32>, vector<32x32xf32>, vector<2x32xf32> -> vector<2x32xf32>
    %c2_230 = arith.constant 2 : index
    %c0_231 = arith.constant 0 : index
    %c0_232 = arith.constant 0 : index
    %480 = vector.load %arg10[%c2_230, %c0_231, %c0_232] : memref<3x1x32xf32, #tpu.memory_space<vmem>>, vector<1x1x32xf32>
    %481 = vector.shape_cast %480 : vector<1x1x32xf32> to vector<1x32xf32>
    %482 = vector.broadcast %481 : vector<1x32xf32> to vector<2x32xf32>
    %483 = arith.addf %479, %482 : vector<2x32xf32>
    %484 = vector.extract_strided_slice %127 {offsets = [3, 0, 0], sizes = [1, 2, 32], strides = [1, 1, 1]} : vector<8x2x32xf32> to vector<1x2x32xf32>
    %485 = vector.shape_cast %484 : vector<1x2x32xf32> to vector<2x32xf32>
    %486 = arith.addf %485, %473 : vector<2x32xf32>
    %487 = arith.negf %486 : vector<2x32xf32>
    %488 = math.exp %487 : vector<2x32xf32>
    %cst_233 = arith.constant 1.000000e+00 : f32
    %489 = vector.broadcast %cst_233 : f32 to vector<2x32xf32>
    %490 = arith.addf %489, %488 : vector<2x32xf32>
    %491 = arith.divf %489, %490 : vector<2x32xf32>
    %492 = vector.extract_strided_slice %139 {offsets = [3, 0, 0], sizes = [1, 2, 32], strides = [1, 1, 1]} : vector<8x2x32xf32> to vector<1x2x32xf32>
    %493 = vector.shape_cast %492 : vector<1x2x32xf32> to vector<2x32xf32>
    %494 = arith.addf %493, %476 : vector<2x32xf32>
    %495 = arith.negf %494 : vector<2x32xf32>
    %496 = math.exp %495 : vector<2x32xf32>
    %cst_234 = arith.constant 1.000000e+00 : f32
    %497 = vector.broadcast %cst_234 : f32 to vector<2x32xf32>
    %498 = arith.addf %497, %496 : vector<2x32xf32>
    %499 = arith.divf %497, %498 : vector<2x32xf32>
    %500 = vector.extract_strided_slice %147 {offsets = [3, 0, 0], sizes = [1, 2, 32], strides = [1, 1, 1]} : vector<8x2x32xf32> to vector<1x2x32xf32>
    %501 = vector.shape_cast %500 : vector<1x2x32xf32> to vector<2x32xf32>
    %502 = arith.mulf %491, %483 : vector<2x32xf32>
    %503 = arith.addf %501, %502 : vector<2x32xf32>
    %504 = math.tanh %503 : vector<2x32xf32>
    %cst_235 = arith.constant 1.000000e+00 : f32
    %505 = vector.broadcast %cst_235 : f32 to vector<2x32xf32>
    %506 = arith.subf %505, %499 : vector<2x32xf32>
    %507 = arith.mulf %506, %504 : vector<2x32xf32>
    %508 = arith.mulf %499, %431 : vector<2x32xf32>
    %509 = arith.addf %507, %508 : vector<2x32xf32>
    %c0_236 = arith.constant 0 : index
    %c0_237 = arith.constant 0 : index
    %c0_238 = arith.constant 0 : index
    %510 = vector.load %arg4[%c0_236, %c0_237, %c0_238] : memref<3x32x32xf32, #tpu.memory_space<vmem>>, vector<1x32x32xf32>
    %511 = vector.shape_cast %510 : vector<1x32x32xf32> to vector<32x32xf32>
    %cst_239 = arith.constant dense<0.000000e+00> : vector<2x32xf32>
    %512 = tpu.matmul %470, %511, %cst_239 {dimension_numbers = #tpu.dot_dimension_numbers<[1], [0], [0], [1], [0, 0, 1, 1], [], []>} : vector<2x32xf32>, vector<32x32xf32>, vector<2x32xf32> -> vector<2x32xf32>
    %c1_240 = arith.constant 1 : index
    %c0_241 = arith.constant 0 : index
    %c0_242 = arith.constant 0 : index
    %513 = vector.load %arg4[%c1_240, %c0_241, %c0_242] : memref<3x32x32xf32, #tpu.memory_space<vmem>>, vector<1x32x32xf32>
    %514 = vector.shape_cast %513 : vector<1x32x32xf32> to vector<32x32xf32>
    %cst_243 = arith.constant dense<0.000000e+00> : vector<2x32xf32>
    %515 = tpu.matmul %470, %514, %cst_243 {dimension_numbers = #tpu.dot_dimension_numbers<[1], [0], [0], [1], [0, 0, 1, 1], [], []>} : vector<2x32xf32>, vector<32x32xf32>, vector<2x32xf32> -> vector<2x32xf32>
    %c2_244 = arith.constant 2 : index
    %c0_245 = arith.constant 0 : index
    %c0_246 = arith.constant 0 : index
    %516 = vector.load %arg4[%c2_244, %c0_245, %c0_246] : memref<3x32x32xf32, #tpu.memory_space<vmem>>, vector<1x32x32xf32>
    %517 = vector.shape_cast %516 : vector<1x32x32xf32> to vector<32x32xf32>
    %cst_247 = arith.constant dense<0.000000e+00> : vector<2x32xf32>
    %518 = tpu.matmul %470, %517, %cst_247 {dimension_numbers = #tpu.dot_dimension_numbers<[1], [0], [0], [1], [0, 0, 1, 1], [], []>} : vector<2x32xf32>, vector<32x32xf32>, vector<2x32xf32> -> vector<2x32xf32>
    %c2_248 = arith.constant 2 : index
    %c0_249 = arith.constant 0 : index
    %c0_250 = arith.constant 0 : index
    %519 = vector.load %arg6[%c2_248, %c0_249, %c0_250] : memref<3x1x32xf32, #tpu.memory_space<vmem>>, vector<1x1x32xf32>
    %520 = vector.shape_cast %519 : vector<1x1x32xf32> to vector<1x32xf32>
    %521 = vector.broadcast %520 : vector<1x32xf32> to vector<2x32xf32>
    %522 = arith.addf %518, %521 : vector<2x32xf32>
    %523 = vector.extract_strided_slice %95 {offsets = [5, 0, 0], sizes = [1, 2, 32], strides = [1, 1, 1]} : vector<8x2x32xf32> to vector<1x2x32xf32>
    %524 = vector.shape_cast %523 : vector<1x2x32xf32> to vector<2x32xf32>
    %525 = arith.addf %524, %512 : vector<2x32xf32>
    %526 = arith.negf %525 : vector<2x32xf32>
    %527 = math.exp %526 : vector<2x32xf32>
    %cst_251 = arith.constant 1.000000e+00 : f32
    %528 = vector.broadcast %cst_251 : f32 to vector<2x32xf32>
    %529 = arith.addf %528, %527 : vector<2x32xf32>
    %530 = arith.divf %528, %529 : vector<2x32xf32>
    %531 = vector.extract_strided_slice %107 {offsets = [5, 0, 0], sizes = [1, 2, 32], strides = [1, 1, 1]} : vector<8x2x32xf32> to vector<1x2x32xf32>
    %532 = vector.shape_cast %531 : vector<1x2x32xf32> to vector<2x32xf32>
    %533 = arith.addf %532, %515 : vector<2x32xf32>
    %534 = arith.negf %533 : vector<2x32xf32>
    %535 = math.exp %534 : vector<2x32xf32>
    %cst_252 = arith.constant 1.000000e+00 : f32
    %536 = vector.broadcast %cst_252 : f32 to vector<2x32xf32>
    %537 = arith.addf %536, %535 : vector<2x32xf32>
    %538 = arith.divf %536, %537 : vector<2x32xf32>
    %539 = vector.extract_strided_slice %115 {offsets = [5, 0, 0], sizes = [1, 2, 32], strides = [1, 1, 1]} : vector<8x2x32xf32> to vector<1x2x32xf32>
    %540 = vector.shape_cast %539 : vector<1x2x32xf32> to vector<2x32xf32>
    %541 = arith.mulf %530, %522 : vector<2x32xf32>
    %542 = arith.addf %540, %541 : vector<2x32xf32>
    %543 = math.tanh %542 : vector<2x32xf32>
    %cst_253 = arith.constant 1.000000e+00 : f32
    %544 = vector.broadcast %cst_253 : f32 to vector<2x32xf32>
    %545 = arith.subf %544, %538 : vector<2x32xf32>
    %546 = arith.mulf %545, %543 : vector<2x32xf32>
    %547 = arith.mulf %538, %470 : vector<2x32xf32>
    %548 = arith.addf %546, %547 : vector<2x32xf32>
    %c0_254 = arith.constant 0 : index
    %c0_255 = arith.constant 0 : index
    %c0_256 = arith.constant 0 : index
    %549 = vector.load %arg8[%c0_254, %c0_255, %c0_256] : memref<3x32x32xf32, #tpu.memory_space<vmem>>, vector<1x32x32xf32>
    %550 = vector.shape_cast %549 : vector<1x32x32xf32> to vector<32x32xf32>
    %cst_257 = arith.constant dense<0.000000e+00> : vector<2x32xf32>
    %551 = tpu.matmul %509, %550, %cst_257 {dimension_numbers = #tpu.dot_dimension_numbers<[1], [0], [0], [1], [0, 0, 1, 1], [], []>} : vector<2x32xf32>, vector<32x32xf32>, vector<2x32xf32> -> vector<2x32xf32>
    %c1_258 = arith.constant 1 : index
    %c0_259 = arith.constant 0 : index
    %c0_260 = arith.constant 0 : index
    %552 = vector.load %arg8[%c1_258, %c0_259, %c0_260] : memref<3x32x32xf32, #tpu.memory_space<vmem>>, vector<1x32x32xf32>
    %553 = vector.shape_cast %552 : vector<1x32x32xf32> to vector<32x32xf32>
    %cst_261 = arith.constant dense<0.000000e+00> : vector<2x32xf32>
    %554 = tpu.matmul %509, %553, %cst_261 {dimension_numbers = #tpu.dot_dimension_numbers<[1], [0], [0], [1], [0, 0, 1, 1], [], []>} : vector<2x32xf32>, vector<32x32xf32>, vector<2x32xf32> -> vector<2x32xf32>
    %c2_262 = arith.constant 2 : index
    %c0_263 = arith.constant 0 : index
    %c0_264 = arith.constant 0 : index
    %555 = vector.load %arg8[%c2_262, %c0_263, %c0_264] : memref<3x32x32xf32, #tpu.memory_space<vmem>>, vector<1x32x32xf32>
    %556 = vector.shape_cast %555 : vector<1x32x32xf32> to vector<32x32xf32>
    %cst_265 = arith.constant dense<0.000000e+00> : vector<2x32xf32>
    %557 = tpu.matmul %509, %556, %cst_265 {dimension_numbers = #tpu.dot_dimension_numbers<[1], [0], [0], [1], [0, 0, 1, 1], [], []>} : vector<2x32xf32>, vector<32x32xf32>, vector<2x32xf32> -> vector<2x32xf32>
    %c2_266 = arith.constant 2 : index
    %c0_267 = arith.constant 0 : index
    %c0_268 = arith.constant 0 : index
    %558 = vector.load %arg10[%c2_266, %c0_267, %c0_268] : memref<3x1x32xf32, #tpu.memory_space<vmem>>, vector<1x1x32xf32>
    %559 = vector.shape_cast %558 : vector<1x1x32xf32> to vector<1x32xf32>
    %560 = vector.broadcast %559 : vector<1x32xf32> to vector<2x32xf32>
    %561 = arith.addf %557, %560 : vector<2x32xf32>
    %562 = vector.extract_strided_slice %127 {offsets = [2, 0, 0], sizes = [1, 2, 32], strides = [1, 1, 1]} : vector<8x2x32xf32> to vector<1x2x32xf32>
    %563 = vector.shape_cast %562 : vector<1x2x32xf32> to vector<2x32xf32>
    %564 = arith.addf %563, %551 : vector<2x32xf32>
    %565 = arith.negf %564 : vector<2x32xf32>
    %566 = math.exp %565 : vector<2x32xf32>
    %cst_269 = arith.constant 1.000000e+00 : f32
    %567 = vector.broadcast %cst_269 : f32 to vector<2x32xf32>
    %568 = arith.addf %567, %566 : vector<2x32xf32>
    %569 = arith.divf %567, %568 : vector<2x32xf32>
    %570 = vector.extract_strided_slice %139 {offsets = [2, 0, 0], sizes = [1, 2, 32], strides = [1, 1, 1]} : vector<8x2x32xf32> to vector<1x2x32xf32>
    %571 = vector.shape_cast %570 : vector<1x2x32xf32> to vector<2x32xf32>
    %572 = arith.addf %571, %554 : vector<2x32xf32>
    %573 = arith.negf %572 : vector<2x32xf32>
    %574 = math.exp %573 : vector<2x32xf32>
    %cst_270 = arith.constant 1.000000e+00 : f32
    %575 = vector.broadcast %cst_270 : f32 to vector<2x32xf32>
    %576 = arith.addf %575, %574 : vector<2x32xf32>
    %577 = arith.divf %575, %576 : vector<2x32xf32>
    %578 = vector.extract_strided_slice %147 {offsets = [2, 0, 0], sizes = [1, 2, 32], strides = [1, 1, 1]} : vector<8x2x32xf32> to vector<1x2x32xf32>
    %579 = vector.shape_cast %578 : vector<1x2x32xf32> to vector<2x32xf32>
    %580 = arith.mulf %569, %561 : vector<2x32xf32>
    %581 = arith.addf %579, %580 : vector<2x32xf32>
    %582 = math.tanh %581 : vector<2x32xf32>
    %cst_271 = arith.constant 1.000000e+00 : f32
    %583 = vector.broadcast %cst_271 : f32 to vector<2x32xf32>
    %584 = arith.subf %583, %577 : vector<2x32xf32>
    %585 = arith.mulf %584, %582 : vector<2x32xf32>
    %586 = arith.mulf %577, %509 : vector<2x32xf32>
    %587 = arith.addf %585, %586 : vector<2x32xf32>
    %c0_272 = arith.constant 0 : index
    %c0_273 = arith.constant 0 : index
    %c0_274 = arith.constant 0 : index
    %588 = vector.load %arg4[%c0_272, %c0_273, %c0_274] : memref<3x32x32xf32, #tpu.memory_space<vmem>>, vector<1x32x32xf32>
    %589 = vector.shape_cast %588 : vector<1x32x32xf32> to vector<32x32xf32>
    %cst_275 = arith.constant dense<0.000000e+00> : vector<2x32xf32>
    %590 = tpu.matmul %548, %589, %cst_275 {dimension_numbers = #tpu.dot_dimension_numbers<[1], [0], [0], [1], [0, 0, 1, 1], [], []>} : vector<2x32xf32>, vector<32x32xf32>, vector<2x32xf32> -> vector<2x32xf32>
    %c1_276 = arith.constant 1 : index
    %c0_277 = arith.constant 0 : index
    %c0_278 = arith.constant 0 : index
    %591 = vector.load %arg4[%c1_276, %c0_277, %c0_278] : memref<3x32x32xf32, #tpu.memory_space<vmem>>, vector<1x32x32xf32>
    %592 = vector.shape_cast %591 : vector<1x32x32xf32> to vector<32x32xf32>
    %cst_279 = arith.constant dense<0.000000e+00> : vector<2x32xf32>
    %593 = tpu.matmul %548, %592, %cst_279 {dimension_numbers = #tpu.dot_dimension_numbers<[1], [0], [0], [1], [0, 0, 1, 1], [], []>} : vector<2x32xf32>, vector<32x32xf32>, vector<2x32xf32> -> vector<2x32xf32>
    %c2_280 = arith.constant 2 : index
    %c0_281 = arith.constant 0 : index
    %c0_282 = arith.constant 0 : index
    %594 = vector.load %arg4[%c2_280, %c0_281, %c0_282] : memref<3x32x32xf32, #tpu.memory_space<vmem>>, vector<1x32x32xf32>
    %595 = vector.shape_cast %594 : vector<1x32x32xf32> to vector<32x32xf32>
    %cst_283 = arith.constant dense<0.000000e+00> : vector<2x32xf32>
    %596 = tpu.matmul %548, %595, %cst_283 {dimension_numbers = #tpu.dot_dimension_numbers<[1], [0], [0], [1], [0, 0, 1, 1], [], []>} : vector<2x32xf32>, vector<32x32xf32>, vector<2x32xf32> -> vector<2x32xf32>
    %c2_284 = arith.constant 2 : index
    %c0_285 = arith.constant 0 : index
    %c0_286 = arith.constant 0 : index
    %597 = vector.load %arg6[%c2_284, %c0_285, %c0_286] : memref<3x1x32xf32, #tpu.memory_space<vmem>>, vector<1x1x32xf32>
    %598 = vector.shape_cast %597 : vector<1x1x32xf32> to vector<1x32xf32>
    %599 = vector.broadcast %598 : vector<1x32xf32> to vector<2x32xf32>
    %600 = arith.addf %596, %599 : vector<2x32xf32>
    %601 = vector.extract_strided_slice %95 {offsets = [6, 0, 0], sizes = [1, 2, 32], strides = [1, 1, 1]} : vector<8x2x32xf32> to vector<1x2x32xf32>
    %602 = vector.shape_cast %601 : vector<1x2x32xf32> to vector<2x32xf32>
    %603 = arith.addf %602, %590 : vector<2x32xf32>
    %604 = arith.negf %603 : vector<2x32xf32>
    %605 = math.exp %604 : vector<2x32xf32>
    %cst_287 = arith.constant 1.000000e+00 : f32
    %606 = vector.broadcast %cst_287 : f32 to vector<2x32xf32>
    %607 = arith.addf %606, %605 : vector<2x32xf32>
    %608 = arith.divf %606, %607 : vector<2x32xf32>
    %609 = vector.extract_strided_slice %107 {offsets = [6, 0, 0], sizes = [1, 2, 32], strides = [1, 1, 1]} : vector<8x2x32xf32> to vector<1x2x32xf32>
    %610 = vector.shape_cast %609 : vector<1x2x32xf32> to vector<2x32xf32>
    %611 = arith.addf %610, %593 : vector<2x32xf32>
    %612 = arith.negf %611 : vector<2x32xf32>
    %613 = math.exp %612 : vector<2x32xf32>
    %cst_288 = arith.constant 1.000000e+00 : f32
    %614 = vector.broadcast %cst_288 : f32 to vector<2x32xf32>
    %615 = arith.addf %614, %613 : vector<2x32xf32>
    %616 = arith.divf %614, %615 : vector<2x32xf32>
    %617 = vector.extract_strided_slice %115 {offsets = [6, 0, 0], sizes = [1, 2, 32], strides = [1, 1, 1]} : vector<8x2x32xf32> to vector<1x2x32xf32>
    %618 = vector.shape_cast %617 : vector<1x2x32xf32> to vector<2x32xf32>
    %619 = arith.mulf %608, %600 : vector<2x32xf32>
    %620 = arith.addf %618, %619 : vector<2x32xf32>
    %621 = math.tanh %620 : vector<2x32xf32>
    %cst_289 = arith.constant 1.000000e+00 : f32
    %622 = vector.broadcast %cst_289 : f32 to vector<2x32xf32>
    %623 = arith.subf %622, %616 : vector<2x32xf32>
    %624 = arith.mulf %623, %621 : vector<2x32xf32>
    %625 = arith.mulf %616, %548 : vector<2x32xf32>
    %626 = arith.addf %624, %625 : vector<2x32xf32>
    %c0_290 = arith.constant 0 : index
    %c0_291 = arith.constant 0 : index
    %c0_292 = arith.constant 0 : index
    %627 = vector.load %arg8[%c0_290, %c0_291, %c0_292] : memref<3x32x32xf32, #tpu.memory_space<vmem>>, vector<1x32x32xf32>
    %628 = vector.shape_cast %627 : vector<1x32x32xf32> to vector<32x32xf32>
    %cst_293 = arith.constant dense<0.000000e+00> : vector<2x32xf32>
    %629 = tpu.matmul %587, %628, %cst_293 {dimension_numbers = #tpu.dot_dimension_numbers<[1], [0], [0], [1], [0, 0, 1, 1], [], []>} : vector<2x32xf32>, vector<32x32xf32>, vector<2x32xf32> -> vector<2x32xf32>
    %c1_294 = arith.constant 1 : index
    %c0_295 = arith.constant 0 : index
    %c0_296 = arith.constant 0 : index
    %630 = vector.load %arg8[%c1_294, %c0_295, %c0_296] : memref<3x32x32xf32, #tpu.memory_space<vmem>>, vector<1x32x32xf32>
    %631 = vector.shape_cast %630 : vector<1x32x32xf32> to vector<32x32xf32>
    %cst_297 = arith.constant dense<0.000000e+00> : vector<2x32xf32>
    %632 = tpu.matmul %587, %631, %cst_297 {dimension_numbers = #tpu.dot_dimension_numbers<[1], [0], [0], [1], [0, 0, 1, 1], [], []>} : vector<2x32xf32>, vector<32x32xf32>, vector<2x32xf32> -> vector<2x32xf32>
    %c2_298 = arith.constant 2 : index
    %c0_299 = arith.constant 0 : index
    %c0_300 = arith.constant 0 : index
    %633 = vector.load %arg8[%c2_298, %c0_299, %c0_300] : memref<3x32x32xf32, #tpu.memory_space<vmem>>, vector<1x32x32xf32>
    %634 = vector.shape_cast %633 : vector<1x32x32xf32> to vector<32x32xf32>
    %cst_301 = arith.constant dense<0.000000e+00> : vector<2x32xf32>
    %635 = tpu.matmul %587, %634, %cst_301 {dimension_numbers = #tpu.dot_dimension_numbers<[1], [0], [0], [1], [0, 0, 1, 1], [], []>} : vector<2x32xf32>, vector<32x32xf32>, vector<2x32xf32> -> vector<2x32xf32>
    %c2_302 = arith.constant 2 : index
    %c0_303 = arith.constant 0 : index
    %c0_304 = arith.constant 0 : index
    %636 = vector.load %arg10[%c2_302, %c0_303, %c0_304] : memref<3x1x32xf32, #tpu.memory_space<vmem>>, vector<1x1x32xf32>
    %637 = vector.shape_cast %636 : vector<1x1x32xf32> to vector<1x32xf32>
    %638 = vector.broadcast %637 : vector<1x32xf32> to vector<2x32xf32>
    %639 = arith.addf %635, %638 : vector<2x32xf32>
    %640 = vector.extract_strided_slice %127 {offsets = [1, 0, 0], sizes = [1, 2, 32], strides = [1, 1, 1]} : vector<8x2x32xf32> to vector<1x2x32xf32>
    %641 = vector.shape_cast %640 : vector<1x2x32xf32> to vector<2x32xf32>
    %642 = arith.addf %641, %629 : vector<2x32xf32>
    %643 = arith.negf %642 : vector<2x32xf32>
    %644 = math.exp %643 : vector<2x32xf32>
    %cst_305 = arith.constant 1.000000e+00 : f32
    %645 = vector.broadcast %cst_305 : f32 to vector<2x32xf32>
    %646 = arith.addf %645, %644 : vector<2x32xf32>
    %647 = arith.divf %645, %646 : vector<2x32xf32>
    %648 = vector.extract_strided_slice %139 {offsets = [1, 0, 0], sizes = [1, 2, 32], strides = [1, 1, 1]} : vector<8x2x32xf32> to vector<1x2x32xf32>
    %649 = vector.shape_cast %648 : vector<1x2x32xf32> to vector<2x32xf32>
    %650 = arith.addf %649, %632 : vector<2x32xf32>
    %651 = arith.negf %650 : vector<2x32xf32>
    %652 = math.exp %651 : vector<2x32xf32>
    %cst_306 = arith.constant 1.000000e+00 : f32
    %653 = vector.broadcast %cst_306 : f32 to vector<2x32xf32>
    %654 = arith.addf %653, %652 : vector<2x32xf32>
    %655 = arith.divf %653, %654 : vector<2x32xf32>
    %656 = vector.extract_strided_slice %147 {offsets = [1, 0, 0], sizes = [1, 2, 32], strides = [1, 1, 1]} : vector<8x2x32xf32> to vector<1x2x32xf32>
    %657 = vector.shape_cast %656 : vector<1x2x32xf32> to vector<2x32xf32>
    %658 = arith.mulf %647, %639 : vector<2x32xf32>
    %659 = arith.addf %657, %658 : vector<2x32xf32>
    %660 = math.tanh %659 : vector<2x32xf32>
    %cst_307 = arith.constant 1.000000e+00 : f32
    %661 = vector.broadcast %cst_307 : f32 to vector<2x32xf32>
    %662 = arith.subf %661, %655 : vector<2x32xf32>
    %663 = arith.mulf %662, %660 : vector<2x32xf32>
    %664 = arith.mulf %655, %587 : vector<2x32xf32>
    %665 = arith.addf %663, %664 : vector<2x32xf32>
    %c0_308 = arith.constant 0 : index
    %c0_309 = arith.constant 0 : index
    %c0_310 = arith.constant 0 : index
    %666 = vector.load %arg4[%c0_308, %c0_309, %c0_310] : memref<3x32x32xf32, #tpu.memory_space<vmem>>, vector<1x32x32xf32>
    %667 = vector.shape_cast %666 : vector<1x32x32xf32> to vector<32x32xf32>
    %cst_311 = arith.constant dense<0.000000e+00> : vector<2x32xf32>
    %668 = tpu.matmul %626, %667, %cst_311 {dimension_numbers = #tpu.dot_dimension_numbers<[1], [0], [0], [1], [0, 0, 1, 1], [], []>} : vector<2x32xf32>, vector<32x32xf32>, vector<2x32xf32> -> vector<2x32xf32>
    %c1_312 = arith.constant 1 : index
    %c0_313 = arith.constant 0 : index
    %c0_314 = arith.constant 0 : index
    %669 = vector.load %arg4[%c1_312, %c0_313, %c0_314] : memref<3x32x32xf32, #tpu.memory_space<vmem>>, vector<1x32x32xf32>
    %670 = vector.shape_cast %669 : vector<1x32x32xf32> to vector<32x32xf32>
    %cst_315 = arith.constant dense<0.000000e+00> : vector<2x32xf32>
    %671 = tpu.matmul %626, %670, %cst_315 {dimension_numbers = #tpu.dot_dimension_numbers<[1], [0], [0], [1], [0, 0, 1, 1], [], []>} : vector<2x32xf32>, vector<32x32xf32>, vector<2x32xf32> -> vector<2x32xf32>
    %c2_316 = arith.constant 2 : index
    %c0_317 = arith.constant 0 : index
    %c0_318 = arith.constant 0 : index
    %672 = vector.load %arg4[%c2_316, %c0_317, %c0_318] : memref<3x32x32xf32, #tpu.memory_space<vmem>>, vector<1x32x32xf32>
    %673 = vector.shape_cast %672 : vector<1x32x32xf32> to vector<32x32xf32>
    %cst_319 = arith.constant dense<0.000000e+00> : vector<2x32xf32>
    %674 = tpu.matmul %626, %673, %cst_319 {dimension_numbers = #tpu.dot_dimension_numbers<[1], [0], [0], [1], [0, 0, 1, 1], [], []>} : vector<2x32xf32>, vector<32x32xf32>, vector<2x32xf32> -> vector<2x32xf32>
    %c2_320 = arith.constant 2 : index
    %c0_321 = arith.constant 0 : index
    %c0_322 = arith.constant 0 : index
    %675 = vector.load %arg6[%c2_320, %c0_321, %c0_322] : memref<3x1x32xf32, #tpu.memory_space<vmem>>, vector<1x1x32xf32>
    %676 = vector.shape_cast %675 : vector<1x1x32xf32> to vector<1x32xf32>
    %677 = vector.broadcast %676 : vector<1x32xf32> to vector<2x32xf32>
    %678 = arith.addf %674, %677 : vector<2x32xf32>
    %679 = vector.extract_strided_slice %95 {offsets = [7, 0, 0], sizes = [1, 2, 32], strides = [1, 1, 1]} : vector<8x2x32xf32> to vector<1x2x32xf32>
    %680 = vector.shape_cast %679 : vector<1x2x32xf32> to vector<2x32xf32>
    %681 = arith.addf %680, %668 : vector<2x32xf32>
    %682 = arith.negf %681 : vector<2x32xf32>
    %683 = math.exp %682 : vector<2x32xf32>
    %cst_323 = arith.constant 1.000000e+00 : f32
    %684 = vector.broadcast %cst_323 : f32 to vector<2x32xf32>
    %685 = arith.addf %684, %683 : vector<2x32xf32>
    %686 = arith.divf %684, %685 : vector<2x32xf32>
    %687 = vector.extract_strided_slice %107 {offsets = [7, 0, 0], sizes = [1, 2, 32], strides = [1, 1, 1]} : vector<8x2x32xf32> to vector<1x2x32xf32>
    %688 = vector.shape_cast %687 : vector<1x2x32xf32> to vector<2x32xf32>
    %689 = arith.addf %688, %671 : vector<2x32xf32>
    %690 = arith.negf %689 : vector<2x32xf32>
    %691 = math.exp %690 : vector<2x32xf32>
    %cst_324 = arith.constant 1.000000e+00 : f32
    %692 = vector.broadcast %cst_324 : f32 to vector<2x32xf32>
    %693 = arith.addf %692, %691 : vector<2x32xf32>
    %694 = arith.divf %692, %693 : vector<2x32xf32>
    %695 = vector.extract_strided_slice %115 {offsets = [7, 0, 0], sizes = [1, 2, 32], strides = [1, 1, 1]} : vector<8x2x32xf32> to vector<1x2x32xf32>
    %696 = vector.shape_cast %695 : vector<1x2x32xf32> to vector<2x32xf32>
    %697 = arith.mulf %686, %678 : vector<2x32xf32>
    %698 = arith.addf %696, %697 : vector<2x32xf32>
    %699 = math.tanh %698 : vector<2x32xf32>
    %cst_325 = arith.constant 1.000000e+00 : f32
    %700 = vector.broadcast %cst_325 : f32 to vector<2x32xf32>
    %701 = arith.subf %700, %694 : vector<2x32xf32>
    %702 = arith.mulf %701, %699 : vector<2x32xf32>
    %703 = arith.mulf %694, %626 : vector<2x32xf32>
    %704 = arith.addf %702, %703 : vector<2x32xf32>
    %c0_326 = arith.constant 0 : index
    %c0_327 = arith.constant 0 : index
    %c0_328 = arith.constant 0 : index
    %705 = vector.load %arg8[%c0_326, %c0_327, %c0_328] : memref<3x32x32xf32, #tpu.memory_space<vmem>>, vector<1x32x32xf32>
    %706 = vector.shape_cast %705 : vector<1x32x32xf32> to vector<32x32xf32>
    %cst_329 = arith.constant dense<0.000000e+00> : vector<2x32xf32>
    %707 = tpu.matmul %665, %706, %cst_329 {dimension_numbers = #tpu.dot_dimension_numbers<[1], [0], [0], [1], [0, 0, 1, 1], [], []>} : vector<2x32xf32>, vector<32x32xf32>, vector<2x32xf32> -> vector<2x32xf32>
    %c1_330 = arith.constant 1 : index
    %c0_331 = arith.constant 0 : index
    %c0_332 = arith.constant 0 : index
    %708 = vector.load %arg8[%c1_330, %c0_331, %c0_332] : memref<3x32x32xf32, #tpu.memory_space<vmem>>, vector<1x32x32xf32>
    %709 = vector.shape_cast %708 : vector<1x32x32xf32> to vector<32x32xf32>
    %cst_333 = arith.constant dense<0.000000e+00> : vector<2x32xf32>
    %710 = tpu.matmul %665, %709, %cst_333 {dimension_numbers = #tpu.dot_dimension_numbers<[1], [0], [0], [1], [0, 0, 1, 1], [], []>} : vector<2x32xf32>, vector<32x32xf32>, vector<2x32xf32> -> vector<2x32xf32>
    %c2_334 = arith.constant 2 : index
    %c0_335 = arith.constant 0 : index
    %c0_336 = arith.constant 0 : index
    %711 = vector.load %arg8[%c2_334, %c0_335, %c0_336] : memref<3x32x32xf32, #tpu.memory_space<vmem>>, vector<1x32x32xf32>
    %712 = vector.shape_cast %711 : vector<1x32x32xf32> to vector<32x32xf32>
    %cst_337 = arith.constant dense<0.000000e+00> : vector<2x32xf32>
    %713 = tpu.matmul %665, %712, %cst_337 {dimension_numbers = #tpu.dot_dimension_numbers<[1], [0], [0], [1], [0, 0, 1, 1], [], []>} : vector<2x32xf32>, vector<32x32xf32>, vector<2x32xf32> -> vector<2x32xf32>
    %c2_338 = arith.constant 2 : index
    %c0_339 = arith.constant 0 : index
    %c0_340 = arith.constant 0 : index
    %714 = vector.load %arg10[%c2_338, %c0_339, %c0_340] : memref<3x1x32xf32, #tpu.memory_space<vmem>>, vector<1x1x32xf32>
    %715 = vector.shape_cast %714 : vector<1x1x32xf32> to vector<1x32xf32>
    %716 = vector.broadcast %715 : vector<1x32xf32> to vector<2x32xf32>
    %717 = arith.addf %713, %716 : vector<2x32xf32>
    %718 = vector.extract_strided_slice %127 {offsets = [0, 0, 0], sizes = [1, 2, 32], strides = [1, 1, 1]} : vector<8x2x32xf32> to vector<1x2x32xf32>
    %719 = vector.shape_cast %718 : vector<1x2x32xf32> to vector<2x32xf32>
    %720 = arith.addf %719, %707 : vector<2x32xf32>
    %721 = arith.negf %720 : vector<2x32xf32>
    %722 = math.exp %721 : vector<2x32xf32>
    %cst_341 = arith.constant 1.000000e+00 : f32
    %723 = vector.broadcast %cst_341 : f32 to vector<2x32xf32>
    %724 = arith.addf %723, %722 : vector<2x32xf32>
    %725 = arith.divf %723, %724 : vector<2x32xf32>
    %726 = vector.extract_strided_slice %139 {offsets = [0, 0, 0], sizes = [1, 2, 32], strides = [1, 1, 1]} : vector<8x2x32xf32> to vector<1x2x32xf32>
    %727 = vector.shape_cast %726 : vector<1x2x32xf32> to vector<2x32xf32>
    %728 = arith.addf %727, %710 : vector<2x32xf32>
    %729 = arith.negf %728 : vector<2x32xf32>
    %730 = math.exp %729 : vector<2x32xf32>
    %cst_342 = arith.constant 1.000000e+00 : f32
    %731 = vector.broadcast %cst_342 : f32 to vector<2x32xf32>
    %732 = arith.addf %731, %730 : vector<2x32xf32>
    %733 = arith.divf %731, %732 : vector<2x32xf32>
    %734 = vector.extract_strided_slice %147 {offsets = [0, 0, 0], sizes = [1, 2, 32], strides = [1, 1, 1]} : vector<8x2x32xf32> to vector<1x2x32xf32>
    %735 = vector.shape_cast %734 : vector<1x2x32xf32> to vector<2x32xf32>
    %736 = arith.mulf %725, %717 : vector<2x32xf32>
    %737 = arith.addf %735, %736 : vector<2x32xf32>
    %738 = math.tanh %737 : vector<2x32xf32>
    %cst_343 = arith.constant 1.000000e+00 : f32
    %739 = vector.broadcast %cst_343 : f32 to vector<2x32xf32>
    %740 = arith.subf %739, %733 : vector<2x32xf32>
    %741 = arith.mulf %740, %738 : vector<2x32xf32>
    %742 = arith.mulf %733, %665 : vector<2x32xf32>
    %743 = arith.addf %741, %742 : vector<2x32xf32>
    %744 = tpu.concatenate %172, %743 in 1 : vector<2x32xf32>, vector<2x32xf32> -> vector<2x64xf32>
    %745 = tpu.concatenate %236, %665 in 1 : vector<2x32xf32>, vector<2x32xf32> -> vector<2x64xf32>
    %746 = tpu.concatenate %314, %587 in 1 : vector<2x32xf32>, vector<2x32xf32> -> vector<2x64xf32>
    %747 = tpu.concatenate %392, %509 in 1 : vector<2x32xf32>, vector<2x32xf32> -> vector<2x64xf32>
    %748 = tpu.concatenate %470, %431 in 1 : vector<2x32xf32>, vector<2x32xf32> -> vector<2x64xf32>
    %749 = tpu.concatenate %548, %353 in 1 : vector<2x32xf32>, vector<2x32xf32> -> vector<2x64xf32>
    %750 = tpu.concatenate %626, %275 in 1 : vector<2x32xf32>, vector<2x32xf32> -> vector<2x64xf32>
    %751 = tpu.concatenate %704, %197 in 1 : vector<2x32xf32>, vector<2x32xf32> -> vector<2x64xf32>
    %752 = tpu.concatenate %744, %745, %746, %747, %748, %749, %750, %751 in 0 : vector<2x64xf32>, vector<2x64xf32>, vector<2x64xf32>, vector<2x64xf32>, vector<2x64xf32>, vector<2x64xf32>, vector<2x64xf32>, vector<2x64xf32> -> vector<16x64xf32>
    %c0_344 = arith.constant 0 : index
    %c0_345 = arith.constant 0 : index
    %c0_346 = arith.constant 0 : index
    %753 = vector.load %arg11[%c0_344, %c0_345, %c0_346] : memref<3x64x32xf32, #tpu.memory_space<vmem>>, vector<1x64x32xf32>
    %754 = vector.shape_cast %753 : vector<1x64x32xf32> to vector<64x32xf32>
    %cst_347 = arith.constant dense<0.000000e+00> : vector<16x32xf32>
    %755 = tpu.matmul %752, %754, %cst_347 {dimension_numbers = #tpu.dot_dimension_numbers<[1], [0], [0], [1], [0, 0, 1, 1], [], []>} : vector<16x64xf32>, vector<64x32xf32>, vector<16x32xf32> -> vector<16x32xf32>
    %c0_348 = arith.constant 0 : index
    %c0_349 = arith.constant 0 : index
    %c0_350 = arith.constant 0 : index
    %756 = vector.load %arg13[%c0_348, %c0_349, %c0_350] : memref<3x1x32xf32, #tpu.memory_space<vmem>>, vector<1x1x32xf32>
    %757 = vector.shape_cast %756 : vector<1x1x32xf32> to vector<1x32xf32>
    %758 = vector.broadcast %757 : vector<1x32xf32> to vector<16x32xf32>
    %759 = arith.addf %755, %758 : vector<16x32xf32>
    %c0_351 = arith.constant 0 : index
    %c0_352 = arith.constant 0 : index
    %c0_353 = arith.constant 0 : index
    %760 = vector.load %arg14[%c0_351, %c0_352, %c0_353] : memref<3x1x32xf32, #tpu.memory_space<vmem>>, vector<1x1x32xf32>
    %761 = vector.shape_cast %760 : vector<1x1x32xf32> to vector<1x32xf32>
    %762 = vector.broadcast %761 : vector<1x32xf32> to vector<16x32xf32>
    %763 = arith.addf %759, %762 : vector<16x32xf32>
    %764 = vector.shape_cast %763 : vector<16x32xf32> to vector<8x2x32xf32>
    %c1_354 = arith.constant 1 : index
    %c0_355 = arith.constant 0 : index
    %c0_356 = arith.constant 0 : index
    %765 = vector.load %arg11[%c1_354, %c0_355, %c0_356] : memref<3x64x32xf32, #tpu.memory_space<vmem>>, vector<1x64x32xf32>
    %766 = vector.shape_cast %765 : vector<1x64x32xf32> to vector<64x32xf32>
    %cst_357 = arith.constant dense<0.000000e+00> : vector<16x32xf32>
    %767 = tpu.matmul %752, %766, %cst_357 {dimension_numbers = #tpu.dot_dimension_numbers<[1], [0], [0], [1], [0, 0, 1, 1], [], []>} : vector<16x64xf32>, vector<64x32xf32>, vector<16x32xf32> -> vector<16x32xf32>
    %c1_358 = arith.constant 1 : index
    %c0_359 = arith.constant 0 : index
    %c0_360 = arith.constant 0 : index
    %768 = vector.load %arg13[%c1_358, %c0_359, %c0_360] : memref<3x1x32xf32, #tpu.memory_space<vmem>>, vector<1x1x32xf32>
    %769 = vector.shape_cast %768 : vector<1x1x32xf32> to vector<1x32xf32>
    %770 = vector.broadcast %769 : vector<1x32xf32> to vector<16x32xf32>
    %771 = arith.addf %767, %770 : vector<16x32xf32>
    %c1_361 = arith.constant 1 : index
    %c0_362 = arith.constant 0 : index
    %c0_363 = arith.constant 0 : index
    %772 = vector.load %arg14[%c1_361, %c0_362, %c0_363] : memref<3x1x32xf32, #tpu.memory_space<vmem>>, vector<1x1x32xf32>
    %773 = vector.shape_cast %772 : vector<1x1x32xf32> to vector<1x32xf32>
    %774 = vector.broadcast %773 : vector<1x32xf32> to vector<16x32xf32>
    %775 = arith.addf %771, %774 : vector<16x32xf32>
    %776 = vector.shape_cast %775 : vector<16x32xf32> to vector<8x2x32xf32>
    %c2_364 = arith.constant 2 : index
    %c0_365 = arith.constant 0 : index
    %c0_366 = arith.constant 0 : index
    %777 = vector.load %arg11[%c2_364, %c0_365, %c0_366] : memref<3x64x32xf32, #tpu.memory_space<vmem>>, vector<1x64x32xf32>
    %778 = vector.shape_cast %777 : vector<1x64x32xf32> to vector<64x32xf32>
    %cst_367 = arith.constant dense<0.000000e+00> : vector<16x32xf32>
    %779 = tpu.matmul %752, %778, %cst_367 {dimension_numbers = #tpu.dot_dimension_numbers<[1], [0], [0], [1], [0, 0, 1, 1], [], []>} : vector<16x64xf32>, vector<64x32xf32>, vector<16x32xf32> -> vector<16x32xf32>
    %c2_368 = arith.constant 2 : index
    %c0_369 = arith.constant 0 : index
    %c0_370 = arith.constant 0 : index
    %780 = vector.load %arg13[%c2_368, %c0_369, %c0_370] : memref<3x1x32xf32, #tpu.memory_space<vmem>>, vector<1x1x32xf32>
    %781 = vector.shape_cast %780 : vector<1x1x32xf32> to vector<1x32xf32>
    %782 = vector.broadcast %781 : vector<1x32xf32> to vector<16x32xf32>
    %783 = arith.addf %779, %782 : vector<16x32xf32>
    %784 = vector.shape_cast %783 : vector<16x32xf32> to vector<8x2x32xf32>
    %785 = vector.extract_strided_slice %764 {offsets = [0, 0, 0], sizes = [1, 2, 32], strides = [1, 1, 1]} : vector<8x2x32xf32> to vector<1x2x32xf32>
    %786 = vector.shape_cast %785 : vector<1x2x32xf32> to vector<2x32xf32>
    %787 = arith.negf %786 : vector<2x32xf32>
    %788 = math.exp %787 : vector<2x32xf32>
    %cst_371 = arith.constant 1.000000e+00 : f32
    %789 = vector.broadcast %cst_371 : f32 to vector<2x32xf32>
    %790 = arith.addf %789, %788 : vector<2x32xf32>
    %791 = arith.divf %789, %790 : vector<2x32xf32>
    %792 = vector.extract_strided_slice %776 {offsets = [0, 0, 0], sizes = [1, 2, 32], strides = [1, 1, 1]} : vector<8x2x32xf32> to vector<1x2x32xf32>
    %793 = vector.shape_cast %792 : vector<1x2x32xf32> to vector<2x32xf32>
    %794 = arith.negf %793 : vector<2x32xf32>
    %795 = math.exp %794 : vector<2x32xf32>
    %cst_372 = arith.constant 1.000000e+00 : f32
    %796 = vector.broadcast %cst_372 : f32 to vector<2x32xf32>
    %797 = arith.addf %796, %795 : vector<2x32xf32>
    %798 = arith.divf %796, %797 : vector<2x32xf32>
    %799 = vector.extract_strided_slice %784 {offsets = [0, 0, 0], sizes = [1, 2, 32], strides = [1, 1, 1]} : vector<8x2x32xf32> to vector<1x2x32xf32>
    %800 = vector.shape_cast %799 : vector<1x2x32xf32> to vector<2x32xf32>
    %c2_373 = arith.constant 2 : index
    %c0_374 = arith.constant 0 : index
    %c0_375 = arith.constant 0 : index
    %801 = vector.load %arg14[%c2_373, %c0_374, %c0_375] : memref<3x1x32xf32, #tpu.memory_space<vmem>>, vector<1x1x32xf32>
    %802 = vector.shape_cast %801 : vector<1x1x32xf32> to vector<1x32xf32>
    %803 = vector.broadcast %802 : vector<1x32xf32> to vector<2x32xf32>
    %804 = arith.mulf %791, %803 : vector<2x32xf32>
    %805 = arith.addf %800, %804 : vector<2x32xf32>
    %806 = math.tanh %805 : vector<2x32xf32>
    %cst_376 = arith.constant 1.000000e+00 : f32
    %807 = vector.broadcast %cst_376 : f32 to vector<2x32xf32>
    %808 = arith.subf %807, %798 : vector<2x32xf32>
    %809 = arith.mulf %808, %806 : vector<2x32xf32>
    %c0_377 = arith.constant 0 : index
    %c0_378 = arith.constant 0 : index
    %c0_379 = arith.constant 0 : index
    %810 = vector.load %arg12[%c0_377, %c0_378, %c0_379] : memref<3x32x32xf32, #tpu.memory_space<vmem>>, vector<1x32x32xf32>
    %811 = vector.shape_cast %810 : vector<1x32x32xf32> to vector<32x32xf32>
    %cst_380 = arith.constant dense<0.000000e+00> : vector<2x32xf32>
    %812 = tpu.matmul %809, %811, %cst_380 {dimension_numbers = #tpu.dot_dimension_numbers<[1], [0], [0], [1], [0, 0, 1, 1], [], []>} : vector<2x32xf32>, vector<32x32xf32>, vector<2x32xf32> -> vector<2x32xf32>
    %c1_381 = arith.constant 1 : index
    %c0_382 = arith.constant 0 : index
    %c0_383 = arith.constant 0 : index
    %813 = vector.load %arg12[%c1_381, %c0_382, %c0_383] : memref<3x32x32xf32, #tpu.memory_space<vmem>>, vector<1x32x32xf32>
    %814 = vector.shape_cast %813 : vector<1x32x32xf32> to vector<32x32xf32>
    %cst_384 = arith.constant dense<0.000000e+00> : vector<2x32xf32>
    %815 = tpu.matmul %809, %814, %cst_384 {dimension_numbers = #tpu.dot_dimension_numbers<[1], [0], [0], [1], [0, 0, 1, 1], [], []>} : vector<2x32xf32>, vector<32x32xf32>, vector<2x32xf32> -> vector<2x32xf32>
    %c2_385 = arith.constant 2 : index
    %c0_386 = arith.constant 0 : index
    %c0_387 = arith.constant 0 : index
    %816 = vector.load %arg12[%c2_385, %c0_386, %c0_387] : memref<3x32x32xf32, #tpu.memory_space<vmem>>, vector<1x32x32xf32>
    %817 = vector.shape_cast %816 : vector<1x32x32xf32> to vector<32x32xf32>
    %cst_388 = arith.constant dense<0.000000e+00> : vector<2x32xf32>
    %818 = tpu.matmul %809, %817, %cst_388 {dimension_numbers = #tpu.dot_dimension_numbers<[1], [0], [0], [1], [0, 0, 1, 1], [], []>} : vector<2x32xf32>, vector<32x32xf32>, vector<2x32xf32> -> vector<2x32xf32>
    %c2_389 = arith.constant 2 : index
    %c0_390 = arith.constant 0 : index
    %c0_391 = arith.constant 0 : index
    %819 = vector.load %arg14[%c2_389, %c0_390, %c0_391] : memref<3x1x32xf32, #tpu.memory_space<vmem>>, vector<1x1x32xf32>
    %820 = vector.shape_cast %819 : vector<1x1x32xf32> to vector<1x32xf32>
    %821 = vector.broadcast %820 : vector<1x32xf32> to vector<2x32xf32>
    %822 = arith.addf %818, %821 : vector<2x32xf32>
    %823 = vector.extract_strided_slice %764 {offsets = [1, 0, 0], sizes = [1, 2, 32], strides = [1, 1, 1]} : vector<8x2x32xf32> to vector<1x2x32xf32>
    %824 = vector.shape_cast %823 : vector<1x2x32xf32> to vector<2x32xf32>
    %825 = arith.addf %824, %812 : vector<2x32xf32>
    %826 = arith.negf %825 : vector<2x32xf32>
    %827 = math.exp %826 : vector<2x32xf32>
    %cst_392 = arith.constant 1.000000e+00 : f32
    %828 = vector.broadcast %cst_392 : f32 to vector<2x32xf32>
    %829 = arith.addf %828, %827 : vector<2x32xf32>
    %830 = arith.divf %828, %829 : vector<2x32xf32>
    %831 = vector.extract_strided_slice %776 {offsets = [1, 0, 0], sizes = [1, 2, 32], strides = [1, 1, 1]} : vector<8x2x32xf32> to vector<1x2x32xf32>
    %832 = vector.shape_cast %831 : vector<1x2x32xf32> to vector<2x32xf32>
    %833 = arith.addf %832, %815 : vector<2x32xf32>
    %834 = arith.negf %833 : vector<2x32xf32>
    %835 = math.exp %834 : vector<2x32xf32>
    %cst_393 = arith.constant 1.000000e+00 : f32
    %836 = vector.broadcast %cst_393 : f32 to vector<2x32xf32>
    %837 = arith.addf %836, %835 : vector<2x32xf32>
    %838 = arith.divf %836, %837 : vector<2x32xf32>
    %839 = vector.extract_strided_slice %784 {offsets = [1, 0, 0], sizes = [1, 2, 32], strides = [1, 1, 1]} : vector<8x2x32xf32> to vector<1x2x32xf32>
    %840 = vector.shape_cast %839 : vector<1x2x32xf32> to vector<2x32xf32>
    %841 = arith.mulf %830, %822 : vector<2x32xf32>
    %842 = arith.addf %840, %841 : vector<2x32xf32>
    %843 = math.tanh %842 : vector<2x32xf32>
    %cst_394 = arith.constant 1.000000e+00 : f32
    %844 = vector.broadcast %cst_394 : f32 to vector<2x32xf32>
    %845 = arith.subf %844, %838 : vector<2x32xf32>
    %846 = arith.mulf %845, %843 : vector<2x32xf32>
    %847 = arith.mulf %838, %809 : vector<2x32xf32>
    %848 = arith.addf %846, %847 : vector<2x32xf32>
    %c0_395 = arith.constant 0 : index
    %c0_396 = arith.constant 0 : index
    %c0_397 = arith.constant 0 : index
    %849 = vector.load %arg12[%c0_395, %c0_396, %c0_397] : memref<3x32x32xf32, #tpu.memory_space<vmem>>, vector<1x32x32xf32>
    %850 = vector.shape_cast %849 : vector<1x32x32xf32> to vector<32x32xf32>
    %cst_398 = arith.constant dense<0.000000e+00> : vector<2x32xf32>
    %851 = tpu.matmul %848, %850, %cst_398 {dimension_numbers = #tpu.dot_dimension_numbers<[1], [0], [0], [1], [0, 0, 1, 1], [], []>} : vector<2x32xf32>, vector<32x32xf32>, vector<2x32xf32> -> vector<2x32xf32>
    %c1_399 = arith.constant 1 : index
    %c0_400 = arith.constant 0 : index
    %c0_401 = arith.constant 0 : index
    %852 = vector.load %arg12[%c1_399, %c0_400, %c0_401] : memref<3x32x32xf32, #tpu.memory_space<vmem>>, vector<1x32x32xf32>
    %853 = vector.shape_cast %852 : vector<1x32x32xf32> to vector<32x32xf32>
    %cst_402 = arith.constant dense<0.000000e+00> : vector<2x32xf32>
    %854 = tpu.matmul %848, %853, %cst_402 {dimension_numbers = #tpu.dot_dimension_numbers<[1], [0], [0], [1], [0, 0, 1, 1], [], []>} : vector<2x32xf32>, vector<32x32xf32>, vector<2x32xf32> -> vector<2x32xf32>
    %c2_403 = arith.constant 2 : index
    %c0_404 = arith.constant 0 : index
    %c0_405 = arith.constant 0 : index
    %855 = vector.load %arg12[%c2_403, %c0_404, %c0_405] : memref<3x32x32xf32, #tpu.memory_space<vmem>>, vector<1x32x32xf32>
    %856 = vector.shape_cast %855 : vector<1x32x32xf32> to vector<32x32xf32>
    %cst_406 = arith.constant dense<0.000000e+00> : vector<2x32xf32>
    %857 = tpu.matmul %848, %856, %cst_406 {dimension_numbers = #tpu.dot_dimension_numbers<[1], [0], [0], [1], [0, 0, 1, 1], [], []>} : vector<2x32xf32>, vector<32x32xf32>, vector<2x32xf32> -> vector<2x32xf32>
    %c2_407 = arith.constant 2 : index
    %c0_408 = arith.constant 0 : index
    %c0_409 = arith.constant 0 : index
    %858 = vector.load %arg14[%c2_407, %c0_408, %c0_409] : memref<3x1x32xf32, #tpu.memory_space<vmem>>, vector<1x1x32xf32>
    %859 = vector.shape_cast %858 : vector<1x1x32xf32> to vector<1x32xf32>
    %860 = vector.broadcast %859 : vector<1x32xf32> to vector<2x32xf32>
    %861 = arith.addf %857, %860 : vector<2x32xf32>
    %862 = vector.extract_strided_slice %764 {offsets = [2, 0, 0], sizes = [1, 2, 32], strides = [1, 1, 1]} : vector<8x2x32xf32> to vector<1x2x32xf32>
    %863 = vector.shape_cast %862 : vector<1x2x32xf32> to vector<2x32xf32>
    %864 = arith.addf %863, %851 : vector<2x32xf32>
    %865 = arith.negf %864 : vector<2x32xf32>
    %866 = math.exp %865 : vector<2x32xf32>
    %cst_410 = arith.constant 1.000000e+00 : f32
    %867 = vector.broadcast %cst_410 : f32 to vector<2x32xf32>
    %868 = arith.addf %867, %866 : vector<2x32xf32>
    %869 = arith.divf %867, %868 : vector<2x32xf32>
    %870 = vector.extract_strided_slice %776 {offsets = [2, 0, 0], sizes = [1, 2, 32], strides = [1, 1, 1]} : vector<8x2x32xf32> to vector<1x2x32xf32>
    %871 = vector.shape_cast %870 : vector<1x2x32xf32> to vector<2x32xf32>
    %872 = arith.addf %871, %854 : vector<2x32xf32>
    %873 = arith.negf %872 : vector<2x32xf32>
    %874 = math.exp %873 : vector<2x32xf32>
    %cst_411 = arith.constant 1.000000e+00 : f32
    %875 = vector.broadcast %cst_411 : f32 to vector<2x32xf32>
    %876 = arith.addf %875, %874 : vector<2x32xf32>
    %877 = arith.divf %875, %876 : vector<2x32xf32>
    %878 = vector.extract_strided_slice %784 {offsets = [2, 0, 0], sizes = [1, 2, 32], strides = [1, 1, 1]} : vector<8x2x32xf32> to vector<1x2x32xf32>
    %879 = vector.shape_cast %878 : vector<1x2x32xf32> to vector<2x32xf32>
    %880 = arith.mulf %869, %861 : vector<2x32xf32>
    %881 = arith.addf %879, %880 : vector<2x32xf32>
    %882 = math.tanh %881 : vector<2x32xf32>
    %cst_412 = arith.constant 1.000000e+00 : f32
    %883 = vector.broadcast %cst_412 : f32 to vector<2x32xf32>
    %884 = arith.subf %883, %877 : vector<2x32xf32>
    %885 = arith.mulf %884, %882 : vector<2x32xf32>
    %886 = arith.mulf %877, %848 : vector<2x32xf32>
    %887 = arith.addf %885, %886 : vector<2x32xf32>
    %c0_413 = arith.constant 0 : index
    %c0_414 = arith.constant 0 : index
    %c0_415 = arith.constant 0 : index
    %888 = vector.load %arg12[%c0_413, %c0_414, %c0_415] : memref<3x32x32xf32, #tpu.memory_space<vmem>>, vector<1x32x32xf32>
    %889 = vector.shape_cast %888 : vector<1x32x32xf32> to vector<32x32xf32>
    %cst_416 = arith.constant dense<0.000000e+00> : vector<2x32xf32>
    %890 = tpu.matmul %887, %889, %cst_416 {dimension_numbers = #tpu.dot_dimension_numbers<[1], [0], [0], [1], [0, 0, 1, 1], [], []>} : vector<2x32xf32>, vector<32x32xf32>, vector<2x32xf32> -> vector<2x32xf32>
    %c1_417 = arith.constant 1 : index
    %c0_418 = arith.constant 0 : index
    %c0_419 = arith.constant 0 : index
    %891 = vector.load %arg12[%c1_417, %c0_418, %c0_419] : memref<3x32x32xf32, #tpu.memory_space<vmem>>, vector<1x32x32xf32>
    %892 = vector.shape_cast %891 : vector<1x32x32xf32> to vector<32x32xf32>
    %cst_420 = arith.constant dense<0.000000e+00> : vector<2x32xf32>
    %893 = tpu.matmul %887, %892, %cst_420 {dimension_numbers = #tpu.dot_dimension_numbers<[1], [0], [0], [1], [0, 0, 1, 1], [], []>} : vector<2x32xf32>, vector<32x32xf32>, vector<2x32xf32> -> vector<2x32xf32>
    %c2_421 = arith.constant 2 : index
    %c0_422 = arith.constant 0 : index
    %c0_423 = arith.constant 0 : index
    %894 = vector.load %arg12[%c2_421, %c0_422, %c0_423] : memref<3x32x32xf32, #tpu.memory_space<vmem>>, vector<1x32x32xf32>
    %895 = vector.shape_cast %894 : vector<1x32x32xf32> to vector<32x32xf32>
    %cst_424 = arith.constant dense<0.000000e+00> : vector<2x32xf32>
    %896 = tpu.matmul %887, %895, %cst_424 {dimension_numbers = #tpu.dot_dimension_numbers<[1], [0], [0], [1], [0, 0, 1, 1], [], []>} : vector<2x32xf32>, vector<32x32xf32>, vector<2x32xf32> -> vector<2x32xf32>
    %c2_425 = arith.constant 2 : index
    %c0_426 = arith.constant 0 : index
    %c0_427 = arith.constant 0 : index
    %897 = vector.load %arg14[%c2_425, %c0_426, %c0_427] : memref<3x1x32xf32, #tpu.memory_space<vmem>>, vector<1x1x32xf32>
    %898 = vector.shape_cast %897 : vector<1x1x32xf32> to vector<1x32xf32>
    %899 = vector.broadcast %898 : vector<1x32xf32> to vector<2x32xf32>
    %900 = arith.addf %896, %899 : vector<2x32xf32>
    %901 = vector.extract_strided_slice %764 {offsets = [3, 0, 0], sizes = [1, 2, 32], strides = [1, 1, 1]} : vector<8x2x32xf32> to vector<1x2x32xf32>
    %902 = vector.shape_cast %901 : vector<1x2x32xf32> to vector<2x32xf32>
    %903 = arith.addf %902, %890 : vector<2x32xf32>
    %904 = arith.negf %903 : vector<2x32xf32>
    %905 = math.exp %904 : vector<2x32xf32>
    %cst_428 = arith.constant 1.000000e+00 : f32
    %906 = vector.broadcast %cst_428 : f32 to vector<2x32xf32>
    %907 = arith.addf %906, %905 : vector<2x32xf32>
    %908 = arith.divf %906, %907 : vector<2x32xf32>
    %909 = vector.extract_strided_slice %776 {offsets = [3, 0, 0], sizes = [1, 2, 32], strides = [1, 1, 1]} : vector<8x2x32xf32> to vector<1x2x32xf32>
    %910 = vector.shape_cast %909 : vector<1x2x32xf32> to vector<2x32xf32>
    %911 = arith.addf %910, %893 : vector<2x32xf32>
    %912 = arith.negf %911 : vector<2x32xf32>
    %913 = math.exp %912 : vector<2x32xf32>
    %cst_429 = arith.constant 1.000000e+00 : f32
    %914 = vector.broadcast %cst_429 : f32 to vector<2x32xf32>
    %915 = arith.addf %914, %913 : vector<2x32xf32>
    %916 = arith.divf %914, %915 : vector<2x32xf32>
    %917 = vector.extract_strided_slice %784 {offsets = [3, 0, 0], sizes = [1, 2, 32], strides = [1, 1, 1]} : vector<8x2x32xf32> to vector<1x2x32xf32>
    %918 = vector.shape_cast %917 : vector<1x2x32xf32> to vector<2x32xf32>
    %919 = arith.mulf %908, %900 : vector<2x32xf32>
    %920 = arith.addf %918, %919 : vector<2x32xf32>
    %921 = math.tanh %920 : vector<2x32xf32>
    %cst_430 = arith.constant 1.000000e+00 : f32
    %922 = vector.broadcast %cst_430 : f32 to vector<2x32xf32>
    %923 = arith.subf %922, %916 : vector<2x32xf32>
    %924 = arith.mulf %923, %921 : vector<2x32xf32>
    %925 = arith.mulf %916, %887 : vector<2x32xf32>
    %926 = arith.addf %924, %925 : vector<2x32xf32>
    %c0_431 = arith.constant 0 : index
    %c0_432 = arith.constant 0 : index
    %c0_433 = arith.constant 0 : index
    %927 = vector.load %arg12[%c0_431, %c0_432, %c0_433] : memref<3x32x32xf32, #tpu.memory_space<vmem>>, vector<1x32x32xf32>
    %928 = vector.shape_cast %927 : vector<1x32x32xf32> to vector<32x32xf32>
    %cst_434 = arith.constant dense<0.000000e+00> : vector<2x32xf32>
    %929 = tpu.matmul %926, %928, %cst_434 {dimension_numbers = #tpu.dot_dimension_numbers<[1], [0], [0], [1], [0, 0, 1, 1], [], []>} : vector<2x32xf32>, vector<32x32xf32>, vector<2x32xf32> -> vector<2x32xf32>
    %c1_435 = arith.constant 1 : index
    %c0_436 = arith.constant 0 : index
    %c0_437 = arith.constant 0 : index
    %930 = vector.load %arg12[%c1_435, %c0_436, %c0_437] : memref<3x32x32xf32, #tpu.memory_space<vmem>>, vector<1x32x32xf32>
    %931 = vector.shape_cast %930 : vector<1x32x32xf32> to vector<32x32xf32>
    %cst_438 = arith.constant dense<0.000000e+00> : vector<2x32xf32>
    %932 = tpu.matmul %926, %931, %cst_438 {dimension_numbers = #tpu.dot_dimension_numbers<[1], [0], [0], [1], [0, 0, 1, 1], [], []>} : vector<2x32xf32>, vector<32x32xf32>, vector<2x32xf32> -> vector<2x32xf32>
    %c2_439 = arith.constant 2 : index
    %c0_440 = arith.constant 0 : index
    %c0_441 = arith.constant 0 : index
    %933 = vector.load %arg12[%c2_439, %c0_440, %c0_441] : memref<3x32x32xf32, #tpu.memory_space<vmem>>, vector<1x32x32xf32>
    %934 = vector.shape_cast %933 : vector<1x32x32xf32> to vector<32x32xf32>
    %cst_442 = arith.constant dense<0.000000e+00> : vector<2x32xf32>
    %935 = tpu.matmul %926, %934, %cst_442 {dimension_numbers = #tpu.dot_dimension_numbers<[1], [0], [0], [1], [0, 0, 1, 1], [], []>} : vector<2x32xf32>, vector<32x32xf32>, vector<2x32xf32> -> vector<2x32xf32>
    %c2_443 = arith.constant 2 : index
    %c0_444 = arith.constant 0 : index
    %c0_445 = arith.constant 0 : index
    %936 = vector.load %arg14[%c2_443, %c0_444, %c0_445] : memref<3x1x32xf32, #tpu.memory_space<vmem>>, vector<1x1x32xf32>
    %937 = vector.shape_cast %936 : vector<1x1x32xf32> to vector<1x32xf32>
    %938 = vector.broadcast %937 : vector<1x32xf32> to vector<2x32xf32>
    %939 = arith.addf %935, %938 : vector<2x32xf32>
    %940 = vector.extract_strided_slice %764 {offsets = [4, 0, 0], sizes = [1, 2, 32], strides = [1, 1, 1]} : vector<8x2x32xf32> to vector<1x2x32xf32>
    %941 = vector.shape_cast %940 : vector<1x2x32xf32> to vector<2x32xf32>
    %942 = arith.addf %941, %929 : vector<2x32xf32>
    %943 = arith.negf %942 : vector<2x32xf32>
    %944 = math.exp %943 : vector<2x32xf32>
    %cst_446 = arith.constant 1.000000e+00 : f32
    %945 = vector.broadcast %cst_446 : f32 to vector<2x32xf32>
    %946 = arith.addf %945, %944 : vector<2x32xf32>
    %947 = arith.divf %945, %946 : vector<2x32xf32>
    %948 = vector.extract_strided_slice %776 {offsets = [4, 0, 0], sizes = [1, 2, 32], strides = [1, 1, 1]} : vector<8x2x32xf32> to vector<1x2x32xf32>
    %949 = vector.shape_cast %948 : vector<1x2x32xf32> to vector<2x32xf32>
    %950 = arith.addf %949, %932 : vector<2x32xf32>
    %951 = arith.negf %950 : vector<2x32xf32>
    %952 = math.exp %951 : vector<2x32xf32>
    %cst_447 = arith.constant 1.000000e+00 : f32
    %953 = vector.broadcast %cst_447 : f32 to vector<2x32xf32>
    %954 = arith.addf %953, %952 : vector<2x32xf32>
    %955 = arith.divf %953, %954 : vector<2x32xf32>
    %956 = vector.extract_strided_slice %784 {offsets = [4, 0, 0], sizes = [1, 2, 32], strides = [1, 1, 1]} : vector<8x2x32xf32> to vector<1x2x32xf32>
    %957 = vector.shape_cast %956 : vector<1x2x32xf32> to vector<2x32xf32>
    %958 = arith.mulf %947, %939 : vector<2x32xf32>
    %959 = arith.addf %957, %958 : vector<2x32xf32>
    %960 = math.tanh %959 : vector<2x32xf32>
    %cst_448 = arith.constant 1.000000e+00 : f32
    %961 = vector.broadcast %cst_448 : f32 to vector<2x32xf32>
    %962 = arith.subf %961, %955 : vector<2x32xf32>
    %963 = arith.mulf %962, %960 : vector<2x32xf32>
    %964 = arith.mulf %955, %926 : vector<2x32xf32>
    %965 = arith.addf %963, %964 : vector<2x32xf32>
    %c0_449 = arith.constant 0 : index
    %c0_450 = arith.constant 0 : index
    %c0_451 = arith.constant 0 : index
    %966 = vector.load %arg12[%c0_449, %c0_450, %c0_451] : memref<3x32x32xf32, #tpu.memory_space<vmem>>, vector<1x32x32xf32>
    %967 = vector.shape_cast %966 : vector<1x32x32xf32> to vector<32x32xf32>
    %cst_452 = arith.constant dense<0.000000e+00> : vector<2x32xf32>
    %968 = tpu.matmul %965, %967, %cst_452 {dimension_numbers = #tpu.dot_dimension_numbers<[1], [0], [0], [1], [0, 0, 1, 1], [], []>} : vector<2x32xf32>, vector<32x32xf32>, vector<2x32xf32> -> vector<2x32xf32>
    %c1_453 = arith.constant 1 : index
    %c0_454 = arith.constant 0 : index
    %c0_455 = arith.constant 0 : index
    %969 = vector.load %arg12[%c1_453, %c0_454, %c0_455] : memref<3x32x32xf32, #tpu.memory_space<vmem>>, vector<1x32x32xf32>
    %970 = vector.shape_cast %969 : vector<1x32x32xf32> to vector<32x32xf32>
    %cst_456 = arith.constant dense<0.000000e+00> : vector<2x32xf32>
    %971 = tpu.matmul %965, %970, %cst_456 {dimension_numbers = #tpu.dot_dimension_numbers<[1], [0], [0], [1], [0, 0, 1, 1], [], []>} : vector<2x32xf32>, vector<32x32xf32>, vector<2x32xf32> -> vector<2x32xf32>
    %c2_457 = arith.constant 2 : index
    %c0_458 = arith.constant 0 : index
    %c0_459 = arith.constant 0 : index
    %972 = vector.load %arg12[%c2_457, %c0_458, %c0_459] : memref<3x32x32xf32, #tpu.memory_space<vmem>>, vector<1x32x32xf32>
    %973 = vector.shape_cast %972 : vector<1x32x32xf32> to vector<32x32xf32>
    %cst_460 = arith.constant dense<0.000000e+00> : vector<2x32xf32>
    %974 = tpu.matmul %965, %973, %cst_460 {dimension_numbers = #tpu.dot_dimension_numbers<[1], [0], [0], [1], [0, 0, 1, 1], [], []>} : vector<2x32xf32>, vector<32x32xf32>, vector<2x32xf32> -> vector<2x32xf32>
    %c2_461 = arith.constant 2 : index
    %c0_462 = arith.constant 0 : index
    %c0_463 = arith.constant 0 : index
    %975 = vector.load %arg14[%c2_461, %c0_462, %c0_463] : memref<3x1x32xf32, #tpu.memory_space<vmem>>, vector<1x1x32xf32>
    %976 = vector.shape_cast %975 : vector<1x1x32xf32> to vector<1x32xf32>
    %977 = vector.broadcast %976 : vector<1x32xf32> to vector<2x32xf32>
    %978 = arith.addf %974, %977 : vector<2x32xf32>
    %979 = vector.extract_strided_slice %764 {offsets = [5, 0, 0], sizes = [1, 2, 32], strides = [1, 1, 1]} : vector<8x2x32xf32> to vector<1x2x32xf32>
    %980 = vector.shape_cast %979 : vector<1x2x32xf32> to vector<2x32xf32>
    %981 = arith.addf %980, %968 : vector<2x32xf32>
    %982 = arith.negf %981 : vector<2x32xf32>
    %983 = math.exp %982 : vector<2x32xf32>
    %cst_464 = arith.constant 1.000000e+00 : f32
    %984 = vector.broadcast %cst_464 : f32 to vector<2x32xf32>
    %985 = arith.addf %984, %983 : vector<2x32xf32>
    %986 = arith.divf %984, %985 : vector<2x32xf32>
    %987 = vector.extract_strided_slice %776 {offsets = [5, 0, 0], sizes = [1, 2, 32], strides = [1, 1, 1]} : vector<8x2x32xf32> to vector<1x2x32xf32>
    %988 = vector.shape_cast %987 : vector<1x2x32xf32> to vector<2x32xf32>
    %989 = arith.addf %988, %971 : vector<2x32xf32>
    %990 = arith.negf %989 : vector<2x32xf32>
    %991 = math.exp %990 : vector<2x32xf32>
    %cst_465 = arith.constant 1.000000e+00 : f32
    %992 = vector.broadcast %cst_465 : f32 to vector<2x32xf32>
    %993 = arith.addf %992, %991 : vector<2x32xf32>
    %994 = arith.divf %992, %993 : vector<2x32xf32>
    %995 = vector.extract_strided_slice %784 {offsets = [5, 0, 0], sizes = [1, 2, 32], strides = [1, 1, 1]} : vector<8x2x32xf32> to vector<1x2x32xf32>
    %996 = vector.shape_cast %995 : vector<1x2x32xf32> to vector<2x32xf32>
    %997 = arith.mulf %986, %978 : vector<2x32xf32>
    %998 = arith.addf %996, %997 : vector<2x32xf32>
    %999 = math.tanh %998 : vector<2x32xf32>
    %cst_466 = arith.constant 1.000000e+00 : f32
    %1000 = vector.broadcast %cst_466 : f32 to vector<2x32xf32>
    %1001 = arith.subf %1000, %994 : vector<2x32xf32>
    %1002 = arith.mulf %1001, %999 : vector<2x32xf32>
    %1003 = arith.mulf %994, %965 : vector<2x32xf32>
    %1004 = arith.addf %1002, %1003 : vector<2x32xf32>
    %c0_467 = arith.constant 0 : index
    %c0_468 = arith.constant 0 : index
    %c0_469 = arith.constant 0 : index
    %1005 = vector.load %arg12[%c0_467, %c0_468, %c0_469] : memref<3x32x32xf32, #tpu.memory_space<vmem>>, vector<1x32x32xf32>
    %1006 = vector.shape_cast %1005 : vector<1x32x32xf32> to vector<32x32xf32>
    %cst_470 = arith.constant dense<0.000000e+00> : vector<2x32xf32>
    %1007 = tpu.matmul %1004, %1006, %cst_470 {dimension_numbers = #tpu.dot_dimension_numbers<[1], [0], [0], [1], [0, 0, 1, 1], [], []>} : vector<2x32xf32>, vector<32x32xf32>, vector<2x32xf32> -> vector<2x32xf32>
    %c1_471 = arith.constant 1 : index
    %c0_472 = arith.constant 0 : index
    %c0_473 = arith.constant 0 : index
    %1008 = vector.load %arg12[%c1_471, %c0_472, %c0_473] : memref<3x32x32xf32, #tpu.memory_space<vmem>>, vector<1x32x32xf32>
    %1009 = vector.shape_cast %1008 : vector<1x32x32xf32> to vector<32x32xf32>
    %cst_474 = arith.constant dense<0.000000e+00> : vector<2x32xf32>
    %1010 = tpu.matmul %1004, %1009, %cst_474 {dimension_numbers = #tpu.dot_dimension_numbers<[1], [0], [0], [1], [0, 0, 1, 1], [], []>} : vector<2x32xf32>, vector<32x32xf32>, vector<2x32xf32> -> vector<2x32xf32>
    %c2_475 = arith.constant 2 : index
    %c0_476 = arith.constant 0 : index
    %c0_477 = arith.constant 0 : index
    %1011 = vector.load %arg12[%c2_475, %c0_476, %c0_477] : memref<3x32x32xf32, #tpu.memory_space<vmem>>, vector<1x32x32xf32>
    %1012 = vector.shape_cast %1011 : vector<1x32x32xf32> to vector<32x32xf32>
    %cst_478 = arith.constant dense<0.000000e+00> : vector<2x32xf32>
    %1013 = tpu.matmul %1004, %1012, %cst_478 {dimension_numbers = #tpu.dot_dimension_numbers<[1], [0], [0], [1], [0, 0, 1, 1], [], []>} : vector<2x32xf32>, vector<32x32xf32>, vector<2x32xf32> -> vector<2x32xf32>
    %c2_479 = arith.constant 2 : index
    %c0_480 = arith.constant 0 : index
    %c0_481 = arith.constant 0 : index
    %1014 = vector.load %arg14[%c2_479, %c0_480, %c0_481] : memref<3x1x32xf32, #tpu.memory_space<vmem>>, vector<1x1x32xf32>
    %1015 = vector.shape_cast %1014 : vector<1x1x32xf32> to vector<1x32xf32>
    %1016 = vector.broadcast %1015 : vector<1x32xf32> to vector<2x32xf32>
    %1017 = arith.addf %1013, %1016 : vector<2x32xf32>
    %1018 = vector.extract_strided_slice %764 {offsets = [6, 0, 0], sizes = [1, 2, 32], strides = [1, 1, 1]} : vector<8x2x32xf32> to vector<1x2x32xf32>
    %1019 = vector.shape_cast %1018 : vector<1x2x32xf32> to vector<2x32xf32>
    %1020 = arith.addf %1019, %1007 : vector<2x32xf32>
    %1021 = arith.negf %1020 : vector<2x32xf32>
    %1022 = math.exp %1021 : vector<2x32xf32>
    %cst_482 = arith.constant 1.000000e+00 : f32
    %1023 = vector.broadcast %cst_482 : f32 to vector<2x32xf32>
    %1024 = arith.addf %1023, %1022 : vector<2x32xf32>
    %1025 = arith.divf %1023, %1024 : vector<2x32xf32>
    %1026 = vector.extract_strided_slice %776 {offsets = [6, 0, 0], sizes = [1, 2, 32], strides = [1, 1, 1]} : vector<8x2x32xf32> to vector<1x2x32xf32>
    %1027 = vector.shape_cast %1026 : vector<1x2x32xf32> to vector<2x32xf32>
    %1028 = arith.addf %1027, %1010 : vector<2x32xf32>
    %1029 = arith.negf %1028 : vector<2x32xf32>
    %1030 = math.exp %1029 : vector<2x32xf32>
    %cst_483 = arith.constant 1.000000e+00 : f32
    %1031 = vector.broadcast %cst_483 : f32 to vector<2x32xf32>
    %1032 = arith.addf %1031, %1030 : vector<2x32xf32>
    %1033 = arith.divf %1031, %1032 : vector<2x32xf32>
    %1034 = vector.extract_strided_slice %784 {offsets = [6, 0, 0], sizes = [1, 2, 32], strides = [1, 1, 1]} : vector<8x2x32xf32> to vector<1x2x32xf32>
    %1035 = vector.shape_cast %1034 : vector<1x2x32xf32> to vector<2x32xf32>
    %1036 = arith.mulf %1025, %1017 : vector<2x32xf32>
    %1037 = arith.addf %1035, %1036 : vector<2x32xf32>
    %1038 = math.tanh %1037 : vector<2x32xf32>
    %cst_484 = arith.constant 1.000000e+00 : f32
    %1039 = vector.broadcast %cst_484 : f32 to vector<2x32xf32>
    %1040 = arith.subf %1039, %1033 : vector<2x32xf32>
    %1041 = arith.mulf %1040, %1038 : vector<2x32xf32>
    %1042 = arith.mulf %1033, %1004 : vector<2x32xf32>
    %1043 = arith.addf %1041, %1042 : vector<2x32xf32>
    %c0_485 = arith.constant 0 : index
    %c0_486 = arith.constant 0 : index
    %c0_487 = arith.constant 0 : index
    %1044 = vector.load %arg12[%c0_485, %c0_486, %c0_487] : memref<3x32x32xf32, #tpu.memory_space<vmem>>, vector<1x32x32xf32>
    %1045 = vector.shape_cast %1044 : vector<1x32x32xf32> to vector<32x32xf32>
    %cst_488 = arith.constant dense<0.000000e+00> : vector<2x32xf32>
    %1046 = tpu.matmul %1043, %1045, %cst_488 {dimension_numbers = #tpu.dot_dimension_numbers<[1], [0], [0], [1], [0, 0, 1, 1], [], []>} : vector<2x32xf32>, vector<32x32xf32>, vector<2x32xf32> -> vector<2x32xf32>
    %c1_489 = arith.constant 1 : index
    %c0_490 = arith.constant 0 : index
    %c0_491 = arith.constant 0 : index
    %1047 = vector.load %arg12[%c1_489, %c0_490, %c0_491] : memref<3x32x32xf32, #tpu.memory_space<vmem>>, vector<1x32x32xf32>
    %1048 = vector.shape_cast %1047 : vector<1x32x32xf32> to vector<32x32xf32>
    %cst_492 = arith.constant dense<0.000000e+00> : vector<2x32xf32>
    %1049 = tpu.matmul %1043, %1048, %cst_492 {dimension_numbers = #tpu.dot_dimension_numbers<[1], [0], [0], [1], [0, 0, 1, 1], [], []>} : vector<2x32xf32>, vector<32x32xf32>, vector<2x32xf32> -> vector<2x32xf32>
    %c2_493 = arith.constant 2 : index
    %c0_494 = arith.constant 0 : index
    %c0_495 = arith.constant 0 : index
    %1050 = vector.load %arg12[%c2_493, %c0_494, %c0_495] : memref<3x32x32xf32, #tpu.memory_space<vmem>>, vector<1x32x32xf32>
    %1051 = vector.shape_cast %1050 : vector<1x32x32xf32> to vector<32x32xf32>
    %cst_496 = arith.constant dense<0.000000e+00> : vector<2x32xf32>
    %1052 = tpu.matmul %1043, %1051, %cst_496 {dimension_numbers = #tpu.dot_dimension_numbers<[1], [0], [0], [1], [0, 0, 1, 1], [], []>} : vector<2x32xf32>, vector<32x32xf32>, vector<2x32xf32> -> vector<2x32xf32>
    %c2_497 = arith.constant 2 : index
    %c0_498 = arith.constant 0 : index
    %c0_499 = arith.constant 0 : index
    %1053 = vector.load %arg14[%c2_497, %c0_498, %c0_499] : memref<3x1x32xf32, #tpu.memory_space<vmem>>, vector<1x1x32xf32>
    %1054 = vector.shape_cast %1053 : vector<1x1x32xf32> to vector<1x32xf32>
    %1055 = vector.broadcast %1054 : vector<1x32xf32> to vector<2x32xf32>
    %1056 = arith.addf %1052, %1055 : vector<2x32xf32>
    %1057 = vector.extract_strided_slice %764 {offsets = [7, 0, 0], sizes = [1, 2, 32], strides = [1, 1, 1]} : vector<8x2x32xf32> to vector<1x2x32xf32>
    %1058 = vector.shape_cast %1057 : vector<1x2x32xf32> to vector<2x32xf32>
    %1059 = arith.addf %1058, %1046 : vector<2x32xf32>
    %1060 = arith.negf %1059 : vector<2x32xf32>
    %1061 = math.exp %1060 : vector<2x32xf32>
    %cst_500 = arith.constant 1.000000e+00 : f32
    %1062 = vector.broadcast %cst_500 : f32 to vector<2x32xf32>
    %1063 = arith.addf %1062, %1061 : vector<2x32xf32>
    %1064 = arith.divf %1062, %1063 : vector<2x32xf32>
    %1065 = vector.extract_strided_slice %776 {offsets = [7, 0, 0], sizes = [1, 2, 32], strides = [1, 1, 1]} : vector<8x2x32xf32> to vector<1x2x32xf32>
    %1066 = vector.shape_cast %1065 : vector<1x2x32xf32> to vector<2x32xf32>
    %1067 = arith.addf %1066, %1049 : vector<2x32xf32>
    %1068 = arith.negf %1067 : vector<2x32xf32>
    %1069 = math.exp %1068 : vector<2x32xf32>
    %cst_501 = arith.constant 1.000000e+00 : f32
    %1070 = vector.broadcast %cst_501 : f32 to vector<2x32xf32>
    %1071 = arith.addf %1070, %1069 : vector<2x32xf32>
    %1072 = arith.divf %1070, %1071 : vector<2x32xf32>
    %1073 = vector.extract_strided_slice %784 {offsets = [7, 0, 0], sizes = [1, 2, 32], strides = [1, 1, 1]} : vector<8x2x32xf32> to vector<1x2x32xf32>
    %1074 = vector.shape_cast %1073 : vector<1x2x32xf32> to vector<2x32xf32>
    %1075 = arith.mulf %1064, %1056 : vector<2x32xf32>
    %1076 = arith.addf %1074, %1075 : vector<2x32xf32>
    %1077 = math.tanh %1076 : vector<2x32xf32>
    %cst_502 = arith.constant 1.000000e+00 : f32
    %1078 = vector.broadcast %cst_502 : f32 to vector<2x32xf32>
    %1079 = arith.subf %1078, %1072 : vector<2x32xf32>
    %1080 = arith.mulf %1079, %1077 : vector<2x32xf32>
    %1081 = arith.mulf %1072, %1043 : vector<2x32xf32>
    %1082 = arith.addf %1080, %1081 : vector<2x32xf32>
    %1083 = vector.extract_strided_slice %752 {offsets = [14, 0], sizes = [2, 64], strides = [1, 1]} : vector<16x64xf32> to vector<2x64xf32>
    %c0_503 = arith.constant 0 : index
    %c0_504 = arith.constant 0 : index
    %c0_505 = arith.constant 0 : index
    %1084 = vector.load %arg15[%c0_503, %c0_504, %c0_505] : memref<3x64x32xf32, #tpu.memory_space<vmem>>, vector<1x64x32xf32>
    %1085 = vector.shape_cast %1084 : vector<1x64x32xf32> to vector<64x32xf32>
    %cst_506 = arith.constant dense<0.000000e+00> : vector<2x32xf32>
    %1086 = tpu.matmul %1083, %1085, %cst_506 {dimension_numbers = #tpu.dot_dimension_numbers<[1], [0], [0], [1], [0, 0, 1, 1], [], []>} : vector<2x64xf32>, vector<64x32xf32>, vector<2x32xf32> -> vector<2x32xf32>
    %c0_507 = arith.constant 0 : index
    %c0_508 = arith.constant 0 : index
    %c0_509 = arith.constant 0 : index
    %1087 = vector.load %arg17[%c0_507, %c0_508, %c0_509] : memref<3x1x32xf32, #tpu.memory_space<vmem>>, vector<1x1x32xf32>
    %1088 = vector.shape_cast %1087 : vector<1x1x32xf32> to vector<1x32xf32>
    %1089 = vector.broadcast %1088 : vector<1x32xf32> to vector<2x32xf32>
    %1090 = arith.addf %1086, %1089 : vector<2x32xf32>
    %c0_510 = arith.constant 0 : index
    %c0_511 = arith.constant 0 : index
    %c0_512 = arith.constant 0 : index
    %1091 = vector.load %arg18[%c0_510, %c0_511, %c0_512] : memref<3x1x32xf32, #tpu.memory_space<vmem>>, vector<1x1x32xf32>
    %1092 = vector.shape_cast %1091 : vector<1x1x32xf32> to vector<1x32xf32>
    %1093 = vector.broadcast %1092 : vector<1x32xf32> to vector<2x32xf32>
    %1094 = arith.addf %1090, %1093 : vector<2x32xf32>
    %1095 = arith.negf %1094 : vector<2x32xf32>
    %1096 = math.exp %1095 : vector<2x32xf32>
    %cst_513 = arith.constant 1.000000e+00 : f32
    %1097 = vector.broadcast %cst_513 : f32 to vector<2x32xf32>
    %1098 = arith.addf %1097, %1096 : vector<2x32xf32>
    %1099 = arith.divf %1097, %1098 : vector<2x32xf32>
    %c1_514 = arith.constant 1 : index
    %c0_515 = arith.constant 0 : index
    %c0_516 = arith.constant 0 : index
    %1100 = vector.load %arg15[%c1_514, %c0_515, %c0_516] : memref<3x64x32xf32, #tpu.memory_space<vmem>>, vector<1x64x32xf32>
    %1101 = vector.shape_cast %1100 : vector<1x64x32xf32> to vector<64x32xf32>
    %cst_517 = arith.constant dense<0.000000e+00> : vector<2x32xf32>
    %1102 = tpu.matmul %1083, %1101, %cst_517 {dimension_numbers = #tpu.dot_dimension_numbers<[1], [0], [0], [1], [0, 0, 1, 1], [], []>} : vector<2x64xf32>, vector<64x32xf32>, vector<2x32xf32> -> vector<2x32xf32>
    %c1_518 = arith.constant 1 : index
    %c0_519 = arith.constant 0 : index
    %c0_520 = arith.constant 0 : index
    %1103 = vector.load %arg17[%c1_518, %c0_519, %c0_520] : memref<3x1x32xf32, #tpu.memory_space<vmem>>, vector<1x1x32xf32>
    %1104 = vector.shape_cast %1103 : vector<1x1x32xf32> to vector<1x32xf32>
    %1105 = vector.broadcast %1104 : vector<1x32xf32> to vector<2x32xf32>
    %1106 = arith.addf %1102, %1105 : vector<2x32xf32>
    %c1_521 = arith.constant 1 : index
    %c0_522 = arith.constant 0 : index
    %c0_523 = arith.constant 0 : index
    %1107 = vector.load %arg18[%c1_521, %c0_522, %c0_523] : memref<3x1x32xf32, #tpu.memory_space<vmem>>, vector<1x1x32xf32>
    %1108 = vector.shape_cast %1107 : vector<1x1x32xf32> to vector<1x32xf32>
    %1109 = vector.broadcast %1108 : vector<1x32xf32> to vector<2x32xf32>
    %1110 = arith.addf %1106, %1109 : vector<2x32xf32>
    %1111 = arith.negf %1110 : vector<2x32xf32>
    %1112 = math.exp %1111 : vector<2x32xf32>
    %cst_524 = arith.constant 1.000000e+00 : f32
    %1113 = vector.broadcast %cst_524 : f32 to vector<2x32xf32>
    %1114 = arith.addf %1113, %1112 : vector<2x32xf32>
    %1115 = arith.divf %1113, %1114 : vector<2x32xf32>
    %c2_525 = arith.constant 2 : index
    %c0_526 = arith.constant 0 : index
    %c0_527 = arith.constant 0 : index
    %1116 = vector.load %arg15[%c2_525, %c0_526, %c0_527] : memref<3x64x32xf32, #tpu.memory_space<vmem>>, vector<1x64x32xf32>
    %1117 = vector.shape_cast %1116 : vector<1x64x32xf32> to vector<64x32xf32>
    %cst_528 = arith.constant dense<0.000000e+00> : vector<2x32xf32>
    %1118 = tpu.matmul %1083, %1117, %cst_528 {dimension_numbers = #tpu.dot_dimension_numbers<[1], [0], [0], [1], [0, 0, 1, 1], [], []>} : vector<2x64xf32>, vector<64x32xf32>, vector<2x32xf32> -> vector<2x32xf32>
    %c2_529 = arith.constant 2 : index
    %c0_530 = arith.constant 0 : index
    %c0_531 = arith.constant 0 : index
    %1119 = vector.load %arg17[%c2_529, %c0_530, %c0_531] : memref<3x1x32xf32, #tpu.memory_space<vmem>>, vector<1x1x32xf32>
    %1120 = vector.shape_cast %1119 : vector<1x1x32xf32> to vector<1x32xf32>
    %1121 = vector.broadcast %1120 : vector<1x32xf32> to vector<2x32xf32>
    %1122 = arith.addf %1118, %1121 : vector<2x32xf32>
    %c2_532 = arith.constant 2 : index
    %c0_533 = arith.constant 0 : index
    %c0_534 = arith.constant 0 : index
    %1123 = vector.load %arg18[%c2_532, %c0_533, %c0_534] : memref<3x1x32xf32, #tpu.memory_space<vmem>>, vector<1x1x32xf32>
    %1124 = vector.shape_cast %1123 : vector<1x1x32xf32> to vector<1x32xf32>
    %1125 = vector.broadcast %1124 : vector<1x32xf32> to vector<2x32xf32>
    %1126 = arith.mulf %1099, %1125 : vector<2x32xf32>
    %1127 = arith.addf %1122, %1126 : vector<2x32xf32>
    %1128 = math.tanh %1127 : vector<2x32xf32>
    %cst_535 = arith.constant 1.000000e+00 : f32
    %1129 = vector.broadcast %cst_535 : f32 to vector<2x32xf32>
    %1130 = arith.subf %1129, %1115 : vector<2x32xf32>
    %1131 = arith.mulf %1130, %1128 : vector<2x32xf32>
    %1132 = tpu.concatenate %1082, %1131 in 1 : vector<2x32xf32>, vector<2x32xf32> -> vector<2x64xf32>
    %c0_536 = arith.constant 0 : index
    %c0_537 = arith.constant 0 : index
    %1133 = vector.load %arg19[%c0_536, %c0_537] : memref<64x32xf32, #tpu.memory_space<vmem>>, vector<64x32xf32>
    %cst_538 = arith.constant dense<0.000000e+00> : vector<2x32xf32>
    %1134 = tpu.matmul %1132, %1133, %cst_538 {dimension_numbers = #tpu.dot_dimension_numbers<[1], [0], [0], [1], [0, 0, 1, 1], [], []>} : vector<2x64xf32>, vector<64x32xf32>, vector<2x32xf32> -> vector<2x32xf32>
    %c0_539 = arith.constant 0 : index
    %c0_540 = arith.constant 0 : index
    %1135 = vector.load %arg20[%c0_539, %c0_540] : memref<1x32xf32, #tpu.memory_space<vmem>>, vector<1x32xf32>
    %1136 = vector.broadcast %1135 : vector<1x32xf32> to vector<2x32xf32>
    %1137 = arith.addf %1134, %1136 : vector<2x32xf32>
    %cst_541 = arith.constant 0.000000e+00 : f32
    %1138 = vector.broadcast %cst_541 : f32 to vector<2x32xf32>
    %1139 = arith.maximumf %1137, %1138 : vector<2x32xf32>
    %c0_542 = arith.constant 0 : index
    %c0_543 = arith.constant 0 : index
    %1140 = vector.load %arg21[%c0_542, %c0_543] : memref<32x4xf32, #tpu.memory_space<vmem>>, vector<32x4xf32>
    %cst_544 = arith.constant dense<0.000000e+00> : vector<2x4xf32>
    %1141 = tpu.matmul %1139, %1140, %cst_544 {dimension_numbers = #tpu.dot_dimension_numbers<[1], [0], [0], [1], [0, 0, 1, 1], [], []>} : vector<2x32xf32>, vector<32x4xf32>, vector<2x4xf32> -> vector<2x4xf32>
    %c0_545 = arith.constant 0 : index
    %c0_546 = arith.constant 0 : index
    %1142 = vector.load %arg22[%c0_545, %c0_546] : memref<1x4xf32, #tpu.memory_space<vmem>>, vector<1x4xf32>
    %1143 = vector.broadcast %1142 : vector<1x4xf32> to vector<2x4xf32>
    %1144 = arith.addf %1141, %1143 : vector<2x4xf32>
    %cst_547 = arith.constant dense<0xFF800000> : vector<2xf32>
    %1145 = vector.multi_reduction <maximumf>, %1144, %cst_547 [1] : vector<2x4xf32> to vector<2xf32>
    %1146 = vector.shape_cast %1145 : vector<2xf32> to vector<2x1xf32>
    %1147 = vector.broadcast %1146 : vector<2x1xf32> to vector<2x4xf32>
    %1148 = arith.subf %1144, %1147 : vector<2x4xf32>
    %1149 = math.exp %1148 : vector<2x4xf32>
    %cst_548 = arith.constant dense<0.000000e+00> : vector<2xf32>
    %1150 = vector.multi_reduction <add>, %1149, %cst_548 [1] : vector<2x4xf32> to vector<2xf32>
    %1151 = vector.shape_cast %1150 : vector<2xf32> to vector<2x1xf32>
    %1152 = vector.broadcast %1151 : vector<2x1xf32> to vector<2x4xf32>
    %1153 = arith.divf %1149, %1152 : vector<2x4xf32>
    %c0_549 = arith.constant 0 : index
    %c0_550 = arith.constant 0 : index
    %1154 = vector.load %arg23[%c0_549, %c0_550] : memref<2x4xf32, #tpu.memory_space<vmem>>, vector<2x4xf32>
    tpu.vector_store %arg23[%c0_549, %c0_550], %1153 {strides = array<i32>} : memref<2x4xf32, #tpu.memory_space<vmem>>, vector<2x4xf32>,
    return
  }
  func.func @transform_0(%arg0: i32, %arg1: memref<8x2xi32, #tpu.memory_space<smem>>) -> (i32, i32) {
    %c0_i32 = arith.constant 0 : i32
    %c0_i32_0 = arith.constant 0 : i32
    %c0_i32_1 = arith.constant 0 : i32
    return %c0_i32, %c0_i32_0 : i32, i32
  }
  func.func @transform_1(%arg0: i32, %arg1: memref<8x2xi32, #tpu.memory_space<smem>>) -> (i32, i32, i32) {
    %c0_i32 = arith.constant 0 : i32
    %c0_i32_0 = arith.constant 0 : i32
    %c0_i32_1 = arith.constant 0 : i32
    %c0_i32_2 = arith.constant 0 : i32
    return %c0_i32, %c0_i32_0, %c0_i32_1 : i32, i32, i32
  }
  func.func @transform_2(%arg0: i32, %arg1: memref<8x2xi32, #tpu.memory_space<smem>>) -> (i32, i32, i32) {
    %c0_i32 = arith.constant 0 : i32
    %c0_i32_0 = arith.constant 0 : i32
    %c0_i32_1 = arith.constant 0 : i32
    %c0_i32_2 = arith.constant 0 : i32
    return %c0_i32, %c0_i32_0, %c0_i32_1 : i32, i32, i32
  }
  func.func @transform_3(%arg0: i32, %arg1: memref<8x2xi32, #tpu.memory_space<smem>>) -> (i32, i32, i32) {
    %c0_i32 = arith.constant 0 : i32
    %c0_i32_0 = arith.constant 0 : i32
    %c0_i32_1 = arith.constant 0 : i32
    %c0_i32_2 = arith.constant 0 : i32
    return %c0_i32, %c0_i32_0, %c0_i32_1 : i32, i32, i32
  }
  func.func @transform_4(%arg0: i32, %arg1: memref<8x2xi32, #tpu.memory_space<smem>>) -> (i32, i32, i32) {
    %c0_i32 = arith.constant 0 : i32
    %c0_i32_0 = arith.constant 0 : i32
    %c0_i32_1 = arith.constant 0 : i32
    %c0_i32_2 = arith.constant 0 : i32
    return %c0_i32, %c0_i32_0, %c0_i32_1 : i32, i32, i32
  }
  func.func @transform_5(%arg0: i32, %arg1: memref<8x2xi32, #tpu.memory_space<smem>>) -> (i32, i32, i32) {
    %c0_i32 = arith.constant 0 : i32
    %c0_i32_0 = arith.constant 0 : i32
    %c0_i32_1 = arith.constant 0 : i32
    %c0_i32_2 = arith.constant 0 : i32
    return %c0_i32, %c0_i32_0, %c0_i32_1 : i32, i32, i32
  }
  func.func @transform_6(%arg0: i32, %arg1: memref<8x2xi32, #tpu.memory_space<smem>>) -> (i32, i32, i32) {
    %c0_i32 = arith.constant 0 : i32
    %c0_i32_0 = arith.constant 0 : i32
    %c0_i32_1 = arith.constant 0 : i32
    %c0_i32_2 = arith.constant 0 : i32
    return %c0_i32, %c0_i32_0, %c0_i32_1 : i32, i32, i32
  }
  func.func @transform_7(%arg0: i32, %arg1: memref<8x2xi32, #tpu.memory_space<smem>>) -> (i32, i32, i32) {
    %c0_i32 = arith.constant 0 : i32
    %c0_i32_0 = arith.constant 0 : i32
    %c0_i32_1 = arith.constant 0 : i32
    %c0_i32_2 = arith.constant 0 : i32
    return %c0_i32, %c0_i32_0, %c0_i32_1 : i32, i32, i32
  }
  func.func @transform_8(%arg0: i32, %arg1: memref<8x2xi32, #tpu.memory_space<smem>>) -> (i32, i32, i32) {
    %c0_i32 = arith.constant 0 : i32
    %c0_i32_0 = arith.constant 0 : i32
    %c0_i32_1 = arith.constant 0 : i32
    %c0_i32_2 = arith.constant 0 : i32
    return %c0_i32, %c0_i32_0, %c0_i32_1 : i32, i32, i32
  }
  func.func @transform_9(%arg0: i32, %arg1: memref<8x2xi32, #tpu.memory_space<smem>>) -> (i32, i32, i32) {
    %c0_i32 = arith.constant 0 : i32
    %c0_i32_0 = arith.constant 0 : i32
    %c0_i32_1 = arith.constant 0 : i32
    %c0_i32_2 = arith.constant 0 : i32
    return %c0_i32, %c0_i32_0, %c0_i32_1 : i32, i32, i32
  }
  func.func @transform_10(%arg0: i32, %arg1: memref<8x2xi32, #tpu.memory_space<smem>>) -> (i32, i32, i32) {
    %c0_i32 = arith.constant 0 : i32
    %c0_i32_0 = arith.constant 0 : i32
    %c0_i32_1 = arith.constant 0 : i32
    %c0_i32_2 = arith.constant 0 : i32
    return %c0_i32, %c0_i32_0, %c0_i32_1 : i32, i32, i32
  }
  func.func @transform_11(%arg0: i32, %arg1: memref<8x2xi32, #tpu.memory_space<smem>>) -> (i32, i32, i32) {
    %c0_i32 = arith.constant 0 : i32
    %c0_i32_0 = arith.constant 0 : i32
    %c0_i32_1 = arith.constant 0 : i32
    %c0_i32_2 = arith.constant 0 : i32
    return %c0_i32, %c0_i32_0, %c0_i32_1 : i32, i32, i32
  }
  func.func @transform_12(%arg0: i32, %arg1: memref<8x2xi32, #tpu.memory_space<smem>>) -> (i32, i32, i32) {
    %c0_i32 = arith.constant 0 : i32
    %c0_i32_0 = arith.constant 0 : i32
    %c0_i32_1 = arith.constant 0 : i32
    %c0_i32_2 = arith.constant 0 : i32
    return %c0_i32, %c0_i32_0, %c0_i32_1 : i32, i32, i32
  }
  func.func @transform_13(%arg0: i32, %arg1: memref<8x2xi32, #tpu.memory_space<smem>>) -> (i32, i32, i32) {
    %c0_i32 = arith.constant 0 : i32
    %c0_i32_0 = arith.constant 0 : i32
    %c0_i32_1 = arith.constant 0 : i32
    %c0_i32_2 = arith.constant 0 : i32
    return %c0_i32, %c0_i32_0, %c0_i32_1 : i32, i32, i32
  }
  func.func @transform_14(%arg0: i32, %arg1: memref<8x2xi32, #tpu.memory_space<smem>>) -> (i32, i32, i32) {
    %c0_i32 = arith.constant 0 : i32
    %c0_i32_0 = arith.constant 0 : i32
    %c0_i32_1 = arith.constant 0 : i32
    %c0_i32_2 = arith.constant 0 : i32
    return %c0_i32, %c0_i32_0, %c0_i32_1 : i32, i32, i32
  }
  func.func @transform_15(%arg0: i32, %arg1: memref<8x2xi32, #tpu.memory_space<smem>>) -> (i32, i32, i32) {
    %c0_i32 = arith.constant 0 : i32
    %c0_i32_0 = arith.constant 0 : i32
    %c0_i32_1 = arith.constant 0 : i32
    %c0_i32_2 = arith.constant 0 : i32
    return %c0_i32, %c0_i32_0, %c0_i32_1 : i32, i32, i32
  }
  func.func @transform_16(%arg0: i32, %arg1: memref<8x2xi32, #tpu.memory_space<smem>>) -> (i32, i32, i32) {
    %c0_i32 = arith.constant 0 : i32
    %c0_i32_0 = arith.constant 0 : i32
    %c0_i32_1 = arith.constant 0 : i32
    %c0_i32_2 = arith.constant 0 : i32
    return %c0_i32, %c0_i32_0, %c0_i32_1 : i32, i32, i32
  }
  func.func @transform_17(%arg0: i32, %arg1: memref<8x2xi32, #tpu.memory_space<smem>>) -> (i32, i32) {
    %c0_i32 = arith.constant 0 : i32
    %c0_i32_0 = arith.constant 0 : i32
    %c0_i32_1 = arith.constant 0 : i32
    return %c0_i32, %c0_i32_0 : i32, i32
  }
  func.func @transform_18(%arg0: i32, %arg1: memref<8x2xi32, #tpu.memory_space<smem>>) -> (i32, i32) {
    %c0_i32 = arith.constant 0 : i32
    %c0_i32_0 = arith.constant 0 : i32
    %c0_i32_1 = arith.constant 0 : i32
    return %c0_i32, %c0_i32_0 : i32, i32
  }
  func.func @transform_19(%arg0: i32, %arg1: memref<8x2xi32, #tpu.memory_space<smem>>) -> (i32, i32) {
    %c0_i32 = arith.constant 0 : i32
    %c0_i32_0 = arith.constant 0 : i32
    %c0_i32_1 = arith.constant 0 : i32
    return %c0_i32, %c0_i32_0 : i32, i32
  }
  func.func @transform_20(%arg0: i32, %arg1: memref<8x2xi32, #tpu.memory_space<smem>>) -> (i32, i32) {
    %c0_i32 = arith.constant 0 : i32
    %c0_i32_0 = arith.constant 0 : i32
    %c0_i32_1 = arith.constant 0 : i32
    return %c0_i32, %c0_i32_0 : i32, i32
  }
  func.func @transform_21(%arg0: i32, %arg1: memref<8x2xi32, #tpu.memory_space<smem>>) -> (i32, i32) {
    %c0_i32 = arith.constant 0 : i32
    %c0_i32_0 = arith.constant 0 : i32
    %c0_i32_1 = arith.constant 0 : i32
    return %c0_i32, %c0_i32_0 : i32, i32
  }
}

</mosaic_0001>

<llo_original>
// kernel: cls_model_forward.1
$region0: #{cls_model_forward.1}
  #allocation0 [shape = 'u32[]', space=smem, size = 0x4, offset = 0x4, fixed_abs, tag = 'smem constant byte address 0x4 - core index']
  #allocation1 [shape = 'u32[144,128]{1,0:T(1,128)}', space=vmem, size = 0x12000, scoped, tag = 'internal scratch']
  #allocation2 [shape = 's32[1]{0}', space=sflag, size = 0x4, scoped, tag = 'scoped memory for cls_model_forward.1']
  #allocation3 [shape = 'u8[4096]{0}', space=smem, size = 0x1000, scoped, tag = 'prefetched SMEM operand 0']
  %s0 = inlined_call_operand.vmem [shape: s32[8,2], index: 0, kind: input, shape index: {}]
  %s1 = inlined_call_operand.vmem [shape: f32[50,16], index: 1, kind: input, shape index: {}]
  %s2 = inlined_call_operand.vmem [shape: f32[3,16,32], index: 2, kind: input, shape index: {}]
  %s3 = inlined_call_operand.vmem [shape: f32[3,32,32], index: 3, kind: input, shape index: {}]
  %s4 = inlined_call_operand.vmem [shape: f32[3,1,32], index: 4, kind: input, shape index: {}]
  %s5 = inlined_call_operand.vmem [shape: f32[3,1,32], index: 5, kind: input, shape index: {}]
  %s6 = inlined_call_operand.vmem [shape: f32[3,16,32], index: 6, kind: input, shape index: {}]
  %s7 = inlined_call_operand.vmem [shape: f32[3,32,32], index: 7, kind: input, shape index: {}]
  %s8 = inlined_call_operand.vmem [shape: f32[3,1,32], index: 8, kind: input, shape index: {}]
  %s9 = inlined_call_operand.vmem [shape: f32[3,1,32], index: 9, kind: input, shape index: {}]
  %s10 = inlined_call_operand.vmem [shape: f32[3,64,32], index: 10, kind: input, shape index: {}]
  %s11 = inlined_call_operand.vmem [shape: f32[3,32,32], index: 11, kind: input, shape index: {}]
  %s12 = inlined_call_operand.vmem [shape: f32[3,1,32], index: 12, kind: input, shape index: {}]
  %s13 = inlined_call_operand.vmem [shape: f32[3,1,32], index: 13, kind: input, shape index: {}]
  %s14 = inlined_call_operand.vmem [shape: f32[3,64,32], index: 14, kind: input, shape index: {}]
  %s15 = inlined_call_operand.vmem [shape: f32[3,32,32], index: 15, kind: input, shape index: {}]
  %s16 = inlined_call_operand.vmem [shape: f32[3,1,32], index: 16, kind: input, shape index: {}]
  %s17 = inlined_call_operand.vmem [shape: f32[3,1,32], index: 17, kind: input, shape index: {}]
  %s18 = inlined_call_operand.vmem [shape: f32[64,32], index: 18, kind: input, shape index: {}]
  %s19 = inlined_call_operand.vmem [shape: f32[1,32], index: 19, kind: input, shape index: {}]
  %s20 = inlined_call_operand.vmem [shape: f32[32,4], index: 20, kind: input, shape index: {}]
  %s21 = inlined_call_operand.vmem [shape: f32[1,4], index: 21, kind: input, shape index: {}]
  %s22 = inlined_call_operand.hbm [shape: f32[2,4], index: 22, kind: output, shape index: {}]
  %s23 = sld [smem:[#allocation0]]
  $region94: #{cls_model_forward.1} parent=0
    _
  %s25 = ssub.s32 1, %s23
  %s26 = scalar_select 0, %s25, %s23
  %s27 = sshll.u32 %s0, 4
  %s28 = int_to_ptr.vmem [resolvable:$true] %s27
  %30 = dma.vmem_to_smem %s28, 128, [#allocation3], [#allocation2]
  %31 = dma.done [#allocation2], 128
  %32 = sfence
  $region1: #{cls_model_forward.1} parent=0
    #allocation4 [shape = 'u8[1024]{0}', space=vmem, size = 0x400, scoped, tag = 'output window, operand 0, single buffered']
    #allocation5 [shape = 's32[1]{0}', space=sflag, size = 0x4, scoped, tag = 'scoped memory for cls_model_forward.1']
    %33 = vsyncpa [#allocation5], 0
    // Predicated region
    $region2: #{cls_model_forward.1} parent=1 // pred_check
      _
    $region3: #{cls_model_forward.1} parent=1 // pred_check_branch
      %35 = sbr.rel (0) target = $region5
    $region4: #{cls_model_forward.1} parent=1 // pred_region
      _
    $region5: #{cls_model_forward.1} parent=1 // pred_fallthru
      _
    // Predicated region
    $region6: #{cls_model_forward.1} parent=1 // pred_check
      _
    $region7: #{cls_model_forward.1} parent=1 // pred_check_branch
      %37 = sbr.rel (0) target = $region9
    $region8: #{cls_model_forward.1} parent=1 // pred_region
      _
    $region9: #{cls_model_forward.1} parent=1 // pred_fallthru
      _
    // Predicated region
    $region10: #{cls_model_forward.1} parent=1 // pred_check
      _
    $region11: #{cls_model_forward.1} parent=1 // pred_check_branch
      %39 = sbr.rel (0) target = $region13
    $region12: #{cls_model_forward.1} parent=1 // pred_region
      _
    $region13: #{cls_model_forward.1} parent=1 // pred_fallthru
      _
    // Predicated region
    $region14: #{cls_model_forward.1} parent=1 // pred_check
      _
    $region15: #{cls_model_forward.1} parent=1 // pred_check_branch
      %41 = sbr.rel (0) target = $region17
    $region16: #{cls_model_forward.1} parent=1 // pred_region
      _
    $region17: #{cls_model_forward.1} parent=1 // pred_fallthru
      _
    // Predicated region
    $region18: #{cls_model_forward.1} parent=1 // pred_check
      _
    $region19: #{cls_model_forward.1} parent=1 // pred_check_branch
      %43 = sbr.rel (0) target = $region21
    $region20: #{cls_model_forward.1} parent=1 // pred_region
      _
    $region21: #{cls_model_forward.1} parent=1 // pred_fallthru
      _
    // Predicated region
    $region22: #{cls_model_forward.1} parent=1 // pred_check
      _
    $region23: #{cls_model_forward.1} parent=1 // pred_check_branch
      %45 = sbr.rel (0) target = $region25
    $region24: #{cls_model_forward.1} parent=1 // pred_region
      _
    $region25: #{cls_model_forward.1} parent=1 // pred_fallthru
      _
    // Predicated region
    $region26: #{cls_model_forward.1} parent=1 // pred_check
      _
    $region27: #{cls_model_forward.1} parent=1 // pred_check_branch
      %47 = sbr.rel (0) target = $region29
    $region28: #{cls_model_forward.1} parent=1 // pred_region
      _
    $region29: #{cls_model_forward.1} parent=1 // pred_fallthru
      _
    // Predicated region
    $region30: #{cls_model_forward.1} parent=1 // pred_check
      _
    $region31: #{cls_model_forward.1} parent=1 // pred_check_branch
      %49 = sbr.rel (0) target = $region33
    $region32: #{cls_model_forward.1} parent=1 // pred_region
      _
    $region33: #{cls_model_forward.1} parent=1 // pred_fallthru
      _
    // Predicated region
    $region34: #{cls_model_forward.1} parent=1 // pred_check
      _
    $region35: #{cls_model_forward.1} parent=1 // pred_check_branch
      %51 = sbr.rel (0) target = $region37
    $region36: #{cls_model_forward.1} parent=1 // pred_region
      _
    $region37: #{cls_model_forward.1} parent=1 // pred_fallthru
      _
    // Predicated region
    $region38: #{cls_model_forward.1} parent=1 // pred_check
      _
    $region39: #{cls_model_forward.1} parent=1 // pred_check_branch
      %53 = sbr.rel (0) target = $region41
    $region40: #{cls_model_forward.1} parent=1 // pred_region
      _
    $region41: #{cls_model_forward.1} parent=1 // pred_fallthru
      _
    // Predicated region
    $region42: #{cls_model_forward.1} parent=1 // pred_check
      _
    $region43: #{cls_model_forward.1} parent=1 // pred_check_branch
      %55 = sbr.rel (0) target = $region45
    $region44: #{cls_model_forward.1} parent=1 // pred_region
      _
    $region45: #{cls_model_forward.1} parent=1 // pred_fallthru
      _
    // Predicated region
    $region46: #{cls_model_forward.1} parent=1 // pred_check
      _
    $region47: #{cls_model_forward.1} parent=1 // pred_check_branch
      %57 = sbr.rel (0) target = $region49
    $region48: #{cls_model_forward.1} parent=1 // pred_region
      _
    $region49: #{cls_model_forward.1} parent=1 // pred_fallthru
      _
    // Predicated region
    $region50: #{cls_model_forward.1} parent=1 // pred_check
      _
    $region51: #{cls_model_forward.1} parent=1 // pred_check_branch
      %59 = sbr.rel (0) target = $region53
    $region52: #{cls_model_forward.1} parent=1 // pred_region
      _
    $region53: #{cls_model_forward.1} parent=1 // pred_fallthru
      _
    // Predicated region
    $region54: #{cls_model_forward.1} parent=1 // pred_check
      _
    $region55: #{cls_model_forward.1} parent=1 // pred_check_branch
      %61 = sbr.rel (0) target = $region57
    $region56: #{cls_model_forward.1} parent=1 // pred_region
      _
    $region57: #{cls_model_forward.1} parent=1 // pred_fallthru
      _
    // Predicated region
    $region58: #{cls_model_forward.1} parent=1 // pred_check
      _
    $region59: #{cls_model_forward.1} parent=1 // pred_check_branch
      %63 = sbr.rel (0) target = $region61
    $region60: #{cls_model_forward.1} parent=1 // pred_region
      _
    $region61: #{cls_model_forward.1} parent=1 // pred_fallthru
      _
    // Predicated region
    $region62: #{cls_model_forward.1} parent=1 // pred_check
      _
    $region63: #{cls_model_forward.1} parent=1 // pred_check_branch
      %65 = sbr.rel (0) target = $region65
    $region64: #{cls_model_forward.1} parent=1 // pred_region
      _
    $region65: #{cls_model_forward.1} parent=1 // pred_fallthru
      _
    // Predicated region
    $region66: #{cls_model_forward.1} parent=1 // pred_check
      _
    $region67: #{cls_model_forward.1} parent=1 // pred_check_branch
      %67 = sbr.rel (0) target = $region69
    $region68: #{cls_model_forward.1} parent=1 // pred_region
      _
    $region69: #{cls_model_forward.1} parent=1 // pred_fallthru
      _
    // Predicated region
    $region70: #{cls_model_forward.1} parent=1 // pred_check
      _
    $region71: #{cls_model_forward.1} parent=1 // pred_check_branch
      %69 = sbr.rel (0) target = $region73
    $region72: #{cls_model_forward.1} parent=1 // pred_region
      _
    $region73: #{cls_model_forward.1} parent=1 // pred_fallthru
      _
    // Predicated region
    $region74: #{cls_model_forward.1} parent=1 // pred_check
      _
    $region75: #{cls_model_forward.1} parent=1 // pred_check_branch
      %71 = sbr.rel (0) target = $region77
    $region76: #{cls_model_forward.1} parent=1 // pred_region
      _
    $region77: #{cls_model_forward.1} parent=1 // pred_fallthru
      _
    // Predicated region
    $region78: #{cls_model_forward.1} parent=1 // pred_check
      _
    $region79: #{cls_model_forward.1} parent=1 // pred_check_branch
      %73 = sbr.rel (0) target = $region81
    $region80: #{cls_model_forward.1} parent=1 // pred_region
      _
    $region81: #{cls_model_forward.1} parent=1 // pred_fallthru
      _
    // Predicated region
    $region82: #{cls_model_forward.1} parent=1 // pred_check
      _
    $region83: #{cls_model_forward.1} parent=1 // pred_check_branch
      %75 = sbr.rel (0) target = $region85
    $region84: #{cls_model_forward.1} parent=1 // pred_region
      _
    $region85: #{cls_model_forward.1} parent=1 // pred_fallthru
      _
    %v76 = vlaneseq
    %v77 = vand.u32 %v76, 127
    %s78 = sld [smem:[#allocation3]]
    %v79 = vstv %s78
    %vm80 = vcmp.eq.s32.totalorder %v77, %v79
    %v81 = vsel %vm80, 1, 0
    %v82 = vcvt.s32.f32 %v81
    %s83 = sld [smem:[#allocation3 + $0x1]]
    %v84 = vstv %s83
    %vm85 = vcmp.eq.s32.totalorder %v77, %v84
    %v86 = vsel %vm85, 1, 0
    %v87 = vcvt.s32.f32 %v86
    %s88 = sld [smem:[#allocation3 + $0x80]]
    %v89 = vstv %s88
    %vm90 = vcmp.eq.s32.totalorder %v77, %v89
    %v91 = vsel %vm90, 1, 0
    %v92 = vcvt.s32.f32 %v91
    %s93 = sld [smem:[#allocation3 + $0x81]]
    %v94 = vstv %s93
    %vm95 = vcmp.eq.s32.totalorder %v77, %v94
    %v96 = vsel %vm95, 1, 0
    %v97 = vcvt.s32.f32 %v96
    %s98 = sld [smem:[#allocation3 + $0x100]]
    %v99 = vstv %s98
    %vm100 = vcmp.eq.s32.totalorder %v77, %v99
    %v101 = vsel %vm100, 1, 0
    %v102 = vcvt.s32.f32 %v101
    %s103 = sld [smem:[#allocation3 + $0x101]]
    %v104 = vstv %s103
    %vm105 = vcmp.eq.s32.totalorder %v77, %v104
    %v106 = vsel %vm105, 1, 0
    %v107 = vcvt.s32.f32 %v106
    %s108 = sld [smem:[#allocation3 + $0x180]]
    %v109 = vstv %s108
    %vm110 = vcmp.eq.s32.totalorder %v77, %v109
    %v111 = vsel %vm110, 1, 0
    %v112 = vcvt.s32.f32 %v111
    %s113 = sld [smem:[#allocation3 + $0x181]]
    %v114 = vstv %s113
    %vm115 = vcmp.eq.s32.totalorder %v77, %v114
    %v116 = vsel %vm115, 1, 0
    %v117 = vcvt.s32.f32 %v116
    %s118 = sld [smem:[#allocation3 + $0x200]]
    %v119 = vstv %s118
    %vm120 = vcmp.eq.s32.totalorder %v77, %v119
    %v121 = vsel %vm120, 1, 0
    %v122 = vcvt.s32.f32 %v121
    %s123 = sld [smem:[#allocation3 + $0x201]]
    %v124 = vstv %s123
    %vm125 = vcmp.eq.s32.totalorder %v77, %v124
    %v126 = vsel %vm125, 1, 0
    %v127 = vcvt.s32.f32 %v126
    %s128 = sld [smem:[#allocation3 + $0x280]]
    %v129 = vstv %s128
    %vm130 = vcmp.eq.s32.totalorder %v77, %v129
    %v131 = vsel %vm130, 1, 0
    %v132 = vcvt.s32.f32 %v131
    %s133 = sld [smem:[#allocation3 + $0x281]]
    %v134 = vstv %s133
    %vm135 = vcmp.eq.s32.totalorder %v77, %v134
    %v136 = vsel %vm135, 1, 0
    %v137 = vcvt.s32.f32 %v136
    %s138 = sld [smem:[#allocation3 + $0x300]]
    %v139 = vstv %s138
    %vm140 = vcmp.eq.s32.totalorder %v77, %v139
    %v141 = vsel %vm140, 1, 0
    %v142 = vcvt.s32.f32 %v141
    %s143 = sld [smem:[#allocation3 + $0x301]]
    %v144 = vstv %s143
    %vm145 = vcmp.eq.s32.totalorder %v77, %v144
    %v146 = vsel %vm145, 1, 0
    %v147 = vcvt.s32.f32 %v146
    %s148 = sld [smem:[#allocation3 + $0x380]]
    %v149 = vstv %s148
    %vm150 = vcmp.eq.s32.totalorder %v77, %v149
    %v151 = vsel %vm150, 1, 0
    %v152 = vcvt.s32.f32 %v151
    %s153 = sld [smem:[#allocation3 + $0x381]]
    %v154 = vstv %s153
    %vm155 = vcmp.eq.s32.totalorder %v77, %v154
    %v156 = vsel %vm155, 1, 0
    %v157 = vcvt.s32.f32 %v156
    %vm158 = vcmask 1040384
    %v159 = vsel %vm158, %v82, %v87
    %vm160 = vcmask 1041408
    %v161 = vsel %vm160, %v159, %v92
    %vm162 = vcmask 1042432
    %v163 = vsel %vm162, %v161, %v97
    %vm164 = vcmask 1043456
    %v165 = vsel %vm164, %v163, %v102
    %vm166 = vcmask 1044480
    %v167 = vsel %vm166, %v165, %v107
    %vm168 = vcmask 1045504
    %v169 = vsel %vm168, %v167, %v112
    %vm170 = vcmask 1046528
    %v171 = vsel %vm170, %v169, %v117
    %v172 = vsel %vm158, %v122, %v127
    %v173 = vsel %vm160, %v172, %v132
    %v174 = vsel %vm162, %v173, %v137
    %v175 = vsel %vm164, %v174, %v142
    %v176 = vsel %vm166, %v175, %v147
    %v177 = vsel %vm168, %v176, %v152
    %v178 = vsel %vm170, %v177, %v157
    %v179 = vld [vmem:[%s1] sm:$0xff]
    %v180 = vld [vmem:[%s1 + $0x8] sm:$0xff]
    %v181 = vld [vmem:[%s1 + $0x10] sm:$0xff]
    %v182 = vld [vmem:[%s1 + $0x18] sm:$0xff]
    %v183 = vld [vmem:[%s1 + $0x20] sm:$0xff]
    %v184 = vld [vmem:[%s1 + $0x28] sm:$0xff]
    %v185 = vld [vmem:[%s1 + $0x30] sm:$0x3]
    %vm186 = vcmask 408576
    %v188 = vsel %vm186, %v171, 0
    %v191 = vsel %vm186, %v178, 0
    %v194 = vsel %vm160, %v185, 0
    %196 = vmatprep.subr.mxu0 0.0
    %197 = vmatpush1.msra.mxu0 %v179
    %198 = vmatprep.subr.mxu0 0.0
    %199 = vmatpush1.msra.mxu0 %v180
    %200 = vmatprep.subr.mxu0 0.0
    %201 = vmatpush1.msra.mxu0 %v181
    %202 = vmatprep.subr.mxu0 0.0
    %203 = vmatpush1.msra.mxu0 %v182
    %204 = vmatprep.subr.mxu0 0.0
    %205 = vmatpush1.msra.mxu0 %v183
    %206 = vmatprep.subr.mxu0 0.0
    %207 = vmatpush1.msra.mxu0 %v184
    %208 = vmatprep.subr.mxu0 0.0
    %209 = vmatpush1.msra.mxu0 %v194
    %210 = vmatprep.subr.mxu0 0.0
    %211 = vmatpush1.msra.mxu0 0.0
    %212 = vmatprep.subr.mxu0 0.0
    %213 = vmatpush1.msra.mxu0 0.0
    %214 = vmatprep.subr.mxu0 0.0
    %215 = vmatpush1.msra.mxu0 0.0
    %216 = vmatprep.subr.mxu0 0.0
    %217 = vmatpush1.msra.mxu0 0.0
    %218 = vmatprep.subr.mxu0 0.0
    %219 = vmatpush1.msra.mxu0 0.0
    %220 = vmatprep.subr.mxu0 0.0
    %221 = vmatpush1.msra.mxu0 0.0
    %222 = vmatprep.subr.mxu0 0.0
    %223 = vmatpush1.msra.mxu0 0.0
    %224 = vmatprep.subr.mxu0 0.0
    %225 = vmatpush1.msra.mxu0 0.0
    %226 = vmatprep.subr.mxu0 0.0
    %227 = vmatpush1.msra.mxu0 0.0
    %228 = vmatprep.subr.mxu0 0.0
    %229 = vmatpush1.msra.mxu0 0.0
    %230 = vmatprep.subr.mxu0 0.0
    %231 = vmatpush1.msra.mxu0 0.0
    %232 = vmatprep.subr.mxu0 0.0
    %233 = vmatpush1.msra.mxu0 0.0
    %234 = vmatprep.subr.mxu0 0.0
    %235 = vmatpush1.msra.mxu0 0.0
    %236 = vmatprep.subr.mxu0 0.0
    %237 = vmatpush1.msra.mxu0 0.0
    %238 = vmatprep.subr.mxu0 0.0
    %239 = vmatpush1.msra.mxu0 0.0
    %240 = vmatprep.subr.mxu0 0.0
    %241 = vmatpush1.msra.mxu0 0.0
    %242 = vmatprep.subr.mxu0 0.0
    %243 = vmatpush1.msra.mxu0 0.0
    %244 = vmatprep.subr.mxu0 0.0
    %245 = vmatpush1.msra.mxu0 0.0
    %246 = vmatprep.subr.mxu0 0.0
    %247 = vmatpush1.msra.mxu0 0.0
    %248 = vmatprep.subr.mxu0 0.0
    %249 = vmatpush1.msra.mxu0 0.0
    %250 = vmatprep.subr.mxu0 0.0
    %251 = vmatpush1.msra.mxu0 0.0
    %252 = vmatprep.subr.mxu0 0.0
    %253 = vmatpush1.msra.mxu0 0.0
    %254 = vmatprep.subr.mxu0 0.0
    %255 = vmatpush1.msra.mxu0 0.0
    %256 = vmatprep.subr.mxu0 0.0
    %257 = vmatpush1.msra.mxu0 0.0
    %258 = vmatprep.subr.mxu0 0.0
    %259 = vmatpush1.msra.mxu0 0.0
    %260 = vmatprep.mubr.f32.mxu0 0.0
    %261 = vmatmul.mubr.f32.gmra.mrb[0].mxu0 %v188
    %v262 = vpop.f32.mrb[0].mxu0
    %v263 = vadd.f32 0.0, %v262
    %v264 = vpop.f32.mrb[0].mxu0
    %265 = vmatprep.mubr.f32.mxu0 0.0
    %266 = vmatmul.mubr.f32.gmra.mrb[0].mxu0 %v191
    %v267 = vpop.f32.mrb[0].mxu0
    %v268 = vadd.f32 0.0, %v267
    %v269 = vpop.f32.mrb[0].mxu0
    %270 = vdwg.mxu0
    %v271 = vld [vmem:[%s2] sm:$0xff]
    %v272 = vld [vmem:[%s2 + $0x8] sm:$0xff]
    %v273 = vld [vmem:[%s4] sm:$0x1]
    %v275 = vlaneseq
    %v276 = vshrl.u32 %v275, 7
    %v277 = vsub.s32 0, %v276
    %v278 = vrot.slane %v273, %v277
    %vm280 = vcmask 130048
    %v282 = vsel %vm280, %v263, 0
    %v285 = vsel %vm280, %v268, 0
    %287 = vmatprep.subr.mxu0 0.0
    %288 = vmatpush1.msra.mxu0 %v271
    %289 = vmatprep.subr.mxu0 0.0
    %290 = vmatpush1.msra.mxu0 %v272
    %291 = vmatprep.subr.mxu0 0.0
    %292 = vmatpush1.msra.mxu0 0.0
    %293 = vmatprep.subr.mxu0 0.0
    %294 = vmatpush1.msra.mxu0 0.0
    %295 = vmatprep.subr.mxu0 0.0
    %296 = vmatpush1.msra.mxu0 0.0
    %297 = vmatprep.subr.mxu0 0.0
    %298 = vmatpush1.msra.mxu0 0.0
    %299 = vmatprep.subr.mxu0 0.0
    %300 = vmatpush1.msra.mxu0 0.0
    %301 = vmatprep.subr.mxu0 0.0
    %302 = vmatpush1.msra.mxu0 0.0
    %303 = vmatprep.subr.mxu0 0.0
    %304 = vmatpush1.msra.mxu0 0.0
    %305 = vmatprep.subr.mxu0 0.0
    %306 = vmatpush1.msra.mxu0 0.0
    %307 = vmatprep.subr.mxu0 0.0
    %308 = vmatpush1.msra.mxu0 0.0
    %309 = vmatprep.subr.mxu0 0.0
    %310 = vmatpush1.msra.mxu0 0.0
    %311 = vmatprep.subr.mxu0 0.0
    %312 = vmatpush1.msra.mxu0 0.0
    %313 = vmatprep.subr.mxu0 0.0
    %314 = vmatpush1.msra.mxu0 0.0
    %315 = vmatprep.subr.mxu0 0.0
    %316 = vmatpush1.msra.mxu0 0.0
    %317 = vmatprep.subr.mxu0 0.0
    %318 = vmatpush1.msra.mxu0 0.0
    %319 = vmatprep.subr.mxu0 0.0
    %320 = vmatpush1.msra.mxu0 0.0
    %321 = vmatprep.subr.mxu0 0.0
    %322 = vmatpush1.msra.mxu0 0.0
    %323 = vmatprep.subr.mxu0 0.0
    %324 = vmatpush1.msra.mxu0 0.0
    %325 = vmatprep.subr.mxu0 0.0
    %326 = vmatpush1.msra.mxu0 0.0
    %327 = vmatprep.subr.mxu0 0.0
    %328 = vmatpush1.msra.mxu0 0.0
    %329 = vmatprep.subr.mxu0 0.0
    %330 = vmatpush1.msra.mxu0 0.0
    %331 = vmatprep.subr.mxu0 0.0
    %332 = vmatpush1.msra.mxu0 0.0
    %333 = vmatprep.subr.mxu0 0.0
    %334 = vmatpush1.msra.mxu0 0.0
    %335 = vmatprep.subr.mxu0 0.0
    %336 = vmatpush1.msra.mxu0 0.0
    %337 = vmatprep.subr.mxu0 0.0
    %338 = vmatpush1.msra.mxu0 0.0
    %339 = vmatprep.subr.mxu0 0.0
    %340 = vmatpush1.msra.mxu0 0.0
    %341 = vmatprep.subr.mxu0 0.0
    %342 = vmatpush1.msra.mxu0 0.0
    %343 = vmatprep.subr.mxu0 0.0
    %344 = vmatpush1.msra.mxu0 0.0
    %345 = vmatprep.subr.mxu0 0.0
    %346 = vmatpush1.msra.mxu0 0.0
    %347 = vmatprep.subr.mxu0 0.0
    %348 = vmatpush1.msra.mxu0 0.0
    %349 = vmatprep.subr.mxu0 0.0
    %350 = vmatpush1.msra.mxu0 0.0
    %351 = vmatprep.mubr.f32.mxu0 0.0
    %352 = vmatmul.mubr.f32.gmra.mrb[0].mxu0 %v282
    %v353 = vpop.f32.mrb[0].mxu0
    %v354 = vadd.f32 %v278, %v353
    %v355 = vpop.f32.mrb[0].mxu0
    %356 = vmatprep.mubr.f32.mxu0 0.0
    %357 = vmatmul.mubr.f32.gmra.mrb[0].mxu0 %v285
    %v358 = vpop.f32.mrb[0].mxu0
    %v359 = vadd.f32 %v278, %v358
    %v360 = vpop.f32.mrb[0].mxu0
    %361 = vdwg.mxu0
    %v362 = vld [vmem:[%s5] sm:$0x1]
    %v364 = vlaneseq
    %v365 = vshrl.u32 %v364, 7
    %v366 = vsub.s32 0, %v365
    %v367 = vrot.slane %v362, %v366
    %v369 = vadd.f32 %v354, %v367
    %v370 = vadd.f32 %v359, %v367
    %v373 = vcombine.high %v369, %v369
    %v375 = vunpack.c.l.s4 1983009808
    %v376 = vunpack.c.0.s8 %v375
    %v377 = vlaneseq
    %v378 = vshrl.u32 %v377, 7
    %v379 = vsub.s32 %v376, %v378
    %v380 = vrot.slane %v369, %v379
    %v382 = vunpack.c.l.s4 1983009808
    %v383 = vunpack.c.0.s8 %v382
    %v384 = vlaneseq
    %v385 = vshrl.u32 %v384, 7
    %v386 = vsub.s32 %v383, %v385
    %v387 = vrot.slane %v373, %v386
    %v388 = vcombine.high %v380, %v380
    %v389 = vcombine.high %v387, %v387
    %v390 = vcombine.high %v370, %v370
    %v392 = vunpack.c.l.s4 1983009808
    %v393 = vunpack.c.0.s8 %v392
    %v394 = vlaneseq
    %v395 = vshrl.u32 %v394, 7
    %v396 = vsub.s32 %v393, %v395
    %v397 = vrot.slane %v370, %v396
    %v399 = vunpack.c.l.s4 1983009808
    %v400 = vunpack.c.0.s8 %v399
    %v401 = vlaneseq
    %v402 = vshrl.u32 %v401, 7
    %v403 = vsub.s32 %v400, %v402
    %v404 = vrot.slane %v390, %v403
    %v405 = vcombine.high %v397, %v397
    %v406 = vcombine.high %v404, %v404
    %s415 = scalar_lea.vmem %s2, 16
    %v416 = vld [vmem:[%s415] sm:$0xff]
    %v417 = vld [vmem:[%s415 + $0x8] sm:$0xff]
    %s418 = scalar_lea.vmem %s4, 1
    %v419 = vld [vmem:[%s418] sm:$0x1]
    %v421 = vlaneseq
    %v422 = vshrl.u32 %v421, 7
    %v423 = vsub.s32 0, %v422
    %v424 = vrot.slane %v419, %v423
    %426 = vmatprep.subr.mxu0 0.0
    %427 = vmatpush1.msra.mxu0 %v416
    %428 = vmatprep.subr.mxu0 0.0
    %429 = vmatpush1.msra.mxu0 %v417
    %430 = vmatprep.subr.mxu0 0.0
    %431 = vmatpush1.msra.mxu0 0.0
    %432 = vmatprep.subr.mxu0 0.0
    %433 = vmatpush1.msra.mxu0 0.0
    %434 = vmatprep.subr.mxu0 0.0
    %435 = vmatpush1.msra.mxu0 0.0
    %436 = vmatprep.subr.mxu0 0.0
    %437 = vmatpush1.msra.mxu0 0.0
    %438 = vmatprep.subr.mxu0 0.0
    %439 = vmatpush1.msra.mxu0 0.0
    %440 = vmatprep.subr.mxu0 0.0
    %441 = vmatpush1.msra.mxu0 0.0
    %442 = vmatprep.subr.mxu0 0.0
    %443 = vmatpush1.msra.mxu0 0.0
    %444 = vmatprep.subr.mxu0 0.0
    %445 = vmatpush1.msra.mxu0 0.0
    %446 = vmatprep.subr.mxu0 0.0
    %447 = vmatpush1.msra.mxu0 0.0
    %448 = vmatprep.subr.mxu0 0.0
    %449 = vmatpush1.msra.mxu0 0.0
    %450 = vmatprep.subr.mxu0 0.0
    %451 = vmatpush1.msra.mxu0 0.0
    %452 = vmatprep.subr.mxu0 0.0
    %453 = vmatpush1.msra.mxu0 0.0
    %454 = vmatprep.subr.mxu0 0.0
    %455 = vmatpush1.msra.mxu0 0.0
    %456 = vmatprep.subr.mxu0 0.0
    %457 = vmatpush1.msra.mxu0 0.0
    %458 = vmatprep.subr.mxu0 0.0
    %459 = vmatpush1.msra.mxu0 0.0
    %460 = vmatprep.subr.mxu0 0.0
    %461 = vmatpush1.msra.mxu0 0.0
    %462 = vmatprep.subr.mxu0 0.0
    %463 = vmatpush1.msra.mxu0 0.0
    %464 = vmatprep.subr.mxu0 0.0
    %465 = vmatpush1.msra.mxu0 0.0
    %466 = vmatprep.subr.mxu0 0.0
    %467 = vmatpush1.msra.mxu0 0.0
    %468 = vmatprep.subr.mxu0 0.0
    %469 = vmatpush1.msra.mxu0 0.0
    %470 = vmatprep.subr.mxu0 0.0
    %471 = vmatpush1.msra.mxu0 0.0
    %472 = vmatprep.subr.mxu0 0.0
    %473 = vmatpush1.msra.mxu0 0.0
    %474 = vmatprep.subr.mxu0 0.0
    %475 = vmatpush1.msra.mxu0 0.0
    %476 = vmatprep.subr.mxu0 0.0
    %477 = vmatpush1.msra.mxu0 0.0
    %478 = vmatprep.subr.mxu0 0.0
    %479 = vmatpush1.msra.mxu0 0.0
    %480 = vmatprep.subr.mxu0 0.0
    %481 = vmatpush1.msra.mxu0 0.0
    %482 = vmatprep.subr.mxu0 0.0
    %483 = vmatpush1.msra.mxu0 0.0
    %484 = vmatprep.subr.mxu0 0.0
    %485 = vmatpush1.msra.mxu0 0.0
    %486 = vmatprep.subr.mxu0 0.0
    %487 = vmatpush1.msra.mxu0 0.0
    %488 = vmatprep.subr.mxu0 0.0
    %489 = vmatpush1.msra.mxu0 0.0
    %490 = vmatprep.mubr.f32.mxu0 0.0
    %491 = vmatmul.mubr.f32.gmra.mrb[0].mxu0 %v282
    %v492 = vpop.f32.mrb[0].mxu0
    %v493 = vadd.f32 %v424, %v492
    %v494 = vpop.f32.mrb[0].mxu0
    %495 = vmatprep.mubr.f32.mxu0 0.0
    %496 = vmatmul.mubr.f32.gmra.mrb[0].mxu0 %v285
    %v497 = vpop.f32.mrb[0].mxu0
    %v498 = vadd.f32 %v424, %v497
    %v499 = vpop.f32.mrb[0].mxu0
    %500 = vdwg.mxu0
    %s501 = scalar_lea.vmem %s5, 1
    %v502 = vld [vmem:[%s501] sm:$0x1]
    %v504 = vlaneseq
    %v505 = vshrl.u32 %v504, 7
    %v506 = vsub.s32 0, %v505
    %v507 = vrot.slane %v502, %v506
    %v509 = vadd.f32 %v493, %v507
    %v510 = vadd.f32 %v498, %v507
    %v513 = vcombine.high %v509, %v509
    %v515 = vunpack.c.l.s4 1983009808
    %v516 = vunpack.c.0.s8 %v515
    %v517 = vlaneseq
    %v518 = vshrl.u32 %v517, 7
    %v519 = vsub.s32 %v516, %v518
    %v520 = vrot.slane %v509, %v519
    %v522 = vunpack.c.l.s4 1983009808
    %v523 = vunpack.c.0.s8 %v522
    %v524 = vlaneseq
    %v525 = vshrl.u32 %v524, 7
    %v526 = vsub.s32 %v523, %v525
    %v527 = vrot.slane %v513, %v526
    %v528 = vcombine.high %v520, %v520
    %v529 = vcombine.high %v527, %v527
    %v530 = vcombine.high %v510, %v510
    %v532 = vunpack.c.l.s4 1983009808
    %v533 = vunpack.c.0.s8 %v532
    %v534 = vlaneseq
    %v535 = vshrl.u32 %v534, 7
    %v536 = vsub.s32 %v533, %v535
    %v537 = vrot.slane %v510, %v536
    %v539 = vunpack.c.l.s4 1983009808
    %v540 = vunpack.c.0.s8 %v539
    %v541 = vlaneseq
    %v542 = vshrl.u32 %v541, 7
    %v543 = vsub.s32 %v540, %v542
    %v544 = vrot.slane %v530, %v543
    %v545 = vcombine.high %v537, %v537
    %v546 = vcombine.high %v544, %v544
    %s555 = scalar_lea.vmem %s2, 32
    %v556 = vld [vmem:[%s555] sm:$0xff]
    %v557 = vld [vmem:[%s555 + $0x8] sm:$0xff]
    %s558 = scalar_lea.vmem %s4, 2
    %v559 = vld [vmem:[%s558] sm:$0x1]
    %v561 = vlaneseq
    %v562 = vshrl.u32 %v561, 7
    %v563 = vsub.s32 0, %v562
    %v564 = vrot.slane %v559, %v563
    %566 = vmatprep.subr.mxu0 0.0
    %567 = vmatpush1.msra.mxu0 %v556
    %568 = vmatprep.subr.mxu0 0.0
    %569 = vmatpush1.msra.mxu0 %v557
    %570 = vmatprep.subr.mxu0 0.0
    %571 = vmatpush1.msra.mxu0 0.0
    %572 = vmatprep.subr.mxu0 0.0
    %573 = vmatpush1.msra.mxu0 0.0
    %574 = vmatprep.subr.mxu0 0.0
    %575 = vmatpush1.msra.mxu0 0.0
    %576 = vmatprep.subr.mxu0 0.0
    %577 = vmatpush1.msra.mxu0 0.0
    %578 = vmatprep.subr.mxu0 0.0
    %579 = vmatpush1.msra.mxu0 0.0
    %580 = vmatprep.subr.mxu0 0.0
    %581 = vmatpush1.msra.mxu0 0.0
    %582 = vmatprep.subr.mxu0 0.0
    %583 = vmatpush1.msra.mxu0 0.0
    %584 = vmatprep.subr.mxu0 0.0
    %585 = vmatpush1.msra.mxu0 0.0
    %586 = vmatprep.subr.mxu0 0.0
    %587 = vmatpush1.msra.mxu0 0.0
    %588 = vmatprep.subr.mxu0 0.0
    %589 = vmatpush1.msra.mxu0 0.0
    %590 = vmatprep.subr.mxu0 0.0
    %591 = vmatpush1.msra.mxu0 0.0
    %592 = vmatprep.subr.mxu0 0.0
    %593 = vmatpush1.msra.mxu0 0.0
    %594 = vmatprep.subr.mxu0 0.0
    %595 = vmatpush1.msra.mxu0 0.0
    %596 = vmatprep.subr.mxu0 0.0
    %597 = vmatpush1.msra.mxu0 0.0
    %598 = vmatprep.subr.mxu0 0.0
    %599 = vmatpush1.msra.mxu0 0.0
    %600 = vmatprep.subr.mxu0 0.0
    %601 = vmatpush1.msra.mxu0 0.0
    %602 = vmatprep.subr.mxu0 0.0
    %603 = vmatpush1.msra.mxu0 0.0
    %604 = vmatprep.subr.mxu0 0.0
    %605 = vmatpush1.msra.mxu0 0.0
    %606 = vmatprep.subr.mxu0 0.0
    %607 = vmatpush1.msra.mxu0 0.0
    %608 = vmatprep.subr.mxu0 0.0
    %609 = vmatpush1.msra.mxu0 0.0
    %610 = vmatprep.subr.mxu0 0.0
    %611 = vmatpush1.msra.mxu0 0.0
    %612 = vmatprep.subr.mxu0 0.0
    %613 = vmatpush1.msra.mxu0 0.0
    %614 = vmatprep.subr.mxu0 0.0
    %615 = vmatpush1.msra.mxu0 0.0
    %616 = vmatprep.subr.mxu0 0.0
    %617 = vmatpush1.msra.mxu0 0.0
    %618 = vmatprep.subr.mxu0 0.0
    %619 = vmatpush1.msra.mxu0 0.0
    %620 = vmatprep.subr.mxu0 0.0
    %621 = vmatpush1.msra.mxu0 0.0
    %622 = vmatprep.subr.mxu0 0.0
    %623 = vmatpush1.msra.mxu0 0.0
    %624 = vmatprep.subr.mxu0 0.0
    %625 = vmatpush1.msra.mxu0 0.0
    %626 = vmatprep.subr.mxu0 0.0
    %627 = vmatpush1.msra.mxu0 0.0
    %628 = vmatprep.subr.mxu0 0.0
    %629 = vmatpush1.msra.mxu0 0.0
    %630 = vmatprep.mubr.f32.mxu0 0.0
    %631 = vmatmul.mubr.f32.gmra.mrb[0].mxu0 %v282
    %v632 = vpop.f32.mrb[0].mxu0
    %v633 = vadd.f32 %v564, %v632
    %v634 = vpop.f32.mrb[0].mxu0
    %635 = vmatprep.mubr.f32.mxu0 0.0
    %636 = vmatmul.mubr.f32.gmra.mrb[0].mxu0 %v285
    %v637 = vpop.f32.mrb[0].mxu0
    %v638 = vadd.f32 %v564, %v637
    %v639 = vpop.f32.mrb[0].mxu0
    %640 = vdwg.mxu0
    %v643 = vcombine.high %v633, %v633
    %v645 = vunpack.c.l.s4 1983009808
    %v646 = vunpack.c.0.s8 %v645
    %v647 = vlaneseq
    %v648 = vshrl.u32 %v647, 7
    %v649 = vsub.s32 %v646, %v648
    %v650 = vrot.slane %v633, %v649
    %v652 = vunpack.c.l.s4 1983009808
    %v653 = vunpack.c.0.s8 %v652
    %v654 = vlaneseq
    %v655 = vshrl.u32 %v654, 7
    %v656 = vsub.s32 %v653, %v655
    %v657 = vrot.slane %v643, %v656
    %v658 = vcombine.high %v650, %v650
    %v659 = vcombine.high %v657, %v657
    %v660 = vcombine.high %v638, %v638
    %v662 = vunpack.c.l.s4 1983009808
    %v663 = vunpack.c.0.s8 %v662
    %v664 = vlaneseq
    %v665 = vshrl.u32 %v664, 7
    %v666 = vsub.s32 %v663, %v665
    %v667 = vrot.slane %v638, %v666
    %v669 = vunpack.c.l.s4 1983009808
    %v670 = vunpack.c.0.s8 %v669
    %v671 = vlaneseq
    %v672 = vshrl.u32 %v671, 7
    %v673 = vsub.s32 %v670, %v672
    %v674 = vrot.slane %v660, %v673
    %v675 = vcombine.high %v667, %v667
    %v676 = vcombine.high %v674, %v674
    %v685 = vld [vmem:[%s6] sm:$0xff]
    %v686 = vld [vmem:[%s6 + $0x8] sm:$0xff]
    %v687 = vld [vmem:[%s8] sm:$0x1]
    %v689 = vlaneseq
    %v690 = vshrl.u32 %v689, 7
    %v691 = vsub.s32 0, %v690
    %v692 = vrot.slane %v687, %v691
    %694 = vmatprep.subr.mxu0 0.0
    %695 = vmatpush1.msra.mxu0 %v685
    %696 = vmatprep.subr.mxu0 0.0
    %697 = vmatpush1.msra.mxu0 %v686
    %698 = vmatprep.subr.mxu0 0.0
    %699 = vmatpush1.msra.mxu0 0.0
    %700 = vmatprep.subr.mxu0 0.0
    %701 = vmatpush1.msra.mxu0 0.0
    %702 = vmatprep.subr.mxu0 0.0
    %703 = vmatpush1.msra.mxu0 0.0
    %704 = vmatprep.subr.mxu0 0.0
    %705 = vmatpush1.msra.mxu0 0.0
    %706 = vmatprep.subr.mxu0 0.0
    %707 = vmatpush1.msra.mxu0 0.0
    %708 = vmatprep.subr.mxu0 0.0
    %709 = vmatpush1.msra.mxu0 0.0
    %710 = vmatprep.subr.mxu0 0.0
    %711 = vmatpush1.msra.mxu0 0.0
    %712 = vmatprep.subr.mxu0 0.0
    %713 = vmatpush1.msra.mxu0 0.0
    %714 = vmatprep.subr.mxu0 0.0
    %715 = vmatpush1.msra.mxu0 0.0
    %716 = vmatprep.subr.mxu0 0.0
    %717 = vmatpush1.msra.mxu0 0.0
    %718 = vmatprep.subr.mxu0 0.0
    %719 = vmatpush1.msra.mxu0 0.0
    %720 = vmatprep.subr.mxu0 0.0
    %721 = vmatpush1.msra.mxu0 0.0
    %722 = vmatprep.subr.mxu0 0.0
    %723 = vmatpush1.msra.mxu0 0.0
    %724 = vmatprep.subr.mxu0 0.0
    %725 = vmatpush1.msra.mxu0 0.0
    %726 = vmatprep.subr.mxu0 0.0
    %727 = vmatpush1.msra.mxu0 0.0
    %728 = vmatprep.subr.mxu0 0.0
    %729 = vmatpush1.msra.mxu0 0.0
    %730 = vmatprep.subr.mxu0 0.0
    %731 = vmatpush1.msra.mxu0 0.0
    %732 = vmatprep.subr.mxu0 0.0
    %733 = vmatpush1.msra.mxu0 0.0
    %734 = vmatprep.subr.mxu0 0.0
    %735 = vmatpush1.msra.mxu0 0.0
    %736 = vmatprep.subr.mxu0 0.0
    %737 = vmatpush1.msra.mxu0 0.0
    %738 = vmatprep.subr.mxu0 0.0
    %739 = vmatpush1.msra.mxu0 0.0
    %740 = vmatprep.subr.mxu0 0.0
    %741 = vmatpush1.msra.mxu0 0.0
    %742 = vmatprep.subr.mxu0 0.0
    %743 = vmatpush1.msra.mxu0 0.0
    %744 = vmatprep.subr.mxu0 0.0
    %745 = vmatpush1.msra.mxu0 0.0
    %746 = vmatprep.subr.mxu0 0.0
    %747 = vmatpush1.msra.mxu0 0.0
    %748 = vmatprep.subr.mxu0 0.0
    %749 = vmatpush1.msra.mxu0 0.0
    %750 = vmatprep.subr.mxu0 0.0
    %751 = vmatpush1.msra.mxu0 0.0
    %752 = vmatprep.subr.mxu0 0.0
    %753 = vmatpush1.msra.mxu0 0.0
    %754 = vmatprep.subr.mxu0 0.0
    %755 = vmatpush1.msra.mxu0 0.0
    %756 = vmatprep.subr.mxu0 0.0
    %757 = vmatpush1.msra.mxu0 0.0
    %758 = vmatprep.mubr.f32.mxu0 0.0
    %759 = vmatmul.mubr.f32.gmra.mrb[0].mxu0 %v282
    %v760 = vpop.f32.mrb[0].mxu0
    %v761 = vadd.f32 %v692, %v760
    %v762 = vpop.f32.mrb[0].mxu0
    %763 = vmatprep.mubr.f32.mxu0 0.0
    %764 = vmatmul.mubr.f32.gmra.mrb[0].mxu0 %v285
    %v765 = vpop.f32.mrb[0].mxu0
    %v766 = vadd.f32 %v692, %v765
    %v767 = vpop.f32.mrb[0].mxu0
    %768 = vdwg.mxu0
    %v769 = vld [vmem:[%s9] sm:$0x1]
    %v771 = vlaneseq
    %v772 = vshrl.u32 %v771, 7
    %v773 = vsub.s32 0, %v772
    %v774 = vrot.slane %v769, %v773
    %v776 = vadd.f32 %v761, %v774
    %v777 = vadd.f32 %v766, %v774
    %v780 = vcombine.high %v776, %v776
    %v782 = vunpack.c.l.s4 1983009808
    %v783 = vunpack.c.0.s8 %v782
    %v784 = vlaneseq
    %v785 = vshrl.u32 %v784, 7
    %v786 = vsub.s32 %v783, %v785
    %v787 = vrot.slane %v776, %v786
    %v789 = vunpack.c.l.s4 1983009808
    %v790 = vunpack.c.0.s8 %v789
    %v791 = vlaneseq
    %v792 = vshrl.u32 %v791, 7
    %v793 = vsub.s32 %v790, %v792
    %v794 = vrot.slane %v780, %v793
    %v795 = vcombine.high %v787, %v787
    %v796 = vcombine.high %v794, %v794
    %v797 = vcombine.high %v777, %v777
    %v799 = vunpack.c.l.s4 1983009808
    %v800 = vunpack.c.0.s8 %v799
    %v801 = vlaneseq
    %v802 = vshrl.u32 %v801, 7
    %v803 = vsub.s32 %v800, %v802
    %v804 = vrot.slane %v777, %v803
    %v806 = vunpack.c.l.s4 1983009808
    %v807 = vunpack.c.0.s8 %v806
    %v808 = vlaneseq
    %v809 = vshrl.u32 %v808, 7
    %v810 = vsub.s32 %v807, %v809
    %v811 = vrot.slane %v797, %v810
    %v812 = vcombine.high %v804, %v804
    %v813 = vcombine.high %v811, %v811
    %s822 = scalar_lea.vmem %s6, 16
    %v823 = vld [vmem:[%s822] sm:$0xff]
    %v824 = vld [vmem:[%s822 + $0x8] sm:$0xff]
    %s825 = scalar_lea.vmem %s8, 1
    %v826 = vld [vmem:[%s825] sm:$0x1]
    %v828 = vlaneseq
    %v829 = vshrl.u32 %v828, 7
    %v830 = vsub.s32 0, %v829
    %v831 = vrot.slane %v826, %v830
    %833 = vmatprep.subr.mxu0 0.0
    %834 = vmatpush1.msra.mxu0 %v823
    %835 = vmatprep.subr.mxu0 0.0
    %836 = vmatpush1.msra.mxu0 %v824
    %837 = vmatprep.subr.mxu0 0.0
    %838 = vmatpush1.msra.mxu0 0.0
    %839 = vmatprep.subr.mxu0 0.0
    %840 = vmatpush1.msra.mxu0 0.0
    %841 = vmatprep.subr.mxu0 0.0
    %842 = vmatpush1.msra.mxu0 0.0
    %843 = vmatprep.subr.mxu0 0.0
    %844 = vmatpush1.msra.mxu0 0.0
    %845 = vmatprep.subr.mxu0 0.0
    %846 = vmatpush1.msra.mxu0 0.0
    %847 = vmatprep.subr.mxu0 0.0
    %848 = vmatpush1.msra.mxu0 0.0
    %849 = vmatprep.subr.mxu0 0.0
    %850 = vmatpush1.msra.mxu0 0.0
    %851 = vmatprep.subr.mxu0 0.0
    %852 = vmatpush1.msra.mxu0 0.0
    %853 = vmatprep.subr.mxu0 0.0
    %854 = vmatpush1.msra.mxu0 0.0
    %855 = vmatprep.subr.mxu0 0.0
    %856 = vmatpush1.msra.mxu0 0.0
    %857 = vmatprep.subr.mxu0 0.0
    %858 = vmatpush1.msra.mxu0 0.0
    %859 = vmatprep.subr.mxu0 0.0
    %860 = vmatpush1.msra.mxu0 0.0
    %861 = vmatprep.subr.mxu0 0.0
    %862 = vmatpush1.msra.mxu0 0.0
    %863 = vmatprep.subr.mxu0 0.0
    %864 = vmatpush1.msra.mxu0 0.0
    %865 = vmatprep.subr.mxu0 0.0
    %866 = vmatpush1.msra.mxu0 0.0
    %867 = vmatprep.subr.mxu0 0.0
    %868 = vmatpush1.msra.mxu0 0.0
    %869 = vmatprep.subr.mxu0 0.0
    %870 = vmatpush1.msra.mxu0 0.0
    %871 = vmatprep.subr.mxu0 0.0
    %872 = vmatpush1.msra.mxu0 0.0
    %873 = vmatprep.subr.mxu0 0.0
    %874 = vmatpush1.msra.mxu0 0.0
    %875 = vmatprep.subr.mxu0 0.0
    %876 = vmatpush1.msra.mxu0 0.0
    %877 = vmatprep.subr.mxu0 0.0
    %878 = vmatpush1.msra.mxu0 0.0
    %879 = vmatprep.subr.mxu0 0.0
    %880 = vmatpush1.msra.mxu0 0.0
    %881 = vmatprep.subr.mxu0 0.0
    %882 = vmatpush1.msra.mxu0 0.0
    %883 = vmatprep.subr.mxu0 0.0
    %884 = vmatpush1.msra.mxu0 0.0
    %885 = vmatprep.subr.mxu0 0.0
    %886 = vmatpush1.msra.mxu0 0.0
    %887 = vmatprep.subr.mxu0 0.0
    %888 = vmatpush1.msra.mxu0 0.0
    %889 = vmatprep.subr.mxu0 0.0
    %890 = vmatpush1.msra.mxu0 0.0
    %891 = vmatprep.subr.mxu0 0.0
    %892 = vmatpush1.msra.mxu0 0.0
    %893 = vmatprep.subr.mxu0 0.0
    %894 = vmatpush1.msra.mxu0 0.0
    %895 = vmatprep.subr.mxu0 0.0
    %896 = vmatpush1.msra.mxu0 0.0
    %897 = vmatprep.mubr.f32.mxu0 0.0
    %898 = vmatmul.mubr.f32.gmra.mrb[0].mxu0 %v282
    %v899 = vpop.f32.mrb[0].mxu0
    %v900 = vadd.f32 %v831, %v899
    %v901 = vpop.f32.mrb[0].mxu0
    %902 = vmatprep.mubr.f32.mxu0 0.0
    %903 = vmatmul.mubr.f32.gmra.mrb[0].mxu0 %v285
    %v904 = vpop.f32.mrb[0].mxu0
    %v905 = vadd.f32 %v831, %v904
    %v906 = vpop.f32.mrb[0].mxu0
    %907 = vdwg.mxu0
    %s908 = scalar_lea.vmem %s9, 1
    %v909 = vld [vmem:[%s908] sm:$0x1]
    %v911 = vlaneseq
    %v912 = vshrl.u32 %v911, 7
    %v913 = vsub.s32 0, %v912
    %v914 = vrot.slane %v909, %v913
    %v916 = vadd.f32 %v900, %v914
    %v917 = vadd.f32 %v905, %v914
    %v920 = vcombine.high %v916, %v916
    %v922 = vunpack.c.l.s4 1983009808
    %v923 = vunpack.c.0.s8 %v922
    %v924 = vlaneseq
    %v925 = vshrl.u32 %v924, 7
    %v926 = vsub.s32 %v923, %v925
    %v927 = vrot.slane %v916, %v926
    %v929 = vunpack.c.l.s4 1983009808
    %v930 = vunpack.c.0.s8 %v929
    %v931 = vlaneseq
    %v932 = vshrl.u32 %v931, 7
    %v933 = vsub.s32 %v930, %v932
    %v934 = vrot.slane %v920, %v933
    %v935 = vcombine.high %v927, %v927
    %v936 = vcombine.high %v934, %v934
    %v937 = vcombine.high %v917, %v917
    %v939 = vunpack.c.l.s4 1983009808
    %v940 = vunpack.c.0.s8 %v939
    %v941 = vlaneseq
    %v942 = vshrl.u32 %v941, 7
    %v943 = vsub.s32 %v940, %v942
    %v944 = vrot.slane %v917, %v943
    %v946 = vunpack.c.l.s4 1983009808
    %v947 = vunpack.c.0.s8 %v946
    %v948 = vlaneseq
    %v949 = vshrl.u32 %v948, 7
    %v950 = vsub.s32 %v947, %v949
    %v951 = vrot.slane %v937, %v950
    %v952 = vcombine.high %v944, %v944
    %v953 = vcombine.high %v951, %v951
    %s962 = scalar_lea.vmem %s6, 32
    %v963 = vld [vmem:[%s962] sm:$0xff]
    %v964 = vld [vmem:[%s962 + $0x8] sm:$0xff]
    %s965 = scalar_lea.vmem %s8, 2
    %v966 = vld [vmem:[%s965] sm:$0x1]
    %v968 = vlaneseq
    %v969 = vshrl.u32 %v968, 7
    %v970 = vsub.s32 0, %v969
    %v971 = vrot.slane %v966, %v970
    %973 = vmatprep.subr.mxu0 0.0
    %974 = vmatpush1.msra.mxu0 %v963
    %975 = vmatprep.subr.mxu0 0.0
    %976 = vmatpush1.msra.mxu0 %v964
    %977 = vmatprep.subr.mxu0 0.0
    %978 = vmatpush1.msra.mxu0 0.0
    %979 = vmatprep.subr.mxu0 0.0
    %980 = vmatpush1.msra.mxu0 0.0
    %981 = vmatprep.subr.mxu0 0.0
    %982 = vmatpush1.msra.mxu0 0.0
    %983 = vmatprep.subr.mxu0 0.0
    %984 = vmatpush1.msra.mxu0 0.0
    %985 = vmatprep.subr.mxu0 0.0
    %986 = vmatpush1.msra.mxu0 0.0
    %987 = vmatprep.subr.mxu0 0.0
    %988 = vmatpush1.msra.mxu0 0.0
    %989 = vmatprep.subr.mxu0 0.0
    %990 = vmatpush1.msra.mxu0 0.0
    %991 = vmatprep.subr.mxu0 0.0
    %992 = vmatpush1.msra.mxu0 0.0
    %993 = vmatprep.subr.mxu0 0.0
    %994 = vmatpush1.msra.mxu0 0.0
    %995 = vmatprep.subr.mxu0 0.0
    %996 = vmatpush1.msra.mxu0 0.0
    %997 = vmatprep.subr.mxu0 0.0
    %998 = vmatpush1.msra.mxu0 0.0
    %999 = vmatprep.subr.mxu0 0.0
    %1000 = vmatpush1.msra.mxu0 0.0
    %1001 = vmatprep.subr.mxu0 0.0
    %1002 = vmatpush1.msra.mxu0 0.0
    %1003 = vmatprep.subr.mxu0 0.0
    %1004 = vmatpush1.msra.mxu0 0.0
    %1005 = vmatprep.subr.mxu0 0.0
    %1006 = vmatpush1.msra.mxu0 0.0
    %1007 = vmatprep.subr.mxu0 0.0
    %1008 = vmatpush1.msra.mxu0 0.0
    %1009 = vmatprep.subr.mxu0 0.0
    %1010 = vmatpush1.msra.mxu0 0.0
    %1011 = vmatprep.subr.mxu0 0.0
    %1012 = vmatpush1.msra.mxu0 0.0
    %1013 = vmatprep.subr.mxu0 0.0
    %1014 = vmatpush1.msra.mxu0 0.0
    %1015 = vmatprep.subr.mxu0 0.0
    %1016 = vmatpush1.msra.mxu0 0.0
    %1017 = vmatprep.subr.mxu0 0.0
    %1018 = vmatpush1.msra.mxu0 0.0
    %1019 = vmatprep.subr.mxu0 0.0
    %1020 = vmatpush1.msra.mxu0 0.0
    %1021 = vmatprep.subr.mxu0 0.0
    %1022 = vmatpush1.msra.mxu0 0.0
    %1023 = vmatprep.subr.mxu0 0.0
    %1024 = vmatpush1.msra.mxu0 0.0
    %1025 = vmatprep.subr.mxu0 0.0
    %1026 = vmatpush1.msra.mxu0 0.0
    %1027 = vmatprep.subr.mxu0 0.0
    %1028 = vmatpush1.msra.mxu0 0.0
    %1029 = vmatprep.subr.mxu0 0.0
    %1030 = vmatpush1.msra.mxu0 0.0
    %1031 = vmatprep.subr.mxu0 0.0
    %1032 = vmatpush1.msra.mxu0 0.0
    %1033 = vmatprep.subr.mxu0 0.0
    %1034 = vmatpush1.msra.mxu0 0.0
    %1035 = vmatprep.subr.mxu0 0.0
    %1036 = vmatpush1.msra.mxu0 0.0
    %1037 = vmatprep.mubr.f32.mxu0 0.0
    %1038 = vmatmul.mubr.f32.gmra.mrb[0].mxu0 %v282
    %v1039 = vpop.f32.mrb[0].mxu0
    %v1040 = vadd.f32 %v971, %v1039
    %v1041 = vpop.f32.mrb[0].mxu0
    %1042 = vmatprep.mubr.f32.mxu0 0.0
    %1043 = vmatmul.mubr.f32.gmra.mrb[0].mxu0 %v285
    %v1044 = vpop.f32.mrb[0].mxu0
    %v1045 = vadd.f32 %v971, %v1044
    %v1046 = vpop.f32.mrb[0].mxu0
    %1047 = vdwg.mxu0
    %v1050 = vcombine.high %v1040, %v1040
    %v1052 = vunpack.c.l.s4 1983009808
    %v1053 = vunpack.c.0.s8 %v1052
    %v1054 = vlaneseq
    %v1055 = vshrl.u32 %v1054, 7
    %v1056 = vsub.s32 %v1053, %v1055
    %v1057 = vrot.slane %v1040, %v1056
    %v1059 = vunpack.c.l.s4 1983009808
    %v1060 = vunpack.c.0.s8 %v1059
    %v1061 = vlaneseq
    %v1062 = vshrl.u32 %v1061, 7
    %v1063 = vsub.s32 %v1060, %v1062
    %v1064 = vrot.slane %v1050, %v1063
    %v1065 = vcombine.high %v1057, %v1057
    %v1066 = vcombine.high %v1064, %v1064
    %v1067 = vcombine.high %v1045, %v1045
    %v1069 = vunpack.c.l.s4 1983009808
    %v1070 = vunpack.c.0.s8 %v1069
    %v1071 = vlaneseq
    %v1072 = vshrl.u32 %v1071, 7
    %v1073 = vsub.s32 %v1070, %v1072
    %v1074 = vrot.slane %v1045, %v1073
    %v1076 = vunpack.c.l.s4 1983009808
    %v1077 = vunpack.c.0.s8 %v1076
    %v1078 = vlaneseq
    %v1079 = vshrl.u32 %v1078, 7
    %v1080 = vsub.s32 %v1077, %v1079
    %v1081 = vrot.slane %v1067, %v1080
    %v1082 = vcombine.high %v1074, %v1074
    %v1083 = vcombine.high %v1081, %v1081
    %v1092 = vxor.u32 %v380, 2147483648
    %v1093 = vmul.f32 %v1092, 1.442695
    %v1094 = vpow.pop %v1093
    %v1095 = vadd.f32 %v1094, 1.0
    %v1096 = vrcp.pop %v1095
    %v1097 = vmul.f32 1.0, %v1096
    %v1098 = vxor.u32 %v520, 2147483648
    %v1099 = vmul.f32 %v1098, 1.442695
    %v1100 = vpow.pop %v1099
    %v1101 = vadd.f32 %v1100, 1.0
    %v1102 = vrcp.pop %v1101
    %v1103 = vmul.f32 1.0, %v1102
    %s1104 = scalar_lea.vmem %s5, 2
    %v1105 = vld [vmem:[%s1104] sm:$0x1]
    %v1107 = vlaneseq
    %v1108 = vshrl.u32 %v1107, 7
    %v1109 = vsub.s32 0, %v1108
    %v1110 = vrot.slane %v1105, %v1109
    %v1112 = vmul.f32 %v1097, %v1110
    %v1113 = vadd.f32 %v650, %v1112
    %v1114 = vtanh.pop %v1113
    %v1115 = vsub.f32 1.0, %v1103
    %v1116 = vmul.f32 %v1115, %v1114
    %v1117 = vxor.u32 %v813, 2147483648
    %v1118 = vmul.f32 %v1117, 1.442695
    %v1119 = vpow.pop %v1118
    %v1120 = vadd.f32 %v1119, 1.0
    %v1121 = vrcp.pop %v1120
    %v1122 = vmul.f32 1.0, %v1121
    %v1123 = vxor.u32 %v953, 2147483648
    %v1124 = vmul.f32 %v1123, 1.442695
    %v1125 = vpow.pop %v1124
    %v1126 = vadd.f32 %v1125, 1.0
    %v1127 = vrcp.pop %v1126
    %v1128 = vmul.f32 1.0, %v1127
    %s1129 = scalar_lea.vmem %s9, 2
    %v1130 = vld [vmem:[%s1129] sm:$0x1]
    %v1132 = vlaneseq
    %v1133 = vshrl.u32 %v1132, 7
    %v1134 = vsub.s32 0, %v1133
    %v1135 = vrot.slane %v1130, %v1134
    %v1137 = vmul.f32 %v1122, %v1135
    %v1138 = vadd.f32 %v1083, %v1137
    %v1139 = vtanh.pop %v1138
    %v1140 = vsub.f32 1.0, %v1128
    %v1141 = vmul.f32 %v1140, %v1139
    %v1142 = vld [vmem:[%s3] sm:$0xff]
    %v1143 = vld [vmem:[%s3 + $0x8] sm:$0xff]
    %v1144 = vld [vmem:[%s3 + $0x10] sm:$0xff]
    %v1145 = vld [vmem:[%s3 + $0x18] sm:$0xff]
    %vm1146 = vcmask 261120
    %v1148 = vsel %vm1146, %v1116, 0
    %1150 = vmatprep.subr.mxu0 0.0
    %1151 = vmatpush1.msra.mxu0 %v1142
    %1152 = vmatprep.subr.mxu0 0.0
    %1153 = vmatpush1.msra.mxu0 %v1143
    %1154 = vmatprep.subr.mxu0 0.0
    %1155 = vmatpush1.msra.mxu0 %v1144
    %1156 = vmatprep.subr.mxu0 0.0
    %1157 = vmatpush1.msra.mxu0 %v1145
    %1158 = vmatprep.subr.mxu0 0.0
    %1159 = vmatpush1.msra.mxu0 0.0
    %1160 = vmatprep.subr.mxu0 0.0
    %1161 = vmatpush1.msra.mxu0 0.0
    %1162 = vmatprep.subr.mxu0 0.0
    %1163 = vmatpush1.msra.mxu0 0.0
    %1164 = vmatprep.subr.mxu0 0.0
    %1165 = vmatpush1.msra.mxu0 0.0
    %1166 = vmatprep.subr.mxu0 0.0
    %1167 = vmatpush1.msra.mxu0 0.0
    %1168 = vmatprep.subr.mxu0 0.0
    %1169 = vmatpush1.msra.mxu0 0.0
    %1170 = vmatprep.subr.mxu0 0.0
    %1171 = vmatpush1.msra.mxu0 0.0
    %1172 = vmatprep.subr.mxu0 0.0
    %1173 = vmatpush1.msra.mxu0 0.0
    %1174 = vmatprep.subr.mxu0 0.0
    %1175 = vmatpush1.msra.mxu0 0.0
    %1176 = vmatprep.subr.mxu0 0.0
    %1177 = vmatpush1.msra.mxu0 0.0
    %1178 = vmatprep.subr.mxu0 0.0
    %1179 = vmatpush1.msra.mxu0 0.0
    %1180 = vmatprep.subr.mxu0 0.0
    %1181 = vmatpush1.msra.mxu0 0.0
    %1182 = vmatprep.subr.mxu0 0.0
    %1183 = vmatpush1.msra.mxu0 0.0
    %1184 = vmatprep.subr.mxu0 0.0
    %1185 = vmatpush1.msra.mxu0 0.0
    %1186 = vmatprep.subr.mxu0 0.0
    %1187 = vmatpush1.msra.mxu0 0.0
    %1188 = vmatprep.subr.mxu0 0.0
    %1189 = vmatpush1.msra.mxu0 0.0
    %1190 = vmatprep.subr.mxu0 0.0
    %1191 = vmatpush1.msra.mxu0 0.0
    %1192 = vmatprep.subr.mxu0 0.0
    %1193 = vmatpush1.msra.mxu0 0.0
    %1194 = vmatprep.subr.mxu0 0.0
    %1195 = vmatpush1.msra.mxu0 0.0
    %1196 = vmatprep.subr.mxu0 0.0
    %1197 = vmatpush1.msra.mxu0 0.0
    %1198 = vmatprep.subr.mxu0 0.0
    %1199 = vmatpush1.msra.mxu0 0.0
    %1200 = vmatprep.subr.mxu0 0.0
    %1201 = vmatpush1.msra.mxu0 0.0
    %1202 = vmatprep.subr.mxu0 0.0
    %1203 = vmatpush1.msra.mxu0 0.0
    %1204 = vmatprep.subr.mxu0 0.0
    %1205 = vmatpush1.msra.mxu0 0.0
    %1206 = vmatprep.subr.mxu0 0.0
    %1207 = vmatpush1.msra.mxu0 0.0
    %1208 = vmatprep.subr.mxu0 0.0
    %1209 = vmatpush1.msra.mxu0 0.0
    %1210 = vmatprep.subr.mxu0 0.0
    %1211 = vmatpush1.msra.mxu0 0.0
    %1212 = vmatprep.subr.mxu0 0.0
    %1213 = vmatpush1.msra.mxu0 0.0
    %1214 = vmatprep.mubr.f32.mxu0 0.0
    %1215 = vmatmul.mubr.f32.gmra.mrb[0].mxu0 %v1148
    %v1216 = vpop.f32.mrb[0].mxu0
    %v1217 = vadd.f32 0.0, %v1216
    %v1218 = vpop.f32.mrb[0].mxu0
    %1219 = vdwg.mxu0
    %s1220 = scalar_lea.vmem %s3, 32
    %v1221 = vld [vmem:[%s1220] sm:$0xff]
    %v1222 = vld [vmem:[%s1220 + $0x8] sm:$0xff]
    %v1223 = vld [vmem:[%s1220 + $0x10] sm:$0xff]
    %v1224 = vld [vmem:[%s1220 + $0x18] sm:$0xff]
    %1225 = vmatprep.subr.mxu0 0.0
    %1226 = vmatpush1.msra.mxu0 %v1221
    %1227 = vmatprep.subr.mxu0 0.0
    %1228 = vmatpush1.msra.mxu0 %v1222
    %1229 = vmatprep.subr.mxu0 0.0
    %1230 = vmatpush1.msra.mxu0 %v1223
    %1231 = vmatprep.subr.mxu0 0.0
    %1232 = vmatpush1.msra.mxu0 %v1224
    %1233 = vmatprep.subr.mxu0 0.0
    %1234 = vmatpush1.msra.mxu0 0.0
    %1235 = vmatprep.subr.mxu0 0.0
    %1236 = vmatpush1.msra.mxu0 0.0
    %1237 = vmatprep.subr.mxu0 0.0
    %1238 = vmatpush1.msra.mxu0 0.0
    %1239 = vmatprep.subr.mxu0 0.0
    %1240 = vmatpush1.msra.mxu0 0.0
    %1241 = vmatprep.subr.mxu0 0.0
    %1242 = vmatpush1.msra.mxu0 0.0
    %1243 = vmatprep.subr.mxu0 0.0
    %1244 = vmatpush1.msra.mxu0 0.0
    %1245 = vmatprep.subr.mxu0 0.0
    %1246 = vmatpush1.msra.mxu0 0.0
    %1247 = vmatprep.subr.mxu0 0.0
    %1248 = vmatpush1.msra.mxu0 0.0
    %1249 = vmatprep.subr.mxu0 0.0
    %1250 = vmatpush1.msra.mxu0 0.0
    %1251 = vmatprep.subr.mxu0 0.0
    %1252 = vmatpush1.msra.mxu0 0.0
    %1253 = vmatprep.subr.mxu0 0.0
    %1254 = vmatpush1.msra.mxu0 0.0
    %1255 = vmatprep.subr.mxu0 0.0
    %1256 = vmatpush1.msra.mxu0 0.0
    %1257 = vmatprep.subr.mxu0 0.0
    %1258 = vmatpush1.msra.mxu0 0.0
    %1259 = vmatprep.subr.mxu0 0.0
    %1260 = vmatpush1.msra.mxu0 0.0
    %1261 = vmatprep.subr.mxu0 0.0
    %1262 = vmatpush1.msra.mxu0 0.0
    %1263 = vmatprep.subr.mxu0 0.0
    %1264 = vmatpush1.msra.mxu0 0.0
    %1265 = vmatprep.subr.mxu0 0.0
    %1266 = vmatpush1.msra.mxu0 0.0
    %1267 = vmatprep.subr.mxu0 0.0
    %1268 = vmatpush1.msra.mxu0 0.0
    %1269 = vmatprep.subr.mxu0 0.0
    %1270 = vmatpush1.msra.mxu0 0.0
    %1271 = vmatprep.subr.mxu0 0.0
    %1272 = vmatpush1.msra.mxu0 0.0
    %1273 = vmatprep.subr.mxu0 0.0
    %1274 = vmatpush1.msra.mxu0 0.0
    %1275 = vmatprep.subr.mxu0 0.0
    %1276 = vmatpush1.msra.mxu0 0.0
    %1277 = vmatprep.subr.mxu0 0.0
    %1278 = vmatpush1.msra.mxu0 0.0
    %1279 = vmatprep.subr.mxu0 0.0
    %1280 = vmatpush1.msra.mxu0 0.0
    %1281 = vmatprep.subr.mxu0 0.0
    %1282 = vmatpush1.msra.mxu0 0.0
    %1283 = vmatprep.subr.mxu0 0.0
    %1284 = vmatpush1.msra.mxu0 0.0
    %1285 = vmatprep.subr.mxu0 0.0
    %1286 = vmatpush1.msra.mxu0 0.0
    %1287 = vmatprep.subr.mxu0 0.0
    %1288 = vmatpush1.msra.mxu0 0.0
    %1289 = vmatprep.mubr.f32.mxu0 0.0
    %1290 = vmatmul.mubr.f32.gmra.mrb[0].mxu0 %v1148
    %v1291 = vpop.f32.mrb[0].mxu0
    %v1292 = vadd.f32 0.0, %v1291
    %v1293 = vpop.f32.mrb[0].mxu0
    %1294 = vdwg.mxu0
    %s1295 = scalar_lea.vmem %s3, 64
    %v1296 = vld [vmem:[%s1295] sm:$0xff]
    %v1297 = vld [vmem:[%s1295 + $0x8] sm:$0xff]
    %v1298 = vld [vmem:[%s1295 + $0x10] sm:$0xff]
    %v1299 = vld [vmem:[%s1295 + $0x18] sm:$0xff]
    %1300 = vmatprep.subr.mxu0 0.0
    %1301 = vmatpush1.msra.mxu0 %v1296
    %1302 = vmatprep.subr.mxu0 0.0
    %1303 = vmatpush1.msra.mxu0 %v1297
    %1304 = vmatprep.subr.mxu0 0.0
    %1305 = vmatpush1.msra.mxu0 %v1298
    %1306 = vmatprep.subr.mxu0 0.0
    %1307 = vmatpush1.msra.mxu0 %v1299
    %1308 = vmatprep.subr.mxu0 0.0
    %1309 = vmatpush1.msra.mxu0 0.0
    %1310 = vmatprep.subr.mxu0 0.0
    %1311 = vmatpush1.msra.mxu0 0.0
    %1312 = vmatprep.subr.mxu0 0.0
    %1313 = vmatpush1.msra.mxu0 0.0
    %1314 = vmatprep.subr.mxu0 0.0
    %1315 = vmatpush1.msra.mxu0 0.0
    %1316 = vmatprep.subr.mxu0 0.0
    %1317 = vmatpush1.msra.mxu0 0.0
    %1318 = vmatprep.subr.mxu0 0.0
    %1319 = vmatpush1.msra.mxu0 0.0
    %1320 = vmatprep.subr.mxu0 0.0
    %1321 = vmatpush1.msra.mxu0 0.0
    %1322 = vmatprep.subr.mxu0 0.0
    %1323 = vmatpush1.msra.mxu0 0.0
    %1324 = vmatprep.subr.mxu0 0.0
    %1325 = vmatpush1.msra.mxu0 0.0
    %1326 = vmatprep.subr.mxu0 0.0
    %1327 = vmatpush1.msra.mxu0 0.0
    %1328 = vmatprep.subr.mxu0 0.0
    %1329 = vmatpush1.msra.mxu0 0.0
    %1330 = vmatprep.subr.mxu0 0.0
    %1331 = vmatpush1.msra.mxu0 0.0
    %1332 = vmatprep.subr.mxu0 0.0
    %1333 = vmatpush1.msra.mxu0 0.0
    %1334 = vmatprep.subr.mxu0 0.0
    %1335 = vmatpush1.msra.mxu0 0.0
    %1336 = vmatprep.subr.mxu0 0.0
    %1337 = vmatpush1.msra.mxu0 0.0
    %1338 = vmatprep.subr.mxu0 0.0
    %1339 = vmatpush1.msra.mxu0 0.0
    %1340 = vmatprep.subr.mxu0 0.0
    %1341 = vmatpush1.msra.mxu0 0.0
    %1342 = vmatprep.subr.mxu0 0.0
    %1343 = vmatpush1.msra.mxu0 0.0
    %1344 = vmatprep.subr.mxu0 0.0
    %1345 = vmatpush1.msra.mxu0 0.0
    %1346 = vmatprep.subr.mxu0 0.0
    %1347 = vmatpush1.msra.mxu0 0.0
    %1348 = vmatprep.subr.mxu0 0.0
    %1349 = vmatpush1.msra.mxu0 0.0
    %1350 = vmatprep.subr.mxu0 0.0
    %1351 = vmatpush1.msra.mxu0 0.0
    %1352 = vmatprep.subr.mxu0 0.0
    %1353 = vmatpush1.msra.mxu0 0.0
    %1354 = vmatprep.subr.mxu0 0.0
    %1355 = vmatpush1.msra.mxu0 0.0
    %1356 = vmatprep.subr.mxu0 0.0
    %1357 = vmatpush1.msra.mxu0 0.0
    %1358 = vmatprep.subr.mxu0 0.0
    %1359 = vmatpush1.msra.mxu0 0.0
    %1360 = vmatprep.subr.mxu0 0.0
    %1361 = vmatpush1.msra.mxu0 0.0
    %1362 = vmatprep.subr.mxu0 0.0
    %1363 = vmatpush1.msra.mxu0 0.0
    %1364 = vmatprep.mubr.f32.mxu0 0.0
    %1365 = vmatmul.mubr.f32.gmra.mrb[0].mxu0 %v1148
    %v1366 = vpop.f32.mrb[0].mxu0
    %v1367 = vadd.f32 %v1110, %v1366
    %v1368 = vpop.f32.mrb[0].mxu0
    %1369 = vdwg.mxu0
    %v1370 = vadd.f32 %v388, %v1217
    %v1371 = vxor.u32 %v1370, 2147483648
    %v1372 = vmul.f32 %v1371, 1.442695
    %v1373 = vpow.pop %v1372
    %v1374 = vadd.f32 %v1373, 1.0
    %v1375 = vrcp.pop %v1374
    %v1376 = vmul.f32 1.0, %v1375
    %v1377 = vadd.f32 %v528, %v1292
    %v1378 = vxor.u32 %v1377, 2147483648
    %v1379 = vmul.f32 %v1378, 1.442695
    %v1380 = vpow.pop %v1379
    %v1381 = vadd.f32 %v1380, 1.0
    %v1382 = vrcp.pop %v1381
    %v1383 = vmul.f32 1.0, %v1382
    %v1384 = vmul.f32 %v1376, %v1367
    %v1385 = vadd.f32 %v658, %v1384
    %v1386 = vtanh.pop %v1385
    %v1387 = vsub.f32 1.0, %v1383
    %v1388 = vmul.f32 %v1387, %v1386
    %v1389 = vmul.f32 %v1383, %v1116
    %v1390 = vadd.f32 %v1388, %v1389
    %v1391 = vld [vmem:[%s7] sm:$0xff]
    %v1392 = vld [vmem:[%s7 + $0x8] sm:$0xff]
    %v1393 = vld [vmem:[%s7 + $0x10] sm:$0xff]
    %v1394 = vld [vmem:[%s7 + $0x18] sm:$0xff]
    %v1396 = vsel %vm1146, %v1141, 0
    %1398 = vmatprep.subr.mxu0 0.0
    %1399 = vmatpush1.msra.mxu0 %v1391
    %1400 = vmatprep.subr.mxu0 0.0
    %1401 = vmatpush1.msra.mxu0 %v1392
    %1402 = vmatprep.subr.mxu0 0.0
    %1403 = vmatpush1.msra.mxu0 %v1393
    %1404 = vmatprep.subr.mxu0 0.0
    %1405 = vmatpush1.msra.mxu0 %v1394
    %1406 = vmatprep.subr.mxu0 0.0
    %1407 = vmatpush1.msra.mxu0 0.0
    %1408 = vmatprep.subr.mxu0 0.0
    %1409 = vmatpush1.msra.mxu0 0.0
    %1410 = vmatprep.subr.mxu0 0.0
    %1411 = vmatpush1.msra.mxu0 0.0
    %1412 = vmatprep.subr.mxu0 0.0
    %1413 = vmatpush1.msra.mxu0 0.0
    %1414 = vmatprep.subr.mxu0 0.0
    %1415 = vmatpush1.msra.mxu0 0.0
    %1416 = vmatprep.subr.mxu0 0.0
    %1417 = vmatpush1.msra.mxu0 0.0
    %1418 = vmatprep.subr.mxu0 0.0
    %1419 = vmatpush1.msra.mxu0 0.0
    %1420 = vmatprep.subr.mxu0 0.0
    %1421 = vmatpush1.msra.mxu0 0.0
    %1422 = vmatprep.subr.mxu0 0.0
    %1423 = vmatpush1.msra.mxu0 0.0
    %1424 = vmatprep.subr.mxu0 0.0
    %1425 = vmatpush1.msra.mxu0 0.0
    %1426 = vmatprep.subr.mxu0 0.0
    %1427 = vmatpush1.msra.mxu0 0.0
    %1428 = vmatprep.subr.mxu0 0.0
    %1429 = vmatpush1.msra.mxu0 0.0
    %1430 = vmatprep.subr.mxu0 0.0
    %1431 = vmatpush1.msra.mxu0 0.0
    %1432 = vmatprep.subr.mxu0 0.0
    %1433 = vmatpush1.msra.mxu0 0.0
    %1434 = vmatprep.subr.mxu0 0.0
    %1435 = vmatpush1.msra.mxu0 0.0
    %1436 = vmatprep.subr.mxu0 0.0
    %1437 = vmatpush1.msra.mxu0 0.0
    %1438 = vmatprep.subr.mxu0 0.0
    %1439 = vmatpush1.msra.mxu0 0.0
    %1440 = vmatprep.subr.mxu0 0.0
    %1441 = vmatpush1.msra.mxu0 0.0
    %1442 = vmatprep.subr.mxu0 0.0
    %1443 = vmatpush1.msra.mxu0 0.0
    %1444 = vmatprep.subr.mxu0 0.0
    %1445 = vmatpush1.msra.mxu0 0.0
    %1446 = vmatprep.subr.mxu0 0.0
    %1447 = vmatpush1.msra.mxu0 0.0
    %1448 = vmatprep.subr.mxu0 0.0
    %1449 = vmatpush1.msra.mxu0 0.0
    %1450 = vmatprep.subr.mxu0 0.0
    %1451 = vmatpush1.msra.mxu0 0.0
    %1452 = vmatprep.subr.mxu0 0.0
    %1453 = vmatpush1.msra.mxu0 0.0
    %1454 = vmatprep.subr.mxu0 0.0
    %1455 = vmatpush1.msra.mxu0 0.0
    %1456 = vmatprep.subr.mxu0 0.0
    %1457 = vmatpush1.msra.mxu0 0.0
    %1458 = vmatprep.subr.mxu0 0.0
    %1459 = vmatpush1.msra.mxu0 0.0
    %1460 = vmatprep.subr.mxu0 0.0
    %1461 = vmatpush1.msra.mxu0 0.0
    %1462 = vmatprep.mubr.f32.mxu0 0.0
    %1463 = vmatmul.mubr.f32.gmra.mrb[0].mxu0 %v1396
    %v1464 = vpop.f32.mrb[0].mxu0
    %v1465 = vadd.f32 0.0, %v1464
    %v1466 = vpop.f32.mrb[0].mxu0
    %1467 = vdwg.mxu0
    %s1468 = scalar_lea.vmem %s7, 32
    %v1469 = vld [vmem:[%s1468] sm:$0xff]
    %v1470 = vld [vmem:[%s1468 + $0x8] sm:$0xff]
    %v1471 = vld [vmem:[%s1468 + $0x10] sm:$0xff]
    %v1472 = vld [vmem:[%s1468 + $0x18] sm:$0xff]
    %1473 = vmatprep.subr.mxu0 0.0
    %1474 = vmatpush1.msra.mxu0 %v1469
    %1475 = vmatprep.subr.mxu0 0.0
    %1476 = vmatpush1.msra.mxu0 %v1470
    %1477 = vmatprep.subr.mxu0 0.0
    %1478 = vmatpush1.msra.mxu0 %v1471
    %1479 = vmatprep.subr.mxu0 0.0
    %1480 = vmatpush1.msra.mxu0 %v1472
    %1481 = vmatprep.subr.mxu0 0.0
    %1482 = vmatpush1.msra.mxu0 0.0
    %1483 = vmatprep.subr.mxu0 0.0
    %1484 = vmatpush1.msra.mxu0 0.0
    %1485 = vmatprep.subr.mxu0 0.0
    %1486 = vmatpush1.msra.mxu0 0.0
    %1487 = vmatprep.subr.mxu0 0.0
    %1488 = vmatpush1.msra.mxu0 0.0
    %1489 = vmatprep.subr.mxu0 0.0
    %1490 = vmatpush1.msra.mxu0 0.0
    %1491 = vmatprep.subr.mxu0 0.0
    %1492 = vmatpush1.msra.mxu0 0.0
    %1493 = vmatprep.subr.mxu0 0.0
    %1494 = vmatpush1.msra.mxu0 0.0
    %1495 = vmatprep.subr.mxu0 0.0
    %1496 = vmatpush1.msra.mxu0 0.0
    %1497 = vmatprep.subr.mxu0 0.0
    %1498 = vmatpush1.msra.mxu0 0.0
    %1499 = vmatprep.subr.mxu0 0.0
    %1500 = vmatpush1.msra.mxu0 0.0
    %1501 = vmatprep.subr.mxu0 0.0
    %1502 = vmatpush1.msra.mxu0 0.0
    %1503 = vmatprep.subr.mxu0 0.0
    %1504 = vmatpush1.msra.mxu0 0.0
    %1505 = vmatprep.subr.mxu0 0.0
    %1506 = vmatpush1.msra.mxu0 0.0
    %1507 = vmatprep.subr.mxu0 0.0
    %1508 = vmatpush1.msra.mxu0 0.0
    %1509 = vmatprep.subr.mxu0 0.0
    %1510 = vmatpush1.msra.mxu0 0.0
    %1511 = vmatprep.subr.mxu0 0.0
    %1512 = vmatpush1.msra.mxu0 0.0
    %1513 = vmatprep.subr.mxu0 0.0
    %1514 = vmatpush1.msra.mxu0 0.0
    %1515 = vmatprep.subr.mxu0 0.0
    %1516 = vmatpush1.msra.mxu0 0.0
    %1517 = vmatprep.subr.mxu0 0.0
    %1518 = vmatpush1.msra.mxu0 0.0
    %1519 = vmatprep.subr.mxu0 0.0
    %1520 = vmatpush1.msra.mxu0 0.0
    %1521 = vmatprep.subr.mxu0 0.0
    %1522 = vmatpush1.msra.mxu0 0.0
    %1523 = vmatprep.subr.mxu0 0.0
    %1524 = vmatpush1.msra.mxu0 0.0
    %1525 = vmatprep.subr.mxu0 0.0
    %1526 = vmatpush1.msra.mxu0 0.0
    %1527 = vmatprep.subr.mxu0 0.0
    %1528 = vmatpush1.msra.mxu0 0.0
    %1529 = vmatprep.subr.mxu0 0.0
    %1530 = vmatpush1.msra.mxu0 0.0
    %1531 = vmatprep.subr.mxu0 0.0
    %1532 = vmatpush1.msra.mxu0 0.0
    %1533 = vmatprep.subr.mxu0 0.0
    %1534 = vmatpush1.msra.mxu0 0.0
    %1535 = vmatprep.subr.mxu0 0.0
    %1536 = vmatpush1.msra.mxu0 0.0
    %1537 = vmatprep.mubr.f32.mxu0 0.0
    %1538 = vmatmul.mubr.f32.gmra.mrb[0].mxu0 %v1396
    %v1539 = vpop.f32.mrb[0].mxu0
    %v1540 = vadd.f32 0.0, %v1539
    %v1541 = vpop.f32.mrb[0].mxu0
    %1542 = vdwg.mxu0
    %s1543 = scalar_lea.vmem %s7, 64
    %v1544 = vld [vmem:[%s1543] sm:$0xff]
    %v1545 = vld [vmem:[%s1543 + $0x8] sm:$0xff]
    %v1546 = vld [vmem:[%s1543 + $0x10] sm:$0xff]
    %v1547 = vld [vmem:[%s1543 + $0x18] sm:$0xff]
    %1548 = vmatprep.subr.mxu0 0.0
    %1549 = vmatpush1.msra.mxu0 %v1544
    %1550 = vmatprep.subr.mxu0 0.0
    %1551 = vmatpush1.msra.mxu0 %v1545
    %1552 = vmatprep.subr.mxu0 0.0
    %1553 = vmatpush1.msra.mxu0 %v1546
    %1554 = vmatprep.subr.mxu0 0.0
    %1555 = vmatpush1.msra.mxu0 %v1547
    %1556 = vmatprep.subr.mxu0 0.0
    %1557 = vmatpush1.msra.mxu0 0.0
    %1558 = vmatprep.subr.mxu0 0.0
    %1559 = vmatpush1.msra.mxu0 0.0
    %1560 = vmatprep.subr.mxu0 0.0
    %1561 = vmatpush1.msra.mxu0 0.0
    %1562 = vmatprep.subr.mxu0 0.0
    %1563 = vmatpush1.msra.mxu0 0.0
    %1564 = vmatprep.subr.mxu0 0.0
    %1565 = vmatpush1.msra.mxu0 0.0
    %1566 = vmatprep.subr.mxu0 0.0
    %1567 = vmatpush1.msra.mxu0 0.0
    %1568 = vmatprep.subr.mxu0 0.0
    %1569 = vmatpush1.msra.mxu0 0.0
    %1570 = vmatprep.subr.mxu0 0.0
    %1571 = vmatpush1.msra.mxu0 0.0
    %1572 = vmatprep.subr.mxu0 0.0
    %1573 = vmatpush1.msra.mxu0 0.0
    %1574 = vmatprep.subr.mxu0 0.0
    %1575 = vmatpush1.msra.mxu0 0.0
    %1576 = vmatprep.subr.mxu0 0.0
    %1577 = vmatpush1.msra.mxu0 0.0
    %1578 = vmatprep.subr.mxu0 0.0
    %1579 = vmatpush1.msra.mxu0 0.0
    %1580 = vmatprep.subr.mxu0 0.0
    %1581 = vmatpush1.msra.mxu0 0.0
    %1582 = vmatprep.subr.mxu0 0.0
    %1583 = vmatpush1.msra.mxu0 0.0
    %1584 = vmatprep.subr.mxu0 0.0
    %1585 = vmatpush1.msra.mxu0 0.0
    %1586 = vmatprep.subr.mxu0 0.0
    %1587 = vmatpush1.msra.mxu0 0.0
    %1588 = vmatprep.subr.mxu0 0.0
    %1589 = vmatpush1.msra.mxu0 0.0
    %1590 = vmatprep.subr.mxu0 0.0
    %1591 = vmatpush1.msra.mxu0 0.0
    %1592 = vmatprep.subr.mxu0 0.0
    %1593 = vmatpush1.msra.mxu0 0.0
    %1594 = vmatprep.subr.mxu0 0.0
    %1595 = vmatpush1.msra.mxu0 0.0
    %1596 = vmatprep.subr.mxu0 0.0
    %1597 = vmatpush1.msra.mxu0 0.0
    %1598 = vmatprep.subr.mxu0 0.0
    %1599 = vmatpush1.msra.mxu0 0.0
    %1600 = vmatprep.subr.mxu0 0.0
    %1601 = vmatpush1.msra.mxu0 0.0
    %1602 = vmatprep.subr.mxu0 0.0
    %1603 = vmatpush1.msra.mxu0 0.0
    %1604 = vmatprep.subr.mxu0 0.0
    %1605 = vmatpush1.msra.mxu0 0.0
    %1606 = vmatprep.subr.mxu0 0.0
    %1607 = vmatpush1.msra.mxu0 0.0
    %1608 = vmatprep.subr.mxu0 0.0
    %1609 = vmatpush1.msra.mxu0 0.0
    %1610 = vmatprep.subr.mxu0 0.0
    %1611 = vmatpush1.msra.mxu0 0.0
    %1612 = vmatprep.mubr.f32.mxu0 0.0
    %1613 = vmatmul.mubr.f32.gmra.mrb[0].mxu0 %v1396
    %v1614 = vpop.f32.mrb[0].mxu0
    %v1615 = vadd.f32 %v1135, %v1614
    %v1616 = vpop.f32.mrb[0].mxu0
    %1617 = vdwg.mxu0
    %v1618 = vadd.f32 %v811, %v1465
    %v1619 = vxor.u32 %v1618, 2147483648
    %v1620 = vmul.f32 %v1619, 1.442695
    %v1621 = vpow.pop %v1620
    %v1622 = vadd.f32 %v1621, 1.0
    %v1623 = vrcp.pop %v1622
    %v1624 = vmul.f32 1.0, %v1623
    %v1625 = vadd.f32 %v951, %v1540
    %v1626 = vxor.u32 %v1625, 2147483648
    %v1627 = vmul.f32 %v1626, 1.442695
    %v1628 = vpow.pop %v1627
    %v1629 = vadd.f32 %v1628, 1.0
    %v1630 = vrcp.pop %v1629
    %v1631 = vmul.f32 1.0, %v1630
    %v1632 = vmul.f32 %v1624, %v1615
    %v1633 = vadd.f32 %v1081, %v1632
    %v1634 = vtanh.pop %v1633
    %v1635 = vsub.f32 1.0, %v1631
    %v1636 = vmul.f32 %v1635, %v1634
    %v1637 = vmul.f32 %v1631, %v1141
    %v1638 = vadd.f32 %v1636, %v1637
    %v1640 = vsel %vm1146, %v1390, 0
    %1642 = vmatprep.subr.mxu0 0.0
    %1643 = vmatpush1.msra.mxu0 %v1142
    %1644 = vmatprep.subr.mxu0 0.0
    %1645 = vmatpush1.msra.mxu0 %v1143
    %1646 = vmatprep.subr.mxu0 0.0
    %1647 = vmatpush1.msra.mxu0 %v1144
    %1648 = vmatprep.subr.mxu0 0.0
    %1649 = vmatpush1.msra.mxu0 %v1145
    %1650 = vmatprep.subr.mxu0 0.0
    %1651 = vmatpush1.msra.mxu0 0.0
    %1652 = vmatprep.subr.mxu0 0.0
    %1653 = vmatpush1.msra.mxu0 0.0
    %1654 = vmatprep.subr.mxu0 0.0
    %1655 = vmatpush1.msra.mxu0 0.0
    %1656 = vmatprep.subr.mxu0 0.0
    %1657 = vmatpush1.msra.mxu0 0.0
    %1658 = vmatprep.subr.mxu0 0.0
    %1659 = vmatpush1.msra.mxu0 0.0
    %1660 = vmatprep.subr.mxu0 0.0
    %1661 = vmatpush1.msra.mxu0 0.0
    %1662 = vmatprep.subr.mxu0 0.0
    %1663 = vmatpush1.msra.mxu0 0.0
    %1664 = vmatprep.subr.mxu0 0.0
    %1665 = vmatpush1.msra.mxu0 0.0
    %1666 = vmatprep.subr.mxu0 0.0
    %1667 = vmatpush1.msra.mxu0 0.0
    %1668 = vmatprep.subr.mxu0 0.0
    %1669 = vmatpush1.msra.mxu0 0.0
    %1670 = vmatprep.subr.mxu0 0.0
    %1671 = vmatpush1.msra.mxu0 0.0
    %1672 = vmatprep.subr.mxu0 0.0
    %1673 = vmatpush1.msra.mxu0 0.0
    %1674 = vmatprep.subr.mxu0 0.0
    %1675 = vmatpush1.msra.mxu0 0.0
    %1676 = vmatprep.subr.mxu0 0.0
    %1677 = vmatpush1.msra.mxu0 0.0
    %1678 = vmatprep.subr.mxu0 0.0
    %1679 = vmatpush1.msra.mxu0 0.0
    %1680 = vmatprep.subr.mxu0 0.0
    %1681 = vmatpush1.msra.mxu0 0.0
    %1682 = vmatprep.subr.mxu0 0.0
    %1683 = vmatpush1.msra.mxu0 0.0
    %1684 = vmatprep.subr.mxu0 0.0
    %1685 = vmatpush1.msra.mxu0 0.0
    %1686 = vmatprep.subr.mxu0 0.0
    %1687 = vmatpush1.msra.mxu0 0.0
    %1688 = vmatprep.subr.mxu0 0.0
    %1689 = vmatpush1.msra.mxu0 0.0
    %1690 = vmatprep.subr.mxu0 0.0
    %1691 = vmatpush1.msra.mxu0 0.0
    %1692 = vmatprep.subr.mxu0 0.0
    %1693 = vmatpush1.msra.mxu0 0.0
    %1694 = vmatprep.subr.mxu0 0.0
    %1695 = vmatpush1.msra.mxu0 0.0
    %1696 = vmatprep.subr.mxu0 0.0
    %1697 = vmatpush1.msra.mxu0 0.0
    %1698 = vmatprep.subr.mxu0 0.0
    %1699 = vmatpush1.msra.mxu0 0.0
    %1700 = vmatprep.subr.mxu0 0.0
    %1701 = vmatpush1.msra.mxu0 0.0
    %1702 = vmatprep.subr.mxu0 0.0
    %1703 = vmatpush1.msra.mxu0 0.0
    %1704 = vmatprep.subr.mxu0 0.0
    %1705 = vmatpush1.msra.mxu0 0.0
    %1706 = vmatprep.mubr.f32.mxu0 0.0
    %1707 = vmatmul.mubr.f32.gmra.mrb[0].mxu0 %v1640
    %v1708 = vpop.f32.mrb[0].mxu0
    %v1709 = vadd.f32 0.0, %v1708
    %v1710 = vpop.f32.mrb[0].mxu0
    %1711 = vdwg.mxu0
    %1712 = vmatprep.subr.mxu0 0.0
    %1713 = vmatpush1.msra.mxu0 %v1221
    %1714 = vmatprep.subr.mxu0 0.0
    %1715 = vmatpush1.msra.mxu0 %v1222
    %1716 = vmatprep.subr.mxu0 0.0
    %1717 = vmatpush1.msra.mxu0 %v1223
    %1718 = vmatprep.subr.mxu0 0.0
    %1719 = vmatpush1.msra.mxu0 %v1224
    %1720 = vmatprep.subr.mxu0 0.0
    %1721 = vmatpush1.msra.mxu0 0.0
    %1722 = vmatprep.subr.mxu0 0.0
    %1723 = vmatpush1.msra.mxu0 0.0
    %1724 = vmatprep.subr.mxu0 0.0
    %1725 = vmatpush1.msra.mxu0 0.0
    %1726 = vmatprep.subr.mxu0 0.0
    %1727 = vmatpush1.msra.mxu0 0.0
    %1728 = vmatprep.subr.mxu0 0.0
    %1729 = vmatpush1.msra.mxu0 0.0
    %1730 = vmatprep.subr.mxu0 0.0
    %1731 = vmatpush1.msra.mxu0 0.0
    %1732 = vmatprep.subr.mxu0 0.0
    %1733 = vmatpush1.msra.mxu0 0.0
    %1734 = vmatprep.subr.mxu0 0.0
    %1735 = vmatpush1.msra.mxu0 0.0
    %1736 = vmatprep.subr.mxu0 0.0
    %1737 = vmatpush1.msra.mxu0 0.0
    %1738 = vmatprep.subr.mxu0 0.0
    %1739 = vmatpush1.msra.mxu0 0.0
    %1740 = vmatprep.subr.mxu0 0.0
    %1741 = vmatpush1.msra.mxu0 0.0
    %1742 = vmatprep.subr.mxu0 0.0
    %1743 = vmatpush1.msra.mxu0 0.0
    %1744 = vmatprep.subr.mxu0 0.0
    %1745 = vmatpush1.msra.mxu0 0.0
    %1746 = vmatprep.subr.mxu0 0.0
    %1747 = vmatpush1.msra.mxu0 0.0
    %1748 = vmatprep.subr.mxu0 0.0
    %1749 = vmatpush1.msra.mxu0 0.0
    %1750 = vmatprep.subr.mxu0 0.0
    %1751 = vmatpush1.msra.mxu0 0.0
    %1752 = vmatprep.subr.mxu0 0.0
    %1753 = vmatpush1.msra.mxu0 0.0
    %1754 = vmatprep.subr.mxu0 0.0
    %1755 = vmatpush1.msra.mxu0 0.0
    %1756 = vmatprep.subr.mxu0 0.0
    %1757 = vmatpush1.msra.mxu0 0.0
    %1758 = vmatprep.subr.mxu0 0.0
    %1759 = vmatpush1.msra.mxu0 0.0
    %1760 = vmatprep.subr.mxu0 0.0
    %1761 = vmatpush1.msra.mxu0 0.0
    %1762 = vmatprep.subr.mxu0 0.0
    %1763 = vmatpush1.msra.mxu0 0.0
    %1764 = vmatprep.subr.mxu0 0.0
    %1765 = vmatpush1.msra.mxu0 0.0
    %1766 = vmatprep.subr.mxu0 0.0
    %1767 = vmatpush1.msra.mxu0 0.0
    %1768 = vmatprep.subr.mxu0 0.0
    %1769 = vmatpush1.msra.mxu0 0.0
    %1770 = vmatprep.subr.mxu0 0.0
    %1771 = vmatpush1.msra.mxu0 0.0
    %1772 = vmatprep.subr.mxu0 0.0
    %1773 = vmatpush1.msra.mxu0 0.0
    %1774 = vmatprep.subr.mxu0 0.0
    %1775 = vmatpush1.msra.mxu0 0.0
    %1776 = vmatprep.mubr.f32.mxu0 0.0
    %1777 = vmatmul.mubr.f32.gmra.mrb[0].mxu0 %v1640
    %v1778 = vpop.f32.mrb[0].mxu0
    %v1779 = vadd.f32 0.0, %v1778
    %v1780 = vpop.f32.mrb[0].mxu0
    %1781 = vdwg.mxu0
    %1782 = vmatprep.subr.mxu0 0.0
    %1783 = vmatpush1.msra.mxu0 %v1296
    %1784 = vmatprep.subr.mxu0 0.0
    %1785 = vmatpush1.msra.mxu0 %v1297
    %1786 = vmatprep.subr.mxu0 0.0
    %1787 = vmatpush1.msra.mxu0 %v1298
    %1788 = vmatprep.subr.mxu0 0.0
    %1789 = vmatpush1.msra.mxu0 %v1299
    %1790 = vmatprep.subr.mxu0 0.0
    %1791 = vmatpush1.msra.mxu0 0.0
    %1792 = vmatprep.subr.mxu0 0.0
    %1793 = vmatpush1.msra.mxu0 0.0
    %1794 = vmatprep.subr.mxu0 0.0
    %1795 = vmatpush1.msra.mxu0 0.0
    %1796 = vmatprep.subr.mxu0 0.0
    %1797 = vmatpush1.msra.mxu0 0.0
    %1798 = vmatprep.subr.mxu0 0.0
    %1799 = vmatpush1.msra.mxu0 0.0
    %1800 = vmatprep.subr.mxu0 0.0
    %1801 = vmatpush1.msra.mxu0 0.0
    %1802 = vmatprep.subr.mxu0 0.0
    %1803 = vmatpush1.msra.mxu0 0.0
    %1804 = vmatprep.subr.mxu0 0.0
    %1805 = vmatpush1.msra.mxu0 0.0
    %1806 = vmatprep.subr.mxu0 0.0
    %1807 = vmatpush1.msra.mxu0 0.0
    %1808 = vmatprep.subr.mxu0 0.0
    %1809 = vmatpush1.msra.mxu0 0.0
    %1810 = vmatprep.subr.mxu0 0.0
    %1811 = vmatpush1.msra.mxu0 0.0
    %1812 = vmatprep.subr.mxu0 0.0
    %1813 = vmatpush1.msra.mxu0 0.0
    %1814 = vmatprep.subr.mxu0 0.0
    %1815 = vmatpush1.msra.mxu0 0.0
    %1816 = vmatprep.subr.mxu0 0.0
    %1817 = vmatpush1.msra.mxu0 0.0
    %1818 = vmatprep.subr.mxu0 0.0
    %1819 = vmatpush1.msra.mxu0 0.0
    %1820 = vmatprep.subr.mxu0 0.0
    %1821 = vmatpush1.msra.mxu0 0.0
    %1822 = vmatprep.subr.mxu0 0.0
    %1823 = vmatpush1.msra.mxu0 0.0
    %1824 = vmatprep.subr.mxu0 0.0
    %1825 = vmatpush1.msra.mxu0 0.0
    %1826 = vmatprep.subr.mxu0 0.0
    %1827 = vmatpush1.msra.mxu0 0.0
    %1828 = vmatprep.subr.mxu0 0.0
    %1829 = vmatpush1.msra.mxu0 0.0
    %1830 = vmatprep.subr.mxu0 0.0
    %1831 = vmatpush1.msra.mxu0 0.0
    %1832 = vmatprep.subr.mxu0 0.0
    %1833 = vmatpush1.msra.mxu0 0.0
    %1834 = vmatprep.subr.mxu0 0.0
    %1835 = vmatpush1.msra.mxu0 0.0
    %1836 = vmatprep.subr.mxu0 0.0
    %1837 = vmatpush1.msra.mxu0 0.0
    %1838 = vmatprep.subr.mxu0 0.0
    %1839 = vmatpush1.msra.mxu0 0.0
    %1840 = vmatprep.subr.mxu0 0.0
    %1841 = vmatpush1.msra.mxu0 0.0
    %1842 = vmatprep.subr.mxu0 0.0
    %1843 = vmatpush1.msra.mxu0 0.0
    %1844 = vmatprep.subr.mxu0 0.0
    %1845 = vmatpush1.msra.mxu0 0.0
    %1846 = vmatprep.mubr.f32.mxu0 0.0
    %1847 = vmatmul.mubr.f32.gmra.mrb[0].mxu0 %v1640
    %v1848 = vpop.f32.mrb[0].mxu0
    %v1849 = vadd.f32 %v1110, %v1848
    %v1850 = vpop.f32.mrb[0].mxu0
    %1851 = vdwg.mxu0
    %v1852 = vadd.f32 %v387, %v1709
    %v1853 = vxor.u32 %v1852, 2147483648
    %v1854 = vmul.f32 %v1853, 1.442695
    %v1855 = vpow.pop %v1854
    %v1856 = vadd.f32 %v1855, 1.0
    %v1857 = vrcp.pop %v1856
    %v1858 = vmul.f32 1.0, %v1857
    %v1859 = vadd.f32 %v527, %v1779
    %v1860 = vxor.u32 %v1859, 2147483648
    %v1861 = vmul.f32 %v1860, 1.442695
    %v1862 = vpow.pop %v1861
    %v1863 = vadd.f32 %v1862, 1.0
    %v1864 = vrcp.pop %v1863
    %v1865 = vmul.f32 1.0, %v1864
    %v1866 = vmul.f32 %v1858, %v1849
    %v1867 = vadd.f32 %v657, %v1866
    %v1868 = vtanh.pop %v1867
    %v1869 = vsub.f32 1.0, %v1865
    %v1870 = vmul.f32 %v1869, %v1868
    %v1871 = vmul.f32 %v1865, %v1390
    %v1872 = vadd.f32 %v1870, %v1871
    %v1874 = vsel %vm1146, %v1638, 0
    %1876 = vmatprep.subr.mxu0 0.0
    %1877 = vmatpush1.msra.mxu0 %v1391
    %1878 = vmatprep.subr.mxu0 0.0
    %1879 = vmatpush1.msra.mxu0 %v1392
    %1880 = vmatprep.subr.mxu0 0.0
    %1881 = vmatpush1.msra.mxu0 %v1393
    %1882 = vmatprep.subr.mxu0 0.0
    %1883 = vmatpush1.msra.mxu0 %v1394
    %1884 = vmatprep.subr.mxu0 0.0
    %1885 = vmatpush1.msra.mxu0 0.0
    %1886 = vmatprep.subr.mxu0 0.0
    %1887 = vmatpush1.msra.mxu0 0.0
    %1888 = vmatprep.subr.mxu0 0.0
    %1889 = vmatpush1.msra.mxu0 0.0
    %1890 = vmatprep.subr.mxu0 0.0
    %1891 = vmatpush1.msra.mxu0 0.0
    %1892 = vmatprep.subr.mxu0 0.0
    %1893 = vmatpush1.msra.mxu0 0.0
    %1894 = vmatprep.subr.mxu0 0.0
    %1895 = vmatpush1.msra.mxu0 0.0
    %1896 = vmatprep.subr.mxu0 0.0
    %1897 = vmatpush1.msra.mxu0 0.0
    %1898 = vmatprep.subr.mxu0 0.0
    %1899 = vmatpush1.msra.mxu0 0.0
    %1900 = vmatprep.subr.mxu0 0.0
    %1901 = vmatpush1.msra.mxu0 0.0
    %1902 = vmatprep.subr.mxu0 0.0
    %1903 = vmatpush1.msra.mxu0 0.0
    %1904 = vmatprep.subr.mxu0 0.0
    %1905 = vmatpush1.msra.mxu0 0.0
    %1906 = vmatprep.subr.mxu0 0.0
    %1907 = vmatpush1.msra.mxu0 0.0
    %1908 = vmatprep.subr.mxu0 0.0
    %1909 = vmatpush1.msra.mxu0 0.0
    %1910 = vmatprep.subr.mxu0 0.0
    %1911 = vmatpush1.msra.mxu0 0.0
    %1912 = vmatprep.subr.mxu0 0.0
    %1913 = vmatpush1.msra.mxu0 0.0
    %1914 = vmatprep.subr.mxu0 0.0
    %1915 = vmatpush1.msra.mxu0 0.0
    %1916 = vmatprep.subr.mxu0 0.0
    %1917 = vmatpush1.msra.mxu0 0.0
    %1918 = vmatprep.subr.mxu0 0.0
    %1919 = vmatpush1.msra.mxu0 0.0
    %1920 = vmatprep.subr.mxu0 0.0
    %1921 = vmatpush1.msra.mxu0 0.0
    %1922 = vmatprep.subr.mxu0 0.0
    %1923 = vmatpush1.msra.mxu0 0.0
    %1924 = vmatprep.subr.mxu0 0.0
    %1925 = vmatpush1.msra.mxu0 0.0
    %1926 = vmatprep.subr.mxu0 0.0
    %1927 = vmatpush1.msra.mxu0 0.0
    %1928 = vmatprep.subr.mxu0 0.0
    %1929 = vmatpush1.msra.mxu0 0.0
    %1930 = vmatprep.subr.mxu0 0.0
    %1931 = vmatpush1.msra.mxu0 0.0
    %1932 = vmatprep.subr.mxu0 0.0
    %1933 = vmatpush1.msra.mxu0 0.0
    %1934 = vmatprep.subr.mxu0 0.0
    %1935 = vmatpush1.msra.mxu0 0.0
    %1936 = vmatprep.subr.mxu0 0.0
    %1937 = vmatpush1.msra.mxu0 0.0
    %1938 = vmatprep.subr.mxu0 0.0
    %1939 = vmatpush1.msra.mxu0 0.0
    %1940 = vmatprep.mubr.f32.mxu0 0.0
    %1941 = vmatmul.mubr.f32.gmra.mrb[0].mxu0 %v1874
    %v1942 = vpop.f32.mrb[0].mxu0
    %v1943 = vadd.f32 0.0, %v1942
    %v1944 = vpop.f32.mrb[0].mxu0
    %1945 = vdwg.mxu0
    %1946 = vmatprep.subr.mxu0 0.0
    %1947 = vmatpush1.msra.mxu0 %v1469
    %1948 = vmatprep.subr.mxu0 0.0
    %1949 = vmatpush1.msra.mxu0 %v1470
    %1950 = vmatprep.subr.mxu0 0.0
    %1951 = vmatpush1.msra.mxu0 %v1471
    %1952 = vmatprep.subr.mxu0 0.0
    %1953 = vmatpush1.msra.mxu0 %v1472
    %1954 = vmatprep.subr.mxu0 0.0
    %1955 = vmatpush1.msra.mxu0 0.0
    %1956 = vmatprep.subr.mxu0 0.0
    %1957 = vmatpush1.msra.mxu0 0.0
    %1958 = vmatprep.subr.mxu0 0.0
    %1959 = vmatpush1.msra.mxu0 0.0
    %1960 = vmatprep.subr.mxu0 0.0
    %1961 = vmatpush1.msra.mxu0 0.0
    %1962 = vmatprep.subr.mxu0 0.0
    %1963 = vmatpush1.msra.mxu0 0.0
    %1964 = vmatprep.subr.mxu0 0.0
    %1965 = vmatpush1.msra.mxu0 0.0
    %1966 = vmatprep.subr.mxu0 0.0
    %1967 = vmatpush1.msra.mxu0 0.0
    %1968 = vmatprep.subr.mxu0 0.0
    %1969 = vmatpush1.msra.mxu0 0.0
    %1970 = vmatprep.subr.mxu0 0.0
    %1971 = vmatpush1.msra.mxu0 0.0
    %1972 = vmatprep.subr.mxu0 0.0
    %1973 = vmatpush1.msra.mxu0 0.0
    %1974 = vmatprep.subr.mxu0 0.0
    %1975 = vmatpush1.msra.mxu0 0.0
    %1976 = vmatprep.subr.mxu0 0.0
    %1977 = vmatpush1.msra.mxu0 0.0
    %1978 = vmatprep.subr.mxu0 0.0
    %1979 = vmatpush1.msra.mxu0 0.0
    %1980 = vmatprep.subr.mxu0 0.0
    %1981 = vmatpush1.msra.mxu0 0.0
    %1982 = vmatprep.subr.mxu0 0.0
    %1983 = vmatpush1.msra.mxu0 0.0
    %1984 = vmatprep.subr.mxu0 0.0
    %1985 = vmatpush1.msra.mxu0 0.0
    %1986 = vmatprep.subr.mxu0 0.0
    %1987 = vmatpush1.msra.mxu0 0.0
    %1988 = vmatprep.subr.mxu0 0.0
    %1989 = vmatpush1.msra.mxu0 0.0
    %1990 = vmatprep.subr.mxu0 0.0
    %1991 = vmatpush1.msra.mxu0 0.0
    %1992 = vmatprep.subr.mxu0 0.0
    %1993 = vmatpush1.msra.mxu0 0.0
    %1994 = vmatprep.subr.mxu0 0.0
    %1995 = vmatpush1.msra.mxu0 0.0
    %1996 = vmatprep.subr.mxu0 0.0
    %1997 = vmatpush1.msra.mxu0 0.0
    %1998 = vmatprep.subr.mxu0 0.0
    %1999 = vmatpush1.msra.mxu0 0.0
    %2000 = vmatprep.subr.mxu0 0.0
    %2001 = vmatpush1.msra.mxu0 0.0
    %2002 = vmatprep.subr.mxu0 0.0
    %2003 = vmatpush1.msra.mxu0 0.0
    %2004 = vmatprep.subr.mxu0 0.0
    %2005 = vmatpush1.msra.mxu0 0.0
    %2006 = vmatprep.subr.mxu0 0.0
    %2007 = vmatpush1.msra.mxu0 0.0
    %2008 = vmatprep.subr.mxu0 0.0
    %2009 = vmatpush1.msra.mxu0 0.0
    %2010 = vmatprep.mubr.f32.mxu0 0.0
    %2011 = vmatmul.mubr.f32.gmra.mrb[0].mxu0 %v1874
    %v2012 = vpop.f32.mrb[0].mxu0
    %v2013 = vadd.f32 0.0, %v2012
    %v2014 = vpop.f32.mrb[0].mxu0
    %2015 = vdwg.mxu0
    %2016 = vmatprep.subr.mxu0 0.0
    %2017 = vmatpush1.msra.mxu0 %v1544
    %2018 = vmatprep.subr.mxu0 0.0
    %2019 = vmatpush1.msra.mxu0 %v1545
    %2020 = vmatprep.subr.mxu0 0.0
    %2021 = vmatpush1.msra.mxu0 %v1546
    %2022 = vmatprep.subr.mxu0 0.0
    %2023 = vmatpush1.msra.mxu0 %v1547
    %2024 = vmatprep.subr.mxu0 0.0
    %2025 = vmatpush1.msra.mxu0 0.0
    %2026 = vmatprep.subr.mxu0 0.0
    %2027 = vmatpush1.msra.mxu0 0.0
    %2028 = vmatprep.subr.mxu0 0.0
    %2029 = vmatpush1.msra.mxu0 0.0
    %2030 = vmatprep.subr.mxu0 0.0
    %2031 = vmatpush1.msra.mxu0 0.0
    %2032 = vmatprep.subr.mxu0 0.0
    %2033 = vmatpush1.msra.mxu0 0.0
    %2034 = vmatprep.subr.mxu0 0.0
    %2035 = vmatpush1.msra.mxu0 0.0
    %2036 = vmatprep.subr.mxu0 0.0
    %2037 = vmatpush1.msra.mxu0 0.0
    %2038 = vmatprep.subr.mxu0 0.0
    %2039 = vmatpush1.msra.mxu0 0.0
    %2040 = vmatprep.subr.mxu0 0.0
    %2041 = vmatpush1.msra.mxu0 0.0
    %2042 = vmatprep.subr.mxu0 0.0
    %2043 = vmatpush1.msra.mxu0 0.0
    %2044 = vmatprep.subr.mxu0 0.0
    %2045 = vmatpush1.msra.mxu0 0.0
    %2046 = vmatprep.subr.mxu0 0.0
    %2047 = vmatpush1.msra.mxu0 0.0
    %2048 = vmatprep.subr.mxu0 0.0
    %2049 = vmatpush1.msra.mxu0 0.0
    %2050 = vmatprep.subr.mxu0 0.0
    %2051 = vmatpush1.msra.mxu0 0.0
    %2052 = vmatprep.subr.mxu0 0.0
    %2053 = vmatpush1.msra.mxu0 0.0
    %2054 = vmatprep.subr.mxu0 0.0
    %2055 = vmatpush1.msra.mxu0 0.0
    %2056 = vmatprep.subr.mxu0 0.0
    %2057 = vmatpush1.msra.mxu0 0.0
    %2058 = vmatprep.subr.mxu0 0.0
    %2059 = vmatpush1.msra.mxu0 0.0
    %2060 = vmatprep.subr.mxu0 0.0
    %2061 = vmatpush1.msra.mxu0 0.0
    %2062 = vmatprep.subr.mxu0 0.0
    %2063 = vmatpush1.msra.mxu0 0.0
    %2064 = vmatprep.subr.mxu0 0.0
    %2065 = vmatpush1.msra.mxu0 0.0
    %2066 = vmatprep.subr.mxu0 0.0
    %2067 = vmatpush1.msra.mxu0 0.0
    %2068 = vmatprep.subr.mxu0 0.0
    %2069 = vmatpush1.msra.mxu0 0.0
    %2070 = vmatprep.subr.mxu0 0.0
    %2071 = vmatpush1.msra.mxu0 0.0
    %2072 = vmatprep.subr.mxu0 0.0
    %2073 = vmatpush1.msra.mxu0 0.0
    %2074 = vmatprep.subr.mxu0 0.0
    %2075 = vmatpush1.msra.mxu0 0.0
    %2076 = vmatprep.subr.mxu0 0.0
    %2077 = vmatpush1.msra.mxu0 0.0
    %2078 = vmatprep.subr.mxu0 0.0
    %2079 = vmatpush1.msra.mxu0 0.0
    %2080 = vmatprep.mubr.f32.mxu0 0.0
    %2081 = vmatmul.mubr.f32.gmra.mrb[0].mxu0 %v1874
    %v2082 = vpop.f32.mrb[0].mxu0
    %v2083 = vadd.f32 %v1135, %v2082
    %v2084 = vpop.f32.mrb[0].mxu0
    %2085 = vdwg.mxu0
    %v2086 = vadd.f32 %v812, %v1943
    %v2087 = vxor.u32 %v2086, 2147483648
    %v2088 = vmul.f32 %v2087, 1.442695
    %v2089 = vpow.pop %v2088
    %v2090 = vadd.f32 %v2089, 1.0
    %v2091 = vrcp.pop %v2090
    %v2092 = vmul.f32 1.0, %v2091
    %v2093 = vadd.f32 %v952, %v2013
    %v2094 = vxor.u32 %v2093, 2147483648
    %v2095 = vmul.f32 %v2094, 1.442695
    %v2096 = vpow.pop %v2095
    %v2097 = vadd.f32 %v2096, 1.0
    %v2098 = vrcp.pop %v2097
    %v2099 = vmul.f32 1.0, %v2098
    %v2100 = vmul.f32 %v2092, %v2083
    %v2101 = vadd.f32 %v1082, %v2100
    %v2102 = vtanh.pop %v2101
    %v2103 = vsub.f32 1.0, %v2099
    %v2104 = vmul.f32 %v2103, %v2102
    %v2105 = vmul.f32 %v2099, %v1638
    %v2106 = vadd.f32 %v2104, %v2105
    %v2108 = vsel %vm1146, %v1872, 0
    %2110 = vmatprep.subr.mxu0 0.0
    %2111 = vmatpush1.msra.mxu0 %v1142
    %2112 = vmatprep.subr.mxu0 0.0
    %2113 = vmatpush1.msra.mxu0 %v1143
    %2114 = vmatprep.subr.mxu0 0.0
    %2115 = vmatpush1.msra.mxu0 %v1144
    %2116 = vmatprep.subr.mxu0 0.0
    %2117 = vmatpush1.msra.mxu0 %v1145
    %2118 = vmatprep.subr.mxu0 0.0
    %2119 = vmatpush1.msra.mxu0 0.0
    %2120 = vmatprep.subr.mxu0 0.0
    %2121 = vmatpush1.msra.mxu0 0.0
    %2122 = vmatprep.subr.mxu0 0.0
    %2123 = vmatpush1.msra.mxu0 0.0
    %2124 = vmatprep.subr.mxu0 0.0
    %2125 = vmatpush1.msra.mxu0 0.0
    %2126 = vmatprep.subr.mxu0 0.0
    %2127 = vmatpush1.msra.mxu0 0.0
    %2128 = vmatprep.subr.mxu0 0.0
    %2129 = vmatpush1.msra.mxu0 0.0
    %2130 = vmatprep.subr.mxu0 0.0
    %2131 = vmatpush1.msra.mxu0 0.0
    %2132 = vmatprep.subr.mxu0 0.0
    %2133 = vmatpush1.msra.mxu0 0.0
    %2134 = vmatprep.subr.mxu0 0.0
    %2135 = vmatpush1.msra.mxu0 0.0
    %2136 = vmatprep.subr.mxu0 0.0
    %2137 = vmatpush1.msra.mxu0 0.0
    %2138 = vmatprep.subr.mxu0 0.0
    %2139 = vmatpush1.msra.mxu0 0.0
    %2140 = vmatprep.subr.mxu0 0.0
    %2141 = vmatpush1.msra.mxu0 0.0
    %2142 = vmatprep.subr.mxu0 0.0
    %2143 = vmatpush1.msra.mxu0 0.0
    %2144 = vmatprep.subr.mxu0 0.0
    %2145 = vmatpush1.msra.mxu0 0.0
    %2146 = vmatprep.subr.mxu0 0.0
    %2147 = vmatpush1.msra.mxu0 0.0
    %2148 = vmatprep.subr.mxu0 0.0
    %2149 = vmatpush1.msra.mxu0 0.0
    %2150 = vmatprep.subr.mxu0 0.0
    %2151 = vmatpush1.msra.mxu0 0.0
    %2152 = vmatprep.subr.mxu0 0.0
    %2153 = vmatpush1.msra.mxu0 0.0
    %2154 = vmatprep.subr.mxu0 0.0
    %2155 = vmatpush1.msra.mxu0 0.0
    %2156 = vmatprep.subr.mxu0 0.0
    %2157 = vmatpush1.msra.mxu0 0.0
    %2158 = vmatprep.subr.mxu0 0.0
    %2159 = vmatpush1.msra.mxu0 0.0
    %2160 = vmatprep.subr.mxu0 0.0
    %2161 = vmatpush1.msra.mxu0 0.0
    %2162 = vmatprep.subr.mxu0 0.0
    %2163 = vmatpush1.msra.mxu0 0.0
    %2164 = vmatprep.subr.mxu0 0.0
    %2165 = vmatpush1.msra.mxu0 0.0
    %2166 = vmatprep.subr.mxu0 0.0
    %2167 = vmatpush1.msra.mxu0 0.0
    %2168 = vmatprep.subr.mxu0 0.0
    %2169 = vmatpush1.msra.mxu0 0.0
    %2170 = vmatprep.subr.mxu0 0.0
    %2171 = vmatpush1.msra.mxu0 0.0
    %2172 = vmatprep.subr.mxu0 0.0
    %2173 = vmatpush1.msra.mxu0 0.0
    %2174 = vmatprep.mubr.f32.mxu0 0.0
    %2175 = vmatmul.mubr.f32.gmra.mrb[0].mxu0 %v2108
    %v2176 = vpop.f32.mrb[0].mxu0
    %v2177 = vadd.f32 0.0, %v2176
    %v2178 = vpop.f32.mrb[0].mxu0
    %2179 = vdwg.mxu0
    %2180 = vmatprep.subr.mxu0 0.0
    %2181 = vmatpush1.msra.mxu0 %v1221
    %2182 = vmatprep.subr.mxu0 0.0
    %2183 = vmatpush1.msra.mxu0 %v1222
    %2184 = vmatprep.subr.mxu0 0.0
    %2185 = vmatpush1.msra.mxu0 %v1223
    %2186 = vmatprep.subr.mxu0 0.0
    %2187 = vmatpush1.msra.mxu0 %v1224
    %2188 = vmatprep.subr.mxu0 0.0
    %2189 = vmatpush1.msra.mxu0 0.0
    %2190 = vmatprep.subr.mxu0 0.0
    %2191 = vmatpush1.msra.mxu0 0.0
    %2192 = vmatprep.subr.mxu0 0.0
    %2193 = vmatpush1.msra.mxu0 0.0
    %2194 = vmatprep.subr.mxu0 0.0
    %2195 = vmatpush1.msra.mxu0 0.0
    %2196 = vmatprep.subr.mxu0 0.0
    %2197 = vmatpush1.msra.mxu0 0.0
    %2198 = vmatprep.subr.mxu0 0.0
    %2199 = vmatpush1.msra.mxu0 0.0
    %2200 = vmatprep.subr.mxu0 0.0
    %2201 = vmatpush1.msra.mxu0 0.0
    %2202 = vmatprep.subr.mxu0 0.0
    %2203 = vmatpush1.msra.mxu0 0.0
    %2204 = vmatprep.subr.mxu0 0.0
    %2205 = vmatpush1.msra.mxu0 0.0
    %2206 = vmatprep.subr.mxu0 0.0
    %2207 = vmatpush1.msra.mxu0 0.0
    %2208 = vmatprep.subr.mxu0 0.0
    %2209 = vmatpush1.msra.mxu0 0.0
    %2210 = vmatprep.subr.mxu0 0.0
    %2211 = vmatpush1.msra.mxu0 0.0
    %2212 = vmatprep.subr.mxu0 0.0
    %2213 = vmatpush1.msra.mxu0 0.0
    %2214 = vmatprep.subr.mxu0 0.0
    %2215 = vmatpush1.msra.mxu0 0.0
    %2216 = vmatprep.subr.mxu0 0.0
    %2217 = vmatpush1.msra.mxu0 0.0
    %2218 = vmatprep.subr.mxu0 0.0
    %2219 = vmatpush1.msra.mxu0 0.0
    %2220 = vmatprep.subr.mxu0 0.0
    %2221 = vmatpush1.msra.mxu0 0.0
    %2222 = vmatprep.subr.mxu0 0.0
    %2223 = vmatpush1.msra.mxu0 0.0
    %2224 = vmatprep.subr.mxu0 0.0
    %2225 = vmatpush1.msra.mxu0 0.0
    %2226 = vmatprep.subr.mxu0 0.0
    %2227 = vmatpush1.msra.mxu0 0.0
    %2228 = vmatprep.subr.mxu0 0.0
    %2229 = vmatpush1.msra.mxu0 0.0
    %2230 = vmatprep.subr.mxu0 0.0
    %2231 = vmatpush1.msra.mxu0 0.0
    %2232 = vmatprep.subr.mxu0 0.0
    %2233 = vmatpush1.msra.mxu0 0.0
    %2234 = vmatprep.subr.mxu0 0.0
    %2235 = vmatpush1.msra.mxu0 0.0
    %2236 = vmatprep.subr.mxu0 0.0
    %2237 = vmatpush1.msra.mxu0 0.0
    %2238 = vmatprep.subr.mxu0 0.0
    %2239 = vmatpush1.msra.mxu0 0.0
    %2240 = vmatprep.subr.mxu0 0.0
    %2241 = vmatpush1.msra.mxu0 0.0
    %2242 = vmatprep.subr.mxu0 0.0
    %2243 = vmatpush1.msra.mxu0 0.0
    %2244 = vmatprep.mubr.f32.mxu0 0.0
    %2245 = vmatmul.mubr.f32.gmra.mrb[0].mxu0 %v2108
    %v2246 = vpop.f32.mrb[0].mxu0
    %v2247 = vadd.f32 0.0, %v2246
    %v2248 = vpop.f32.mrb[0].mxu0
    %2249 = vdwg.mxu0
    %2250 = vmatprep.subr.mxu0 0.0
    %2251 = vmatpush1.msra.mxu0 %v1296
    %2252 = vmatprep.subr.mxu0 0.0
    %2253 = vmatpush1.msra.mxu0 %v1297
    %2254 = vmatprep.subr.mxu0 0.0
    %2255 = vmatpush1.msra.mxu0 %v1298
    %2256 = vmatprep.subr.mxu0 0.0
    %2257 = vmatpush1.msra.mxu0 %v1299
    %2258 = vmatprep.subr.mxu0 0.0
    %2259 = vmatpush1.msra.mxu0 0.0
    %2260 = vmatprep.subr.mxu0 0.0
    %2261 = vmatpush1.msra.mxu0 0.0
    %2262 = vmatprep.subr.mxu0 0.0
    %2263 = vmatpush1.msra.mxu0 0.0
    %2264 = vmatprep.subr.mxu0 0.0
    %2265 = vmatpush1.msra.mxu0 0.0
    %2266 = vmatprep.subr.mxu0 0.0
    %2267 = vmatpush1.msra.mxu0 0.0
    %2268 = vmatprep.subr.mxu0 0.0
    %2269 = vmatpush1.msra.mxu0 0.0
    %2270 = vmatprep.subr.mxu0 0.0
    %2271 = vmatpush1.msra.mxu0 0.0
    %2272 = vmatprep.subr.mxu0 0.0
    %2273 = vmatpush1.msra.mxu0 0.0
    %2274 = vmatprep.subr.mxu0 0.0
    %2275 = vmatpush1.msra.mxu0 0.0
    %2276 = vmatprep.subr.mxu0 0.0
    %2277 = vmatpush1.msra.mxu0 0.0
    %2278 = vmatprep.subr.mxu0 0.0
    %2279 = vmatpush1.msra.mxu0 0.0
    %2280 = vmatprep.subr.mxu0 0.0
    %2281 = vmatpush1.msra.mxu0 0.0
    %2282 = vmatprep.subr.mxu0 0.0
    %2283 = vmatpush1.msra.mxu0 0.0
    %2284 = vmatprep.subr.mxu0 0.0
    %2285 = vmatpush1.msra.mxu0 0.0
    %2286 = vmatprep.subr.mxu0 0.0
    %2287 = vmatpush1.msra.mxu0 0.0
    %2288 = vmatprep.subr.mxu0 0.0
    %2289 = vmatpush1.msra.mxu0 0.0
    %2290 = vmatprep.subr.mxu0 0.0
    %2291 = vmatpush1.msra.mxu0 0.0
    %2292 = vmatprep.subr.mxu0 0.0
    %2293 = vmatpush1.msra.mxu0 0.0
    %2294 = vmatprep.subr.mxu0 0.0
    %2295 = vmatpush1.msra.mxu0 0.0
    %2296 = vmatprep.subr.mxu0 0.0
    %2297 = vmatpush1.msra.mxu0 0.0
    %2298 = vmatprep.subr.mxu0 0.0
    %2299 = vmatpush1.msra.mxu0 0.0
    %2300 = vmatprep.subr.mxu0 0.0
    %2301 = vmatpush1.msra.mxu0 0.0
    %2302 = vmatprep.subr.mxu0 0.0
    %2303 = vmatpush1.msra.mxu0 0.0
    %2304 = vmatprep.subr.mxu0 0.0
    %2305 = vmatpush1.msra.mxu0 0.0
    %2306 = vmatprep.subr.mxu0 0.0
    %2307 = vmatpush1.msra.mxu0 0.0
    %2308 = vmatprep.subr.mxu0 0.0
    %2309 = vmatpush1.msra.mxu0 0.0
    %2310 = vmatprep.subr.mxu0 0.0
    %2311 = vmatpush1.msra.mxu0 0.0
    %2312 = vmatprep.subr.mxu0 0.0
    %2313 = vmatpush1.msra.mxu0 0.0
    %2314 = vmatprep.mubr.f32.mxu0 0.0
    %2315 = vmatmul.mubr.f32.gmra.mrb[0].mxu0 %v2108
    %v2316 = vpop.f32.mrb[0].mxu0
    %v2317 = vadd.f32 %v1110, %v2316
    %v2318 = vpop.f32.mrb[0].mxu0
    %2319 = vdwg.mxu0
    %v2320 = vadd.f32 %v389, %v2177
    %v2321 = vxor.u32 %v2320, 2147483648
    %v2322 = vmul.f32 %v2321, 1.442695
    %v2323 = vpow.pop %v2322
    %v2324 = vadd.f32 %v2323, 1.0
    %v2325 = vrcp.pop %v2324
    %v2326 = vmul.f32 1.0, %v2325
    %v2327 = vadd.f32 %v529, %v2247
    %v2328 = vxor.u32 %v2327, 2147483648
    %v2329 = vmul.f32 %v2328, 1.442695
    %v2330 = vpow.pop %v2329
    %v2331 = vadd.f32 %v2330, 1.0
    %v2332 = vrcp.pop %v2331
    %v2333 = vmul.f32 1.0, %v2332
    %v2334 = vmul.f32 %v2326, %v2317
    %v2335 = vadd.f32 %v659, %v2334
    %v2336 = vtanh.pop %v2335
    %v2337 = vsub.f32 1.0, %v2333
    %v2338 = vmul.f32 %v2337, %v2336
    %v2339 = vmul.f32 %v2333, %v1872
    %v2340 = vadd.f32 %v2338, %v2339
    %v2342 = vsel %vm1146, %v2106, 0
    %2344 = vmatprep.subr.mxu0 0.0
    %2345 = vmatpush1.msra.mxu0 %v1391
    %2346 = vmatprep.subr.mxu0 0.0
    %2347 = vmatpush1.msra.mxu0 %v1392
    %2348 = vmatprep.subr.mxu0 0.0
    %2349 = vmatpush1.msra.mxu0 %v1393
    %2350 = vmatprep.subr.mxu0 0.0
    %2351 = vmatpush1.msra.mxu0 %v1394
    %2352 = vmatprep.subr.mxu0 0.0
    %2353 = vmatpush1.msra.mxu0 0.0
    %2354 = vmatprep.subr.mxu0 0.0
    %2355 = vmatpush1.msra.mxu0 0.0
    %2356 = vmatprep.subr.mxu0 0.0
    %2357 = vmatpush1.msra.mxu0 0.0
    %2358 = vmatprep.subr.mxu0 0.0
    %2359 = vmatpush1.msra.mxu0 0.0
    %2360 = vmatprep.subr.mxu0 0.0
    %2361 = vmatpush1.msra.mxu0 0.0
    %2362 = vmatprep.subr.mxu0 0.0
    %2363 = vmatpush1.msra.mxu0 0.0
    %2364 = vmatprep.subr.mxu0 0.0
    %2365 = vmatpush1.msra.mxu0 0.0
    %2366 = vmatprep.subr.mxu0 0.0
    %2367 = vmatpush1.msra.mxu0 0.0
    %2368 = vmatprep.subr.mxu0 0.0
    %2369 = vmatpush1.msra.mxu0 0.0
    %2370 = vmatprep.subr.mxu0 0.0
    %2371 = vmatpush1.msra.mxu0 0.0
    %2372 = vmatprep.subr.mxu0 0.0
    %2373 = vmatpush1.msra.mxu0 0.0
    %2374 = vmatprep.subr.mxu0 0.0
    %2375 = vmatpush1.msra.mxu0 0.0
    %2376 = vmatprep.subr.mxu0 0.0
    %2377 = vmatpush1.msra.mxu0 0.0
    %2378 = vmatprep.subr.mxu0 0.0
    %2379 = vmatpush1.msra.mxu0 0.0
    %2380 = vmatprep.subr.mxu0 0.0
    %2381 = vmatpush1.msra.mxu0 0.0
    %2382 = vmatprep.subr.mxu0 0.0
    %2383 = vmatpush1.msra.mxu0 0.0
    %2384 = vmatprep.subr.mxu0 0.0
    %2385 = vmatpush1.msra.mxu0 0.0
    %2386 = vmatprep.subr.mxu0 0.0
    %2387 = vmatpush1.msra.mxu0 0.0
    %2388 = vmatprep.subr.mxu0 0.0
    %2389 = vmatpush1.msra.mxu0 0.0
    %2390 = vmatprep.subr.mxu0 0.0
    %2391 = vmatpush1.msra.mxu0 0.0
    %2392 = vmatprep.subr.mxu0 0.0
    %2393 = vmatpush1.msra.mxu0 0.0
    %2394 = vmatprep.subr.mxu0 0.0
    %2395 = vmatpush1.msra.mxu0 0.0
    %2396 = vmatprep.subr.mxu0 0.0
    %2397 = vmatpush1.msra.mxu0 0.0
    %2398 = vmatprep.subr.mxu0 0.0
    %2399 = vmatpush1.msra.mxu0 0.0
    %2400 = vmatprep.subr.mxu0 0.0
    %2401 = vmatpush1.msra.mxu0 0.0
    %2402 = vmatprep.subr.mxu0 0.0
    %2403 = vmatpush1.msra.mxu0 0.0
    %2404 = vmatprep.subr.mxu0 0.0
    %2405 = vmatpush1.msra.mxu0 0.0
    %2406 = vmatprep.subr.mxu0 0.0
    %2407 = vmatpush1.msra.mxu0 0.0
    %2408 = vmatprep.mubr.f32.mxu0 0.0
    %2409 = vmatmul.mubr.f32.gmra.mrb[0].mxu0 %v2342
    %v2410 = vpop.f32.mrb[0].mxu0
    %v2411 = vadd.f32 0.0, %v2410
    %v2412 = vpop.f32.mrb[0].mxu0
    %2413 = vdwg.mxu0
    %2414 = vmatprep.subr.mxu0 0.0
    %2415 = vmatpush1.msra.mxu0 %v1469
    %2416 = vmatprep.subr.mxu0 0.0
    %2417 = vmatpush1.msra.mxu0 %v1470
    %2418 = vmatprep.subr.mxu0 0.0
    %2419 = vmatpush1.msra.mxu0 %v1471
    %2420 = vmatprep.subr.mxu0 0.0
    %2421 = vmatpush1.msra.mxu0 %v1472
    %2422 = vmatprep.subr.mxu0 0.0
    %2423 = vmatpush1.msra.mxu0 0.0
    %2424 = vmatprep.subr.mxu0 0.0
    %2425 = vmatpush1.msra.mxu0 0.0
    %2426 = vmatprep.subr.mxu0 0.0
    %2427 = vmatpush1.msra.mxu0 0.0
    %2428 = vmatprep.subr.mxu0 0.0
    %2429 = vmatpush1.msra.mxu0 0.0
    %2430 = vmatprep.subr.mxu0 0.0
    %2431 = vmatpush1.msra.mxu0 0.0
    %2432 = vmatprep.subr.mxu0 0.0
    %2433 = vmatpush1.msra.mxu0 0.0
    %2434 = vmatprep.subr.mxu0 0.0
    %2435 = vmatpush1.msra.mxu0 0.0
    %2436 = vmatprep.subr.mxu0 0.0
    %2437 = vmatpush1.msra.mxu0 0.0
    %2438 = vmatprep.subr.mxu0 0.0
    %2439 = vmatpush1.msra.mxu0 0.0
    %2440 = vmatprep.subr.mxu0 0.0
    %2441 = vmatpush1.msra.mxu0 0.0
    %2442 = vmatprep.subr.mxu0 0.0
    %2443 = vmatpush1.msra.mxu0 0.0
    %2444 = vmatprep.subr.mxu0 0.0
    %2445 = vmatpush1.msra.mxu0 0.0
    %2446 = vmatprep.subr.mxu0 0.0
    %2447 = vmatpush1.msra.mxu0 0.0
    %2448 = vmatprep.subr.mxu0 0.0
    %2449 = vmatpush1.msra.mxu0 0.0
    %2450 = vmatprep.subr.mxu0 0.0
    %2451 = vmatpush1.msra.mxu0 0.0
    %2452 = vmatprep.subr.mxu0 0.0
    %2453 = vmatpush1.msra.mxu0 0.0
    %2454 = vmatprep.subr.mxu0 0.0
    %2455 = vmatpush1.msra.mxu0 0.0
    %2456 = vmatprep.subr.mxu0 0.0
    %2457 = vmatpush1.msra.mxu0 0.0
    %2458 = vmatprep.subr.mxu0 0.0
    %2459 = vmatpush1.msra.mxu0 0.0
    %2460 = vmatprep.subr.mxu0 0.0
    %2461 = vmatpush1.msra.mxu0 0.0
    %2462 = vmatprep.subr.mxu0 0.0
    %2463 = vmatpush1.msra.mxu0 0.0
    %2464 = vmatprep.subr.mxu0 0.0
    %2465 = vmatpush1.msra.mxu0 0.0
    %2466 = vmatprep.subr.mxu0 0.0
    %2467 = vmatpush1.msra.mxu0 0.0
    %2468 = vmatprep.subr.mxu0 0.0
    %2469 = vmatpush1.msra.mxu0 0.0
    %2470 = vmatprep.subr.mxu0 0.0
    %2471 = vmatpush1.msra.mxu0 0.0
    %2472 = vmatprep.subr.mxu0 0.0
    %2473 = vmatpush1.msra.mxu0 0.0
    %2474 = vmatprep.subr.mxu0 0.0
    %2475 = vmatpush1.msra.mxu0 0.0
    %2476 = vmatprep.subr.mxu0 0.0
    %2477 = vmatpush1.msra.mxu0 0.0
    %2478 = vmatprep.mubr.f32.mxu0 0.0
    %2479 = vmatmul.mubr.f32.gmra.mrb[0].mxu0 %v2342
    %v2480 = vpop.f32.mrb[0].mxu0
    %v2481 = vadd.f32 0.0, %v2480
    %v2482 = vpop.f32.mrb[0].mxu0
    %2483 = vdwg.mxu0
    %2484 = vmatprep.subr.mxu0 0.0
    %2485 = vmatpush1.msra.mxu0 %v1544
    %2486 = vmatprep.subr.mxu0 0.0
    %2487 = vmatpush1.msra.mxu0 %v1545
    %2488 = vmatprep.subr.mxu0 0.0
    %2489 = vmatpush1.msra.mxu0 %v1546
    %2490 = vmatprep.subr.mxu0 0.0
    %2491 = vmatpush1.msra.mxu0 %v1547
    %2492 = vmatprep.subr.mxu0 0.0
    %2493 = vmatpush1.msra.mxu0 0.0
    %2494 = vmatprep.subr.mxu0 0.0
    %2495 = vmatpush1.msra.mxu0 0.0
    %2496 = vmatprep.subr.mxu0 0.0
    %2497 = vmatpush1.msra.mxu0 0.0
    %2498 = vmatprep.subr.mxu0 0.0
    %2499 = vmatpush1.msra.mxu0 0.0
    %2500 = vmatprep.subr.mxu0 0.0
    %2501 = vmatpush1.msra.mxu0 0.0
    %2502 = vmatprep.subr.mxu0 0.0
    %2503 = vmatpush1.msra.mxu0 0.0
    %2504 = vmatprep.subr.mxu0 0.0
    %2505 = vmatpush1.msra.mxu0 0.0
    %2506 = vmatprep.subr.mxu0 0.0
    %2507 = vmatpush1.msra.mxu0 0.0
    %2508 = vmatprep.subr.mxu0 0.0
    %2509 = vmatpush1.msra.mxu0 0.0
    %2510 = vmatprep.subr.mxu0 0.0
    %2511 = vmatpush1.msra.mxu0 0.0
    %2512 = vmatprep.subr.mxu0 0.0
    %2513 = vmatpush1.msra.mxu0 0.0
    %2514 = vmatprep.subr.mxu0 0.0
    %2515 = vmatpush1.msra.mxu0 0.0
    %2516 = vmatprep.subr.mxu0 0.0
    %2517 = vmatpush1.msra.mxu0 0.0
    %2518 = vmatprep.subr.mxu0 0.0
    %2519 = vmatpush1.msra.mxu0 0.0
    %2520 = vmatprep.subr.mxu0 0.0
    %2521 = vmatpush1.msra.mxu0 0.0
    %2522 = vmatprep.subr.mxu0 0.0
    %2523 = vmatpush1.msra.mxu0 0.0
    %2524 = vmatprep.subr.mxu0 0.0
    %2525 = vmatpush1.msra.mxu0 0.0
    %2526 = vmatprep.subr.mxu0 0.0
    %2527 = vmatpush1.msra.mxu0 0.0
    %2528 = vmatprep.subr.mxu0 0.0
    %2529 = vmatpush1.msra.mxu0 0.0
    %2530 = vmatprep.subr.mxu0 0.0
    %2531 = vmatpush1.msra.mxu0 0.0
    %2532 = vmatprep.subr.mxu0 0.0
    %2533 = vmatpush1.msra.mxu0 0.0
    %2534 = vmatprep.subr.mxu0 0.0
    %2535 = vmatpush1.msra.mxu0 0.0
    %2536 = vmatprep.subr.mxu0 0.0
    %2537 = vmatpush1.msra.mxu0 0.0
    %2538 = vmatprep.subr.mxu0 0.0
    %2539 = vmatpush1.msra.mxu0 0.0
    %2540 = vmatprep.subr.mxu0 0.0
    %2541 = vmatpush1.msra.mxu0 0.0
    %2542 = vmatprep.subr.mxu0 0.0
    %2543 = vmatpush1.msra.mxu0 0.0
    %2544 = vmatprep.subr.mxu0 0.0
    %2545 = vmatpush1.msra.mxu0 0.0
    %2546 = vmatprep.subr.mxu0 0.0
    %2547 = vmatpush1.msra.mxu0 0.0
    %2548 = vmatprep.mubr.f32.mxu0 0.0
    %2549 = vmatmul.mubr.f32.gmra.mrb[0].mxu0 %v2342
    %v2550 = vpop.f32.mrb[0].mxu0
    %v2551 = vadd.f32 %v1135, %v2550
    %v2552 = vpop.f32.mrb[0].mxu0
    %2553 = vdwg.mxu0
    %v2554 = vadd.f32 %v804, %v2411
    %v2555 = vxor.u32 %v2554, 2147483648
    %v2556 = vmul.f32 %v2555, 1.442695
    %v2557 = vpow.pop %v2556
    %v2558 = vadd.f32 %v2557, 1.0
    %v2559 = vrcp.pop %v2558
    %v2560 = vmul.f32 1.0, %v2559
    %v2561 = vadd.f32 %v944, %v2481
    %v2562 = vxor.u32 %v2561, 2147483648
    %v2563 = vmul.f32 %v2562, 1.442695
    %v2564 = vpow.pop %v2563
    %v2565 = vadd.f32 %v2564, 1.0
    %v2566 = vrcp.pop %v2565
    %v2567 = vmul.f32 1.0, %v2566
    %v2568 = vmul.f32 %v2560, %v2551
    %v2569 = vadd.f32 %v1074, %v2568
    %v2570 = vtanh.pop %v2569
    %v2571 = vsub.f32 1.0, %v2567
    %v2572 = vmul.f32 %v2571, %v2570
    %v2573 = vmul.f32 %v2567, %v2106
    %v2574 = vadd.f32 %v2572, %v2573
    %v2576 = vsel %vm1146, %v2340, 0
    %2578 = vmatprep.subr.mxu0 0.0
    %2579 = vmatpush1.msra.mxu0 %v1142
    %2580 = vmatprep.subr.mxu0 0.0
    %2581 = vmatpush1.msra.mxu0 %v1143
    %2582 = vmatprep.subr.mxu0 0.0
    %2583 = vmatpush1.msra.mxu0 %v1144
    %2584 = vmatprep.subr.mxu0 0.0
    %2585 = vmatpush1.msra.mxu0 %v1145
    %2586 = vmatprep.subr.mxu0 0.0
    %2587 = vmatpush1.msra.mxu0 0.0
    %2588 = vmatprep.subr.mxu0 0.0
    %2589 = vmatpush1.msra.mxu0 0.0
    %2590 = vmatprep.subr.mxu0 0.0
    %2591 = vmatpush1.msra.mxu0 0.0
    %2592 = vmatprep.subr.mxu0 0.0
    %2593 = vmatpush1.msra.mxu0 0.0
    %2594 = vmatprep.subr.mxu0 0.0
    %2595 = vmatpush1.msra.mxu0 0.0
    %2596 = vmatprep.subr.mxu0 0.0
    %2597 = vmatpush1.msra.mxu0 0.0
    %2598 = vmatprep.subr.mxu0 0.0
    %2599 = vmatpush1.msra.mxu0 0.0
    %2600 = vmatprep.subr.mxu0 0.0
    %2601 = vmatpush1.msra.mxu0 0.0
    %2602 = vmatprep.subr.mxu0 0.0
    %2603 = vmatpush1.msra.mxu0 0.0
    %2604 = vmatprep.subr.mxu0 0.0
    %2605 = vmatpush1.msra.mxu0 0.0
    %2606 = vmatprep.subr.mxu0 0.0
    %2607 = vmatpush1.msra.mxu0 0.0
    %2608 = vmatprep.subr.mxu0 0.0
    %2609 = vmatpush1.msra.mxu0 0.0
    %2610 = vmatprep.subr.mxu0 0.0
    %2611 = vmatpush1.msra.mxu0 0.0
    %2612 = vmatprep.subr.mxu0 0.0
    %2613 = vmatpush1.msra.mxu0 0.0
    %2614 = vmatprep.subr.mxu0 0.0
    %2615 = vmatpush1.msra.mxu0 0.0
    %2616 = vmatprep.subr.mxu0 0.0
    %2617 = vmatpush1.msra.mxu0 0.0
    %2618 = vmatprep.subr.mxu0 0.0
    %2619 = vmatpush1.msra.mxu0 0.0
    %2620 = vmatprep.subr.mxu0 0.0
    %2621 = vmatpush1.msra.mxu0 0.0
    %2622 = vmatprep.subr.mxu0 0.0
    %2623 = vmatpush1.msra.mxu0 0.0
    %2624 = vmatprep.subr.mxu0 0.0
    %2625 = vmatpush1.msra.mxu0 0.0
    %2626 = vmatprep.subr.mxu0 0.0
    %2627 = vmatpush1.msra.mxu0 0.0
    %2628 = vmatprep.subr.mxu0 0.0
    %2629 = vmatpush1.msra.mxu0 0.0
    %2630 = vmatprep.subr.mxu0 0.0
    %2631 = vmatpush1.msra.mxu0 0.0
    %2632 = vmatprep.subr.mxu0 0.0
    %2633 = vmatpush1.msra.mxu0 0.0
    %2634 = vmatprep.subr.mxu0 0.0
    %2635 = vmatpush1.msra.mxu0 0.0
    %2636 = vmatprep.subr.mxu0 0.0
    %2637 = vmatpush1.msra.mxu0 0.0
    %2638 = vmatprep.subr.mxu0 0.0
    %2639 = vmatpush1.msra.mxu0 0.0
    %2640 = vmatprep.subr.mxu0 0.0
    %2641 = vmatpush1.msra.mxu0 0.0
    %2642 = vmatprep.mubr.f32.mxu0 0.0
    %2643 = vmatmul.mubr.f32.gmra.mrb[0].mxu0 %v2576
    %v2644 = vpop.f32.mrb[0].mxu0
    %v2645 = vadd.f32 0.0, %v2644
    %v2646 = vpop.f32.mrb[0].mxu0
    %2647 = vdwg.mxu0
    %2648 = vmatprep.subr.mxu0 0.0
    %2649 = vmatpush1.msra.mxu0 %v1221
    %2650 = vmatprep.subr.mxu0 0.0
    %2651 = vmatpush1.msra.mxu0 %v1222
    %2652 = vmatprep.subr.mxu0 0.0
    %2653 = vmatpush1.msra.mxu0 %v1223
    %2654 = vmatprep.subr.mxu0 0.0
    %2655 = vmatpush1.msra.mxu0 %v1224
    %2656 = vmatprep.subr.mxu0 0.0
    %2657 = vmatpush1.msra.mxu0 0.0
    %2658 = vmatprep.subr.mxu0 0.0
    %2659 = vmatpush1.msra.mxu0 0.0
    %2660 = vmatprep.subr.mxu0 0.0
    %2661 = vmatpush1.msra.mxu0 0.0
    %2662 = vmatprep.subr.mxu0 0.0
    %2663 = vmatpush1.msra.mxu0 0.0
    %2664 = vmatprep.subr.mxu0 0.0
    %2665 = vmatpush1.msra.mxu0 0.0
    %2666 = vmatprep.subr.mxu0 0.0
    %2667 = vmatpush1.msra.mxu0 0.0
    %2668 = vmatprep.subr.mxu0 0.0
    %2669 = vmatpush1.msra.mxu0 0.0
    %2670 = vmatprep.subr.mxu0 0.0
    %2671 = vmatpush1.msra.mxu0 0.0
    %2672 = vmatprep.subr.mxu0 0.0
    %2673 = vmatpush1.msra.mxu0 0.0
    %2674 = vmatprep.subr.mxu0 0.0
    %2675 = vmatpush1.msra.mxu0 0.0
    %2676 = vmatprep.subr.mxu0 0.0
    %2677 = vmatpush1.msra.mxu0 0.0
    %2678 = vmatprep.subr.mxu0 0.0
    %2679 = vmatpush1.msra.mxu0 0.0
    %2680 = vmatprep.subr.mxu0 0.0
    %2681 = vmatpush1.msra.mxu0 0.0
    %2682 = vmatprep.subr.mxu0 0.0
    %2683 = vmatpush1.msra.mxu0 0.0
    %2684 = vmatprep.subr.mxu0 0.0
    %2685 = vmatpush1.msra.mxu0 0.0
    %2686 = vmatprep.subr.mxu0 0.0
    %2687 = vmatpush1.msra.mxu0 0.0
    %2688 = vmatprep.subr.mxu0 0.0
    %2689 = vmatpush1.msra.mxu0 0.0
    %2690 = vmatprep.subr.mxu0 0.0
    %2691 = vmatpush1.msra.mxu0 0.0
    %2692 = vmatprep.subr.mxu0 0.0
    %2693 = vmatpush1.msra.mxu0 0.0
    %2694 = vmatprep.subr.mxu0 0.0
    %2695 = vmatpush1.msra.mxu0 0.0
    %2696 = vmatprep.subr.mxu0 0.0
    %2697 = vmatpush1.msra.mxu0 0.0
    %2698 = vmatprep.subr.mxu0 0.0
    %2699 = vmatpush1.msra.mxu0 0.0
    %2700 = vmatprep.subr.mxu0 0.0
    %2701 = vmatpush1.msra.mxu0 0.0
    %2702 = vmatprep.subr.mxu0 0.0
    %2703 = vmatpush1.msra.mxu0 0.0
    %2704 = vmatprep.subr.mxu0 0.0
    %2705 = vmatpush1.msra.mxu0 0.0
    %2706 = vmatprep.subr.mxu0 0.0
    %2707 = vmatpush1.msra.mxu0 0.0
    %2708 = vmatprep.subr.mxu0 0.0
    %2709 = vmatpush1.msra.mxu0 0.0
    %2710 = vmatprep.subr.mxu0 0.0
    %2711 = vmatpush1.msra.mxu0 0.0
    %2712 = vmatprep.mubr.f32.mxu0 0.0
    %2713 = vmatmul.mubr.f32.gmra.mrb[0].mxu0 %v2576
    %v2714 = vpop.f32.mrb[0].mxu0
    %v2715 = vadd.f32 0.0, %v2714
    %v2716 = vpop.f32.mrb[0].mxu0
    %2717 = vdwg.mxu0
    %2718 = vmatprep.subr.mxu0 0.0
    %2719 = vmatpush1.msra.mxu0 %v1296
    %2720 = vmatprep.subr.mxu0 0.0
    %2721 = vmatpush1.msra.mxu0 %v1297
    %2722 = vmatprep.subr.mxu0 0.0
    %2723 = vmatpush1.msra.mxu0 %v1298
    %2724 = vmatprep.subr.mxu0 0.0
    %2725 = vmatpush1.msra.mxu0 %v1299
    %2726 = vmatprep.subr.mxu0 0.0
    %2727 = vmatpush1.msra.mxu0 0.0
    %2728 = vmatprep.subr.mxu0 0.0
    %2729 = vmatpush1.msra.mxu0 0.0
    %2730 = vmatprep.subr.mxu0 0.0
    %2731 = vmatpush1.msra.mxu0 0.0
    %2732 = vmatprep.subr.mxu0 0.0
    %2733 = vmatpush1.msra.mxu0 0.0
    %2734 = vmatprep.subr.mxu0 0.0
    %2735 = vmatpush1.msra.mxu0 0.0
    %2736 = vmatprep.subr.mxu0 0.0
    %2737 = vmatpush1.msra.mxu0 0.0
    %2738 = vmatprep.subr.mxu0 0.0
    %2739 = vmatpush1.msra.mxu0 0.0
    %2740 = vmatprep.subr.mxu0 0.0
    %2741 = vmatpush1.msra.mxu0 0.0
    %2742 = vmatprep.subr.mxu0 0.0
    %2743 = vmatpush1.msra.mxu0 0.0
    %2744 = vmatprep.subr.mxu0 0.0
    %2745 = vmatpush1.msra.mxu0 0.0
    %2746 = vmatprep.subr.mxu0 0.0
    %2747 = vmatpush1.msra.mxu0 0.0
    %2748 = vmatprep.subr.mxu0 0.0
    %2749 = vmatpush1.msra.mxu0 0.0
    %2750 = vmatprep.subr.mxu0 0.0
    %2751 = vmatpush1.msra.mxu0 0.0
    %2752 = vmatprep.subr.mxu0 0.0
    %2753 = vmatpush1.msra.mxu0 0.0
    %2754 = vmatprep.subr.mxu0 0.0
    %2755 = vmatpush1.msra.mxu0 0.0
    %2756 = vmatprep.subr.mxu0 0.0
    %2757 = vmatpush1.msra.mxu0 0.0
    %2758 = vmatprep.subr.mxu0 0.0
    %2759 = vmatpush1.msra.mxu0 0.0
    %2760 = vmatprep.subr.mxu0 0.0
    %2761 = vmatpush1.msra.mxu0 0.0
    %2762 = vmatprep.subr.mxu0 0.0
    %2763 = vmatpush1.msra.mxu0 0.0
    %2764 = vmatprep.subr.mxu0 0.0
    %2765 = vmatpush1.msra.mxu0 0.0
    %2766 = vmatprep.subr.mxu0 0.0
    %2767 = vmatpush1.msra.mxu0 0.0
    %2768 = vmatprep.subr.mxu0 0.0
    %2769 = vmatpush1.msra.mxu0 0.0
    %2770 = vmatprep.subr.mxu0 0.0
    %2771 = vmatpush1.msra.mxu0 0.0
    %2772 = vmatprep.subr.mxu0 0.0
    %2773 = vmatpush1.msra.mxu0 0.0
    %2774 = vmatprep.subr.mxu0 0.0
    %2775 = vmatpush1.msra.mxu0 0.0
    %2776 = vmatprep.subr.mxu0 0.0
    %2777 = vmatpush1.msra.mxu0 0.0
    %2778 = vmatprep.subr.mxu0 0.0
    %2779 = vmatpush1.msra.mxu0 0.0
    %2780 = vmatprep.subr.mxu0 0.0
    %2781 = vmatpush1.msra.mxu0 0.0
    %2782 = vmatprep.mubr.f32.mxu0 0.0
    %2783 = vmatmul.mubr.f32.gmra.mrb[0].mxu0 %v2576
    %v2784 = vpop.f32.mrb[0].mxu0
    %v2785 = vadd.f32 %v1110, %v2784
    %v2786 = vpop.f32.mrb[0].mxu0
    %2787 = vdwg.mxu0
    %v2788 = vadd.f32 %v397, %v2645
    %v2789 = vxor.u32 %v2788, 2147483648
    %v2790 = vmul.f32 %v2789, 1.442695
    %v2791 = vpow.pop %v2790
    %v2792 = vadd.f32 %v2791, 1.0
    %v2793 = vrcp.pop %v2792
    %v2794 = vmul.f32 1.0, %v2793
    %v2795 = vadd.f32 %v537, %v2715
    %v2796 = vxor.u32 %v2795, 2147483648
    %v2797 = vmul.f32 %v2796, 1.442695
    %v2798 = vpow.pop %v2797
    %v2799 = vadd.f32 %v2798, 1.0
    %v2800 = vrcp.pop %v2799
    %v2801 = vmul.f32 1.0, %v2800
    %v2802 = vmul.f32 %v2794, %v2785
    %v2803 = vadd.f32 %v667, %v2802
    %v2804 = vtanh.pop %v2803
    %v2805 = vsub.f32 1.0, %v2801
    %v2806 = vmul.f32 %v2805, %v2804
    %v2807 = vmul.f32 %v2801, %v2340
    %v2808 = vadd.f32 %v2806, %v2807
    %v2810 = vsel %vm1146, %v2574, 0
    %2812 = vmatprep.subr.mxu0 0.0
    %2813 = vmatpush1.msra.mxu0 %v1391
    %2814 = vmatprep.subr.mxu0 0.0
    %2815 = vmatpush1.msra.mxu0 %v1392
    %2816 = vmatprep.subr.mxu0 0.0
    %2817 = vmatpush1.msra.mxu0 %v1393
    %2818 = vmatprep.subr.mxu0 0.0
    %2819 = vmatpush1.msra.mxu0 %v1394
    %2820 = vmatprep.subr.mxu0 0.0
    %2821 = vmatpush1.msra.mxu0 0.0
    %2822 = vmatprep.subr.mxu0 0.0
    %2823 = vmatpush1.msra.mxu0 0.0
    %2824 = vmatprep.subr.mxu0 0.0
    %2825 = vmatpush1.msra.mxu0 0.0
    %2826 = vmatprep.subr.mxu0 0.0
    %2827 = vmatpush1.msra.mxu0 0.0
    %2828 = vmatprep.subr.mxu0 0.0
    %2829 = vmatpush1.msra.mxu0 0.0
    %2830 = vmatprep.subr.mxu0 0.0
    %2831 = vmatpush1.msra.mxu0 0.0
    %2832 = vmatprep.subr.mxu0 0.0
    %2833 = vmatpush1.msra.mxu0 0.0
    %2834 = vmatprep.subr.mxu0 0.0
    %2835 = vmatpush1.msra.mxu0 0.0
    %2836 = vmatprep.subr.mxu0 0.0
    %2837 = vmatpush1.msra.mxu0 0.0
    %2838 = vmatprep.subr.mxu0 0.0
    %2839 = vmatpush1.msra.mxu0 0.0
    %2840 = vmatprep.subr.mxu0 0.0
    %2841 = vmatpush1.msra.mxu0 0.0
    %2842 = vmatprep.subr.mxu0 0.0
    %2843 = vmatpush1.msra.mxu0 0.0
    %2844 = vmatprep.subr.mxu0 0.0
    %2845 = vmatpush1.msra.mxu0 0.0
    %2846 = vmatprep.subr.mxu0 0.0
    %2847 = vmatpush1.msra.mxu0 0.0
    %2848 = vmatprep.subr.mxu0 0.0
    %2849 = vmatpush1.msra.mxu0 0.0
    %2850 = vmatprep.subr.mxu0 0.0
    %2851 = vmatpush1.msra.mxu0 0.0
    %2852 = vmatprep.subr.mxu0 0.0
    %2853 = vmatpush1.msra.mxu0 0.0
    %2854 = vmatprep.subr.mxu0 0.0
    %2855 = vmatpush1.msra.mxu0 0.0
    %2856 = vmatprep.subr.mxu0 0.0
    %2857 = vmatpush1.msra.mxu0 0.0
    %2858 = vmatprep.subr.mxu0 0.0
    %2859 = vmatpush1.msra.mxu0 0.0
    %2860 = vmatprep.subr.mxu0 0.0
    %2861 = vmatpush1.msra.mxu0 0.0
    %2862 = vmatprep.subr.mxu0 0.0
    %2863 = vmatpush1.msra.mxu0 0.0
    %2864 = vmatprep.subr.mxu0 0.0
    %2865 = vmatpush1.msra.mxu0 0.0
    %2866 = vmatprep.subr.mxu0 0.0
    %2867 = vmatpush1.msra.mxu0 0.0
    %2868 = vmatprep.subr.mxu0 0.0
    %2869 = vmatpush1.msra.mxu0 0.0
    %2870 = vmatprep.subr.mxu0 0.0
    %2871 = vmatpush1.msra.mxu0 0.0
    %2872 = vmatprep.subr.mxu0 0.0
    %2873 = vmatpush1.msra.mxu0 0.0
    %2874 = vmatprep.subr.mxu0 0.0
    %2875 = vmatpush1.msra.mxu0 0.0
    %2876 = vmatprep.mubr.f32.mxu0 0.0
    %2877 = vmatmul.mubr.f32.gmra.mrb[0].mxu0 %v2810
    %v2878 = vpop.f32.mrb[0].mxu0
    %v2879 = vadd.f32 0.0, %v2878
    %v2880 = vpop.f32.mrb[0].mxu0
    %2881 = vdwg.mxu0
    %2882 = vmatprep.subr.mxu0 0.0
    %2883 = vmatpush1.msra.mxu0 %v1469
    %2884 = vmatprep.subr.mxu0 0.0
    %2885 = vmatpush1.msra.mxu0 %v1470
    %2886 = vmatprep.subr.mxu0 0.0
    %2887 = vmatpush1.msra.mxu0 %v1471
    %2888 = vmatprep.subr.mxu0 0.0
    %2889 = vmatpush1.msra.mxu0 %v1472
    %2890 = vmatprep.subr.mxu0 0.0
    %2891 = vmatpush1.msra.mxu0 0.0
    %2892 = vmatprep.subr.mxu0 0.0
    %2893 = vmatpush1.msra.mxu0 0.0
    %2894 = vmatprep.subr.mxu0 0.0
    %2895 = vmatpush1.msra.mxu0 0.0
    %2896 = vmatprep.subr.mxu0 0.0
    %2897 = vmatpush1.msra.mxu0 0.0
    %2898 = vmatprep.subr.mxu0 0.0
    %2899 = vmatpush1.msra.mxu0 0.0
    %2900 = vmatprep.subr.mxu0 0.0
    %2901 = vmatpush1.msra.mxu0 0.0
    %2902 = vmatprep.subr.mxu0 0.0
    %2903 = vmatpush1.msra.mxu0 0.0
    %2904 = vmatprep.subr.mxu0 0.0
    %2905 = vmatpush1.msra.mxu0 0.0
    %2906 = vmatprep.subr.mxu0 0.0
    %2907 = vmatpush1.msra.mxu0 0.0
    %2908 = vmatprep.subr.mxu0 0.0
    %2909 = vmatpush1.msra.mxu0 0.0
    %2910 = vmatprep.subr.mxu0 0.0
    %2911 = vmatpush1.msra.mxu0 0.0
    %2912 = vmatprep.subr.mxu0 0.0
    %2913 = vmatpush1.msra.mxu0 0.0
    %2914 = vmatprep.subr.mxu0 0.0
    %2915 = vmatpush1.msra.mxu0 0.0
    %2916 = vmatprep.subr.mxu0 0.0
    %2917 = vmatpush1.msra.mxu0 0.0
    %2918 = vmatprep.subr.mxu0 0.0
    %2919 = vmatpush1.msra.mxu0 0.0
    %2920 = vmatprep.subr.mxu0 0.0
    %2921 = vmatpush1.msra.mxu0 0.0
    %2922 = vmatprep.subr.mxu0 0.0
    %2923 = vmatpush1.msra.mxu0 0.0
    %2924 = vmatprep.subr.mxu0 0.0
    %2925 = vmatpush1.msra.mxu0 0.0
    %2926 = vmatprep.subr.mxu0 0.0
    %2927 = vmatpush1.msra.mxu0 0.0
    %2928 = vmatprep.subr.mxu0 0.0
    %2929 = vmatpush1.msra.mxu0 0.0
    %2930 = vmatprep.subr.mxu0 0.0
    %2931 = vmatpush1.msra.mxu0 0.0
    %2932 = vmatprep.subr.mxu0 0.0
    %2933 = vmatpush1.msra.mxu0 0.0
    %2934 = vmatprep.subr.mxu0 0.0
    %2935 = vmatpush1.msra.mxu0 0.0
    %2936 = vmatprep.subr.mxu0 0.0
    %2937 = vmatpush1.msra.mxu0 0.0
    %2938 = vmatprep.subr.mxu0 0.0
    %2939 = vmatpush1.msra.mxu0 0.0
    %2940 = vmatprep.subr.mxu0 0.0
    %2941 = vmatpush1.msra.mxu0 0.0
    %2942 = vmatprep.subr.mxu0 0.0
    %2943 = vmatpush1.msra.mxu0 0.0
    %2944 = vmatprep.subr.mxu0 0.0
    %2945 = vmatpush1.msra.mxu0 0.0
    %2946 = vmatprep.mubr.f32.mxu0 0.0
    %2947 = vmatmul.mubr.f32.gmra.mrb[0].mxu0 %v2810
    %v2948 = vpop.f32.mrb[0].mxu0
    %v2949 = vadd.f32 0.0, %v2948
    %v2950 = vpop.f32.mrb[0].mxu0
    %2951 = vdwg.mxu0
    %2952 = vmatprep.subr.mxu0 0.0
    %2953 = vmatpush1.msra.mxu0 %v1544
    %2954 = vmatprep.subr.mxu0 0.0
    %2955 = vmatpush1.msra.mxu0 %v1545
    %2956 = vmatprep.subr.mxu0 0.0
    %2957 = vmatpush1.msra.mxu0 %v1546
    %2958 = vmatprep.subr.mxu0 0.0
    %2959 = vmatpush1.msra.mxu0 %v1547
    %2960 = vmatprep.subr.mxu0 0.0
    %2961 = vmatpush1.msra.mxu0 0.0
    %2962 = vmatprep.subr.mxu0 0.0
    %2963 = vmatpush1.msra.mxu0 0.0
    %2964 = vmatprep.subr.mxu0 0.0
    %2965 = vmatpush1.msra.mxu0 0.0
    %2966 = vmatprep.subr.mxu0 0.0
    %2967 = vmatpush1.msra.mxu0 0.0
    %2968 = vmatprep.subr.mxu0 0.0
    %2969 = vmatpush1.msra.mxu0 0.0
    %2970 = vmatprep.subr.mxu0 0.0
    %2971 = vmatpush1.msra.mxu0 0.0
    %2972 = vmatprep.subr.mxu0 0.0
    %2973 = vmatpush1.msra.mxu0 0.0
    %2974 = vmatprep.subr.mxu0 0.0
    %2975 = vmatpush1.msra.mxu0 0.0
    %2976 = vmatprep.subr.mxu0 0.0
    %2977 = vmatpush1.msra.mxu0 0.0
    %2978 = vmatprep.subr.mxu0 0.0
    %2979 = vmatpush1.msra.mxu0 0.0
    %2980 = vmatprep.subr.mxu0 0.0
    %2981 = vmatpush1.msra.mxu0 0.0
    %2982 = vmatprep.subr.mxu0 0.0
    %2983 = vmatpush1.msra.mxu0 0.0
    %2984 = vmatprep.subr.mxu0 0.0
    %2985 = vmatpush1.msra.mxu0 0.0
    %2986 = vmatprep.subr.mxu0 0.0
    %2987 = vmatpush1.msra.mxu0 0.0
    %2988 = vmatprep.subr.mxu0 0.0
    %2989 = vmatpush1.msra.mxu0 0.0
    %2990 = vmatprep.subr.mxu0 0.0
    %2991 = vmatpush1.msra.mxu0 0.0
    %2992 = vmatprep.subr.mxu0 0.0
    %2993 = vmatpush1.msra.mxu0 0.0
    %2994 = vmatprep.subr.mxu0 0.0
    %2995 = vmatpush1.msra.mxu0 0.0
    %2996 = vmatprep.subr.mxu0 0.0
    %2997 = vmatpush1.msra.mxu0 0.0
    %2998 = vmatprep.subr.mxu0 0.0
    %2999 = vmatpush1.msra.mxu0 0.0
    %3000 = vmatprep.subr.mxu0 0.0
    %3001 = vmatpush1.msra.mxu0 0.0
    %3002 = vmatprep.subr.mxu0 0.0
    %3003 = vmatpush1.msra.mxu0 0.0
    %3004 = vmatprep.subr.mxu0 0.0
    %3005 = vmatpush1.msra.mxu0 0.0
    %3006 = vmatprep.subr.mxu0 0.0
    %3007 = vmatpush1.msra.mxu0 0.0
    %3008 = vmatprep.subr.mxu0 0.0
    %3009 = vmatpush1.msra.mxu0 0.0
    %3010 = vmatprep.subr.mxu0 0.0
    %3011 = vmatpush1.msra.mxu0 0.0
    %3012 = vmatprep.subr.mxu0 0.0
    %3013 = vmatpush1.msra.mxu0 0.0
    %3014 = vmatprep.subr.mxu0 0.0
    %3015 = vmatpush1.msra.mxu0 0.0
    %3016 = vmatprep.mubr.f32.mxu0 0.0
    %3017 = vmatmul.mubr.f32.gmra.mrb[0].mxu0 %v2810
    %v3018 = vpop.f32.mrb[0].mxu0
    %v3019 = vadd.f32 %v1135, %v3018
    %v3020 = vpop.f32.mrb[0].mxu0
    %3021 = vdwg.mxu0
    %v3022 = vadd.f32 %v796, %v2879
    %v3023 = vxor.u32 %v3022, 2147483648
    %v3024 = vmul.f32 %v3023, 1.442695
    %v3025 = vpow.pop %v3024
    %v3026 = vadd.f32 %v3025, 1.0
    %v3027 = vrcp.pop %v3026
    %v3028 = vmul.f32 1.0, %v3027
    %v3029 = vadd.f32 %v936, %v2949
    %v3030 = vxor.u32 %v3029, 2147483648
    %v3031 = vmul.f32 %v3030, 1.442695
    %v3032 = vpow.pop %v3031
    %v3033 = vadd.f32 %v3032, 1.0
    %v3034 = vrcp.pop %v3033
    %v3035 = vmul.f32 1.0, %v3034
    %v3036 = vmul.f32 %v3028, %v3019
    %v3037 = vadd.f32 %v1066, %v3036
    %v3038 = vtanh.pop %v3037
    %v3039 = vsub.f32 1.0, %v3035
    %v3040 = vmul.f32 %v3039, %v3038
    %v3041 = vmul.f32 %v3035, %v2574
    %v3042 = vadd.f32 %v3040, %v3041
    %v3044 = vsel %vm1146, %v2808, 0
    %3046 = vmatprep.subr.mxu0 0.0
    %3047 = vmatpush1.msra.mxu0 %v1142
    %3048 = vmatprep.subr.mxu0 0.0
    %3049 = vmatpush1.msra.mxu0 %v1143
    %3050 = vmatprep.subr.mxu0 0.0
    %3051 = vmatpush1.msra.mxu0 %v1144
    %3052 = vmatprep.subr.mxu0 0.0
    %3053 = vmatpush1.msra.mxu0 %v1145
    %3054 = vmatprep.subr.mxu0 0.0
    %3055 = vmatpush1.msra.mxu0 0.0
    %3056 = vmatprep.subr.mxu0 0.0
    %3057 = vmatpush1.msra.mxu0 0.0
    %3058 = vmatprep.subr.mxu0 0.0
    %3059 = vmatpush1.msra.mxu0 0.0
    %3060 = vmatprep.subr.mxu0 0.0
    %3061 = vmatpush1.msra.mxu0 0.0
    %3062 = vmatprep.subr.mxu0 0.0
    %3063 = vmatpush1.msra.mxu0 0.0
    %3064 = vmatprep.subr.mxu0 0.0
    %3065 = vmatpush1.msra.mxu0 0.0
    %3066 = vmatprep.subr.mxu0 0.0
    %3067 = vmatpush1.msra.mxu0 0.0
    %3068 = vmatprep.subr.mxu0 0.0
    %3069 = vmatpush1.msra.mxu0 0.0
    %3070 = vmatprep.subr.mxu0 0.0
    %3071 = vmatpush1.msra.mxu0 0.0
    %3072 = vmatprep.subr.mxu0 0.0
    %3073 = vmatpush1.msra.mxu0 0.0
    %3074 = vmatprep.subr.mxu0 0.0
    %3075 = vmatpush1.msra.mxu0 0.0
    %3076 = vmatprep.subr.mxu0 0.0
    %3077 = vmatpush1.msra.mxu0 0.0
    %3078 = vmatprep.subr.mxu0 0.0
    %3079 = vmatpush1.msra.mxu0 0.0
    %3080 = vmatprep.subr.mxu0 0.0
    %3081 = vmatpush1.msra.mxu0 0.0
    %3082 = vmatprep.subr.mxu0 0.0
    %3083 = vmatpush1.msra.mxu0 0.0
    %3084 = vmatprep.subr.mxu0 0.0
    %3085 = vmatpush1.msra.mxu0 0.0
    %3086 = vmatprep.subr.mxu0 0.0
    %3087 = vmatpush1.msra.mxu0 0.0
    %3088 = vmatprep.subr.mxu0 0.0
    %3089 = vmatpush1.msra.mxu0 0.0
    %3090 = vmatprep.subr.mxu0 0.0
    %3091 = vmatpush1.msra.mxu0 0.0
    %3092 = vmatprep.subr.mxu0 0.0
    %3093 = vmatpush1.msra.mxu0 0.0
    %3094 = vmatprep.subr.mxu0 0.0
    %3095 = vmatpush1.msra.mxu0 0.0
    %3096 = vmatprep.subr.mxu0 0.0
    %3097 = vmatpush1.msra.mxu0 0.0
    %3098 = vmatprep.subr.mxu0 0.0
    %3099 = vmatpush1.msra.mxu0 0.0
    %3100 = vmatprep.subr.mxu0 0.0
    %3101 = vmatpush1.msra.mxu0 0.0
    %3102 = vmatprep.subr.mxu0 0.0
    %3103 = vmatpush1.msra.mxu0 0.0
    %3104 = vmatprep.subr.mxu0 0.0
    %3105 = vmatpush1.msra.mxu0 0.0
    %3106 = vmatprep.subr.mxu0 0.0
    %3107 = vmatpush1.msra.mxu0 0.0
    %3108 = vmatprep.subr.mxu0 0.0
    %3109 = vmatpush1.msra.mxu0 0.0
    %3110 = vmatprep.mubr.f32.mxu0 0.0
    %3111 = vmatmul.mubr.f32.gmra.mrb[0].mxu0 %v3044
    %v3112 = vpop.f32.mrb[0].mxu0
    %v3113 = vadd.f32 0.0, %v3112
    %v3114 = vpop.f32.mrb[0].mxu0
    %3115 = vdwg.mxu0
    %3116 = vmatprep.subr.mxu0 0.0
    %3117 = vmatpush1.msra.mxu0 %v1221
    %3118 = vmatprep.subr.mxu0 0.0
    %3119 = vmatpush1.msra.mxu0 %v1222
    %3120 = vmatprep.subr.mxu0 0.0
    %3121 = vmatpush1.msra.mxu0 %v1223
    %3122 = vmatprep.subr.mxu0 0.0
    %3123 = vmatpush1.msra.mxu0 %v1224
    %3124 = vmatprep.subr.mxu0 0.0
    %3125 = vmatpush1.msra.mxu0 0.0
    %3126 = vmatprep.subr.mxu0 0.0
    %3127 = vmatpush1.msra.mxu0 0.0
    %3128 = vmatprep.subr.mxu0 0.0
    %3129 = vmatpush1.msra.mxu0 0.0
    %3130 = vmatprep.subr.mxu0 0.0
    %3131 = vmatpush1.msra.mxu0 0.0
    %3132 = vmatprep.subr.mxu0 0.0
    %3133 = vmatpush1.msra.mxu0 0.0
    %3134 = vmatprep.subr.mxu0 0.0
    %3135 = vmatpush1.msra.mxu0 0.0
    %3136 = vmatprep.subr.mxu0 0.0
    %3137 = vmatpush1.msra.mxu0 0.0
    %3138 = vmatprep.subr.mxu0 0.0
    %3139 = vmatpush1.msra.mxu0 0.0
    %3140 = vmatprep.subr.mxu0 0.0
    %3141 = vmatpush1.msra.mxu0 0.0
    %3142 = vmatprep.subr.mxu0 0.0
    %3143 = vmatpush1.msra.mxu0 0.0
    %3144 = vmatprep.subr.mxu0 0.0
    %3145 = vmatpush1.msra.mxu0 0.0
    %3146 = vmatprep.subr.mxu0 0.0
    %3147 = vmatpush1.msra.mxu0 0.0
    %3148 = vmatprep.subr.mxu0 0.0
    %3149 = vmatpush1.msra.mxu0 0.0
    %3150 = vmatprep.subr.mxu0 0.0
    %3151 = vmatpush1.msra.mxu0 0.0
    %3152 = vmatprep.subr.mxu0 0.0
    %3153 = vmatpush1.msra.mxu0 0.0
    %3154 = vmatprep.subr.mxu0 0.0
    %3155 = vmatpush1.msra.mxu0 0.0
    %3156 = vmatprep.subr.mxu0 0.0
    %3157 = vmatpush1.msra.mxu0 0.0
    %3158 = vmatprep.subr.mxu0 0.0
    %3159 = vmatpush1.msra.mxu0 0.0
    %3160 = vmatprep.subr.mxu0 0.0
    %3161 = vmatpush1.msra.mxu0 0.0
    %3162 = vmatprep.subr.mxu0 0.0
    %3163 = vmatpush1.msra.mxu0 0.0
    %3164 = vmatprep.subr.mxu0 0.0
    %3165 = vmatpush1.msra.mxu0 0.0
    %3166 = vmatprep.subr.mxu0 0.0
    %3167 = vmatpush1.msra.mxu0 0.0
    %3168 = vmatprep.subr.mxu0 0.0
    %3169 = vmatpush1.msra.mxu0 0.0
    %3170 = vmatprep.subr.mxu0 0.0
    %3171 = vmatpush1.msra.mxu0 0.0
    %3172 = vmatprep.subr.mxu0 0.0
    %3173 = vmatpush1.msra.mxu0 0.0
    %3174 = vmatprep.subr.mxu0 0.0
    %3175 = vmatpush1.msra.mxu0 0.0
    %3176 = vmatprep.subr.mxu0 0.0
    %3177 = vmatpush1.msra.mxu0 0.0
    %3178 = vmatprep.subr.mxu0 0.0
    %3179 = vmatpush1.msra.mxu0 0.0
    %3180 = vmatprep.mubr.f32.mxu0 0.0
    %3181 = vmatmul.mubr.f32.gmra.mrb[0].mxu0 %v3044
    %v3182 = vpop.f32.mrb[0].mxu0
    %v3183 = vadd.f32 0.0, %v3182
    %v3184 = vpop.f32.mrb[0].mxu0
    %3185 = vdwg.mxu0
    %3186 = vmatprep.subr.mxu0 0.0
    %3187 = vmatpush1.msra.mxu0 %v1296
    %3188 = vmatprep.subr.mxu0 0.0
    %3189 = vmatpush1.msra.mxu0 %v1297
    %3190 = vmatprep.subr.mxu0 0.0
    %3191 = vmatpush1.msra.mxu0 %v1298
    %3192 = vmatprep.subr.mxu0 0.0
    %3193 = vmatpush1.msra.mxu0 %v1299
    %3194 = vmatprep.subr.mxu0 0.0
    %3195 = vmatpush1.msra.mxu0 0.0
    %3196 = vmatprep.subr.mxu0 0.0
    %3197 = vmatpush1.msra.mxu0 0.0
    %3198 = vmatprep.subr.mxu0 0.0
    %3199 = vmatpush1.msra.mxu0 0.0
    %3200 = vmatprep.subr.mxu0 0.0
    %3201 = vmatpush1.msra.mxu0 0.0
    %3202 = vmatprep.subr.mxu0 0.0
    %3203 = vmatpush1.msra.mxu0 0.0
    %3204 = vmatprep.subr.mxu0 0.0
    %3205 = vmatpush1.msra.mxu0 0.0
    %3206 = vmatprep.subr.mxu0 0.0
    %3207 = vmatpush1.msra.mxu0 0.0
    %3208 = vmatprep.subr.mxu0 0.0
    %3209 = vmatpush1.msra.mxu0 0.0
    %3210 = vmatprep.subr.mxu0 0.0
    %3211 = vmatpush1.msra.mxu0 0.0
    %3212 = vmatprep.subr.mxu0 0.0
    %3213 = vmatpush1.msra.mxu0 0.0
    %3214 = vmatprep.subr.mxu0 0.0
    %3215 = vmatpush1.msra.mxu0 0.0
    %3216 = vmatprep.subr.mxu0 0.0
    %3217 = vmatpush1.msra.mxu0 0.0
    %3218 = vmatprep.subr.mxu0 0.0
    %3219 = vmatpush1.msra.mxu0 0.0
    %3220 = vmatprep.subr.mxu0 0.0
    %3221 = vmatpush1.msra.mxu0 0.0
    %3222 = vmatprep.subr.mxu0 0.0
    %3223 = vmatpush1.msra.mxu0 0.0
    %3224 = vmatprep.subr.mxu0 0.0
    %3225 = vmatpush1.msra.mxu0 0.0
    %3226 = vmatprep.subr.mxu0 0.0
    %3227 = vmatpush1.msra.mxu0 0.0
    %3228 = vmatprep.subr.mxu0 0.0
    %3229 = vmatpush1.msra.mxu0 0.0
    %3230 = vmatprep.subr.mxu0 0.0
    %3231 = vmatpush1.msra.mxu0 0.0
    %3232 = vmatprep.subr.mxu0 0.0
    %3233 = vmatpush1.msra.mxu0 0.0
    %3234 = vmatprep.subr.mxu0 0.0
    %3235 = vmatpush1.msra.mxu0 0.0
    %3236 = vmatprep.subr.mxu0 0.0
    %3237 = vmatpush1.msra.mxu0 0.0
    %3238 = vmatprep.subr.mxu0 0.0
    %3239 = vmatpush1.msra.mxu0 0.0
    %3240 = vmatprep.subr.mxu0 0.0
    %3241 = vmatpush1.msra.mxu0 0.0
    %3242 = vmatprep.subr.mxu0 0.0
    %3243 = vmatpush1.msra.mxu0 0.0
    %3244 = vmatprep.subr.mxu0 0.0
    %3245 = vmatpush1.msra.mxu0 0.0
    %3246 = vmatprep.subr.mxu0 0.0
    %3247 = vmatpush1.msra.mxu0 0.0
    %3248 = vmatprep.subr.mxu0 0.0
    %3249 = vmatpush1.msra.mxu0 0.0
    %3250 = vmatprep.mubr.f32.mxu0 0.0
    %3251 = vmatmul.mubr.f32.gmra.mrb[0].mxu0 %v3044
    %v3252 = vpop.f32.mrb[0].mxu0
    %v3253 = vadd.f32 %v1110, %v3252
    %v3254 = vpop.f32.mrb[0].mxu0
    %3255 = vdwg.mxu0
    %v3256 = vadd.f32 %v405, %v3113
    %v3257 = vxor.u32 %v3256, 2147483648
    %v3258 = vmul.f32 %v3257, 1.442695
    %v3259 = vpow.pop %v3258
    %v3260 = vadd.f32 %v3259, 1.0
    %v3261 = vrcp.pop %v3260
    %v3262 = vmul.f32 1.0, %v3261
    %v3263 = vadd.f32 %v545, %v3183
    %v3264 = vxor.u32 %v3263, 2147483648
    %v3265 = vmul.f32 %v3264, 1.442695
    %v3266 = vpow.pop %v3265
    %v3267 = vadd.f32 %v3266, 1.0
    %v3268 = vrcp.pop %v3267
    %v3269 = vmul.f32 1.0, %v3268
    %v3270 = vmul.f32 %v3262, %v3253
    %v3271 = vadd.f32 %v675, %v3270
    %v3272 = vtanh.pop %v3271
    %v3273 = vsub.f32 1.0, %v3269
    %v3274 = vmul.f32 %v3273, %v3272
    %v3275 = vmul.f32 %v3269, %v2808
    %v3276 = vadd.f32 %v3274, %v3275
    %v3278 = vsel %vm1146, %v3042, 0
    %3280 = vmatprep.subr.mxu0 0.0
    %3281 = vmatpush1.msra.mxu0 %v1391
    %3282 = vmatprep.subr.mxu0 0.0
    %3283 = vmatpush1.msra.mxu0 %v1392
    %3284 = vmatprep.subr.mxu0 0.0
    %3285 = vmatpush1.msra.mxu0 %v1393
    %3286 = vmatprep.subr.mxu0 0.0
    %3287 = vmatpush1.msra.mxu0 %v1394
    %3288 = vmatprep.subr.mxu0 0.0
    %3289 = vmatpush1.msra.mxu0 0.0
    %3290 = vmatprep.subr.mxu0 0.0
    %3291 = vmatpush1.msra.mxu0 0.0
    %3292 = vmatprep.subr.mxu0 0.0
    %3293 = vmatpush1.msra.mxu0 0.0
    %3294 = vmatprep.subr.mxu0 0.0
    %3295 = vmatpush1.msra.mxu0 0.0
    %3296 = vmatprep.subr.mxu0 0.0
    %3297 = vmatpush1.msra.mxu0 0.0
    %3298 = vmatprep.subr.mxu0 0.0
    %3299 = vmatpush1.msra.mxu0 0.0
    %3300 = vmatprep.subr.mxu0 0.0
    %3301 = vmatpush1.msra.mxu0 0.0
    %3302 = vmatprep.subr.mxu0 0.0
    %3303 = vmatpush1.msra.mxu0 0.0
    %3304 = vmatprep.subr.mxu0 0.0
    %3305 = vmatpush1.msra.mxu0 0.0
    %3306 = vmatprep.subr.mxu0 0.0
    %3307 = vmatpush1.msra.mxu0 0.0
    %3308 = vmatprep.subr.mxu0 0.0
    %3309 = vmatpush1.msra.mxu0 0.0
    %3310 = vmatprep.subr.mxu0 0.0
    %3311 = vmatpush1.msra.mxu0 0.0
    %3312 = vmatprep.subr.mxu0 0.0
    %3313 = vmatpush1.msra.mxu0 0.0
    %3314 = vmatprep.subr.mxu0 0.0
    %3315 = vmatpush1.msra.mxu0 0.0
    %3316 = vmatprep.subr.mxu0 0.0
    %3317 = vmatpush1.msra.mxu0 0.0
    %3318 = vmatprep.subr.mxu0 0.0
    %3319 = vmatpush1.msra.mxu0 0.0
    %3320 = vmatprep.subr.mxu0 0.0
    %3321 = vmatpush1.msra.mxu0 0.0
    %3322 = vmatprep.subr.mxu0 0.0
    %3323 = vmatpush1.msra.mxu0 0.0
    %3324 = vmatprep.subr.mxu0 0.0
    %3325 = vmatpush1.msra.mxu0 0.0
    %3326 = vmatprep.subr.mxu0 0.0
    %3327 = vmatpush1.msra.mxu0 0.0
    %3328 = vmatprep.subr.mxu0 0.0
    %3329 = vmatpush1.msra.mxu0 0.0
    %3330 = vmatprep.subr.mxu0 0.0
    %3331 = vmatpush1.msra.mxu0 0.0
    %3332 = vmatprep.subr.mxu0 0.0
    %3333 = vmatpush1.msra.mxu0 0.0
    %3334 = vmatprep.subr.mxu0 0.0
    %3335 = vmatpush1.msra.mxu0 0.0
    %3336 = vmatprep.subr.mxu0 0.0
    %3337 = vmatpush1.msra.mxu0 0.0
    %3338 = vmatprep.subr.mxu0 0.0
    %3339 = vmatpush1.msra.mxu0 0.0
    %3340 = vmatprep.subr.mxu0 0.0
    %3341 = vmatpush1.msra.mxu0 0.0
    %3342 = vmatprep.subr.mxu0 0.0
    %3343 = vmatpush1.msra.mxu0 0.0
    %3344 = vmatprep.mubr.f32.mxu0 0.0
    %3345 = vmatmul.mubr.f32.gmra.mrb[0].mxu0 %v3278
    %v3346 = vpop.f32.mrb[0].mxu0
    %v3347 = vadd.f32 0.0, %v3346
    %v3348 = vpop.f32.mrb[0].mxu0
    %3349 = vdwg.mxu0
    %3350 = vmatprep.subr.mxu0 0.0
    %3351 = vmatpush1.msra.mxu0 %v1469
    %3352 = vmatprep.subr.mxu0 0.0
    %3353 = vmatpush1.msra.mxu0 %v1470
    %3354 = vmatprep.subr.mxu0 0.0
    %3355 = vmatpush1.msra.mxu0 %v1471
    %3356 = vmatprep.subr.mxu0 0.0
    %3357 = vmatpush1.msra.mxu0 %v1472
    %3358 = vmatprep.subr.mxu0 0.0
    %3359 = vmatpush1.msra.mxu0 0.0
    %3360 = vmatprep.subr.mxu0 0.0
    %3361 = vmatpush1.msra.mxu0 0.0
    %3362 = vmatprep.subr.mxu0 0.0
    %3363 = vmatpush1.msra.mxu0 0.0
    %3364 = vmatprep.subr.mxu0 0.0
    %3365 = vmatpush1.msra.mxu0 0.0
    %3366 = vmatprep.subr.mxu0 0.0
    %3367 = vmatpush1.msra.mxu0 0.0
    %3368 = vmatprep.subr.mxu0 0.0
    %3369 = vmatpush1.msra.mxu0 0.0
    %3370 = vmatprep.subr.mxu0 0.0
    %3371 = vmatpush1.msra.mxu0 0.0
    %3372 = vmatprep.subr.mxu0 0.0
    %3373 = vmatpush1.msra.mxu0 0.0
    %3374 = vmatprep.subr.mxu0 0.0
    %3375 = vmatpush1.msra.mxu0 0.0
    %3376 = vmatprep.subr.mxu0 0.0
    %3377 = vmatpush1.msra.mxu0 0.0
    %3378 = vmatprep.subr.mxu0 0.0
    %3379 = vmatpush1.msra.mxu0 0.0
    %3380 = vmatprep.subr.mxu0 0.0
    %3381 = vmatpush1.msra.mxu0 0.0
    %3382 = vmatprep.subr.mxu0 0.0
    %3383 = vmatpush1.msra.mxu0 0.0
    %3384 = vmatprep.subr.mxu0 0.0
    %3385 = vmatpush1.msra.mxu0 0.0
    %3386 = vmatprep.subr.mxu0 0.0
    %3387 = vmatpush1.msra.mxu0 0.0
    %3388 = vmatprep.subr.mxu0 0.0
    %3389 = vmatpush1.msra.mxu0 0.0
    %3390 = vmatprep.subr.mxu0 0.0
    %3391 = vmatpush1.msra.mxu0 0.0
    %3392 = vmatprep.subr.mxu0 0.0
    %3393 = vmatpush1.msra.mxu0 0.0
    %3394 = vmatprep.subr.mxu0 0.0
    %3395 = vmatpush1.msra.mxu0 0.0
    %3396 = vmatprep.subr.mxu0 0.0
    %3397 = vmatpush1.msra.mxu0 0.0
    %3398 = vmatprep.subr.mxu0 0.0
    %3399 = vmatpush1.msra.mxu0 0.0
    %3400 = vmatprep.subr.mxu0 0.0
    %3401 = vmatpush1.msra.mxu0 0.0
    %3402 = vmatprep.subr.mxu0 0.0
    %3403 = vmatpush1.msra.mxu0 0.0
    %3404 = vmatprep.subr.mxu0 0.0
    %3405 = vmatpush1.msra.mxu0 0.0
    %3406 = vmatprep.subr.mxu0 0.0
    %3407 = vmatpush1.msra.mxu0 0.0
    %3408 = vmatprep.subr.mxu0 0.0
    %3409 = vmatpush1.msra.mxu0 0.0
    %3410 = vmatprep.subr.mxu0 0.0
    %3411 = vmatpush1.msra.mxu0 0.0
    %3412 = vmatprep.subr.mxu0 0.0
    %3413 = vmatpush1.msra.mxu0 0.0
    %3414 = vmatprep.mubr.f32.mxu0 0.0
    %3415 = vmatmul.mubr.f32.gmra.mrb[0].mxu0 %v3278
    %v3416 = vpop.f32.mrb[0].mxu0
    %v3417 = vadd.f32 0.0, %v3416
    %v3418 = vpop.f32.mrb[0].mxu0
    %3419 = vdwg.mxu0
    %3420 = vmatprep.subr.mxu0 0.0
    %3421 = vmatpush1.msra.mxu0 %v1544
    %3422 = vmatprep.subr.mxu0 0.0
    %3423 = vmatpush1.msra.mxu0 %v1545
    %3424 = vmatprep.subr.mxu0 0.0
    %3425 = vmatpush1.msra.mxu0 %v1546
    %3426 = vmatprep.subr.mxu0 0.0
    %3427 = vmatpush1.msra.mxu0 %v1547
    %3428 = vmatprep.subr.mxu0 0.0
    %3429 = vmatpush1.msra.mxu0 0.0
    %3430 = vmatprep.subr.mxu0 0.0
    %3431 = vmatpush1.msra.mxu0 0.0
    %3432 = vmatprep.subr.mxu0 0.0
    %3433 = vmatpush1.msra.mxu0 0.0
    %3434 = vmatprep.subr.mxu0 0.0
    %3435 = vmatpush1.msra.mxu0 0.0
    %3436 = vmatprep.subr.mxu0 0.0
    %3437 = vmatpush1.msra.mxu0 0.0
    %3438 = vmatprep.subr.mxu0 0.0
    %3439 = vmatpush1.msra.mxu0 0.0
    %3440 = vmatprep.subr.mxu0 0.0
    %3441 = vmatpush1.msra.mxu0 0.0
    %3442 = vmatprep.subr.mxu0 0.0
    %3443 = vmatpush1.msra.mxu0 0.0
    %3444 = vmatprep.subr.mxu0 0.0
    %3445 = vmatpush1.msra.mxu0 0.0
    %3446 = vmatprep.subr.mxu0 0.0
    %3447 = vmatpush1.msra.mxu0 0.0
    %3448 = vmatprep.subr.mxu0 0.0
    %3449 = vmatpush1.msra.mxu0 0.0
    %3450 = vmatprep.subr.mxu0 0.0
    %3451 = vmatpush1.msra.mxu0 0.0
    %3452 = vmatprep.subr.mxu0 0.0
    %3453 = vmatpush1.msra.mxu0 0.0
    %3454 = vmatprep.subr.mxu0 0.0
    %3455 = vmatpush1.msra.mxu0 0.0
    %3456 = vmatprep.subr.mxu0 0.0
    %3457 = vmatpush1.msra.mxu0 0.0
    %3458 = vmatprep.subr.mxu0 0.0
    %3459 = vmatpush1.msra.mxu0 0.0
    %3460 = vmatprep.subr.mxu0 0.0
    %3461 = vmatpush1.msra.mxu0 0.0
    %3462 = vmatprep.subr.mxu0 0.0
    %3463 = vmatpush1.msra.mxu0 0.0
    %3464 = vmatprep.subr.mxu0 0.0
    %3465 = vmatpush1.msra.mxu0 0.0
    %3466 = vmatprep.subr.mxu0 0.0
    %3467 = vmatpush1.msra.mxu0 0.0
    %3468 = vmatprep.subr.mxu0 0.0
    %3469 = vmatpush1.msra.mxu0 0.0
    %3470 = vmatprep.subr.mxu0 0.0
    %3471 = vmatpush1.msra.mxu0 0.0
    %3472 = vmatprep.subr.mxu0 0.0
    %3473 = vmatpush1.msra.mxu0 0.0
    %3474 = vmatprep.subr.mxu0 0.0
    %3475 = vmatpush1.msra.mxu0 0.0
    %3476 = vmatprep.subr.mxu0 0.0
    %3477 = vmatpush1.msra.mxu0 0.0
    %3478 = vmatprep.subr.mxu0 0.0
    %3479 = vmatpush1.msra.mxu0 0.0
    %3480 = vmatprep.subr.mxu0 0.0
    %3481 = vmatpush1.msra.mxu0 0.0
    %3482 = vmatprep.subr.mxu0 0.0
    %3483 = vmatpush1.msra.mxu0 0.0
    %3484 = vmatprep.mubr.f32.mxu0 0.0
    %3485 = vmatmul.mubr.f32.gmra.mrb[0].mxu0 %v3278
    %v3486 = vpop.f32.mrb[0].mxu0
    %v3487 = vadd.f32 %v1135, %v3486
    %v3488 = vpop.f32.mrb[0].mxu0
    %3489 = vdwg.mxu0
    %v3490 = vadd.f32 %v794, %v3347
    %v3491 = vxor.u32 %v3490, 2147483648
    %v3492 = vmul.f32 %v3491, 1.442695
    %v3493 = vpow.pop %v3492
    %v3494 = vadd.f32 %v3493, 1.0
    %v3495 = vrcp.pop %v3494
    %v3496 = vmul.f32 1.0, %v3495
    %v3497 = vadd.f32 %v934, %v3417
    %v3498 = vxor.u32 %v3497, 2147483648
    %v3499 = vmul.f32 %v3498, 1.442695
    %v3500 = vpow.pop %v3499
    %v3501 = vadd.f32 %v3500, 1.0
    %v3502 = vrcp.pop %v3501
    %v3503 = vmul.f32 1.0, %v3502
    %v3504 = vmul.f32 %v3496, %v3487
    %v3505 = vadd.f32 %v1064, %v3504
    %v3506 = vtanh.pop %v3505
    %v3507 = vsub.f32 1.0, %v3503
    %v3508 = vmul.f32 %v3507, %v3506
    %v3509 = vmul.f32 %v3503, %v3042
    %v3510 = vadd.f32 %v3508, %v3509
    %v3512 = vsel %vm1146, %v3276, 0
    %3514 = vmatprep.subr.mxu0 0.0
    %3515 = vmatpush1.msra.mxu0 %v1142
    %3516 = vmatprep.subr.mxu0 0.0
    %3517 = vmatpush1.msra.mxu0 %v1143
    %3518 = vmatprep.subr.mxu0 0.0
    %3519 = vmatpush1.msra.mxu0 %v1144
    %3520 = vmatprep.subr.mxu0 0.0
    %3521 = vmatpush1.msra.mxu0 %v1145
    %3522 = vmatprep.subr.mxu0 0.0
    %3523 = vmatpush1.msra.mxu0 0.0
    %3524 = vmatprep.subr.mxu0 0.0
    %3525 = vmatpush1.msra.mxu0 0.0
    %3526 = vmatprep.subr.mxu0 0.0
    %3527 = vmatpush1.msra.mxu0 0.0
    %3528 = vmatprep.subr.mxu0 0.0
    %3529 = vmatpush1.msra.mxu0 0.0
    %3530 = vmatprep.subr.mxu0 0.0
    %3531 = vmatpush1.msra.mxu0 0.0
    %3532 = vmatprep.subr.mxu0 0.0
    %3533 = vmatpush1.msra.mxu0 0.0
    %3534 = vmatprep.subr.mxu0 0.0
    %3535 = vmatpush1.msra.mxu0 0.0
    %3536 = vmatprep.subr.mxu0 0.0
    %3537 = vmatpush1.msra.mxu0 0.0
    %3538 = vmatprep.subr.mxu0 0.0
    %3539 = vmatpush1.msra.mxu0 0.0
    %3540 = vmatprep.subr.mxu0 0.0
    %3541 = vmatpush1.msra.mxu0 0.0
    %3542 = vmatprep.subr.mxu0 0.0
    %3543 = vmatpush1.msra.mxu0 0.0
    %3544 = vmatprep.subr.mxu0 0.0
    %3545 = vmatpush1.msra.mxu0 0.0
    %3546 = vmatprep.subr.mxu0 0.0
    %3547 = vmatpush1.msra.mxu0 0.0
    %3548 = vmatprep.subr.mxu0 0.0
    %3549 = vmatpush1.msra.mxu0 0.0
    %3550 = vmatprep.subr.mxu0 0.0
    %3551 = vmatpush1.msra.mxu0 0.0
    %3552 = vmatprep.subr.mxu0 0.0
    %3553 = vmatpush1.msra.mxu0 0.0
    %3554 = vmatprep.subr.mxu0 0.0
    %3555 = vmatpush1.msra.mxu0 0.0
    %3556 = vmatprep.subr.mxu0 0.0
    %3557 = vmatpush1.msra.mxu0 0.0
    %3558 = vmatprep.subr.mxu0 0.0
    %3559 = vmatpush1.msra.mxu0 0.0
    %3560 = vmatprep.subr.mxu0 0.0
    %3561 = vmatpush1.msra.mxu0 0.0
    %3562 = vmatprep.subr.mxu0 0.0
    %3563 = vmatpush1.msra.mxu0 0.0
    %3564 = vmatprep.subr.mxu0 0.0
    %3565 = vmatpush1.msra.mxu0 0.0
    %3566 = vmatprep.subr.mxu0 0.0
    %3567 = vmatpush1.msra.mxu0 0.0
    %3568 = vmatprep.subr.mxu0 0.0
    %3569 = vmatpush1.msra.mxu0 0.0
    %3570 = vmatprep.subr.mxu0 0.0
    %3571 = vmatpush1.msra.mxu0 0.0
    %3572 = vmatprep.subr.mxu0 0.0
    %3573 = vmatpush1.msra.mxu0 0.0
    %3574 = vmatprep.subr.mxu0 0.0
    %3575 = vmatpush1.msra.mxu0 0.0
    %3576 = vmatprep.subr.mxu0 0.0
    %3577 = vmatpush1.msra.mxu0 0.0
    %3578 = vmatprep.mubr.f32.mxu0 0.0
    %3579 = vmatmul.mubr.f32.gmra.mrb[0].mxu0 %v3512
    %v3580 = vpop.f32.mrb[0].mxu0
    %v3581 = vadd.f32 0.0, %v3580
    %v3582 = vpop.f32.mrb[0].mxu0
    %3583 = vdwg.mxu0
    %3584 = vmatprep.subr.mxu0 0.0
    %3585 = vmatpush1.msra.mxu0 %v1221
    %3586 = vmatprep.subr.mxu0 0.0
    %3587 = vmatpush1.msra.mxu0 %v1222
    %3588 = vmatprep.subr.mxu0 0.0
    %3589 = vmatpush1.msra.mxu0 %v1223
    %3590 = vmatprep.subr.mxu0 0.0
    %3591 = vmatpush1.msra.mxu0 %v1224
    %3592 = vmatprep.subr.mxu0 0.0
    %3593 = vmatpush1.msra.mxu0 0.0
    %3594 = vmatprep.subr.mxu0 0.0
    %3595 = vmatpush1.msra.mxu0 0.0
    %3596 = vmatprep.subr.mxu0 0.0
    %3597 = vmatpush1.msra.mxu0 0.0
    %3598 = vmatprep.subr.mxu0 0.0
    %3599 = vmatpush1.msra.mxu0 0.0
    %3600 = vmatprep.subr.mxu0 0.0
    %3601 = vmatpush1.msra.mxu0 0.0
    %3602 = vmatprep.subr.mxu0 0.0
    %3603 = vmatpush1.msra.mxu0 0.0
    %3604 = vmatprep.subr.mxu0 0.0
    %3605 = vmatpush1.msra.mxu0 0.0
    %3606 = vmatprep.subr.mxu0 0.0
    %3607 = vmatpush1.msra.mxu0 0.0
    %3608 = vmatprep.subr.mxu0 0.0
    %3609 = vmatpush1.msra.mxu0 0.0
    %3610 = vmatprep.subr.mxu0 0.0
    %3611 = vmatpush1.msra.mxu0 0.0
    %3612 = vmatprep.subr.mxu0 0.0
    %3613 = vmatpush1.msra.mxu0 0.0
    %3614 = vmatprep.subr.mxu0 0.0
    %3615 = vmatpush1.msra.mxu0 0.0
    %3616 = vmatprep.subr.mxu0 0.0
    %3617 = vmatpush1.msra.mxu0 0.0
    %3618 = vmatprep.subr.mxu0 0.0
    %3619 = vmatpush1.msra.mxu0 0.0
    %3620 = vmatprep.subr.mxu0 0.0
    %3621 = vmatpush1.msra.mxu0 0.0
    %3622 = vmatprep.subr.mxu0 0.0
    %3623 = vmatpush1.msra.mxu0 0.0
    %3624 = vmatprep.subr.mxu0 0.0
    %3625 = vmatpush1.msra.mxu0 0.0
    %3626 = vmatprep.subr.mxu0 0.0
    %3627 = vmatpush1.msra.mxu0 0.0
    %3628 = vmatprep.subr.mxu0 0.0
    %3629 = vmatpush1.msra.mxu0 0.0
    %3630 = vmatprep.subr.mxu0 0.0
    %3631 = vmatpush1.msra.mxu0 0.0
    %3632 = vmatprep.subr.mxu0 0.0
    %3633 = vmatpush1.msra.mxu0 0.0
    %3634 = vmatprep.subr.mxu0 0.0
    %3635 = vmatpush1.msra.mxu0 0.0
    %3636 = vmatprep.subr.mxu0 0.0
    %3637 = vmatpush1.msra.mxu0 0.0
    %3638 = vmatprep.subr.mxu0 0.0
    %3639 = vmatpush1.msra.mxu0 0.0
    %3640 = vmatprep.subr.mxu0 0.0
    %3641 = vmatpush1.msra.mxu0 0.0
    %3642 = vmatprep.subr.mxu0 0.0
    %3643 = vmatpush1.msra.mxu0 0.0
    %3644 = vmatprep.subr.mxu0 0.0
    %3645 = vmatpush1.msra.mxu0 0.0
    %3646 = vmatprep.subr.mxu0 0.0
    %3647 = vmatpush1.msra.mxu0 0.0
    %3648 = vmatprep.mubr.f32.mxu0 0.0
    %3649 = vmatmul.mubr.f32.gmra.mrb[0].mxu0 %v3512
    %v3650 = vpop.f32.mrb[0].mxu0
    %v3651 = vadd.f32 0.0, %v3650
    %v3652 = vpop.f32.mrb[0].mxu0
    %3653 = vdwg.mxu0
    %3654 = vmatprep.subr.mxu0 0.0
    %3655 = vmatpush1.msra.mxu0 %v1296
    %3656 = vmatprep.subr.mxu0 0.0
    %3657 = vmatpush1.msra.mxu0 %v1297
    %3658 = vmatprep.subr.mxu0 0.0
    %3659 = vmatpush1.msra.mxu0 %v1298
    %3660 = vmatprep.subr.mxu0 0.0
    %3661 = vmatpush1.msra.mxu0 %v1299
    %3662 = vmatprep.subr.mxu0 0.0
    %3663 = vmatpush1.msra.mxu0 0.0
    %3664 = vmatprep.subr.mxu0 0.0
    %3665 = vmatpush1.msra.mxu0 0.0
    %3666 = vmatprep.subr.mxu0 0.0
    %3667 = vmatpush1.msra.mxu0 0.0
    %3668 = vmatprep.subr.mxu0 0.0
    %3669 = vmatpush1.msra.mxu0 0.0
    %3670 = vmatprep.subr.mxu0 0.0
    %3671 = vmatpush1.msra.mxu0 0.0
    %3672 = vmatprep.subr.mxu0 0.0
    %3673 = vmatpush1.msra.mxu0 0.0
    %3674 = vmatprep.subr.mxu0 0.0
    %3675 = vmatpush1.msra.mxu0 0.0
    %3676 = vmatprep.subr.mxu0 0.0
    %3677 = vmatpush1.msra.mxu0 0.0
    %3678 = vmatprep.subr.mxu0 0.0
    %3679 = vmatpush1.msra.mxu0 0.0
    %3680 = vmatprep.subr.mxu0 0.0
    %3681 = vmatpush1.msra.mxu0 0.0
    %3682 = vmatprep.subr.mxu0 0.0
    %3683 = vmatpush1.msra.mxu0 0.0
    %3684 = vmatprep.subr.mxu0 0.0
    %3685 = vmatpush1.msra.mxu0 0.0
    %3686 = vmatprep.subr.mxu0 0.0
    %3687 = vmatpush1.msra.mxu0 0.0
    %3688 = vmatprep.subr.mxu0 0.0
    %3689 = vmatpush1.msra.mxu0 0.0
    %3690 = vmatprep.subr.mxu0 0.0
    %3691 = vmatpush1.msra.mxu0 0.0
    %3692 = vmatprep.subr.mxu0 0.0
    %3693 = vmatpush1.msra.mxu0 0.0
    %3694 = vmatprep.subr.mxu0 0.0
    %3695 = vmatpush1.msra.mxu0 0.0
    %3696 = vmatprep.subr.mxu0 0.0
    %3697 = vmatpush1.msra.mxu0 0.0
    %3698 = vmatprep.subr.mxu0 0.0
    %3699 = vmatpush1.msra.mxu0 0.0
    %3700 = vmatprep.subr.mxu0 0.0
    %3701 = vmatpush1.msra.mxu0 0.0
    %3702 = vmatprep.subr.mxu0 0.0
    %3703 = vmatpush1.msra.mxu0 0.0
    %3704 = vmatprep.subr.mxu0 0.0
    %3705 = vmatpush1.msra.mxu0 0.0
    %3706 = vmatprep.subr.mxu0 0.0
    %3707 = vmatpush1.msra.mxu0 0.0
    %3708 = vmatprep.subr.mxu0 0.0
    %3709 = vmatpush1.msra.mxu0 0.0
    %3710 = vmatprep.subr.mxu0 0.0
    %3711 = vmatpush1.msra.mxu0 0.0
    %3712 = vmatprep.subr.mxu0 0.0
    %3713 = vmatpush1.msra.mxu0 0.0
    %3714 = vmatprep.subr.mxu0 0.0
    %3715 = vmatpush1.msra.mxu0 0.0
    %3716 = vmatprep.subr.mxu0 0.0
    %3717 = vmatpush1.msra.mxu0 0.0
    %3718 = vmatprep.mubr.f32.mxu0 0.0
    %3719 = vmatmul.mubr.f32.gmra.mrb[0].mxu0 %v3512
    %v3720 = vpop.f32.mrb[0].mxu0
    %v3721 = vadd.f32 %v1110, %v3720
    %v3722 = vpop.f32.mrb[0].mxu0
    %3723 = vdwg.mxu0
    %v3724 = vadd.f32 %v404, %v3581
    %v3725 = vxor.u32 %v3724, 2147483648
    %v3726 = vmul.f32 %v3725, 1.442695
    %v3727 = vpow.pop %v3726
    %v3728 = vadd.f32 %v3727, 1.0
    %v3729 = vrcp.pop %v3728
    %v3730 = vmul.f32 1.0, %v3729
    %v3731 = vadd.f32 %v544, %v3651
    %v3732 = vxor.u32 %v3731, 2147483648
    %v3733 = vmul.f32 %v3732, 1.442695
    %v3734 = vpow.pop %v3733
    %v3735 = vadd.f32 %v3734, 1.0
    %v3736 = vrcp.pop %v3735
    %v3737 = vmul.f32 1.0, %v3736
    %v3738 = vmul.f32 %v3730, %v3721
    %v3739 = vadd.f32 %v674, %v3738
    %v3740 = vtanh.pop %v3739
    %v3741 = vsub.f32 1.0, %v3737
    %v3742 = vmul.f32 %v3741, %v3740
    %v3743 = vmul.f32 %v3737, %v3276
    %v3744 = vadd.f32 %v3742, %v3743
    %v3746 = vsel %vm1146, %v3510, 0
    %3748 = vmatprep.subr.mxu0 0.0
    %3749 = vmatpush1.msra.mxu0 %v1391
    %3750 = vmatprep.subr.mxu0 0.0
    %3751 = vmatpush1.msra.mxu0 %v1392
    %3752 = vmatprep.subr.mxu0 0.0
    %3753 = vmatpush1.msra.mxu0 %v1393
    %3754 = vmatprep.subr.mxu0 0.0
    %3755 = vmatpush1.msra.mxu0 %v1394
    %3756 = vmatprep.subr.mxu0 0.0
    %3757 = vmatpush1.msra.mxu0 0.0
    %3758 = vmatprep.subr.mxu0 0.0
    %3759 = vmatpush1.msra.mxu0 0.0
    %3760 = vmatprep.subr.mxu0 0.0
    %3761 = vmatpush1.msra.mxu0 0.0
    %3762 = vmatprep.subr.mxu0 0.0
    %3763 = vmatpush1.msra.mxu0 0.0
    %3764 = vmatprep.subr.mxu0 0.0
    %3765 = vmatpush1.msra.mxu0 0.0
    %3766 = vmatprep.subr.mxu0 0.0
    %3767 = vmatpush1.msra.mxu0 0.0
    %3768 = vmatprep.subr.mxu0 0.0
    %3769 = vmatpush1.msra.mxu0 0.0
    %3770 = vmatprep.subr.mxu0 0.0
    %3771 = vmatpush1.msra.mxu0 0.0
    %3772 = vmatprep.subr.mxu0 0.0
    %3773 = vmatpush1.msra.mxu0 0.0
    %3774 = vmatprep.subr.mxu0 0.0
    %3775 = vmatpush1.msra.mxu0 0.0
    %3776 = vmatprep.subr.mxu0 0.0
    %3777 = vmatpush1.msra.mxu0 0.0
    %3778 = vmatprep.subr.mxu0 0.0
    %3779 = vmatpush1.msra.mxu0 0.0
    %3780 = vmatprep.subr.mxu0 0.0
    %3781 = vmatpush1.msra.mxu0 0.0
    %3782 = vmatprep.subr.mxu0 0.0
    %3783 = vmatpush1.msra.mxu0 0.0
    %3784 = vmatprep.subr.mxu0 0.0
    %3785 = vmatpush1.msra.mxu0 0.0
    %3786 = vmatprep.subr.mxu0 0.0
    %3787 = vmatpush1.msra.mxu0 0.0
    %3788 = vmatprep.subr.mxu0 0.0
    %3789 = vmatpush1.msra.mxu0 0.0
    %3790 = vmatprep.subr.mxu0 0.0
    %3791 = vmatpush1.msra.mxu0 0.0
    %3792 = vmatprep.subr.mxu0 0.0
    %3793 = vmatpush1.msra.mxu0 0.0
    %3794 = vmatprep.subr.mxu0 0.0
    %3795 = vmatpush1.msra.mxu0 0.0
    %3796 = vmatprep.subr.mxu0 0.0
    %3797 = vmatpush1.msra.mxu0 0.0
    %3798 = vmatprep.subr.mxu0 0.0
    %3799 = vmatpush1.msra.mxu0 0.0
    %3800 = vmatprep.subr.mxu0 0.0
    %3801 = vmatpush1.msra.mxu0 0.0
    %3802 = vmatprep.subr.mxu0 0.0
    %3803 = vmatpush1.msra.mxu0 0.0
    %3804 = vmatprep.subr.mxu0 0.0
    %3805 = vmatpush1.msra.mxu0 0.0
    %3806 = vmatprep.subr.mxu0 0.0
    %3807 = vmatpush1.msra.mxu0 0.0
    %3808 = vmatprep.subr.mxu0 0.0
    %3809 = vmatpush1.msra.mxu0 0.0
    %3810 = vmatprep.subr.mxu0 0.0
    %3811 = vmatpush1.msra.mxu0 0.0
    %3812 = vmatprep.mubr.f32.mxu0 0.0
    %3813 = vmatmul.mubr.f32.gmra.mrb[0].mxu0 %v3746
    %v3814 = vpop.f32.mrb[0].mxu0
    %v3815 = vadd.f32 0.0, %v3814
    %v3816 = vpop.f32.mrb[0].mxu0
    %3817 = vdwg.mxu0
    %3818 = vmatprep.subr.mxu0 0.0
    %3819 = vmatpush1.msra.mxu0 %v1469
    %3820 = vmatprep.subr.mxu0 0.0
    %3821 = vmatpush1.msra.mxu0 %v1470
    %3822 = vmatprep.subr.mxu0 0.0
    %3823 = vmatpush1.msra.mxu0 %v1471
    %3824 = vmatprep.subr.mxu0 0.0
    %3825 = vmatpush1.msra.mxu0 %v1472
    %3826 = vmatprep.subr.mxu0 0.0
    %3827 = vmatpush1.msra.mxu0 0.0
    %3828 = vmatprep.subr.mxu0 0.0
    %3829 = vmatpush1.msra.mxu0 0.0
    %3830 = vmatprep.subr.mxu0 0.0
    %3831 = vmatpush1.msra.mxu0 0.0
    %3832 = vmatprep.subr.mxu0 0.0
    %3833 = vmatpush1.msra.mxu0 0.0
    %3834 = vmatprep.subr.mxu0 0.0
    %3835 = vmatpush1.msra.mxu0 0.0
    %3836 = vmatprep.subr.mxu0 0.0
    %3837 = vmatpush1.msra.mxu0 0.0
    %3838 = vmatprep.subr.mxu0 0.0
    %3839 = vmatpush1.msra.mxu0 0.0
    %3840 = vmatprep.subr.mxu0 0.0
    %3841 = vmatpush1.msra.mxu0 0.0
    %3842 = vmatprep.subr.mxu0 0.0
    %3843 = vmatpush1.msra.mxu0 0.0
    %3844 = vmatprep.subr.mxu0 0.0
    %3845 = vmatpush1.msra.mxu0 0.0
    %3846 = vmatprep.subr.mxu0 0.0
    %3847 = vmatpush1.msra.mxu0 0.0
    %3848 = vmatprep.subr.mxu0 0.0
    %3849 = vmatpush1.msra.mxu0 0.0
    %3850 = vmatprep.subr.mxu0 0.0
    %3851 = vmatpush1.msra.mxu0 0.0
    %3852 = vmatprep.subr.mxu0 0.0
    %3853 = vmatpush1.msra.mxu0 0.0
    %3854 = vmatprep.subr.mxu0 0.0
    %3855 = vmatpush1.msra.mxu0 0.0
    %3856 = vmatprep.subr.mxu0 0.0
    %3857 = vmatpush1.msra.mxu0 0.0
    %3858 = vmatprep.subr.mxu0 0.0
    %3859 = vmatpush1.msra.mxu0 0.0
    %3860 = vmatprep.subr.mxu0 0.0
    %3861 = vmatpush1.msra.mxu0 0.0
    %3862 = vmatprep.subr.mxu0 0.0
    %3863 = vmatpush1.msra.mxu0 0.0
    %3864 = vmatprep.subr.mxu0 0.0
    %3865 = vmatpush1.msra.mxu0 0.0
    %3866 = vmatprep.subr.mxu0 0.0
    %3867 = vmatpush1.msra.mxu0 0.0
    %3868 = vmatprep.subr.mxu0 0.0
    %3869 = vmatpush1.msra.mxu0 0.0
    %3870 = vmatprep.subr.mxu0 0.0
    %3871 = vmatpush1.msra.mxu0 0.0
    %3872 = vmatprep.subr.mxu0 0.0
    %3873 = vmatpush1.msra.mxu0 0.0
    %3874 = vmatprep.subr.mxu0 0.0
    %3875 = vmatpush1.msra.mxu0 0.0
    %3876 = vmatprep.subr.mxu0 0.0
    %3877 = vmatpush1.msra.mxu0 0.0
    %3878 = vmatprep.subr.mxu0 0.0
    %3879 = vmatpush1.msra.mxu0 0.0
    %3880 = vmatprep.subr.mxu0 0.0
    %3881 = vmatpush1.msra.mxu0 0.0
    %3882 = vmatprep.mubr.f32.mxu0 0.0
    %3883 = vmatmul.mubr.f32.gmra.mrb[0].mxu0 %v3746
    %v3884 = vpop.f32.mrb[0].mxu0
    %v3885 = vadd.f32 0.0, %v3884
    %v3886 = vpop.f32.mrb[0].mxu0
    %3887 = vdwg.mxu0
    %3888 = vmatprep.subr.mxu0 0.0
    %3889 = vmatpush1.msra.mxu0 %v1544
    %3890 = vmatprep.subr.mxu0 0.0
    %3891 = vmatpush1.msra.mxu0 %v1545
    %3892 = vmatprep.subr.mxu0 0.0
    %3893 = vmatpush1.msra.mxu0 %v1546
    %3894 = vmatprep.subr.mxu0 0.0
    %3895 = vmatpush1.msra.mxu0 %v1547
    %3896 = vmatprep.subr.mxu0 0.0
    %3897 = vmatpush1.msra.mxu0 0.0
    %3898 = vmatprep.subr.mxu0 0.0
    %3899 = vmatpush1.msra.mxu0 0.0
    %3900 = vmatprep.subr.mxu0 0.0
    %3901 = vmatpush1.msra.mxu0 0.0
    %3902 = vmatprep.subr.mxu0 0.0
    %3903 = vmatpush1.msra.mxu0 0.0
    %3904 = vmatprep.subr.mxu0 0.0
    %3905 = vmatpush1.msra.mxu0 0.0
    %3906 = vmatprep.subr.mxu0 0.0
    %3907 = vmatpush1.msra.mxu0 0.0
    %3908 = vmatprep.subr.mxu0 0.0
    %3909 = vmatpush1.msra.mxu0 0.0
    %3910 = vmatprep.subr.mxu0 0.0
    %3911 = vmatpush1.msra.mxu0 0.0
    %3912 = vmatprep.subr.mxu0 0.0
    %3913 = vmatpush1.msra.mxu0 0.0
    %3914 = vmatprep.subr.mxu0 0.0
    %3915 = vmatpush1.msra.mxu0 0.0
    %3916 = vmatprep.subr.mxu0 0.0
    %3917 = vmatpush1.msra.mxu0 0.0
    %3918 = vmatprep.subr.mxu0 0.0
    %3919 = vmatpush1.msra.mxu0 0.0
    %3920 = vmatprep.subr.mxu0 0.0
    %3921 = vmatpush1.msra.mxu0 0.0
    %3922 = vmatprep.subr.mxu0 0.0
    %3923 = vmatpush1.msra.mxu0 0.0
    %3924 = vmatprep.subr.mxu0 0.0
    %3925 = vmatpush1.msra.mxu0 0.0
    %3926 = vmatprep.subr.mxu0 0.0
    %3927 = vmatpush1.msra.mxu0 0.0
    %3928 = vmatprep.subr.mxu0 0.0
    %3929 = vmatpush1.msra.mxu0 0.0
    %3930 = vmatprep.subr.mxu0 0.0
    %3931 = vmatpush1.msra.mxu0 0.0
    %3932 = vmatprep.subr.mxu0 0.0
    %3933 = vmatpush1.msra.mxu0 0.0
    %3934 = vmatprep.subr.mxu0 0.0
    %3935 = vmatpush1.msra.mxu0 0.0
    %3936 = vmatprep.subr.mxu0 0.0
    %3937 = vmatpush1.msra.mxu0 0.0
    %3938 = vmatprep.subr.mxu0 0.0
    %3939 = vmatpush1.msra.mxu0 0.0
    %3940 = vmatprep.subr.mxu0 0.0
    %3941 = vmatpush1.msra.mxu0 0.0
    %3942 = vmatprep.subr.mxu0 0.0
    %3943 = vmatpush1.msra.mxu0 0.0
    %3944 = vmatprep.subr.mxu0 0.0
    %3945 = vmatpush1.msra.mxu0 0.0
    %3946 = vmatprep.subr.mxu0 0.0
    %3947 = vmatpush1.msra.mxu0 0.0
    %3948 = vmatprep.subr.mxu0 0.0
    %3949 = vmatpush1.msra.mxu0 0.0
    %3950 = vmatprep.subr.mxu0 0.0
    %3951 = vmatpush1.msra.mxu0 0.0
    %3952 = vmatprep.mubr.f32.mxu0 0.0
    %3953 = vmatmul.mubr.f32.gmra.mrb[0].mxu0 %v3746
    %v3954 = vpop.f32.mrb[0].mxu0
    %v3955 = vadd.f32 %v1135, %v3954
    %v3956 = vpop.f32.mrb[0].mxu0
    %3957 = vdwg.mxu0
    %v3958 = vadd.f32 %v795, %v3815
    %v3959 = vxor.u32 %v3958, 2147483648
    %v3960 = vmul.f32 %v3959, 1.442695
    %v3961 = vpow.pop %v3960
    %v3962 = vadd.f32 %v3961, 1.0
    %v3963 = vrcp.pop %v3962
    %v3964 = vmul.f32 1.0, %v3963
    %v3965 = vadd.f32 %v935, %v3885
    %v3966 = vxor.u32 %v3965, 2147483648
    %v3967 = vmul.f32 %v3966, 1.442695
    %v3968 = vpow.pop %v3967
    %v3969 = vadd.f32 %v3968, 1.0
    %v3970 = vrcp.pop %v3969
    %v3971 = vmul.f32 1.0, %v3970
    %v3972 = vmul.f32 %v3964, %v3955
    %v3973 = vadd.f32 %v1065, %v3972
    %v3974 = vtanh.pop %v3973
    %v3975 = vsub.f32 1.0, %v3971
    %v3976 = vmul.f32 %v3975, %v3974
    %v3977 = vmul.f32 %v3971, %v3510
    %v3978 = vadd.f32 %v3976, %v3977
    %v3980 = vsel %vm1146, %v3744, 0
    %3982 = vmatprep.subr.mxu0 0.0
    %3983 = vmatpush1.msra.mxu0 %v1142
    %3984 = vmatprep.subr.mxu0 0.0
    %3985 = vmatpush1.msra.mxu0 %v1143
    %3986 = vmatprep.subr.mxu0 0.0
    %3987 = vmatpush1.msra.mxu0 %v1144
    %3988 = vmatprep.subr.mxu0 0.0
    %3989 = vmatpush1.msra.mxu0 %v1145
    %3990 = vmatprep.subr.mxu0 0.0
    %3991 = vmatpush1.msra.mxu0 0.0
    %3992 = vmatprep.subr.mxu0 0.0
    %3993 = vmatpush1.msra.mxu0 0.0
    %3994 = vmatprep.subr.mxu0 0.0
    %3995 = vmatpush1.msra.mxu0 0.0
    %3996 = vmatprep.subr.mxu0 0.0
    %3997 = vmatpush1.msra.mxu0 0.0
    %3998 = vmatprep.subr.mxu0 0.0
    %3999 = vmatpush1.msra.mxu0 0.0
    %4000 = vmatprep.subr.mxu0 0.0
    %4001 = vmatpush1.msra.mxu0 0.0
    %4002 = vmatprep.subr.mxu0 0.0
    %4003 = vmatpush1.msra.mxu0 0.0
    %4004 = vmatprep.subr.mxu0 0.0
    %4005 = vmatpush1.msra.mxu0 0.0
    %4006 = vmatprep.subr.mxu0 0.0
    %4007 = vmatpush1.msra.mxu0 0.0
    %4008 = vmatprep.subr.mxu0 0.0
    %4009 = vmatpush1.msra.mxu0 0.0
    %4010 = vmatprep.subr.mxu0 0.0
    %4011 = vmatpush1.msra.mxu0 0.0
    %4012 = vmatprep.subr.mxu0 0.0
    %4013 = vmatpush1.msra.mxu0 0.0
    %4014 = vmatprep.subr.mxu0 0.0
    %4015 = vmatpush1.msra.mxu0 0.0
    %4016 = vmatprep.subr.mxu0 0.0
    %4017 = vmatpush1.msra.mxu0 0.0
    %4018 = vmatprep.subr.mxu0 0.0
    %4019 = vmatpush1.msra.mxu0 0.0
    %4020 = vmatprep.subr.mxu0 0.0
    %4021 = vmatpush1.msra.mxu0 0.0
    %4022 = vmatprep.subr.mxu0 0.0
    %4023 = vmatpush1.msra.mxu0 0.0
    %4024 = vmatprep.subr.mxu0 0.0
    %4025 = vmatpush1.msra.mxu0 0.0
    %4026 = vmatprep.subr.mxu0 0.0
    %4027 = vmatpush1.msra.mxu0 0.0
    %4028 = vmatprep.subr.mxu0 0.0
    %4029 = vmatpush1.msra.mxu0 0.0
    %4030 = vmatprep.subr.mxu0 0.0
    %4031 = vmatpush1.msra.mxu0 0.0
    %4032 = vmatprep.subr.mxu0 0.0
    %4033 = vmatpush1.msra.mxu0 0.0
    %4034 = vmatprep.subr.mxu0 0.0
    %4035 = vmatpush1.msra.mxu0 0.0
    %4036 = vmatprep.subr.mxu0 0.0
    %4037 = vmatpush1.msra.mxu0 0.0
    %4038 = vmatprep.subr.mxu0 0.0
    %4039 = vmatpush1.msra.mxu0 0.0
    %4040 = vmatprep.subr.mxu0 0.0
    %4041 = vmatpush1.msra.mxu0 0.0
    %4042 = vmatprep.subr.mxu0 0.0
    %4043 = vmatpush1.msra.mxu0 0.0
    %4044 = vmatprep.subr.mxu0 0.0
    %4045 = vmatpush1.msra.mxu0 0.0
    %4046 = vmatprep.mubr.f32.mxu0 0.0
    %4047 = vmatmul.mubr.f32.gmra.mrb[0].mxu0 %v3980
    %v4048 = vpop.f32.mrb[0].mxu0
    %v4049 = vadd.f32 0.0, %v4048
    %v4050 = vpop.f32.mrb[0].mxu0
    %4051 = vdwg.mxu0
    %4052 = vmatprep.subr.mxu0 0.0
    %4053 = vmatpush1.msra.mxu0 %v1221
    %4054 = vmatprep.subr.mxu0 0.0
    %4055 = vmatpush1.msra.mxu0 %v1222
    %4056 = vmatprep.subr.mxu0 0.0
    %4057 = vmatpush1.msra.mxu0 %v1223
    %4058 = vmatprep.subr.mxu0 0.0
    %4059 = vmatpush1.msra.mxu0 %v1224
    %4060 = vmatprep.subr.mxu0 0.0
    %4061 = vmatpush1.msra.mxu0 0.0
    %4062 = vmatprep.subr.mxu0 0.0
    %4063 = vmatpush1.msra.mxu0 0.0
    %4064 = vmatprep.subr.mxu0 0.0
    %4065 = vmatpush1.msra.mxu0 0.0
    %4066 = vmatprep.subr.mxu0 0.0
    %4067 = vmatpush1.msra.mxu0 0.0
    %4068 = vmatprep.subr.mxu0 0.0
    %4069 = vmatpush1.msra.mxu0 0.0
    %4070 = vmatprep.subr.mxu0 0.0
    %4071 = vmatpush1.msra.mxu0 0.0
    %4072 = vmatprep.subr.mxu0 0.0
    %4073 = vmatpush1.msra.mxu0 0.0
    %4074 = vmatprep.subr.mxu0 0.0
    %4075 = vmatpush1.msra.mxu0 0.0
    %4076 = vmatprep.subr.mxu0 0.0
    %4077 = vmatpush1.msra.mxu0 0.0
    %4078 = vmatprep.subr.mxu0 0.0
    %4079 = vmatpush1.msra.mxu0 0.0
    %4080 = vmatprep.subr.mxu0 0.0
    %4081 = vmatpush1.msra.mxu0 0.0
    %4082 = vmatprep.subr.mxu0 0.0
    %4083 = vmatpush1.msra.mxu0 0.0
    %4084 = vmatprep.subr.mxu0 0.0
    %4085 = vmatpush1.msra.mxu0 0.0
    %4086 = vmatprep.subr.mxu0 0.0
    %4087 = vmatpush1.msra.mxu0 0.0
    %4088 = vmatprep.subr.mxu0 0.0
    %4089 = vmatpush1.msra.mxu0 0.0
    %4090 = vmatprep.subr.mxu0 0.0
    %4091 = vmatpush1.msra.mxu0 0.0
    %4092 = vmatprep.subr.mxu0 0.0
    %4093 = vmatpush1.msra.mxu0 0.0
    %4094 = vmatprep.subr.mxu0 0.0
    %4095 = vmatpush1.msra.mxu0 0.0
    %4096 = vmatprep.subr.mxu0 0.0
    %4097 = vmatpush1.msra.mxu0 0.0
    %4098 = vmatprep.subr.mxu0 0.0
    %4099 = vmatpush1.msra.mxu0 0.0
    %4100 = vmatprep.subr.mxu0 0.0
    %4101 = vmatpush1.msra.mxu0 0.0
    %4102 = vmatprep.subr.mxu0 0.0
    %4103 = vmatpush1.msra.mxu0 0.0
    %4104 = vmatprep.subr.mxu0 0.0
    %4105 = vmatpush1.msra.mxu0 0.0
    %4106 = vmatprep.subr.mxu0 0.0
    %4107 = vmatpush1.msra.mxu0 0.0
    %4108 = vmatprep.subr.mxu0 0.0
    %4109 = vmatpush1.msra.mxu0 0.0
    %4110 = vmatprep.subr.mxu0 0.0
    %4111 = vmatpush1.msra.mxu0 0.0
    %4112 = vmatprep.subr.mxu0 0.0
    %4113 = vmatpush1.msra.mxu0 0.0
    %4114 = vmatprep.subr.mxu0 0.0
    %4115 = vmatpush1.msra.mxu0 0.0
    %4116 = vmatprep.mubr.f32.mxu0 0.0
    %4117 = vmatmul.mubr.f32.gmra.mrb[0].mxu0 %v3980
    %v4118 = vpop.f32.mrb[0].mxu0
    %v4119 = vadd.f32 0.0, %v4118
    %v4120 = vpop.f32.mrb[0].mxu0
    %4121 = vdwg.mxu0
    %4122 = vmatprep.subr.mxu0 0.0
    %4123 = vmatpush1.msra.mxu0 %v1296
    %4124 = vmatprep.subr.mxu0 0.0
    %4125 = vmatpush1.msra.mxu0 %v1297
    %4126 = vmatprep.subr.mxu0 0.0
    %4127 = vmatpush1.msra.mxu0 %v1298
    %4128 = vmatprep.subr.mxu0 0.0
    %4129 = vmatpush1.msra.mxu0 %v1299
    %4130 = vmatprep.subr.mxu0 0.0
    %4131 = vmatpush1.msra.mxu0 0.0
    %4132 = vmatprep.subr.mxu0 0.0
    %4133 = vmatpush1.msra.mxu0 0.0
    %4134 = vmatprep.subr.mxu0 0.0
    %4135 = vmatpush1.msra.mxu0 0.0
    %4136 = vmatprep.subr.mxu0 0.0
    %4137 = vmatpush1.msra.mxu0 0.0
    %4138 = vmatprep.subr.mxu0 0.0
    %4139 = vmatpush1.msra.mxu0 0.0
    %4140 = vmatprep.subr.mxu0 0.0
    %4141 = vmatpush1.msra.mxu0 0.0
    %4142 = vmatprep.subr.mxu0 0.0
    %4143 = vmatpush1.msra.mxu0 0.0
    %4144 = vmatprep.subr.mxu0 0.0
    %4145 = vmatpush1.msra.mxu0 0.0
    %4146 = vmatprep.subr.mxu0 0.0
    %4147 = vmatpush1.msra.mxu0 0.0
    %4148 = vmatprep.subr.mxu0 0.0
    %4149 = vmatpush1.msra.mxu0 0.0
    %4150 = vmatprep.subr.mxu0 0.0
    %4151 = vmatpush1.msra.mxu0 0.0
    %4152 = vmatprep.subr.mxu0 0.0
    %4153 = vmatpush1.msra.mxu0 0.0
    %4154 = vmatprep.subr.mxu0 0.0
    %4155 = vmatpush1.msra.mxu0 0.0
    %4156 = vmatprep.subr.mxu0 0.0
    %4157 = vmatpush1.msra.mxu0 0.0
    %4158 = vmatprep.subr.mxu0 0.0
    %4159 = vmatpush1.msra.mxu0 0.0
    %4160 = vmatprep.subr.mxu0 0.0
    %4161 = vmatpush1.msra.mxu0 0.0
    %4162 = vmatprep.subr.mxu0 0.0
    %4163 = vmatpush1.msra.mxu0 0.0
    %4164 = vmatprep.subr.mxu0 0.0
    %4165 = vmatpush1.msra.mxu0 0.0
    %4166 = vmatprep.subr.mxu0 0.0
    %4167 = vmatpush1.msra.mxu0 0.0
    %4168 = vmatprep.subr.mxu0 0.0
    %4169 = vmatpush1.msra.mxu0 0.0
    %4170 = vmatprep.subr.mxu0 0.0
    %4171 = vmatpush1.msra.mxu0 0.0
    %4172 = vmatprep.subr.mxu0 0.0
    %4173 = vmatpush1.msra.mxu0 0.0
    %4174 = vmatprep.subr.mxu0 0.0
    %4175 = vmatpush1.msra.mxu0 0.0
    %4176 = vmatprep.subr.mxu0 0.0
    %4177 = vmatpush1.msra.mxu0 0.0
    %4178 = vmatprep.subr.mxu0 0.0
    %4179 = vmatpush1.msra.mxu0 0.0
    %4180 = vmatprep.subr.mxu0 0.0
    %4181 = vmatpush1.msra.mxu0 0.0
    %4182 = vmatprep.subr.mxu0 0.0
    %4183 = vmatpush1.msra.mxu0 0.0
    %4184 = vmatprep.subr.mxu0 0.0
    %4185 = vmatpush1.msra.mxu0 0.0
    %4186 = vmatprep.mubr.f32.mxu0 0.0
    %4187 = vmatmul.mubr.f32.gmra.mrb[0].mxu0 %v3980
    %v4188 = vpop.f32.mrb[0].mxu0
    %v4189 = vadd.f32 %v1110, %v4188
    %v4190 = vpop.f32.mrb[0].mxu0
    %4191 = vdwg.mxu0
    %v4192 = vadd.f32 %v406, %v4049
    %v4193 = vxor.u32 %v4192, 2147483648
    %v4194 = vmul.f32 %v4193, 1.442695
    %v4195 = vpow.pop %v4194
    %v4196 = vadd.f32 %v4195, 1.0
    %v4197 = vrcp.pop %v4196
    %v4198 = vmul.f32 1.0, %v4197
    %v4199 = vadd.f32 %v546, %v4119
    %v4200 = vxor.u32 %v4199, 2147483648
    %v4201 = vmul.f32 %v4200, 1.442695
    %v4202 = vpow.pop %v4201
    %v4203 = vadd.f32 %v4202, 1.0
    %v4204 = vrcp.pop %v4203
    %v4205 = vmul.f32 1.0, %v4204
    %v4206 = vmul.f32 %v4198, %v4189
    %v4207 = vadd.f32 %v676, %v4206
    %v4208 = vtanh.pop %v4207
    %v4209 = vsub.f32 1.0, %v4205
    %v4210 = vmul.f32 %v4209, %v4208
    %v4211 = vmul.f32 %v4205, %v3744
    %v4212 = vadd.f32 %v4210, %v4211
    %v4214 = vsel %vm1146, %v3978, 0
    %4216 = vmatprep.subr.mxu0 0.0
    %4217 = vmatpush1.msra.mxu0 %v1391
    %4218 = vmatprep.subr.mxu0 0.0
    %4219 = vmatpush1.msra.mxu0 %v1392
    %4220 = vmatprep.subr.mxu0 0.0
    %4221 = vmatpush1.msra.mxu0 %v1393
    %4222 = vmatprep.subr.mxu0 0.0
    %4223 = vmatpush1.msra.mxu0 %v1394
    %4224 = vmatprep.subr.mxu0 0.0
    %4225 = vmatpush1.msra.mxu0 0.0
    %4226 = vmatprep.subr.mxu0 0.0
    %4227 = vmatpush1.msra.mxu0 0.0
    %4228 = vmatprep.subr.mxu0 0.0
    %4229 = vmatpush1.msra.mxu0 0.0
    %4230 = vmatprep.subr.mxu0 0.0
    %4231 = vmatpush1.msra.mxu0 0.0
    %4232 = vmatprep.subr.mxu0 0.0
    %4233 = vmatpush1.msra.mxu0 0.0
    %4234 = vmatprep.subr.mxu0 0.0
    %4235 = vmatpush1.msra.mxu0 0.0
    %4236 = vmatprep.subr.mxu0 0.0
    %4237 = vmatpush1.msra.mxu0 0.0
    %4238 = vmatprep.subr.mxu0 0.0
    %4239 = vmatpush1.msra.mxu0 0.0
    %4240 = vmatprep.subr.mxu0 0.0
    %4241 = vmatpush1.msra.mxu0 0.0
    %4242 = vmatprep.subr.mxu0 0.0
    %4243 = vmatpush1.msra.mxu0 0.0
    %4244 = vmatprep.subr.mxu0 0.0
    %4245 = vmatpush1.msra.mxu0 0.0
    %4246 = vmatprep.subr.mxu0 0.0
    %4247 = vmatpush1.msra.mxu0 0.0
    %4248 = vmatprep.subr.mxu0 0.0
    %4249 = vmatpush1.msra.mxu0 0.0
    %4250 = vmatprep.subr.mxu0 0.0
    %4251 = vmatpush1.msra.mxu0 0.0
    %4252 = vmatprep.subr.mxu0 0.0
    %4253 = vmatpush1.msra.mxu0 0.0
    %4254 = vmatprep.subr.mxu0 0.0
    %4255 = vmatpush1.msra.mxu0 0.0
    %4256 = vmatprep.subr.mxu0 0.0
    %4257 = vmatpush1.msra.mxu0 0.0
    %4258 = vmatprep.subr.mxu0 0.0
    %4259 = vmatpush1.msra.mxu0 0.0
    %4260 = vmatprep.subr.mxu0 0.0
    %4261 = vmatpush1.msra.mxu0 0.0
    %4262 = vmatprep.subr.mxu0 0.0
    %4263 = vmatpush1.msra.mxu0 0.0
    %4264 = vmatprep.subr.mxu0 0.0
    %4265 = vmatpush1.msra.mxu0 0.0
    %4266 = vmatprep.subr.mxu0 0.0
    %4267 = vmatpush1.msra.mxu0 0.0
    %4268 = vmatprep.subr.mxu0 0.0
    %4269 = vmatpush1.msra.mxu0 0.0
    %4270 = vmatprep.subr.mxu0 0.0
    %4271 = vmatpush1.msra.mxu0 0.0
    %4272 = vmatprep.subr.mxu0 0.0
    %4273 = vmatpush1.msra.mxu0 0.0
    %4274 = vmatprep.subr.mxu0 0.0
    %4275 = vmatpush1.msra.mxu0 0.0
    %4276 = vmatprep.subr.mxu0 0.0
    %4277 = vmatpush1.msra.mxu0 0.0
    %4278 = vmatprep.subr.mxu0 0.0
    %4279 = vmatpush1.msra.mxu0 0.0
    %4280 = vmatprep.mubr.f32.mxu0 0.0
    %4281 = vmatmul.mubr.f32.gmra.mrb[0].mxu0 %v4214
    %v4282 = vpop.f32.mrb[0].mxu0
    %v4283 = vadd.f32 0.0, %v4282
    %v4284 = vpop.f32.mrb[0].mxu0
    %4285 = vdwg.mxu0
    %4286 = vmatprep.subr.mxu0 0.0
    %4287 = vmatpush1.msra.mxu0 %v1469
    %4288 = vmatprep.subr.mxu0 0.0
    %4289 = vmatpush1.msra.mxu0 %v1470
    %4290 = vmatprep.subr.mxu0 0.0
    %4291 = vmatpush1.msra.mxu0 %v1471
    %4292 = vmatprep.subr.mxu0 0.0
    %4293 = vmatpush1.msra.mxu0 %v1472
    %4294 = vmatprep.subr.mxu0 0.0
    %4295 = vmatpush1.msra.mxu0 0.0
    %4296 = vmatprep.subr.mxu0 0.0
    %4297 = vmatpush1.msra.mxu0 0.0
    %4298 = vmatprep.subr.mxu0 0.0
    %4299 = vmatpush1.msra.mxu0 0.0
    %4300 = vmatprep.subr.mxu0 0.0
    %4301 = vmatpush1.msra.mxu0 0.0
    %4302 = vmatprep.subr.mxu0 0.0
    %4303 = vmatpush1.msra.mxu0 0.0
    %4304 = vmatprep.subr.mxu0 0.0
    %4305 = vmatpush1.msra.mxu0 0.0
    %4306 = vmatprep.subr.mxu0 0.0
    %4307 = vmatpush1.msra.mxu0 0.0
    %4308 = vmatprep.subr.mxu0 0.0
    %4309 = vmatpush1.msra.mxu0 0.0
    %4310 = vmatprep.subr.mxu0 0.0
    %4311 = vmatpush1.msra.mxu0 0.0
    %4312 = vmatprep.subr.mxu0 0.0
    %4313 = vmatpush1.msra.mxu0 0.0
    %4314 = vmatprep.subr.mxu0 0.0
    %4315 = vmatpush1.msra.mxu0 0.0
    %4316 = vmatprep.subr.mxu0 0.0
    %4317 = vmatpush1.msra.mxu0 0.0
    %4318 = vmatprep.subr.mxu0 0.0
    %4319 = vmatpush1.msra.mxu0 0.0
    %4320 = vmatprep.subr.mxu0 0.0
    %4321 = vmatpush1.msra.mxu0 0.0
    %4322 = vmatprep.subr.mxu0 0.0
    %4323 = vmatpush1.msra.mxu0 0.0
    %4324 = vmatprep.subr.mxu0 0.0
    %4325 = vmatpush1.msra.mxu0 0.0
    %4326 = vmatprep.subr.mxu0 0.0
    %4327 = vmatpush1.msra.mxu0 0.0
    %4328 = vmatprep.subr.mxu0 0.0
    %4329 = vmatpush1.msra.mxu0 0.0
    %4330 = vmatprep.subr.mxu0 0.0
    %4331 = vmatpush1.msra.mxu0 0.0
    %4332 = vmatprep.subr.mxu0 0.0
    %4333 = vmatpush1.msra.mxu0 0.0
    %4334 = vmatprep.subr.mxu0 0.0
    %4335 = vmatpush1.msra.mxu0 0.0
    %4336 = vmatprep.subr.mxu0 0.0
    %4337 = vmatpush1.msra.mxu0 0.0
    %4338 = vmatprep.subr.mxu0 0.0
    %4339 = vmatpush1.msra.mxu0 0.0
    %4340 = vmatprep.subr.mxu0 0.0
    %4341 = vmatpush1.msra.mxu0 0.0
    %4342 = vmatprep.subr.mxu0 0.0
    %4343 = vmatpush1.msra.mxu0 0.0
    %4344 = vmatprep.subr.mxu0 0.0
    %4345 = vmatpush1.msra.mxu0 0.0
    %4346 = vmatprep.subr.mxu0 0.0
    %4347 = vmatpush1.msra.mxu0 0.0
    %4348 = vmatprep.subr.mxu0 0.0
    %4349 = vmatpush1.msra.mxu0 0.0
    %4350 = vmatprep.mubr.f32.mxu0 0.0
    %4351 = vmatmul.mubr.f32.gmra.mrb[0].mxu0 %v4214
    %v4352 = vpop.f32.mrb[0].mxu0
    %v4353 = vadd.f32 0.0, %v4352
    %v4354 = vpop.f32.mrb[0].mxu0
    %4355 = vdwg.mxu0
    %4356 = vmatprep.subr.mxu0 0.0
    %4357 = vmatpush1.msra.mxu0 %v1544
    %4358 = vmatprep.subr.mxu0 0.0
    %4359 = vmatpush1.msra.mxu0 %v1545
    %4360 = vmatprep.subr.mxu0 0.0
    %4361 = vmatpush1.msra.mxu0 %v1546
    %4362 = vmatprep.subr.mxu0 0.0
    %4363 = vmatpush1.msra.mxu0 %v1547
    %4364 = vmatprep.subr.mxu0 0.0
    %4365 = vmatpush1.msra.mxu0 0.0
    %4366 = vmatprep.subr.mxu0 0.0
    %4367 = vmatpush1.msra.mxu0 0.0
    %4368 = vmatprep.subr.mxu0 0.0
    %4369 = vmatpush1.msra.mxu0 0.0
    %4370 = vmatprep.subr.mxu0 0.0
    %4371 = vmatpush1.msra.mxu0 0.0
    %4372 = vmatprep.subr.mxu0 0.0
    %4373 = vmatpush1.msra.mxu0 0.0
    %4374 = vmatprep.subr.mxu0 0.0
    %4375 = vmatpush1.msra.mxu0 0.0
    %4376 = vmatprep.subr.mxu0 0.0
    %4377 = vmatpush1.msra.mxu0 0.0
    %4378 = vmatprep.subr.mxu0 0.0
    %4379 = vmatpush1.msra.mxu0 0.0
    %4380 = vmatprep.subr.mxu0 0.0
    %4381 = vmatpush1.msra.mxu0 0.0
    %4382 = vmatprep.subr.mxu0 0.0
    %4383 = vmatpush1.msra.mxu0 0.0
    %4384 = vmatprep.subr.mxu0 0.0
    %4385 = vmatpush1.msra.mxu0 0.0
    %4386 = vmatprep.subr.mxu0 0.0
    %4387 = vmatpush1.msra.mxu0 0.0
    %4388 = vmatprep.subr.mxu0 0.0
    %4389 = vmatpush1.msra.mxu0 0.0
    %4390 = vmatprep.subr.mxu0 0.0
    %4391 = vmatpush1.msra.mxu0 0.0
    %4392 = vmatprep.subr.mxu0 0.0
    %4393 = vmatpush1.msra.mxu0 0.0
    %4394 = vmatprep.subr.mxu0 0.0
    %4395 = vmatpush1.msra.mxu0 0.0
    %4396 = vmatprep.subr.mxu0 0.0
    %4397 = vmatpush1.msra.mxu0 0.0
    %4398 = vmatprep.subr.mxu0 0.0
    %4399 = vmatpush1.msra.mxu0 0.0
    %4400 = vmatprep.subr.mxu0 0.0
    %4401 = vmatpush1.msra.mxu0 0.0
    %4402 = vmatprep.subr.mxu0 0.0
    %4403 = vmatpush1.msra.mxu0 0.0
    %4404 = vmatprep.subr.mxu0 0.0
    %4405 = vmatpush1.msra.mxu0 0.0
    %4406 = vmatprep.subr.mxu0 0.0
    %4407 = vmatpush1.msra.mxu0 0.0
    %4408 = vmatprep.subr.mxu0 0.0
    %4409 = vmatpush1.msra.mxu0 0.0
    %4410 = vmatprep.subr.mxu0 0.0
    %4411 = vmatpush1.msra.mxu0 0.0
    %4412 = vmatprep.subr.mxu0 0.0
    %4413 = vmatpush1.msra.mxu0 0.0
    %4414 = vmatprep.subr.mxu0 0.0
    %4415 = vmatpush1.msra.mxu0 0.0
    %4416 = vmatprep.subr.mxu0 0.0
    %4417 = vmatpush1.msra.mxu0 0.0
    %4418 = vmatprep.subr.mxu0 0.0
    %4419 = vmatpush1.msra.mxu0 0.0
    %4420 = vmatprep.mubr.f32.mxu0 0.0
    %4421 = vmatmul.mubr.f32.gmra.mrb[0].mxu0 %v4214
    %v4422 = vpop.f32.mrb[0].mxu0
    %v4423 = vadd.f32 %v1135, %v4422
    %v4424 = vpop.f32.mrb[0].mxu0
    %4425 = vdwg.mxu0
    %v4426 = vadd.f32 %v787, %v4283
    %v4427 = vxor.u32 %v4426, 2147483648
    %v4428 = vmul.f32 %v4427, 1.442695
    %v4429 = vpow.pop %v4428
    %v4430 = vadd.f32 %v4429, 1.0
    %v4431 = vrcp.pop %v4430
    %v4432 = vmul.f32 1.0, %v4431
    %v4433 = vadd.f32 %v927, %v4353
    %v4434 = vxor.u32 %v4433, 2147483648
    %v4435 = vmul.f32 %v4434, 1.442695
    %v4436 = vpow.pop %v4435
    %v4437 = vadd.f32 %v4436, 1.0
    %v4438 = vrcp.pop %v4437
    %v4439 = vmul.f32 1.0, %v4438
    %v4440 = vmul.f32 %v4432, %v4423
    %v4441 = vadd.f32 %v1057, %v4440
    %v4442 = vtanh.pop %v4441
    %v4443 = vsub.f32 1.0, %v4439
    %v4444 = vmul.f32 %v4443, %v4442
    %v4445 = vmul.f32 %v4439, %v3978
    %v4446 = vadd.f32 %v4444, %v4445
    %v4449 = vunpack.c.l.s4 1983009808
    %v4450 = vunpack.c.0.s8 %v4449
    %v4451 = vlaneseq
    %v4452 = vshrl.u32 %v4451, 7
    %v4453 = vsub.s32 %v4450, %v4452
    %v4454 = vrot.slane %v4446, %v4453
    %4455 = vrot.lane.b32.xlu0 %v4454, 32
    %v4456 = vpop.permute.xlu0 %4455
    %v4458 = vsel %vm1146, %v1116, %v4456
    %v4460 = vunpack.c.l.s4 1983009808
    %v4461 = vunpack.c.0.s8 %v4460
    %v4462 = vlaneseq
    %v4463 = vshrl.u32 %v4462, 7
    %v4464 = vsub.s32 %v4461, %v4463
    %v4465 = vrot.slane %v3978, %v4464
    %4466 = vrot.lane.b32.xlu0 %v4465, 32
    %v4467 = vpop.permute.xlu0 %4466
    %v4469 = vsel %vm1146, %v1390, %v4467
    %v4471 = vunpack.c.l.s4 1983009808
    %v4472 = vunpack.c.0.s8 %v4471
    %v4473 = vlaneseq
    %v4474 = vshrl.u32 %v4473, 7
    %v4475 = vsub.s32 %v4472, %v4474
    %v4476 = vrot.slane %v3510, %v4475
    %4477 = vrot.lane.b32.xlu0 %v4476, 32
    %v4478 = vpop.permute.xlu0 %4477
    %v4480 = vsel %vm1146, %v1872, %v4478
    %v4482 = vunpack.c.l.s4 1983009808
    %v4483 = vunpack.c.0.s8 %v4482
    %v4484 = vlaneseq
    %v4485 = vshrl.u32 %v4484, 7
    %v4486 = vsub.s32 %v4483, %v4485
    %v4487 = vrot.slane %v3042, %v4486
    %4488 = vrot.lane.b32.xlu0 %v4487, 32
    %v4489 = vpop.permute.xlu0 %4488
    %v4491 = vsel %vm1146, %v2340, %v4489
    %v4493 = vunpack.c.l.s4 1983009808
    %v4494 = vunpack.c.0.s8 %v4493
    %v4495 = vlaneseq
    %v4496 = vshrl.u32 %v4495, 7
    %v4497 = vsub.s32 %v4494, %v4496
    %v4498 = vrot.slane %v2574, %v4497
    %4499 = vrot.lane.b32.xlu0 %v4498, 32
    %v4500 = vpop.permute.xlu0 %4499
    %v4502 = vsel %vm1146, %v2808, %v4500
    %v4504 = vunpack.c.l.s4 1983009808
    %v4505 = vunpack.c.0.s8 %v4504
    %v4506 = vlaneseq
    %v4507 = vshrl.u32 %v4506, 7
    %v4508 = vsub.s32 %v4505, %v4507
    %v4509 = vrot.slane %v2106, %v4508
    %4510 = vrot.lane.b32.xlu0 %v4509, 32
    %v4511 = vpop.permute.xlu0 %4510
    %v4513 = vsel %vm1146, %v3276, %v4511
    %v4515 = vunpack.c.l.s4 1983009808
    %v4516 = vunpack.c.0.s8 %v4515
    %v4517 = vlaneseq
    %v4518 = vshrl.u32 %v4517, 7
    %v4519 = vsub.s32 %v4516, %v4518
    %v4520 = vrot.slane %v1638, %v4519
    %4521 = vrot.lane.b32.xlu0 %v4520, 32
    %v4522 = vpop.permute.xlu0 %4521
    %v4524 = vsel %vm1146, %v3744, %v4522
    %v4526 = vunpack.c.l.s4 1983009808
    %v4527 = vunpack.c.0.s8 %v4526
    %v4528 = vlaneseq
    %v4529 = vshrl.u32 %v4528, 7
    %v4530 = vsub.s32 %v4527, %v4529
    %v4531 = vrot.slane %v1141, %v4530
    %4532 = vrot.lane.b32.xlu0 %v4531, 32
    %v4533 = vpop.permute.xlu0 %4532
    %v4535 = vsel %vm1146, %v4212, %v4533
    %v4537 = vrot.slane %v4469, 6
    %v4540 = vrot.slane %v4480, 4
    %v4543 = vrot.slane %v4491, 2
    %v4546 = vrot.slane %v4513, 6
    %v4549 = vrot.slane %v4524, 4
    %v4552 = vrot.slane %v4535, 2
    %v4554 = vsel %vm160, %v4458, %v4537
    %v4555 = vsel %vm164, %v4554, %v4540
    %v4556 = vsel %vm168, %v4555, %v4543
    %v4557 = vsel %vm160, %v4502, %v4546
    %v4558 = vsel %vm164, %v4557, %v4549
    %v4559 = vsel %vm168, %v4558, %v4552
    %v4560 = vld [vmem:[%s10] sm:$0xff]
    %v4561 = vld [vmem:[%s10 + $0x8] sm:$0xff]
    %v4562 = vld [vmem:[%s10 + $0x10] sm:$0xff]
    %v4563 = vld [vmem:[%s10 + $0x18] sm:$0xff]
    %v4564 = vld [vmem:[%s10 + $0x20] sm:$0xff]
    %v4565 = vld [vmem:[%s10 + $0x28] sm:$0xff]
    %v4566 = vld [vmem:[%s10 + $0x30] sm:$0xff]
    %v4567 = vld [vmem:[%s10 + $0x38] sm:$0xff]
    %v4568 = vld [vmem:[%s12] sm:$0x1]
    %v4570 = vlaneseq
    %v4571 = vshrl.u32 %v4570, 7
    %v4572 = vsub.s32 0, %v4571
    %v4573 = vrot.slane %v4568, %v4572
    %vm4575 = vcmask 523264
    %v4577 = vsel %vm4575, %v4556, 0
    %v4580 = vsel %vm4575, %v4559, 0
    %4582 = vmatprep.subr.mxu0 0.0
    %4583 = vmatpush1.msra.mxu0 %v4560
    %4584 = vmatprep.subr.mxu0 0.0
    %4585 = vmatpush1.msra.mxu0 %v4561
    %4586 = vmatprep.subr.mxu0 0.0
    %4587 = vmatpush1.msra.mxu0 %v4562
    %4588 = vmatprep.subr.mxu0 0.0
    %4589 = vmatpush1.msra.mxu0 %v4563
    %4590 = vmatprep.subr.mxu0 0.0
    %4591 = vmatpush1.msra.mxu0 %v4564
    %4592 = vmatprep.subr.mxu0 0.0
    %4593 = vmatpush1.msra.mxu0 %v4565
    %4594 = vmatprep.subr.mxu0 0.0
    %4595 = vmatpush1.msra.mxu0 %v4566
    %4596 = vmatprep.subr.mxu0 0.0
    %4597 = vmatpush1.msra.mxu0 %v4567
    %4598 = vmatprep.subr.mxu0 0.0
    %4599 = vmatpush1.msra.mxu0 0.0
    %4600 = vmatprep.subr.mxu0 0.0
    %4601 = vmatpush1.msra.mxu0 0.0
    %4602 = vmatprep.subr.mxu0 0.0
    %4603 = vmatpush1.msra.mxu0 0.0
    %4604 = vmatprep.subr.mxu0 0.0
    %4605 = vmatpush1.msra.mxu0 0.0
    %4606 = vmatprep.subr.mxu0 0.0
    %4607 = vmatpush1.msra.mxu0 0.0
    %4608 = vmatprep.subr.mxu0 0.0
    %4609 = vmatpush1.msra.mxu0 0.0
    %4610 = vmatprep.subr.mxu0 0.0
    %4611 = vmatpush1.msra.mxu0 0.0
    %4612 = vmatprep.subr.mxu0 0.0
    %4613 = vmatpush1.msra.mxu0 0.0
    %4614 = vmatprep.subr.mxu0 0.0
    %4615 = vmatpush1.msra.mxu0 0.0
    %4616 = vmatprep.subr.mxu0 0.0
    %4617 = vmatpush1.msra.mxu0 0.0
    %4618 = vmatprep.subr.mxu0 0.0
    %4619 = vmatpush1.msra.mxu0 0.0
    %4620 = vmatprep.subr.mxu0 0.0
    %4621 = vmatpush1.msra.mxu0 0.0
    %4622 = vmatprep.subr.mxu0 0.0
    %4623 = vmatpush1.msra.mxu0 0.0
    %4624 = vmatprep.subr.mxu0 0.0
    %4625 = vmatpush1.msra.mxu0 0.0
    %4626 = vmatprep.subr.mxu0 0.0
    %4627 = vmatpush1.msra.mxu0 0.0
    %4628 = vmatprep.subr.mxu0 0.0
    %4629 = vmatpush1.msra.mxu0 0.0
    %4630 = vmatprep.subr.mxu0 0.0
    %4631 = vmatpush1.msra.mxu0 0.0
    %4632 = vmatprep.subr.mxu0 0.0
    %4633 = vmatpush1.msra.mxu0 0.0
    %4634 = vmatprep.subr.mxu0 0.0
    %4635 = vmatpush1.msra.mxu0 0.0
    %4636 = vmatprep.subr.mxu0 0.0
    %4637 = vmatpush1.msra.mxu0 0.0
    %4638 = vmatprep.subr.mxu0 0.0
    %4639 = vmatpush1.msra.mxu0 0.0
    %4640 = vmatprep.subr.mxu0 0.0
    %4641 = vmatpush1.msra.mxu0 0.0
    %4642 = vmatprep.subr.mxu0 0.0
    %4643 = vmatpush1.msra.mxu0 0.0
    %4644 = vmatprep.subr.mxu0 0.0
    %4645 = vmatpush1.msra.mxu0 0.0
    %4646 = vmatprep.mubr.f32.mxu0 0.0
    %4647 = vmatmul.mubr.f32.gmra.mrb[0].mxu0 %v4577
    %v4648 = vpop.f32.mrb[0].mxu0
    %v4649 = vadd.f32 %v4573, %v4648
    %v4650 = vpop.f32.mrb[0].mxu0
    %4651 = vmatprep.mubr.f32.mxu0 0.0
    %4652 = vmatmul.mubr.f32.gmra.mrb[0].mxu0 %v4580
    %v4653 = vpop.f32.mrb[0].mxu0
    %v4654 = vadd.f32 %v4573, %v4653
    %v4655 = vpop.f32.mrb[0].mxu0
    %4656 = vdwg.mxu0
    %v4657 = vld [vmem:[%s13] sm:$0x1]
    %v4659 = vlaneseq
    %v4660 = vshrl.u32 %v4659, 7
    %v4661 = vsub.s32 0, %v4660
    %v4662 = vrot.slane %v4657, %v4661
    %v4664 = vadd.f32 %v4649, %v4662
    %v4665 = vadd.f32 %v4654, %v4662
    %v4668 = vcombine.high %v4664, %v4664
    %v4670 = vunpack.c.l.s4 1983009808
    %v4671 = vunpack.c.0.s8 %v4670
    %v4672 = vlaneseq
    %v4673 = vshrl.u32 %v4672, 7
    %v4674 = vsub.s32 %v4671, %v4673
    %v4675 = vrot.slane %v4664, %v4674
    %v4677 = vunpack.c.l.s4 1983009808
    %v4678 = vunpack.c.0.s8 %v4677
    %v4679 = vlaneseq
    %v4680 = vshrl.u32 %v4679, 7
    %v4681 = vsub.s32 %v4678, %v4680
    %v4682 = vrot.slane %v4668, %v4681
    %v4683 = vcombine.high %v4675, %v4675
    %v4684 = vcombine.high %v4682, %v4682
    %v4685 = vcombine.high %v4665, %v4665
    %v4687 = vunpack.c.l.s4 1983009808
    %v4688 = vunpack.c.0.s8 %v4687
    %v4689 = vlaneseq
    %v4690 = vshrl.u32 %v4689, 7
    %v4691 = vsub.s32 %v4688, %v4690
    %v4692 = vrot.slane %v4665, %v4691
    %v4694 = vunpack.c.l.s4 1983009808
    %v4695 = vunpack.c.0.s8 %v4694
    %v4696 = vlaneseq
    %v4697 = vshrl.u32 %v4696, 7
    %v4698 = vsub.s32 %v4695, %v4697
    %v4699 = vrot.slane %v4685, %v4698
    %v4700 = vcombine.high %v4692, %v4692
    %v4701 = vcombine.high %v4699, %v4699
    %s4710 = scalar_lea.vmem %s10, 64
    %v4711 = vld [vmem:[%s4710] sm:$0xff]
    %v4712 = vld [vmem:[%s4710 + $0x8] sm:$0xff]
    %v4713 = vld [vmem:[%s4710 + $0x10] sm:$0xff]
    %v4714 = vld [vmem:[%s4710 + $0x18] sm:$0xff]
    %v4715 = vld [vmem:[%s4710 + $0x20] sm:$0xff]
    %v4716 = vld [vmem:[%s4710 + $0x28] sm:$0xff]
    %v4717 = vld [vmem:[%s4710 + $0x30] sm:$0xff]
    %v4718 = vld [vmem:[%s4710 + $0x38] sm:$0xff]
    %s4719 = scalar_lea.vmem %s12, 1
    %v4720 = vld [vmem:[%s4719] sm:$0x1]
    %v4722 = vlaneseq
    %v4723 = vshrl.u32 %v4722, 7
    %v4724 = vsub.s32 0, %v4723
    %v4725 = vrot.slane %v4720, %v4724
    %4727 = vmatprep.subr.mxu0 0.0
    %4728 = vmatpush1.msra.mxu0 %v4711
    %4729 = vmatprep.subr.mxu0 0.0
    %4730 = vmatpush1.msra.mxu0 %v4712
    %4731 = vmatprep.subr.mxu0 0.0
    %4732 = vmatpush1.msra.mxu0 %v4713
    %4733 = vmatprep.subr.mxu0 0.0
    %4734 = vmatpush1.msra.mxu0 %v4714
    %4735 = vmatprep.subr.mxu0 0.0
    %4736 = vmatpush1.msra.mxu0 %v4715
    %4737 = vmatprep.subr.mxu0 0.0
    %4738 = vmatpush1.msra.mxu0 %v4716
    %4739 = vmatprep.subr.mxu0 0.0
    %4740 = vmatpush1.msra.mxu0 %v4717
    %4741 = vmatprep.subr.mxu0 0.0
    %4742 = vmatpush1.msra.mxu0 %v4718
    %4743 = vmatprep.subr.mxu0 0.0
    %4744 = vmatpush1.msra.mxu0 0.0
    %4745 = vmatprep.subr.mxu0 0.0
    %4746 = vmatpush1.msra.mxu0 0.0
    %4747 = vmatprep.subr.mxu0 0.0
    %4748 = vmatpush1.msra.mxu0 0.0
    %4749 = vmatprep.subr.mxu0 0.0
    %4750 = vmatpush1.msra.mxu0 0.0
    %4751 = vmatprep.subr.mxu0 0.0
    %4752 = vmatpush1.msra.mxu0 0.0
    %4753 = vmatprep.subr.mxu0 0.0
    %4754 = vmatpush1.msra.mxu0 0.0
    %4755 = vmatprep.subr.mxu0 0.0
    %4756 = vmatpush1.msra.mxu0 0.0
    %4757 = vmatprep.subr.mxu0 0.0
    %4758 = vmatpush1.msra.mxu0 0.0
    %4759 = vmatprep.subr.mxu0 0.0
    %4760 = vmatpush1.msra.mxu0 0.0
    %4761 = vmatprep.subr.mxu0 0.0
    %4762 = vmatpush1.msra.mxu0 0.0
    %4763 = vmatprep.subr.mxu0 0.0
    %4764 = vmatpush1.msra.mxu0 0.0
    %4765 = vmatprep.subr.mxu0 0.0
    %4766 = vmatpush1.msra.mxu0 0.0
    %4767 = vmatprep.subr.mxu0 0.0
    %4768 = vmatpush1.msra.mxu0 0.0
    %4769 = vmatprep.subr.mxu0 0.0
    %4770 = vmatpush1.msra.mxu0 0.0
    %4771 = vmatprep.subr.mxu0 0.0
    %4772 = vmatpush1.msra.mxu0 0.0
    %4773 = vmatprep.subr.mxu0 0.0
    %4774 = vmatpush1.msra.mxu0 0.0
    %4775 = vmatprep.subr.mxu0 0.0
    %4776 = vmatpush1.msra.mxu0 0.0
    %4777 = vmatprep.subr.mxu0 0.0
    %4778 = vmatpush1.msra.mxu0 0.0
    %4779 = vmatprep.subr.mxu0 0.0
    %4780 = vmatpush1.msra.mxu0 0.0
    %4781 = vmatprep.subr.mxu0 0.0
    %4782 = vmatpush1.msra.mxu0 0.0
    %4783 = vmatprep.subr.mxu0 0.0
    %4784 = vmatpush1.msra.mxu0 0.0
    %4785 = vmatprep.subr.mxu0 0.0
    %4786 = vmatpush1.msra.mxu0 0.0
    %4787 = vmatprep.subr.mxu0 0.0
    %4788 = vmatpush1.msra.mxu0 0.0
    %4789 = vmatprep.subr.mxu0 0.0
    %4790 = vmatpush1.msra.mxu0 0.0
    %4791 = vmatprep.mubr.f32.mxu0 0.0
    %4792 = vmatmul.mubr.f32.gmra.mrb[0].mxu0 %v4577
    %v4793 = vpop.f32.mrb[0].mxu0
    %v4794 = vadd.f32 %v4725, %v4793
    %v4795 = vpop.f32.mrb[0].mxu0
    %4796 = vmatprep.mubr.f32.mxu0 0.0
    %4797 = vmatmul.mubr.f32.gmra.mrb[0].mxu0 %v4580
    %v4798 = vpop.f32.mrb[0].mxu0
    %v4799 = vadd.f32 %v4725, %v4798
    %v4800 = vpop.f32.mrb[0].mxu0
    %4801 = vdwg.mxu0
    %s4802 = scalar_lea.vmem %s13, 1
    %v4803 = vld [vmem:[%s4802] sm:$0x1]
    %v4805 = vlaneseq
    %v4806 = vshrl.u32 %v4805, 7
    %v4807 = vsub.s32 0, %v4806
    %v4808 = vrot.slane %v4803, %v4807
    %v4810 = vadd.f32 %v4794, %v4808
    %v4811 = vadd.f32 %v4799, %v4808
    %v4814 = vcombine.high %v4810, %v4810
    %v4816 = vunpack.c.l.s4 1983009808
    %v4817 = vunpack.c.0.s8 %v4816
    %v4818 = vlaneseq
    %v4819 = vshrl.u32 %v4818, 7
    %v4820 = vsub.s32 %v4817, %v4819
    %v4821 = vrot.slane %v4810, %v4820
    %v4823 = vunpack.c.l.s4 1983009808
    %v4824 = vunpack.c.0.s8 %v4823
    %v4825 = vlaneseq
    %v4826 = vshrl.u32 %v4825, 7
    %v4827 = vsub.s32 %v4824, %v4826
    %v4828 = vrot.slane %v4814, %v4827
    %v4829 = vcombine.high %v4821, %v4821
    %v4830 = vcombine.high %v4828, %v4828
    %v4831 = vcombine.high %v4811, %v4811
    %v4833 = vunpack.c.l.s4 1983009808
    %v4834 = vunpack.c.0.s8 %v4833
    %v4835 = vlaneseq
    %v4836 = vshrl.u32 %v4835, 7
    %v4837 = vsub.s32 %v4834, %v4836
    %v4838 = vrot.slane %v4811, %v4837
    %v4840 = vunpack.c.l.s4 1983009808
    %v4841 = vunpack.c.0.s8 %v4840
    %v4842 = vlaneseq
    %v4843 = vshrl.u32 %v4842, 7
    %v4844 = vsub.s32 %v4841, %v4843
    %v4845 = vrot.slane %v4831, %v4844
    %v4846 = vcombine.high %v4838, %v4838
    %v4847 = vcombine.high %v4845, %v4845
    %s4856 = scalar_lea.vmem %s10, 128
    %v4857 = vld [vmem:[%s4856] sm:$0xff]
    %v4858 = vld [vmem:[%s4856 + $0x8] sm:$0xff]
    %v4859 = vld [vmem:[%s4856 + $0x10] sm:$0xff]
    %v4860 = vld [vmem:[%s4856 + $0x18] sm:$0xff]
    %v4861 = vld [vmem:[%s4856 + $0x20] sm:$0xff]
    %v4862 = vld [vmem:[%s4856 + $0x28] sm:$0xff]
    %v4863 = vld [vmem:[%s4856 + $0x30] sm:$0xff]
    %v4864 = vld [vmem:[%s4856 + $0x38] sm:$0xff]
    %s4865 = scalar_lea.vmem %s12, 2
    %v4866 = vld [vmem:[%s4865] sm:$0x1]
    %v4868 = vlaneseq
    %v4869 = vshrl.u32 %v4868, 7
    %v4870 = vsub.s32 0, %v4869
    %v4871 = vrot.slane %v4866, %v4870
    %4873 = vmatprep.subr.mxu0 0.0
    %4874 = vmatpush1.msra.mxu0 %v4857
    %4875 = vmatprep.subr.mxu0 0.0
    %4876 = vmatpush1.msra.mxu0 %v4858
    %4877 = vmatprep.subr.mxu0 0.0
    %4878 = vmatpush1.msra.mxu0 %v4859
    %4879 = vmatprep.subr.mxu0 0.0
    %4880 = vmatpush1.msra.mxu0 %v4860
    %4881 = vmatprep.subr.mxu0 0.0
    %4882 = vmatpush1.msra.mxu0 %v4861
    %4883 = vmatprep.subr.mxu0 0.0
    %4884 = vmatpush1.msra.mxu0 %v4862
    %4885 = vmatprep.subr.mxu0 0.0
    %4886 = vmatpush1.msra.mxu0 %v4863
    %4887 = vmatprep.subr.mxu0 0.0
    %4888 = vmatpush1.msra.mxu0 %v4864
    %4889 = vmatprep.subr.mxu0 0.0
    %4890 = vmatpush1.msra.mxu0 0.0
    %4891 = vmatprep.subr.mxu0 0.0
    %4892 = vmatpush1.msra.mxu0 0.0
    %4893 = vmatprep.subr.mxu0 0.0
    %4894 = vmatpush1.msra.mxu0 0.0
    %4895 = vmatprep.subr.mxu0 0.0
    %4896 = vmatpush1.msra.mxu0 0.0
    %4897 = vmatprep.subr.mxu0 0.0
    %4898 = vmatpush1.msra.mxu0 0.0
    %4899 = vmatprep.subr.mxu0 0.0
    %4900 = vmatpush1.msra.mxu0 0.0
    %4901 = vmatprep.subr.mxu0 0.0
    %4902 = vmatpush1.msra.mxu0 0.0
    %4903 = vmatprep.subr.mxu0 0.0
    %4904 = vmatpush1.msra.mxu0 0.0
    %4905 = vmatprep.subr.mxu0 0.0
    %4906 = vmatpush1.msra.mxu0 0.0
    %4907 = vmatprep.subr.mxu0 0.0
    %4908 = vmatpush1.msra.mxu0 0.0
    %4909 = vmatprep.subr.mxu0 0.0
    %4910 = vmatpush1.msra.mxu0 0.0
    %4911 = vmatprep.subr.mxu0 0.0
    %4912 = vmatpush1.msra.mxu0 0.0
    %4913 = vmatprep.subr.mxu0 0.0
    %4914 = vmatpush1.msra.mxu0 0.0
    %4915 = vmatprep.subr.mxu0 0.0
    %4916 = vmatpush1.msra.mxu0 0.0
    %4917 = vmatprep.subr.mxu0 0.0
    %4918 = vmatpush1.msra.mxu0 0.0
    %4919 = vmatprep.subr.mxu0 0.0
    %4920 = vmatpush1.msra.mxu0 0.0
    %4921 = vmatprep.subr.mxu0 0.0
    %4922 = vmatpush1.msra.mxu0 0.0
    %4923 = vmatprep.subr.mxu0 0.0
    %4924 = vmatpush1.msra.mxu0 0.0
    %4925 = vmatprep.subr.mxu0 0.0
    %4926 = vmatpush1.msra.mxu0 0.0
    %4927 = vmatprep.subr.mxu0 0.0
    %4928 = vmatpush1.msra.mxu0 0.0
    %4929 = vmatprep.subr.mxu0 0.0
    %4930 = vmatpush1.msra.mxu0 0.0
    %4931 = vmatprep.subr.mxu0 0.0
    %4932 = vmatpush1.msra.mxu0 0.0
    %4933 = vmatprep.subr.mxu0 0.0
    %4934 = vmatpush1.msra.mxu0 0.0
    %4935 = vmatprep.subr.mxu0 0.0
    %4936 = vmatpush1.msra.mxu0 0.0
    %4937 = vmatprep.mubr.f32.mxu0 0.0
    %4938 = vmatmul.mubr.f32.gmra.mrb[0].mxu0 %v4577
    %v4939 = vpop.f32.mrb[0].mxu0
    %v4940 = vadd.f32 %v4871, %v4939
    %v4941 = vpop.f32.mrb[0].mxu0
    %4942 = vmatprep.mubr.f32.mxu0 0.0
    %4943 = vmatmul.mubr.f32.gmra.mrb[0].mxu0 %v4580
    %v4944 = vpop.f32.mrb[0].mxu0
    %v4945 = vadd.f32 %v4871, %v4944
    %v4946 = vpop.f32.mrb[0].mxu0
    %4947 = vdwg.mxu0
    %v4950 = vcombine.high %v4940, %v4940
    %v4952 = vunpack.c.l.s4 1983009808
    %v4953 = vunpack.c.0.s8 %v4952
    %v4954 = vlaneseq
    %v4955 = vshrl.u32 %v4954, 7
    %v4956 = vsub.s32 %v4953, %v4955
    %v4957 = vrot.slane %v4940, %v4956
    %v4959 = vunpack.c.l.s4 1983009808
    %v4960 = vunpack.c.0.s8 %v4959
    %v4961 = vlaneseq
    %v4962 = vshrl.u32 %v4961, 7
    %v4963 = vsub.s32 %v4960, %v4962
    %v4964 = vrot.slane %v4950, %v4963
    %v4965 = vcombine.high %v4957, %v4957
    %v4966 = vcombine.high %v4964, %v4964
    %v4967 = vcombine.high %v4945, %v4945
    %v4969 = vunpack.c.l.s4 1983009808
    %v4970 = vunpack.c.0.s8 %v4969
    %v4971 = vlaneseq
    %v4972 = vshrl.u32 %v4971, 7
    %v4973 = vsub.s32 %v4970, %v4972
    %v4974 = vrot.slane %v4945, %v4973
    %v4976 = vunpack.c.l.s4 1983009808
    %v4977 = vunpack.c.0.s8 %v4976
    %v4978 = vlaneseq
    %v4979 = vshrl.u32 %v4978, 7
    %v4980 = vsub.s32 %v4977, %v4979
    %v4981 = vrot.slane %v4967, %v4980
    %v4982 = vcombine.high %v4974, %v4974
    %v4983 = vcombine.high %v4981, %v4981
    %v4992 = vxor.u32 %v4675, 2147483648
    %v4993 = vmul.f32 %v4992, 1.442695
    %v4994 = vpow.pop %v4993
    %v4995 = vadd.f32 %v4994, 1.0
    %v4996 = vrcp.pop %v4995
    %v4997 = vmul.f32 1.0, %v4996
    %v4998 = vxor.u32 %v4821, 2147483648
    %v4999 = vmul.f32 %v4998, 1.442695
    %v5000 = vpow.pop %v4999
    %v5001 = vadd.f32 %v5000, 1.0
    %v5002 = vrcp.pop %v5001
    %v5003 = vmul.f32 1.0, %v5002
    %s5004 = scalar_lea.vmem %s13, 2
    %v5005 = vld [vmem:[%s5004] sm:$0x1]
    %v5007 = vlaneseq
    %v5008 = vshrl.u32 %v5007, 7
    %v5009 = vsub.s32 0, %v5008
    %v5010 = vrot.slane %v5005, %v5009
    %v5012 = vmul.f32 %v4997, %v5010
    %v5013 = vadd.f32 %v4957, %v5012
    %v5014 = vtanh.pop %v5013
    %v5015 = vsub.f32 1.0, %v5003
    %v5016 = vmul.f32 %v5015, %v5014
    %v5017 = vld [vmem:[%s11] sm:$0xff]
    %v5018 = vld [vmem:[%s11 + $0x8] sm:$0xff]
    %v5019 = vld [vmem:[%s11 + $0x10] sm:$0xff]
    %v5020 = vld [vmem:[%s11 + $0x18] sm:$0xff]
    %v5022 = vsel %vm1146, %v5016, 0
    %5024 = vmatprep.subr.mxu0 0.0
    %5025 = vmatpush1.msra.mxu0 %v5017
    %5026 = vmatprep.subr.mxu0 0.0
    %5027 = vmatpush1.msra.mxu0 %v5018
    %5028 = vmatprep.subr.mxu0 0.0
    %5029 = vmatpush1.msra.mxu0 %v5019
    %5030 = vmatprep.subr.mxu0 0.0
    %5031 = vmatpush1.msra.mxu0 %v5020
    %5032 = vmatprep.subr.mxu0 0.0
    %5033 = vmatpush1.msra.mxu0 0.0
    %5034 = vmatprep.subr.mxu0 0.0
    %5035 = vmatpush1.msra.mxu0 0.0
    %5036 = vmatprep.subr.mxu0 0.0
    %5037 = vmatpush1.msra.mxu0 0.0
    %5038 = vmatprep.subr.mxu0 0.0
    %5039 = vmatpush1.msra.mxu0 0.0
    %5040 = vmatprep.subr.mxu0 0.0
    %5041 = vmatpush1.msra.mxu0 0.0
    %5042 = vmatprep.subr.mxu0 0.0
    %5043 = vmatpush1.msra.mxu0 0.0
    %5044 = vmatprep.subr.mxu0 0.0
    %5045 = vmatpush1.msra.mxu0 0.0
    %5046 = vmatprep.subr.mxu0 0.0
    %5047 = vmatpush1.msra.mxu0 0.0
    %5048 = vmatprep.subr.mxu0 0.0
    %5049 = vmatpush1.msra.mxu0 0.0
    %5050 = vmatprep.subr.mxu0 0.0
    %5051 = vmatpush1.msra.mxu0 0.0
    %5052 = vmatprep.subr.mxu0 0.0
    %5053 = vmatpush1.msra.mxu0 0.0
    %5054 = vmatprep.subr.mxu0 0.0
    %5055 = vmatpush1.msra.mxu0 0.0
    %5056 = vmatprep.subr.mxu0 0.0
    %5057 = vmatpush1.msra.mxu0 0.0
    %5058 = vmatprep.subr.mxu0 0.0
    %5059 = vmatpush1.msra.mxu0 0.0
    %5060 = vmatprep.subr.mxu0 0.0
    %5061 = vmatpush1.msra.mxu0 0.0
    %5062 = vmatprep.subr.mxu0 0.0
    %5063 = vmatpush1.msra.mxu0 0.0
    %5064 = vmatprep.subr.mxu0 0.0
    %5065 = vmatpush1.msra.mxu0 0.0
    %5066 = vmatprep.subr.mxu0 0.0
    %5067 = vmatpush1.msra.mxu0 0.0
    %5068 = vmatprep.subr.mxu0 0.0
    %5069 = vmatpush1.msra.mxu0 0.0
    %5070 = vmatprep.subr.mxu0 0.0
    %5071 = vmatpush1.msra.mxu0 0.0
    %5072 = vmatprep.subr.mxu0 0.0
    %5073 = vmatpush1.msra.mxu0 0.0
    %5074 = vmatprep.subr.mxu0 0.0
    %5075 = vmatpush1.msra.mxu0 0.0
    %5076 = vmatprep.subr.mxu0 0.0
    %5077 = vmatpush1.msra.mxu0 0.0
    %5078 = vmatprep.subr.mxu0 0.0
    %5079 = vmatpush1.msra.mxu0 0.0
    %5080 = vmatprep.subr.mxu0 0.0
    %5081 = vmatpush1.msra.mxu0 0.0
    %5082 = vmatprep.subr.mxu0 0.0
    %5083 = vmatpush1.msra.mxu0 0.0
    %5084 = vmatprep.subr.mxu0 0.0
    %5085 = vmatpush1.msra.mxu0 0.0
    %5086 = vmatprep.subr.mxu0 0.0
    %5087 = vmatpush1.msra.mxu0 0.0
    %5088 = vmatprep.mubr.f32.mxu0 0.0
    %5089 = vmatmul.mubr.f32.gmra.mrb[0].mxu0 %v5022
    %v5090 = vpop.f32.mrb[0].mxu0
    %v5091 = vadd.f32 0.0, %v5090
    %v5092 = vpop.f32.mrb[0].mxu0
    %5093 = vdwg.mxu0
    %s5094 = scalar_lea.vmem %s11, 32
    %v5095 = vld [vmem:[%s5094] sm:$0xff]
    %v5096 = vld [vmem:[%s5094 + $0x8] sm:$0xff]
    %v5097 = vld [vmem:[%s5094 + $0x10] sm:$0xff]
    %v5098 = vld [vmem:[%s5094 + $0x18] sm:$0xff]
    %5099 = vmatprep.subr.mxu0 0.0
    %5100 = vmatpush1.msra.mxu0 %v5095
    %5101 = vmatprep.subr.mxu0 0.0
    %5102 = vmatpush1.msra.mxu0 %v5096
    %5103 = vmatprep.subr.mxu0 0.0
    %5104 = vmatpush1.msra.mxu0 %v5097
    %5105 = vmatprep.subr.mxu0 0.0
    %5106 = vmatpush1.msra.mxu0 %v5098
    %5107 = vmatprep.subr.mxu0 0.0
    %5108 = vmatpush1.msra.mxu0 0.0
    %5109 = vmatprep.subr.mxu0 0.0
    %5110 = vmatpush1.msra.mxu0 0.0
    %5111 = vmatprep.subr.mxu0 0.0
    %5112 = vmatpush1.msra.mxu0 0.0
    %5113 = vmatprep.subr.mxu0 0.0
    %5114 = vmatpush1.msra.mxu0 0.0
    %5115 = vmatprep.subr.mxu0 0.0
    %5116 = vmatpush1.msra.mxu0 0.0
    %5117 = vmatprep.subr.mxu0 0.0
    %5118 = vmatpush1.msra.mxu0 0.0
    %5119 = vmatprep.subr.mxu0 0.0
    %5120 = vmatpush1.msra.mxu0 0.0
    %5121 = vmatprep.subr.mxu0 0.0
    %5122 = vmatpush1.msra.mxu0 0.0
    %5123 = vmatprep.subr.mxu0 0.0
    %5124 = vmatpush1.msra.mxu0 0.0
    %5125 = vmatprep.subr.mxu0 0.0
    %5126 = vmatpush1.msra.mxu0 0.0
    %5127 = vmatprep.subr.mxu0 0.0
    %5128 = vmatpush1.msra.mxu0 0.0
    %5129 = vmatprep.subr.mxu0 0.0
    %5130 = vmatpush1.msra.mxu0 0.0
    %5131 = vmatprep.subr.mxu0 0.0
    %5132 = vmatpush1.msra.mxu0 0.0
    %5133 = vmatprep.subr.mxu0 0.0
    %5134 = vmatpush1.msra.mxu0 0.0
    %5135 = vmatprep.subr.mxu0 0.0
    %5136 = vmatpush1.msra.mxu0 0.0
    %5137 = vmatprep.subr.mxu0 0.0
    %5138 = vmatpush1.msra.mxu0 0.0
    %5139 = vmatprep.subr.mxu0 0.0
    %5140 = vmatpush1.msra.mxu0 0.0
    %5141 = vmatprep.subr.mxu0 0.0
    %5142 = vmatpush1.msra.mxu0 0.0
    %5143 = vmatprep.subr.mxu0 0.0
    %5144 = vmatpush1.msra.mxu0 0.0
    %5145 = vmatprep.subr.mxu0 0.0
    %5146 = vmatpush1.msra.mxu0 0.0
    %5147 = vmatprep.subr.mxu0 0.0
    %5148 = vmatpush1.msra.mxu0 0.0
    %5149 = vmatprep.subr.mxu0 0.0
    %5150 = vmatpush1.msra.mxu0 0.0
    %5151 = vmatprep.subr.mxu0 0.0
    %5152 = vmatpush1.msra.mxu0 0.0
    %5153 = vmatprep.subr.mxu0 0.0
    %5154 = vmatpush1.msra.mxu0 0.0
    %5155 = vmatprep.subr.mxu0 0.0
    %5156 = vmatpush1.msra.mxu0 0.0
    %5157 = vmatprep.subr.mxu0 0.0
    %5158 = vmatpush1.msra.mxu0 0.0
    %5159 = vmatprep.subr.mxu0 0.0
    %5160 = vmatpush1.msra.mxu0 0.0
    %5161 = vmatprep.subr.mxu0 0.0
    %5162 = vmatpush1.msra.mxu0 0.0
    %5163 = vmatprep.mubr.f32.mxu0 0.0
    %5164 = vmatmul.mubr.f32.gmra.mrb[0].mxu0 %v5022
    %v5165 = vpop.f32.mrb[0].mxu0
    %v5166 = vadd.f32 0.0, %v5165
    %v5167 = vpop.f32.mrb[0].mxu0
    %5168 = vdwg.mxu0
    %s5169 = scalar_lea.vmem %s11, 64
    %v5170 = vld [vmem:[%s5169] sm:$0xff]
    %v5171 = vld [vmem:[%s5169 + $0x8] sm:$0xff]
    %v5172 = vld [vmem:[%s5169 + $0x10] sm:$0xff]
    %v5173 = vld [vmem:[%s5169 + $0x18] sm:$0xff]
    %5174 = vmatprep.subr.mxu0 0.0
    %5175 = vmatpush1.msra.mxu0 %v5170
    %5176 = vmatprep.subr.mxu0 0.0
    %5177 = vmatpush1.msra.mxu0 %v5171
    %5178 = vmatprep.subr.mxu0 0.0
    %5179 = vmatpush1.msra.mxu0 %v5172
    %5180 = vmatprep.subr.mxu0 0.0
    %5181 = vmatpush1.msra.mxu0 %v5173
    %5182 = vmatprep.subr.mxu0 0.0
    %5183 = vmatpush1.msra.mxu0 0.0
    %5184 = vmatprep.subr.mxu0 0.0
    %5185 = vmatpush1.msra.mxu0 0.0
    %5186 = vmatprep.subr.mxu0 0.0
    %5187 = vmatpush1.msra.mxu0 0.0
    %5188 = vmatprep.subr.mxu0 0.0
    %5189 = vmatpush1.msra.mxu0 0.0
    %5190 = vmatprep.subr.mxu0 0.0
    %5191 = vmatpush1.msra.mxu0 0.0
    %5192 = vmatprep.subr.mxu0 0.0
    %5193 = vmatpush1.msra.mxu0 0.0
    %5194 = vmatprep.subr.mxu0 0.0
    %5195 = vmatpush1.msra.mxu0 0.0
    %5196 = vmatprep.subr.mxu0 0.0
    %5197 = vmatpush1.msra.mxu0 0.0
    %5198 = vmatprep.subr.mxu0 0.0
    %5199 = vmatpush1.msra.mxu0 0.0
    %5200 = vmatprep.subr.mxu0 0.0
    %5201 = vmatpush1.msra.mxu0 0.0
    %5202 = vmatprep.subr.mxu0 0.0
    %5203 = vmatpush1.msra.mxu0 0.0
    %5204 = vmatprep.subr.mxu0 0.0
    %5205 = vmatpush1.msra.mxu0 0.0
    %5206 = vmatprep.subr.mxu0 0.0
    %5207 = vmatpush1.msra.mxu0 0.0
    %5208 = vmatprep.subr.mxu0 0.0
    %5209 = vmatpush1.msra.mxu0 0.0
    %5210 = vmatprep.subr.mxu0 0.0
    %5211 = vmatpush1.msra.mxu0 0.0
    %5212 = vmatprep.subr.mxu0 0.0
    %5213 = vmatpush1.msra.mxu0 0.0
    %5214 = vmatprep.subr.mxu0 0.0
    %5215 = vmatpush1.msra.mxu0 0.0
    %5216 = vmatprep.subr.mxu0 0.0
    %5217 = vmatpush1.msra.mxu0 0.0
    %5218 = vmatprep.subr.mxu0 0.0
    %5219 = vmatpush1.msra.mxu0 0.0
    %5220 = vmatprep.subr.mxu0 0.0
    %5221 = vmatpush1.msra.mxu0 0.0
    %5222 = vmatprep.subr.mxu0 0.0
    %5223 = vmatpush1.msra.mxu0 0.0
    %5224 = vmatprep.subr.mxu0 0.0
    %5225 = vmatpush1.msra.mxu0 0.0
    %5226 = vmatprep.subr.mxu0 0.0
    %5227 = vmatpush1.msra.mxu0 0.0
    %5228 = vmatprep.subr.mxu0 0.0
    %5229 = vmatpush1.msra.mxu0 0.0
    %5230 = vmatprep.subr.mxu0 0.0
    %5231 = vmatpush1.msra.mxu0 0.0
    %5232 = vmatprep.subr.mxu0 0.0
    %5233 = vmatpush1.msra.mxu0 0.0
    %5234 = vmatprep.subr.mxu0 0.0
    %5235 = vmatpush1.msra.mxu0 0.0
    %5236 = vmatprep.subr.mxu0 0.0
    %5237 = vmatpush1.msra.mxu0 0.0
    %5238 = vmatprep.mubr.f32.mxu0 0.0
    %5239 = vmatmul.mubr.f32.gmra.mrb[0].mxu0 %v5022
    %v5240 = vpop.f32.mrb[0].mxu0
    %v5241 = vadd.f32 %v5010, %v5240
    %v5242 = vpop.f32.mrb[0].mxu0
    %5243 = vdwg.mxu0
    %v5244 = vadd.f32 %v4683, %v5091
    %v5245 = vxor.u32 %v5244, 2147483648
    %v5246 = vmul.f32 %v5245, 1.442695
    %v5247 = vpow.pop %v5246
    %v5248 = vadd.f32 %v5247, 1.0
    %v5249 = vrcp.pop %v5248
    %v5250 = vmul.f32 1.0, %v5249
    %v5251 = vadd.f32 %v4829, %v5166
    %v5252 = vxor.u32 %v5251, 2147483648
    %v5253 = vmul.f32 %v5252, 1.442695
    %v5254 = vpow.pop %v5253
    %v5255 = vadd.f32 %v5254, 1.0
    %v5256 = vrcp.pop %v5255
    %v5257 = vmul.f32 1.0, %v5256
    %v5258 = vmul.f32 %v5250, %v5241
    %v5259 = vadd.f32 %v4965, %v5258
    %v5260 = vtanh.pop %v5259
    %v5261 = vsub.f32 1.0, %v5257
    %v5262 = vmul.f32 %v5261, %v5260
    %v5263 = vmul.f32 %v5257, %v5016
    %v5264 = vadd.f32 %v5262, %v5263
    %v5266 = vsel %vm1146, %v5264, 0
    %5268 = vmatprep.subr.mxu0 0.0
    %5269 = vmatpush1.msra.mxu0 %v5017
    %5270 = vmatprep.subr.mxu0 0.0
    %5271 = vmatpush1.msra.mxu0 %v5018
    %5272 = vmatprep.subr.mxu0 0.0
    %5273 = vmatpush1.msra.mxu0 %v5019
    %5274 = vmatprep.subr.mxu0 0.0
    %5275 = vmatpush1.msra.mxu0 %v5020
    %5276 = vmatprep.subr.mxu0 0.0
    %5277 = vmatpush1.msra.mxu0 0.0
    %5278 = vmatprep.subr.mxu0 0.0
    %5279 = vmatpush1.msra.mxu0 0.0
    %5280 = vmatprep.subr.mxu0 0.0
    %5281 = vmatpush1.msra.mxu0 0.0
    %5282 = vmatprep.subr.mxu0 0.0
    %5283 = vmatpush1.msra.mxu0 0.0
    %5284 = vmatprep.subr.mxu0 0.0
    %5285 = vmatpush1.msra.mxu0 0.0
    %5286 = vmatprep.subr.mxu0 0.0
    %5287 = vmatpush1.msra.mxu0 0.0
    %5288 = vmatprep.subr.mxu0 0.0
    %5289 = vmatpush1.msra.mxu0 0.0
    %5290 = vmatprep.subr.mxu0 0.0
    %5291 = vmatpush1.msra.mxu0 0.0
    %5292 = vmatprep.subr.mxu0 0.0
    %5293 = vmatpush1.msra.mxu0 0.0
    %5294 = vmatprep.subr.mxu0 0.0
    %5295 = vmatpush1.msra.mxu0 0.0
    %5296 = vmatprep.subr.mxu0 0.0
    %5297 = vmatpush1.msra.mxu0 0.0
    %5298 = vmatprep.subr.mxu0 0.0
    %5299 = vmatpush1.msra.mxu0 0.0
    %5300 = vmatprep.subr.mxu0 0.0
    %5301 = vmatpush1.msra.mxu0 0.0
    %5302 = vmatprep.subr.mxu0 0.0
    %5303 = vmatpush1.msra.mxu0 0.0
    %5304 = vmatprep.subr.mxu0 0.0
    %5305 = vmatpush1.msra.mxu0 0.0
    %5306 = vmatprep.subr.mxu0 0.0
    %5307 = vmatpush1.msra.mxu0 0.0
    %5308 = vmatprep.subr.mxu0 0.0
    %5309 = vmatpush1.msra.mxu0 0.0
    %5310 = vmatprep.subr.mxu0 0.0
    %5311 = vmatpush1.msra.mxu0 0.0
    %5312 = vmatprep.subr.mxu0 0.0
    %5313 = vmatpush1.msra.mxu0 0.0
    %5314 = vmatprep.subr.mxu0 0.0
    %5315 = vmatpush1.msra.mxu0 0.0
    %5316 = vmatprep.subr.mxu0 0.0
    %5317 = vmatpush1.msra.mxu0 0.0
    %5318 = vmatprep.subr.mxu0 0.0
    %5319 = vmatpush1.msra.mxu0 0.0
    %5320 = vmatprep.subr.mxu0 0.0
    %5321 = vmatpush1.msra.mxu0 0.0
    %5322 = vmatprep.subr.mxu0 0.0
    %5323 = vmatpush1.msra.mxu0 0.0
    %5324 = vmatprep.subr.mxu0 0.0
    %5325 = vmatpush1.msra.mxu0 0.0
    %5326 = vmatprep.subr.mxu0 0.0
    %5327 = vmatpush1.msra.mxu0 0.0
    %5328 = vmatprep.subr.mxu0 0.0
    %5329 = vmatpush1.msra.mxu0 0.0
    %5330 = vmatprep.subr.mxu0 0.0
    %5331 = vmatpush1.msra.mxu0 0.0
    %5332 = vmatprep.mubr.f32.mxu0 0.0
    %5333 = vmatmul.mubr.f32.gmra.mrb[0].mxu0 %v5266
    %v5334 = vpop.f32.mrb[0].mxu0
    %v5335 = vadd.f32 0.0, %v5334
    %v5336 = vpop.f32.mrb[0].mxu0
    %5337 = vdwg.mxu0
    %5338 = vmatprep.subr.mxu0 0.0
    %5339 = vmatpush1.msra.mxu0 %v5095
    %5340 = vmatprep.subr.mxu0 0.0
    %5341 = vmatpush1.msra.mxu0 %v5096
    %5342 = vmatprep.subr.mxu0 0.0
    %5343 = vmatpush1.msra.mxu0 %v5097
    %5344 = vmatprep.subr.mxu0 0.0
    %5345 = vmatpush1.msra.mxu0 %v5098
    %5346 = vmatprep.subr.mxu0 0.0
    %5347 = vmatpush1.msra.mxu0 0.0
    %5348 = vmatprep.subr.mxu0 0.0
    %5349 = vmatpush1.msra.mxu0 0.0
    %5350 = vmatprep.subr.mxu0 0.0
    %5351 = vmatpush1.msra.mxu0 0.0
    %5352 = vmatprep.subr.mxu0 0.0
    %5353 = vmatpush1.msra.mxu0 0.0
    %5354 = vmatprep.subr.mxu0 0.0
    %5355 = vmatpush1.msra.mxu0 0.0
    %5356 = vmatprep.subr.mxu0 0.0
    %5357 = vmatpush1.msra.mxu0 0.0
    %5358 = vmatprep.subr.mxu0 0.0
    %5359 = vmatpush1.msra.mxu0 0.0
    %5360 = vmatprep.subr.mxu0 0.0
    %5361 = vmatpush1.msra.mxu0 0.0
    %5362 = vmatprep.subr.mxu0 0.0
    %5363 = vmatpush1.msra.mxu0 0.0
    %5364 = vmatprep.subr.mxu0 0.0
    %5365 = vmatpush1.msra.mxu0 0.0
    %5366 = vmatprep.subr.mxu0 0.0
    %5367 = vmatpush1.msra.mxu0 0.0
    %5368 = vmatprep.subr.mxu0 0.0
    %5369 = vmatpush1.msra.mxu0 0.0
    %5370 = vmatprep.subr.mxu0 0.0
    %5371 = vmatpush1.msra.mxu0 0.0
    %5372 = vmatprep.subr.mxu0 0.0
    %5373 = vmatpush1.msra.mxu0 0.0
    %5374 = vmatprep.subr.mxu0 0.0
    %5375 = vmatpush1.msra.mxu0 0.0
    %5376 = vmatprep.subr.mxu0 0.0
    %5377 = vmatpush1.msra.mxu0 0.0
    %5378 = vmatprep.subr.mxu0 0.0
    %5379 = vmatpush1.msra.mxu0 0.0
    %5380 = vmatprep.subr.mxu0 0.0
    %5381 = vmatpush1.msra.mxu0 0.0
    %5382 = vmatprep.subr.mxu0 0.0
    %5383 = vmatpush1.msra.mxu0 0.0
    %5384 = vmatprep.subr.mxu0 0.0
    %5385 = vmatpush1.msra.mxu0 0.0
    %5386 = vmatprep.subr.mxu0 0.0
    %5387 = vmatpush1.msra.mxu0 0.0
    %5388 = vmatprep.subr.mxu0 0.0
    %5389 = vmatpush1.msra.mxu0 0.0
    %5390 = vmatprep.subr.mxu0 0.0
    %5391 = vmatpush1.msra.mxu0 0.0
    %5392 = vmatprep.subr.mxu0 0.0
    %5393 = vmatpush1.msra.mxu0 0.0
    %5394 = vmatprep.subr.mxu0 0.0
    %5395 = vmatpush1.msra.mxu0 0.0
    %5396 = vmatprep.subr.mxu0 0.0
    %5397 = vmatpush1.msra.mxu0 0.0
    %5398 = vmatprep.subr.mxu0 0.0
    %5399 = vmatpush1.msra.mxu0 0.0
    %5400 = vmatprep.subr.mxu0 0.0
    %5401 = vmatpush1.msra.mxu0 0.0
    %5402 = vmatprep.mubr.f32.mxu0 0.0
    %5403 = vmatmul.mubr.f32.gmra.mrb[0].mxu0 %v5266
    %v5404 = vpop.f32.mrb[0].mxu0
    %v5405 = vadd.f32 0.0, %v5404
    %v5406 = vpop.f32.mrb[0].mxu0
    %5407 = vdwg.mxu0
    %5408 = vmatprep.subr.mxu0 0.0
    %5409 = vmatpush1.msra.mxu0 %v5170
    %5410 = vmatprep.subr.mxu0 0.0
    %5411 = vmatpush1.msra.mxu0 %v5171
    %5412 = vmatprep.subr.mxu0 0.0
    %5413 = vmatpush1.msra.mxu0 %v5172
    %5414 = vmatprep.subr.mxu0 0.0
    %5415 = vmatpush1.msra.mxu0 %v5173
    %5416 = vmatprep.subr.mxu0 0.0
    %5417 = vmatpush1.msra.mxu0 0.0
    %5418 = vmatprep.subr.mxu0 0.0
    %5419 = vmatpush1.msra.mxu0 0.0
    %5420 = vmatprep.subr.mxu0 0.0
    %5421 = vmatpush1.msra.mxu0 0.0
    %5422 = vmatprep.subr.mxu0 0.0
    %5423 = vmatpush1.msra.mxu0 0.0
    %5424 = vmatprep.subr.mxu0 0.0
    %5425 = vmatpush1.msra.mxu0 0.0
    %5426 = vmatprep.subr.mxu0 0.0
    %5427 = vmatpush1.msra.mxu0 0.0
    %5428 = vmatprep.subr.mxu0 0.0
    %5429 = vmatpush1.msra.mxu0 0.0
    %5430 = vmatprep.subr.mxu0 0.0
    %5431 = vmatpush1.msra.mxu0 0.0
    %5432 = vmatprep.subr.mxu0 0.0
    %5433 = vmatpush1.msra.mxu0 0.0
    %5434 = vmatprep.subr.mxu0 0.0
    %5435 = vmatpush1.msra.mxu0 0.0
    %5436 = vmatprep.subr.mxu0 0.0
    %5437 = vmatpush1.msra.mxu0 0.0
    %5438 = vmatprep.subr.mxu0 0.0
    %5439 = vmatpush1.msra.mxu0 0.0
    %5440 = vmatprep.subr.mxu0 0.0
    %5441 = vmatpush1.msra.mxu0 0.0
    %5442 = vmatprep.subr.mxu0 0.0
    %5443 = vmatpush1.msra.mxu0 0.0
    %5444 = vmatprep.subr.mxu0 0.0
    %5445 = vmatpush1.msra.mxu0 0.0
    %5446 = vmatprep.subr.mxu0 0.0
    %5447 = vmatpush1.msra.mxu0 0.0
    %5448 = vmatprep.subr.mxu0 0.0
    %5449 = vmatpush1.msra.mxu0 0.0
    %5450 = vmatprep.subr.mxu0 0.0
    %5451 = vmatpush1.msra.mxu0 0.0
    %5452 = vmatprep.subr.mxu0 0.0
    %5453 = vmatpush1.msra.mxu0 0.0
    %5454 = vmatprep.subr.mxu0 0.0
    %5455 = vmatpush1.msra.mxu0 0.0
    %5456 = vmatprep.subr.mxu0 0.0
    %5457 = vmatpush1.msra.mxu0 0.0
    %5458 = vmatprep.subr.mxu0 0.0
    %5459 = vmatpush1.msra.mxu0 0.0
    %5460 = vmatprep.subr.mxu0 0.0
    %5461 = vmatpush1.msra.mxu0 0.0
    %5462 = vmatprep.subr.mxu0 0.0
    %5463 = vmatpush1.msra.mxu0 0.0
    %5464 = vmatprep.subr.mxu0 0.0
    %5465 = vmatpush1.msra.mxu0 0.0
    %5466 = vmatprep.subr.mxu0 0.0
    %5467 = vmatpush1.msra.mxu0 0.0
    %5468 = vmatprep.subr.mxu0 0.0
    %5469 = vmatpush1.msra.mxu0 0.0
    %5470 = vmatprep.subr.mxu0 0.0
    %5471 = vmatpush1.msra.mxu0 0.0
    %5472 = vmatprep.mubr.f32.mxu0 0.0
    %5473 = vmatmul.mubr.f32.gmra.mrb[0].mxu0 %v5266
    %v5474 = vpop.f32.mrb[0].mxu0
    %v5475 = vadd.f32 %v5010, %v5474
    %v5476 = vpop.f32.mrb[0].mxu0
    %5477 = vdwg.mxu0
    %v5478 = vadd.f32 %v4682, %v5335
    %v5479 = vxor.u32 %v5478, 2147483648
    %v5480 = vmul.f32 %v5479, 1.442695
    %v5481 = vpow.pop %v5480
    %v5482 = vadd.f32 %v5481, 1.0
    %v5483 = vrcp.pop %v5482
    %v5484 = vmul.f32 1.0, %v5483
    %v5485 = vadd.f32 %v4828, %v5405
    %v5486 = vxor.u32 %v5485, 2147483648
    %v5487 = vmul.f32 %v5486, 1.442695
    %v5488 = vpow.pop %v5487
    %v5489 = vadd.f32 %v5488, 1.0
    %v5490 = vrcp.pop %v5489
    %v5491 = vmul.f32 1.0, %v5490
    %v5492 = vmul.f32 %v5484, %v5475
    %v5493 = vadd.f32 %v4964, %v5492
    %v5494 = vtanh.pop %v5493
    %v5495 = vsub.f32 1.0, %v5491
    %v5496 = vmul.f32 %v5495, %v5494
    %v5497 = vmul.f32 %v5491, %v5264
    %v5498 = vadd.f32 %v5496, %v5497
    %v5500 = vsel %vm1146, %v5498, 0
    %5502 = vmatprep.subr.mxu0 0.0
    %5503 = vmatpush1.msra.mxu0 %v5017
    %5504 = vmatprep.subr.mxu0 0.0
    %5505 = vmatpush1.msra.mxu0 %v5018
    %5506 = vmatprep.subr.mxu0 0.0
    %5507 = vmatpush1.msra.mxu0 %v5019
    %5508 = vmatprep.subr.mxu0 0.0
    %5509 = vmatpush1.msra.mxu0 %v5020
    %5510 = vmatprep.subr.mxu0 0.0
    %5511 = vmatpush1.msra.mxu0 0.0
    %5512 = vmatprep.subr.mxu0 0.0
    %5513 = vmatpush1.msra.mxu0 0.0
    %5514 = vmatprep.subr.mxu0 0.0
    %5515 = vmatpush1.msra.mxu0 0.0
    %5516 = vmatprep.subr.mxu0 0.0
    %5517 = vmatpush1.msra.mxu0 0.0
    %5518 = vmatprep.subr.mxu0 0.0
    %5519 = vmatpush1.msra.mxu0 0.0
    %5520 = vmatprep.subr.mxu0 0.0
    %5521 = vmatpush1.msra.mxu0 0.0
    %5522 = vmatprep.subr.mxu0 0.0
    %5523 = vmatpush1.msra.mxu0 0.0
    %5524 = vmatprep.subr.mxu0 0.0
    %5525 = vmatpush1.msra.mxu0 0.0
    %5526 = vmatprep.subr.mxu0 0.0
    %5527 = vmatpush1.msra.mxu0 0.0
    %5528 = vmatprep.subr.mxu0 0.0
    %5529 = vmatpush1.msra.mxu0 0.0
    %5530 = vmatprep.subr.mxu0 0.0
    %5531 = vmatpush1.msra.mxu0 0.0
    %5532 = vmatprep.subr.mxu0 0.0
    %5533 = vmatpush1.msra.mxu0 0.0
    %5534 = vmatprep.subr.mxu0 0.0
    %5535 = vmatpush1.msra.mxu0 0.0
    %5536 = vmatprep.subr.mxu0 0.0
    %5537 = vmatpush1.msra.mxu0 0.0
    %5538 = vmatprep.subr.mxu0 0.0
    %5539 = vmatpush1.msra.mxu0 0.0
    %5540 = vmatprep.subr.mxu0 0.0
    %5541 = vmatpush1.msra.mxu0 0.0
    %5542 = vmatprep.subr.mxu0 0.0
    %5543 = vmatpush1.msra.mxu0 0.0
    %5544 = vmatprep.subr.mxu0 0.0
    %5545 = vmatpush1.msra.mxu0 0.0
    %5546 = vmatprep.subr.mxu0 0.0
    %5547 = vmatpush1.msra.mxu0 0.0
    %5548 = vmatprep.subr.mxu0 0.0
    %5549 = vmatpush1.msra.mxu0 0.0
    %5550 = vmatprep.subr.mxu0 0.0
    %5551 = vmatpush1.msra.mxu0 0.0
    %5552 = vmatprep.subr.mxu0 0.0
    %5553 = vmatpush1.msra.mxu0 0.0
    %5554 = vmatprep.subr.mxu0 0.0
    %5555 = vmatpush1.msra.mxu0 0.0
    %5556 = vmatprep.subr.mxu0 0.0
    %5557 = vmatpush1.msra.mxu0 0.0
    %5558 = vmatprep.subr.mxu0 0.0
    %5559 = vmatpush1.msra.mxu0 0.0
    %5560 = vmatprep.subr.mxu0 0.0
    %5561 = vmatpush1.msra.mxu0 0.0
    %5562 = vmatprep.subr.mxu0 0.0
    %5563 = vmatpush1.msra.mxu0 0.0
    %5564 = vmatprep.subr.mxu0 0.0
    %5565 = vmatpush1.msra.mxu0 0.0
    %5566 = vmatprep.mubr.f32.mxu0 0.0
    %5567 = vmatmul.mubr.f32.gmra.mrb[0].mxu0 %v5500
    %v5568 = vpop.f32.mrb[0].mxu0
    %v5569 = vadd.f32 0.0, %v5568
    %v5570 = vpop.f32.mrb[0].mxu0
    %5571 = vdwg.mxu0
    %5572 = vmatprep.subr.mxu0 0.0
    %5573 = vmatpush1.msra.mxu0 %v5095
    %5574 = vmatprep.subr.mxu0 0.0
    %5575 = vmatpush1.msra.mxu0 %v5096
    %5576 = vmatprep.subr.mxu0 0.0
    %5577 = vmatpush1.msra.mxu0 %v5097
    %5578 = vmatprep.subr.mxu0 0.0
    %5579 = vmatpush1.msra.mxu0 %v5098
    %5580 = vmatprep.subr.mxu0 0.0
    %5581 = vmatpush1.msra.mxu0 0.0
    %5582 = vmatprep.subr.mxu0 0.0
    %5583 = vmatpush1.msra.mxu0 0.0
    %5584 = vmatprep.subr.mxu0 0.0
    %5585 = vmatpush1.msra.mxu0 0.0
    %5586 = vmatprep.subr.mxu0 0.0
    %5587 = vmatpush1.msra.mxu0 0.0
    %5588 = vmatprep.subr.mxu0 0.0
    %5589 = vmatpush1.msra.mxu0 0.0
    %5590 = vmatprep.subr.mxu0 0.0
    %5591 = vmatpush1.msra.mxu0 0.0
    %5592 = vmatprep.subr.mxu0 0.0
    %5593 = vmatpush1.msra.mxu0 0.0
    %5594 = vmatprep.subr.mxu0 0.0
    %5595 = vmatpush1.msra.mxu0 0.0
    %5596 = vmatprep.subr.mxu0 0.0
    %5597 = vmatpush1.msra.mxu0 0.0
    %5598 = vmatprep.subr.mxu0 0.0
    %5599 = vmatpush1.msra.mxu0 0.0
    %5600 = vmatprep.subr.mxu0 0.0
    %5601 = vmatpush1.msra.mxu0 0.0
    %5602 = vmatprep.subr.mxu0 0.0
    %5603 = vmatpush1.msra.mxu0 0.0
    %5604 = vmatprep.subr.mxu0 0.0
    %5605 = vmatpush1.msra.mxu0 0.0
    %5606 = vmatprep.subr.mxu0 0.0
    %5607 = vmatpush1.msra.mxu0 0.0
    %5608 = vmatprep.subr.mxu0 0.0
    %5609 = vmatpush1.msra.mxu0 0.0
    %5610 = vmatprep.subr.mxu0 0.0
    %5611 = vmatpush1.msra.mxu0 0.0
    %5612 = vmatprep.subr.mxu0 0.0
    %5613 = vmatpush1.msra.mxu0 0.0
    %5614 = vmatprep.subr.mxu0 0.0
    %5615 = vmatpush1.msra.mxu0 0.0
    %5616 = vmatprep.subr.mxu0 0.0
    %5617 = vmatpush1.msra.mxu0 0.0
    %5618 = vmatprep.subr.mxu0 0.0
    %5619 = vmatpush1.msra.mxu0 0.0
    %5620 = vmatprep.subr.mxu0 0.0
    %5621 = vmatpush1.msra.mxu0 0.0
    %5622 = vmatprep.subr.mxu0 0.0
    %5623 = vmatpush1.msra.mxu0 0.0
    %5624 = vmatprep.subr.mxu0 0.0
    %5625 = vmatpush1.msra.mxu0 0.0
    %5626 = vmatprep.subr.mxu0 0.0
    %5627 = vmatpush1.msra.mxu0 0.0
    %5628 = vmatprep.subr.mxu0 0.0
    %5629 = vmatpush1.msra.mxu0 0.0
    %5630 = vmatprep.subr.mxu0 0.0
    %5631 = vmatpush1.msra.mxu0 0.0
    %5632 = vmatprep.subr.mxu0 0.0
    %5633 = vmatpush1.msra.mxu0 0.0
    %5634 = vmatprep.subr.mxu0 0.0
    %5635 = vmatpush1.msra.mxu0 0.0
    %5636 = vmatprep.mubr.f32.mxu0 0.0
    %5637 = vmatmul.mubr.f32.gmra.mrb[0].mxu0 %v5500
    %v5638 = vpop.f32.mrb[0].mxu0
    %v5639 = vadd.f32 0.0, %v5638
    %v5640 = vpop.f32.mrb[0].mxu0
    %5641 = vdwg.mxu0
    %5642 = vmatprep.subr.mxu0 0.0
    %5643 = vmatpush1.msra.mxu0 %v5170
    %5644 = vmatprep.subr.mxu0 0.0
    %5645 = vmatpush1.msra.mxu0 %v5171
    %5646 = vmatprep.subr.mxu0 0.0
    %5647 = vmatpush1.msra.mxu0 %v5172
    %5648 = vmatprep.subr.mxu0 0.0
    %5649 = vmatpush1.msra.mxu0 %v5173
    %5650 = vmatprep.subr.mxu0 0.0
    %5651 = vmatpush1.msra.mxu0 0.0
    %5652 = vmatprep.subr.mxu0 0.0
    %5653 = vmatpush1.msra.mxu0 0.0
    %5654 = vmatprep.subr.mxu0 0.0
    %5655 = vmatpush1.msra.mxu0 0.0
    %5656 = vmatprep.subr.mxu0 0.0
    %5657 = vmatpush1.msra.mxu0 0.0
    %5658 = vmatprep.subr.mxu0 0.0
    %5659 = vmatpush1.msra.mxu0 0.0
    %5660 = vmatprep.subr.mxu0 0.0
    %5661 = vmatpush1.msra.mxu0 0.0
    %5662 = vmatprep.subr.mxu0 0.0
    %5663 = vmatpush1.msra.mxu0 0.0
    %5664 = vmatprep.subr.mxu0 0.0
    %5665 = vmatpush1.msra.mxu0 0.0
    %5666 = vmatprep.subr.mxu0 0.0
    %5667 = vmatpush1.msra.mxu0 0.0
    %5668 = vmatprep.subr.mxu0 0.0
    %5669 = vmatpush1.msra.mxu0 0.0
    %5670 = vmatprep.subr.mxu0 0.0
    %5671 = vmatpush1.msra.mxu0 0.0
    %5672 = vmatprep.subr.mxu0 0.0
    %5673 = vmatpush1.msra.mxu0 0.0
    %5674 = vmatprep.subr.mxu0 0.0
    %5675 = vmatpush1.msra.mxu0 0.0
    %5676 = vmatprep.subr.mxu0 0.0
    %5677 = vmatpush1.msra.mxu0 0.0
    %5678 = vmatprep.subr.mxu0 0.0
    %5679 = vmatpush1.msra.mxu0 0.0
    %5680 = vmatprep.subr.mxu0 0.0
    %5681 = vmatpush1.msra.mxu0 0.0
    %5682 = vmatprep.subr.mxu0 0.0
    %5683 = vmatpush1.msra.mxu0 0.0
    %5684 = vmatprep.subr.mxu0 0.0
    %5685 = vmatpush1.msra.mxu0 0.0
    %5686 = vmatprep.subr.mxu0 0.0
    %5687 = vmatpush1.msra.mxu0 0.0
    %5688 = vmatprep.subr.mxu0 0.0
    %5689 = vmatpush1.msra.mxu0 0.0
    %5690 = vmatprep.subr.mxu0 0.0
    %5691 = vmatpush1.msra.mxu0 0.0
    %5692 = vmatprep.subr.mxu0 0.0
    %5693 = vmatpush1.msra.mxu0 0.0
    %5694 = vmatprep.subr.mxu0 0.0
    %5695 = vmatpush1.msra.mxu0 0.0
    %5696 = vmatprep.subr.mxu0 0.0
    %5697 = vmatpush1.msra.mxu0 0.0
    %5698 = vmatprep.subr.mxu0 0.0
    %5699 = vmatpush1.msra.mxu0 0.0
    %5700 = vmatprep.subr.mxu0 0.0
    %5701 = vmatpush1.msra.mxu0 0.0
    %5702 = vmatprep.subr.mxu0 0.0
    %5703 = vmatpush1.msra.mxu0 0.0
    %5704 = vmatprep.subr.mxu0 0.0
    %5705 = vmatpush1.msra.mxu0 0.0
    %5706 = vmatprep.mubr.f32.mxu0 0.0
    %5707 = vmatmul.mubr.f32.gmra.mrb[0].mxu0 %v5500
    %v5708 = vpop.f32.mrb[0].mxu0
    %v5709 = vadd.f32 %v5010, %v5708
    %v5710 = vpop.f32.mrb[0].mxu0
    %5711 = vdwg.mxu0
    %v5712 = vadd.f32 %v4684, %v5569
    %v5713 = vxor.u32 %v5712, 2147483648
    %v5714 = vmul.f32 %v5713, 1.442695
    %v5715 = vpow.pop %v5714
    %v5716 = vadd.f32 %v5715, 1.0
    %v5717 = vrcp.pop %v5716
    %v5718 = vmul.f32 1.0, %v5717
    %v5719 = vadd.f32 %v4830, %v5639
    %v5720 = vxor.u32 %v5719, 2147483648
    %v5721 = vmul.f32 %v5720, 1.442695
    %v5722 = vpow.pop %v5721
    %v5723 = vadd.f32 %v5722, 1.0
    %v5724 = vrcp.pop %v5723
    %v5725 = vmul.f32 1.0, %v5724
    %v5726 = vmul.f32 %v5718, %v5709
    %v5727 = vadd.f32 %v4966, %v5726
    %v5728 = vtanh.pop %v5727
    %v5729 = vsub.f32 1.0, %v5725
    %v5730 = vmul.f32 %v5729, %v5728
    %v5731 = vmul.f32 %v5725, %v5498
    %v5732 = vadd.f32 %v5730, %v5731
    %v5734 = vsel %vm1146, %v5732, 0
    %5736 = vmatprep.subr.mxu0 0.0
    %5737 = vmatpush1.msra.mxu0 %v5017
    %5738 = vmatprep.subr.mxu0 0.0
    %5739 = vmatpush1.msra.mxu0 %v5018
    %5740 = vmatprep.subr.mxu0 0.0
    %5741 = vmatpush1.msra.mxu0 %v5019
    %5742 = vmatprep.subr.mxu0 0.0
    %5743 = vmatpush1.msra.mxu0 %v5020
    %5744 = vmatprep.subr.mxu0 0.0
    %5745 = vmatpush1.msra.mxu0 0.0
    %5746 = vmatprep.subr.mxu0 0.0
    %5747 = vmatpush1.msra.mxu0 0.0
    %5748 = vmatprep.subr.mxu0 0.0
    %5749 = vmatpush1.msra.mxu0 0.0
    %5750 = vmatprep.subr.mxu0 0.0
    %5751 = vmatpush1.msra.mxu0 0.0
    %5752 = vmatprep.subr.mxu0 0.0
    %5753 = vmatpush1.msra.mxu0 0.0
    %5754 = vmatprep.subr.mxu0 0.0
    %5755 = vmatpush1.msra.mxu0 0.0
    %5756 = vmatprep.subr.mxu0 0.0
    %5757 = vmatpush1.msra.mxu0 0.0
    %5758 = vmatprep.subr.mxu0 0.0
    %5759 = vmatpush1.msra.mxu0 0.0
    %5760 = vmatprep.subr.mxu0 0.0
    %5761 = vmatpush1.msra.mxu0 0.0
    %5762 = vmatprep.subr.mxu0 0.0
    %5763 = vmatpush1.msra.mxu0 0.0
    %5764 = vmatprep.subr.mxu0 0.0
    %5765 = vmatpush1.msra.mxu0 0.0
    %5766 = vmatprep.subr.mxu0 0.0
    %5767 = vmatpush1.msra.mxu0 0.0
    %5768 = vmatprep.subr.mxu0 0.0
    %5769 = vmatpush1.msra.mxu0 0.0
    %5770 = vmatprep.subr.mxu0 0.0
    %5771 = vmatpush1.msra.mxu0 0.0
    %5772 = vmatprep.subr.mxu0 0.0
    %5773 = vmatpush1.msra.mxu0 0.0
    %5774 = vmatprep.subr.mxu0 0.0
    %5775 = vmatpush1.msra.mxu0 0.0
    %5776 = vmatprep.subr.mxu0 0.0
    %5777 = vmatpush1.msra.mxu0 0.0
    %5778 = vmatprep.subr.mxu0 0.0
    %5779 = vmatpush1.msra.mxu0 0.0
    %5780 = vmatprep.subr.mxu0 0.0
    %5781 = vmatpush1.msra.mxu0 0.0
    %5782 = vmatprep.subr.mxu0 0.0
    %5783 = vmatpush1.msra.mxu0 0.0
    %5784 = vmatprep.subr.mxu0 0.0
    %5785 = vmatpush1.msra.mxu0 0.0
    %5786 = vmatprep.subr.mxu0 0.0
    %5787 = vmatpush1.msra.mxu0 0.0
    %5788 = vmatprep.subr.mxu0 0.0
    %5789 = vmatpush1.msra.mxu0 0.0
    %5790 = vmatprep.subr.mxu0 0.0
    %5791 = vmatpush1.msra.mxu0 0.0
    %5792 = vmatprep.subr.mxu0 0.0
    %5793 = vmatpush1.msra.mxu0 0.0
    %5794 = vmatprep.subr.mxu0 0.0
    %5795 = vmatpush1.msra.mxu0 0.0
    %5796 = vmatprep.subr.mxu0 0.0
    %5797 = vmatpush1.msra.mxu0 0.0
    %5798 = vmatprep.subr.mxu0 0.0
    %5799 = vmatpush1.msra.mxu0 0.0
    %5800 = vmatprep.mubr.f32.mxu0 0.0
    %5801 = vmatmul.mubr.f32.gmra.mrb[0].mxu0 %v5734
    %v5802 = vpop.f32.mrb[0].mxu0
    %v5803 = vadd.f32 0.0, %v5802
    %v5804 = vpop.f32.mrb[0].mxu0
    %5805 = vdwg.mxu0
    %5806 = vmatprep.subr.mxu0 0.0
    %5807 = vmatpush1.msra.mxu0 %v5095
    %5808 = vmatprep.subr.mxu0 0.0
    %5809 = vmatpush1.msra.mxu0 %v5096
    %5810 = vmatprep.subr.mxu0 0.0
    %5811 = vmatpush1.msra.mxu0 %v5097
    %5812 = vmatprep.subr.mxu0 0.0
    %5813 = vmatpush1.msra.mxu0 %v5098
    %5814 = vmatprep.subr.mxu0 0.0
    %5815 = vmatpush1.msra.mxu0 0.0
    %5816 = vmatprep.subr.mxu0 0.0
    %5817 = vmatpush1.msra.mxu0 0.0
    %5818 = vmatprep.subr.mxu0 0.0
    %5819 = vmatpush1.msra.mxu0 0.0
    %5820 = vmatprep.subr.mxu0 0.0
    %5821 = vmatpush1.msra.mxu0 0.0
    %5822 = vmatprep.subr.mxu0 0.0
    %5823 = vmatpush1.msra.mxu0 0.0
    %5824 = vmatprep.subr.mxu0 0.0
    %5825 = vmatpush1.msra.mxu0 0.0
    %5826 = vmatprep.subr.mxu0 0.0
    %5827 = vmatpush1.msra.mxu0 0.0
    %5828 = vmatprep.subr.mxu0 0.0
    %5829 = vmatpush1.msra.mxu0 0.0
    %5830 = vmatprep.subr.mxu0 0.0
    %5831 = vmatpush1.msra.mxu0 0.0
    %5832 = vmatprep.subr.mxu0 0.0
    %5833 = vmatpush1.msra.mxu0 0.0
    %5834 = vmatprep.subr.mxu0 0.0
    %5835 = vmatpush1.msra.mxu0 0.0
    %5836 = vmatprep.subr.mxu0 0.0
    %5837 = vmatpush1.msra.mxu0 0.0
    %5838 = vmatprep.subr.mxu0 0.0
    %5839 = vmatpush1.msra.mxu0 0.0
    %5840 = vmatprep.subr.mxu0 0.0
    %5841 = vmatpush1.msra.mxu0 0.0
    %5842 = vmatprep.subr.mxu0 0.0
    %5843 = vmatpush1.msra.mxu0 0.0
    %5844 = vmatprep.subr.mxu0 0.0
    %5845 = vmatpush1.msra.mxu0 0.0
    %5846 = vmatprep.subr.mxu0 0.0
    %5847 = vmatpush1.msra.mxu0 0.0
    %5848 = vmatprep.subr.mxu0 0.0
    %5849 = vmatpush1.msra.mxu0 0.0
    %5850 = vmatprep.subr.mxu0 0.0
    %5851 = vmatpush1.msra.mxu0 0.0
    %5852 = vmatprep.subr.mxu0 0.0
    %5853 = vmatpush1.msra.mxu0 0.0
    %5854 = vmatprep.subr.mxu0 0.0
    %5855 = vmatpush1.msra.mxu0 0.0
    %5856 = vmatprep.subr.mxu0 0.0
    %5857 = vmatpush1.msra.mxu0 0.0
    %5858 = vmatprep.subr.mxu0 0.0
    %5859 = vmatpush1.msra.mxu0 0.0
    %5860 = vmatprep.subr.mxu0 0.0
    %5861 = vmatpush1.msra.mxu0 0.0
    %5862 = vmatprep.subr.mxu0 0.0
    %5863 = vmatpush1.msra.mxu0 0.0
    %5864 = vmatprep.subr.mxu0 0.0
    %5865 = vmatpush1.msra.mxu0 0.0
    %5866 = vmatprep.subr.mxu0 0.0
    %5867 = vmatpush1.msra.mxu0 0.0
    %5868 = vmatprep.subr.mxu0 0.0
    %5869 = vmatpush1.msra.mxu0 0.0
    %5870 = vmatprep.mubr.f32.mxu0 0.0
    %5871 = vmatmul.mubr.f32.gmra.mrb[0].mxu0 %v5734
    %v5872 = vpop.f32.mrb[0].mxu0
    %v5873 = vadd.f32 0.0, %v5872
    %v5874 = vpop.f32.mrb[0].mxu0
    %5875 = vdwg.mxu0
    %5876 = vmatprep.subr.mxu0 0.0
    %5877 = vmatpush1.msra.mxu0 %v5170
    %5878 = vmatprep.subr.mxu0 0.0
    %5879 = vmatpush1.msra.mxu0 %v5171
    %5880 = vmatprep.subr.mxu0 0.0
    %5881 = vmatpush1.msra.mxu0 %v5172
    %5882 = vmatprep.subr.mxu0 0.0
    %5883 = vmatpush1.msra.mxu0 %v5173
    %5884 = vmatprep.subr.mxu0 0.0
    %5885 = vmatpush1.msra.mxu0 0.0
    %5886 = vmatprep.subr.mxu0 0.0
    %5887 = vmatpush1.msra.mxu0 0.0
    %5888 = vmatprep.subr.mxu0 0.0
    %5889 = vmatpush1.msra.mxu0 0.0
    %5890 = vmatprep.subr.mxu0 0.0
    %5891 = vmatpush1.msra.mxu0 0.0
    %5892 = vmatprep.subr.mxu0 0.0
    %5893 = vmatpush1.msra.mxu0 0.0
    %5894 = vmatprep.subr.mxu0 0.0
    %5895 = vmatpush1.msra.mxu0 0.0
    %5896 = vmatprep.subr.mxu0 0.0
    %5897 = vmatpush1.msra.mxu0 0.0
    %5898 = vmatprep.subr.mxu0 0.0
    %5899 = vmatpush1.msra.mxu0 0.0
    %5900 = vmatprep.subr.mxu0 0.0
    %5901 = vmatpush1.msra.mxu0 0.0
    %5902 = vmatprep.subr.mxu0 0.0
    %5903 = vmatpush1.msra.mxu0 0.0
    %5904 = vmatprep.subr.mxu0 0.0
    %5905 = vmatpush1.msra.mxu0 0.0
    %5906 = vmatprep.subr.mxu0 0.0
    %5907 = vmatpush1.msra.mxu0 0.0
    %5908 = vmatprep.subr.mxu0 0.0
    %5909 = vmatpush1.msra.mxu0 0.0
    %5910 = vmatprep.subr.mxu0 0.0
    %5911 = vmatpush1.msra.mxu0 0.0
    %5912 = vmatprep.subr.mxu0 0.0
    %5913 = vmatpush1.msra.mxu0 0.0
    %5914 = vmatprep.subr.mxu0 0.0
    %5915 = vmatpush1.msra.mxu0 0.0
    %5916 = vmatprep.subr.mxu0 0.0
    %5917 = vmatpush1.msra.mxu0 0.0
    %5918 = vmatprep.subr.mxu0 0.0
    %5919 = vmatpush1.msra.mxu0 0.0
    %5920 = vmatprep.subr.mxu0 0.0
    %5921 = vmatpush1.msra.mxu0 0.0
    %5922 = vmatprep.subr.mxu0 0.0
    %5923 = vmatpush1.msra.mxu0 0.0
    %5924 = vmatprep.subr.mxu0 0.0
    %5925 = vmatpush1.msra.mxu0 0.0
    %5926 = vmatprep.subr.mxu0 0.0
    %5927 = vmatpush1.msra.mxu0 0.0
    %5928 = vmatprep.subr.mxu0 0.0
    %5929 = vmatpush1.msra.mxu0 0.0
    %5930 = vmatprep.subr.mxu0 0.0
    %5931 = vmatpush1.msra.mxu0 0.0
    %5932 = vmatprep.subr.mxu0 0.0
    %5933 = vmatpush1.msra.mxu0 0.0
    %5934 = vmatprep.subr.mxu0 0.0
    %5935 = vmatpush1.msra.mxu0 0.0
    %5936 = vmatprep.subr.mxu0 0.0
    %5937 = vmatpush1.msra.mxu0 0.0
    %5938 = vmatprep.subr.mxu0 0.0
    %5939 = vmatpush1.msra.mxu0 0.0
    %5940 = vmatprep.mubr.f32.mxu0 0.0
    %5941 = vmatmul.mubr.f32.gmra.mrb[0].mxu0 %v5734
    %v5942 = vpop.f32.mrb[0].mxu0
    %v5943 = vadd.f32 %v5010, %v5942
    %v5944 = vpop.f32.mrb[0].mxu0
    %5945 = vdwg.mxu0
    %v5946 = vadd.f32 %v4692, %v5803
    %v5947 = vxor.u32 %v5946, 2147483648
    %v5948 = vmul.f32 %v5947, 1.442695
    %v5949 = vpow.pop %v5948
    %v5950 = vadd.f32 %v5949, 1.0
    %v5951 = vrcp.pop %v5950
    %v5952 = vmul.f32 1.0, %v5951
    %v5953 = vadd.f32 %v4838, %v5873
    %v5954 = vxor.u32 %v5953, 2147483648
    %v5955 = vmul.f32 %v5954, 1.442695
    %v5956 = vpow.pop %v5955
    %v5957 = vadd.f32 %v5956, 1.0
    %v5958 = vrcp.pop %v5957
    %v5959 = vmul.f32 1.0, %v5958
    %v5960 = vmul.f32 %v5952, %v5943
    %v5961 = vadd.f32 %v4974, %v5960
    %v5962 = vtanh.pop %v5961
    %v5963 = vsub.f32 1.0, %v5959
    %v5964 = vmul.f32 %v5963, %v5962
    %v5965 = vmul.f32 %v5959, %v5732
    %v5966 = vadd.f32 %v5964, %v5965
    %v5968 = vsel %vm1146, %v5966, 0
    %5970 = vmatprep.subr.mxu0 0.0
    %5971 = vmatpush1.msra.mxu0 %v5017
    %5972 = vmatprep.subr.mxu0 0.0
    %5973 = vmatpush1.msra.mxu0 %v5018
    %5974 = vmatprep.subr.mxu0 0.0
    %5975 = vmatpush1.msra.mxu0 %v5019
    %5976 = vmatprep.subr.mxu0 0.0
    %5977 = vmatpush1.msra.mxu0 %v5020
    %5978 = vmatprep.subr.mxu0 0.0
    %5979 = vmatpush1.msra.mxu0 0.0
    %5980 = vmatprep.subr.mxu0 0.0
    %5981 = vmatpush1.msra.mxu0 0.0
    %5982 = vmatprep.subr.mxu0 0.0
    %5983 = vmatpush1.msra.mxu0 0.0
    %5984 = vmatprep.subr.mxu0 0.0
    %5985 = vmatpush1.msra.mxu0 0.0
    %5986 = vmatprep.subr.mxu0 0.0
    %5987 = vmatpush1.msra.mxu0 0.0
    %5988 = vmatprep.subr.mxu0 0.0
    %5989 = vmatpush1.msra.mxu0 0.0
    %5990 = vmatprep.subr.mxu0 0.0
    %5991 = vmatpush1.msra.mxu0 0.0
    %5992 = vmatprep.subr.mxu0 0.0
    %5993 = vmatpush1.msra.mxu0 0.0
    %5994 = vmatprep.subr.mxu0 0.0
    %5995 = vmatpush1.msra.mxu0 0.0
    %5996 = vmatprep.subr.mxu0 0.0
    %5997 = vmatpush1.msra.mxu0 0.0
    %5998 = vmatprep.subr.mxu0 0.0
    %5999 = vmatpush1.msra.mxu0 0.0
    %6000 = vmatprep.subr.mxu0 0.0
    %6001 = vmatpush1.msra.mxu0 0.0
    %6002 = vmatprep.subr.mxu0 0.0
    %6003 = vmatpush1.msra.mxu0 0.0
    %6004 = vmatprep.subr.mxu0 0.0
    %6005 = vmatpush1.msra.mxu0 0.0
    %6006 = vmatprep.subr.mxu0 0.0
    %6007 = vmatpush1.msra.mxu0 0.0
    %6008 = vmatprep.subr.mxu0 0.0
    %6009 = vmatpush1.msra.mxu0 0.0
    %6010 = vmatprep.subr.mxu0 0.0
    %6011 = vmatpush1.msra.mxu0 0.0
    %6012 = vmatprep.subr.mxu0 0.0
    %6013 = vmatpush1.msra.mxu0 0.0
    %6014 = vmatprep.subr.mxu0 0.0
    %6015 = vmatpush1.msra.mxu0 0.0
    %6016 = vmatprep.subr.mxu0 0.0
    %6017 = vmatpush1.msra.mxu0 0.0
    %6018 = vmatprep.subr.mxu0 0.0
    %6019 = vmatpush1.msra.mxu0 0.0
    %6020 = vmatprep.subr.mxu0 0.0
    %6021 = vmatpush1.msra.mxu0 0.0
    %6022 = vmatprep.subr.mxu0 0.0
    %6023 = vmatpush1.msra.mxu0 0.0
    %6024 = vmatprep.subr.mxu0 0.0
    %6025 = vmatpush1.msra.mxu0 0.0
    %6026 = vmatprep.subr.mxu0 0.0
    %6027 = vmatpush1.msra.mxu0 0.0
    %6028 = vmatprep.subr.mxu0 0.0
    %6029 = vmatpush1.msra.mxu0 0.0
    %6030 = vmatprep.subr.mxu0 0.0
    %6031 = vmatpush1.msra.mxu0 0.0
    %6032 = vmatprep.subr.mxu0 0.0
    %6033 = vmatpush1.msra.mxu0 0.0
    %6034 = vmatprep.mubr.f32.mxu0 0.0
    %6035 = vmatmul.mubr.f32.gmra.mrb[0].mxu0 %v5968
    %v6036 = vpop.f32.mrb[0].mxu0
    %v6037 = vadd.f32 0.0, %v6036
    %v6038 = vpop.f32.mrb[0].mxu0
    %6039 = vdwg.mxu0
    %6040 = vmatprep.subr.mxu0 0.0
    %6041 = vmatpush1.msra.mxu0 %v5095
    %6042 = vmatprep.subr.mxu0 0.0
    %6043 = vmatpush1.msra.mxu0 %v5096
    %6044 = vmatprep.subr.mxu0 0.0
    %6045 = vmatpush1.msra.mxu0 %v5097
    %6046 = vmatprep.subr.mxu0 0.0
    %6047 = vmatpush1.msra.mxu0 %v5098
    %6048 = vmatprep.subr.mxu0 0.0
    %6049 = vmatpush1.msra.mxu0 0.0
    %6050 = vmatprep.subr.mxu0 0.0
    %6051 = vmatpush1.msra.mxu0 0.0
    %6052 = vmatprep.subr.mxu0 0.0
    %6053 = vmatpush1.msra.mxu0 0.0
    %6054 = vmatprep.subr.mxu0 0.0
    %6055 = vmatpush1.msra.mxu0 0.0
    %6056 = vmatprep.subr.mxu0 0.0
    %6057 = vmatpush1.msra.mxu0 0.0
    %6058 = vmatprep.subr.mxu0 0.0
    %6059 = vmatpush1.msra.mxu0 0.0
    %6060 = vmatprep.subr.mxu0 0.0
    %6061 = vmatpush1.msra.mxu0 0.0
    %6062 = vmatprep.subr.mxu0 0.0
    %6063 = vmatpush1.msra.mxu0 0.0
    %6064 = vmatprep.subr.mxu0 0.0
    %6065 = vmatpush1.msra.mxu0 0.0
    %6066 = vmatprep.subr.mxu0 0.0
    %6067 = vmatpush1.msra.mxu0 0.0
    %6068 = vmatprep.subr.mxu0 0.0
    %6069 = vmatpush1.msra.mxu0 0.0
    %6070 = vmatprep.subr.mxu0 0.0
    %6071 = vmatpush1.msra.mxu0 0.0
    %6072 = vmatprep.subr.mxu0 0.0
    %6073 = vmatpush1.msra.mxu0 0.0
    %6074 = vmatprep.subr.mxu0 0.0
    %6075 = vmatpush1.msra.mxu0 0.0
    %6076 = vmatprep.subr.mxu0 0.0
    %6077 = vmatpush1.msra.mxu0 0.0
    %6078 = vmatprep.subr.mxu0 0.0
    %6079 = vmatpush1.msra.mxu0 0.0
    %6080 = vmatprep.subr.mxu0 0.0
    %6081 = vmatpush1.msra.mxu0 0.0
    %6082 = vmatprep.subr.mxu0 0.0
    %6083 = vmatpush1.msra.mxu0 0.0
    %6084 = vmatprep.subr.mxu0 0.0
    %6085 = vmatpush1.msra.mxu0 0.0
    %6086 = vmatprep.subr.mxu0 0.0
    %6087 = vmatpush1.msra.mxu0 0.0
    %6088 = vmatprep.subr.mxu0 0.0
    %6089 = vmatpush1.msra.mxu0 0.0
    %6090 = vmatprep.subr.mxu0 0.0
    %6091 = vmatpush1.msra.mxu0 0.0
    %6092 = vmatprep.subr.mxu0 0.0
    %6093 = vmatpush1.msra.mxu0 0.0
    %6094 = vmatprep.subr.mxu0 0.0
    %6095 = vmatpush1.msra.mxu0 0.0
    %6096 = vmatprep.subr.mxu0 0.0
    %6097 = vmatpush1.msra.mxu0 0.0
    %6098 = vmatprep.subr.mxu0 0.0
    %6099 = vmatpush1.msra.mxu0 0.0
    %6100 = vmatprep.subr.mxu0 0.0
    %6101 = vmatpush1.msra.mxu0 0.0
    %6102 = vmatprep.subr.mxu0 0.0
    %6103 = vmatpush1.msra.mxu0 0.0
    %6104 = vmatprep.mubr.f32.mxu0 0.0
    %6105 = vmatmul.mubr.f32.gmra.mrb[0].mxu0 %v5968
    %v6106 = vpop.f32.mrb[0].mxu0
    %v6107 = vadd.f32 0.0, %v6106
    %v6108 = vpop.f32.mrb[0].mxu0
    %6109 = vdwg.mxu0
    %6110 = vmatprep.subr.mxu0 0.0
    %6111 = vmatpush1.msra.mxu0 %v5170
    %6112 = vmatprep.subr.mxu0 0.0
    %6113 = vmatpush1.msra.mxu0 %v5171
    %6114 = vmatprep.subr.mxu0 0.0
    %6115 = vmatpush1.msra.mxu0 %v5172
    %6116 = vmatprep.subr.mxu0 0.0
    %6117 = vmatpush1.msra.mxu0 %v5173
    %6118 = vmatprep.subr.mxu0 0.0
    %6119 = vmatpush1.msra.mxu0 0.0
    %6120 = vmatprep.subr.mxu0 0.0
    %6121 = vmatpush1.msra.mxu0 0.0
    %6122 = vmatprep.subr.mxu0 0.0
    %6123 = vmatpush1.msra.mxu0 0.0
    %6124 = vmatprep.subr.mxu0 0.0
    %6125 = vmatpush1.msra.mxu0 0.0
    %6126 = vmatprep.subr.mxu0 0.0
    %6127 = vmatpush1.msra.mxu0 0.0
    %6128 = vmatprep.subr.mxu0 0.0
    %6129 = vmatpush1.msra.mxu0 0.0
    %6130 = vmatprep.subr.mxu0 0.0
    %6131 = vmatpush1.msra.mxu0 0.0
    %6132 = vmatprep.subr.mxu0 0.0
    %6133 = vmatpush1.msra.mxu0 0.0
    %6134 = vmatprep.subr.mxu0 0.0
    %6135 = vmatpush1.msra.mxu0 0.0
    %6136 = vmatprep.subr.mxu0 0.0
    %6137 = vmatpush1.msra.mxu0 0.0
    %6138 = vmatprep.subr.mxu0 0.0
    %6139 = vmatpush1.msra.mxu0 0.0
    %6140 = vmatprep.subr.mxu0 0.0
    %6141 = vmatpush1.msra.mxu0 0.0
    %6142 = vmatprep.subr.mxu0 0.0
    %6143 = vmatpush1.msra.mxu0 0.0
    %6144 = vmatprep.subr.mxu0 0.0
    %6145 = vmatpush1.msra.mxu0 0.0
    %6146 = vmatprep.subr.mxu0 0.0
    %6147 = vmatpush1.msra.mxu0 0.0
    %6148 = vmatprep.subr.mxu0 0.0
    %6149 = vmatpush1.msra.mxu0 0.0
    %6150 = vmatprep.subr.mxu0 0.0
    %6151 = vmatpush1.msra.mxu0 0.0
    %6152 = vmatprep.subr.mxu0 0.0
    %6153 = vmatpush1.msra.mxu0 0.0
    %6154 = vmatprep.subr.mxu0 0.0
    %6155 = vmatpush1.msra.mxu0 0.0
    %6156 = vmatprep.subr.mxu0 0.0
    %6157 = vmatpush1.msra.mxu0 0.0
    %6158 = vmatprep.subr.mxu0 0.0
    %6159 = vmatpush1.msra.mxu0 0.0
    %6160 = vmatprep.subr.mxu0 0.0
    %6161 = vmatpush1.msra.mxu0 0.0
    %6162 = vmatprep.subr.mxu0 0.0
    %6163 = vmatpush1.msra.mxu0 0.0
    %6164 = vmatprep.subr.mxu0 0.0
    %6165 = vmatpush1.msra.mxu0 0.0
    %6166 = vmatprep.subr.mxu0 0.0
    %6167 = vmatpush1.msra.mxu0 0.0
    %6168 = vmatprep.subr.mxu0 0.0
    %6169 = vmatpush1.msra.mxu0 0.0
    %6170 = vmatprep.subr.mxu0 0.0
    %6171 = vmatpush1.msra.mxu0 0.0
    %6172 = vmatprep.subr.mxu0 0.0
    %6173 = vmatpush1.msra.mxu0 0.0
    %6174 = vmatprep.mubr.f32.mxu0 0.0
    %6175 = vmatmul.mubr.f32.gmra.mrb[0].mxu0 %v5968
    %v6176 = vpop.f32.mrb[0].mxu0
    %v6177 = vadd.f32 %v5010, %v6176
    %v6178 = vpop.f32.mrb[0].mxu0
    %6179 = vdwg.mxu0
    %v6180 = vadd.f32 %v4700, %v6037
    %v6181 = vxor.u32 %v6180, 2147483648
    %v6182 = vmul.f32 %v6181, 1.442695
    %v6183 = vpow.pop %v6182
    %v6184 = vadd.f32 %v6183, 1.0
    %v6185 = vrcp.pop %v6184
    %v6186 = vmul.f32 1.0, %v6185
    %v6187 = vadd.f32 %v4846, %v6107
    %v6188 = vxor.u32 %v6187, 2147483648
    %v6189 = vmul.f32 %v6188, 1.442695
    %v6190 = vpow.pop %v6189
    %v6191 = vadd.f32 %v6190, 1.0
    %v6192 = vrcp.pop %v6191
    %v6193 = vmul.f32 1.0, %v6192
    %v6194 = vmul.f32 %v6186, %v6177
    %v6195 = vadd.f32 %v4982, %v6194
    %v6196 = vtanh.pop %v6195
    %v6197 = vsub.f32 1.0, %v6193
    %v6198 = vmul.f32 %v6197, %v6196
    %v6199 = vmul.f32 %v6193, %v5966
    %v6200 = vadd.f32 %v6198, %v6199
    %v6202 = vsel %vm1146, %v6200, 0
    %6204 = vmatprep.subr.mxu0 0.0
    %6205 = vmatpush1.msra.mxu0 %v5017
    %6206 = vmatprep.subr.mxu0 0.0
    %6207 = vmatpush1.msra.mxu0 %v5018
    %6208 = vmatprep.subr.mxu0 0.0
    %6209 = vmatpush1.msra.mxu0 %v5019
    %6210 = vmatprep.subr.mxu0 0.0
    %6211 = vmatpush1.msra.mxu0 %v5020
    %6212 = vmatprep.subr.mxu0 0.0
    %6213 = vmatpush1.msra.mxu0 0.0
    %6214 = vmatprep.subr.mxu0 0.0
    %6215 = vmatpush1.msra.mxu0 0.0
    %6216 = vmatprep.subr.mxu0 0.0
    %6217 = vmatpush1.msra.mxu0 0.0
    %6218 = vmatprep.subr.mxu0 0.0
    %6219 = vmatpush1.msra.mxu0 0.0
    %6220 = vmatprep.subr.mxu0 0.0
    %6221 = vmatpush1.msra.mxu0 0.0
    %6222 = vmatprep.subr.mxu0 0.0
    %6223 = vmatpush1.msra.mxu0 0.0
    %6224 = vmatprep.subr.mxu0 0.0
    %6225 = vmatpush1.msra.mxu0 0.0
    %6226 = vmatprep.subr.mxu0 0.0
    %6227 = vmatpush1.msra.mxu0 0.0
    %6228 = vmatprep.subr.mxu0 0.0
    %6229 = vmatpush1.msra.mxu0 0.0
    %6230 = vmatprep.subr.mxu0 0.0
    %6231 = vmatpush1.msra.mxu0 0.0
    %6232 = vmatprep.subr.mxu0 0.0
    %6233 = vmatpush1.msra.mxu0 0.0
    %6234 = vmatprep.subr.mxu0 0.0
    %6235 = vmatpush1.msra.mxu0 0.0
    %6236 = vmatprep.subr.mxu0 0.0
    %6237 = vmatpush1.msra.mxu0 0.0
    %6238 = vmatprep.subr.mxu0 0.0
    %6239 = vmatpush1.msra.mxu0 0.0
    %6240 = vmatprep.subr.mxu0 0.0
    %6241 = vmatpush1.msra.mxu0 0.0
    %6242 = vmatprep.subr.mxu0 0.0
    %6243 = vmatpush1.msra.mxu0 0.0
    %6244 = vmatprep.subr.mxu0 0.0
    %6245 = vmatpush1.msra.mxu0 0.0
    %6246 = vmatprep.subr.mxu0 0.0
    %6247 = vmatpush1.msra.mxu0 0.0
    %6248 = vmatprep.subr.mxu0 0.0
    %6249 = vmatpush1.msra.mxu0 0.0
    %6250 = vmatprep.subr.mxu0 0.0
    %6251 = vmatpush1.msra.mxu0 0.0
    %6252 = vmatprep.subr.mxu0 0.0
    %6253 = vmatpush1.msra.mxu0 0.0
    %6254 = vmatprep.subr.mxu0 0.0
    %6255 = vmatpush1.msra.mxu0 0.0
    %6256 = vmatprep.subr.mxu0 0.0
    %6257 = vmatpush1.msra.mxu0 0.0
    %6258 = vmatprep.subr.mxu0 0.0
    %6259 = vmatpush1.msra.mxu0 0.0
    %6260 = vmatprep.subr.mxu0 0.0
    %6261 = vmatpush1.msra.mxu0 0.0
    %6262 = vmatprep.subr.mxu0 0.0
    %6263 = vmatpush1.msra.mxu0 0.0
    %6264 = vmatprep.subr.mxu0 0.0
    %6265 = vmatpush1.msra.mxu0 0.0
    %6266 = vmatprep.subr.mxu0 0.0
    %6267 = vmatpush1.msra.mxu0 0.0
    %6268 = vmatprep.mubr.f32.mxu0 0.0
    %6269 = vmatmul.mubr.f32.gmra.mrb[0].mxu0 %v6202
    %v6270 = vpop.f32.mrb[0].mxu0
    %v6271 = vadd.f32 0.0, %v6270
    %v6272 = vpop.f32.mrb[0].mxu0
    %6273 = vdwg.mxu0
    %6274 = vmatprep.subr.mxu0 0.0
    %6275 = vmatpush1.msra.mxu0 %v5095
    %6276 = vmatprep.subr.mxu0 0.0
    %6277 = vmatpush1.msra.mxu0 %v5096
    %6278 = vmatprep.subr.mxu0 0.0
    %6279 = vmatpush1.msra.mxu0 %v5097
    %6280 = vmatprep.subr.mxu0 0.0
    %6281 = vmatpush1.msra.mxu0 %v5098
    %6282 = vmatprep.subr.mxu0 0.0
    %6283 = vmatpush1.msra.mxu0 0.0
    %6284 = vmatprep.subr.mxu0 0.0
    %6285 = vmatpush1.msra.mxu0 0.0
    %6286 = vmatprep.subr.mxu0 0.0
    %6287 = vmatpush1.msra.mxu0 0.0
    %6288 = vmatprep.subr.mxu0 0.0
    %6289 = vmatpush1.msra.mxu0 0.0
    %6290 = vmatprep.subr.mxu0 0.0
    %6291 = vmatpush1.msra.mxu0 0.0
    %6292 = vmatprep.subr.mxu0 0.0
    %6293 = vmatpush1.msra.mxu0 0.0
    %6294 = vmatprep.subr.mxu0 0.0
    %6295 = vmatpush1.msra.mxu0 0.0
    %6296 = vmatprep.subr.mxu0 0.0
    %6297 = vmatpush1.msra.mxu0 0.0
    %6298 = vmatprep.subr.mxu0 0.0
    %6299 = vmatpush1.msra.mxu0 0.0
    %6300 = vmatprep.subr.mxu0 0.0
    %6301 = vmatpush1.msra.mxu0 0.0
    %6302 = vmatprep.subr.mxu0 0.0
    %6303 = vmatpush1.msra.mxu0 0.0
    %6304 = vmatprep.subr.mxu0 0.0
    %6305 = vmatpush1.msra.mxu0 0.0
    %6306 = vmatprep.subr.mxu0 0.0
    %6307 = vmatpush1.msra.mxu0 0.0
    %6308 = vmatprep.subr.mxu0 0.0
    %6309 = vmatpush1.msra.mxu0 0.0
    %6310 = vmatprep.subr.mxu0 0.0
    %6311 = vmatpush1.msra.mxu0 0.0
    %6312 = vmatprep.subr.mxu0 0.0
    %6313 = vmatpush1.msra.mxu0 0.0
    %6314 = vmatprep.subr.mxu0 0.0
    %6315 = vmatpush1.msra.mxu0 0.0
    %6316 = vmatprep.subr.mxu0 0.0
    %6317 = vmatpush1.msra.mxu0 0.0
    %6318 = vmatprep.subr.mxu0 0.0
    %6319 = vmatpush1.msra.mxu0 0.0
    %6320 = vmatprep.subr.mxu0 0.0
    %6321 = vmatpush1.msra.mxu0 0.0
    %6322 = vmatprep.subr.mxu0 0.0
    %6323 = vmatpush1.msra.mxu0 0.0
    %6324 = vmatprep.subr.mxu0 0.0
    %6325 = vmatpush1.msra.mxu0 0.0
    %6326 = vmatprep.subr.mxu0 0.0
    %6327 = vmatpush1.msra.mxu0 0.0
    %6328 = vmatprep.subr.mxu0 0.0
    %6329 = vmatpush1.msra.mxu0 0.0
    %6330 = vmatprep.subr.mxu0 0.0
    %6331 = vmatpush1.msra.mxu0 0.0
    %6332 = vmatprep.subr.mxu0 0.0
    %6333 = vmatpush1.msra.mxu0 0.0
    %6334 = vmatprep.subr.mxu0 0.0
    %6335 = vmatpush1.msra.mxu0 0.0
    %6336 = vmatprep.subr.mxu0 0.0
    %6337 = vmatpush1.msra.mxu0 0.0
    %6338 = vmatprep.mubr.f32.mxu0 0.0
    %6339 = vmatmul.mubr.f32.gmra.mrb[0].mxu0 %v6202
    %v6340 = vpop.f32.mrb[0].mxu0
    %v6341 = vadd.f32 0.0, %v6340
    %v6342 = vpop.f32.mrb[0].mxu0
    %6343 = vdwg.mxu0
    %6344 = vmatprep.subr.mxu0 0.0
    %6345 = vmatpush1.msra.mxu0 %v5170
    %6346 = vmatprep.subr.mxu0 0.0
    %6347 = vmatpush1.msra.mxu0 %v5171
    %6348 = vmatprep.subr.mxu0 0.0
    %6349 = vmatpush1.msra.mxu0 %v5172
    %6350 = vmatprep.subr.mxu0 0.0
    %6351 = vmatpush1.msra.mxu0 %v5173
    %6352 = vmatprep.subr.mxu0 0.0
    %6353 = vmatpush1.msra.mxu0 0.0
    %6354 = vmatprep.subr.mxu0 0.0
    %6355 = vmatpush1.msra.mxu0 0.0
    %6356 = vmatprep.subr.mxu0 0.0
    %6357 = vmatpush1.msra.mxu0 0.0
    %6358 = vmatprep.subr.mxu0 0.0
    %6359 = vmatpush1.msra.mxu0 0.0
    %6360 = vmatprep.subr.mxu0 0.0
    %6361 = vmatpush1.msra.mxu0 0.0
    %6362 = vmatprep.subr.mxu0 0.0
    %6363 = vmatpush1.msra.mxu0 0.0
    %6364 = vmatprep.subr.mxu0 0.0
    %6365 = vmatpush1.msra.mxu0 0.0
    %6366 = vmatprep.subr.mxu0 0.0
    %6367 = vmatpush1.msra.mxu0 0.0
    %6368 = vmatprep.subr.mxu0 0.0
    %6369 = vmatpush1.msra.mxu0 0.0
    %6370 = vmatprep.subr.mxu0 0.0
    %6371 = vmatpush1.msra.mxu0 0.0
    %6372 = vmatprep.subr.mxu0 0.0
    %6373 = vmatpush1.msra.mxu0 0.0
    %6374 = vmatprep.subr.mxu0 0.0
    %6375 = vmatpush1.msra.mxu0 0.0
    %6376 = vmatprep.subr.mxu0 0.0
    %6377 = vmatpush1.msra.mxu0 0.0
    %6378 = vmatprep.subr.mxu0 0.0
    %6379 = vmatpush1.msra.mxu0 0.0
    %6380 = vmatprep.subr.mxu0 0.0
    %6381 = vmatpush1.msra.mxu0 0.0
    %6382 = vmatprep.subr.mxu0 0.0
    %6383 = vmatpush1.msra.mxu0 0.0
    %6384 = vmatprep.subr.mxu0 0.0
    %6385 = vmatpush1.msra.mxu0 0.0
    %6386 = vmatprep.subr.mxu0 0.0
    %6387 = vmatpush1.msra.mxu0 0.0
    %6388 = vmatprep.subr.mxu0 0.0
    %6389 = vmatpush1.msra.mxu0 0.0
    %6390 = vmatprep.subr.mxu0 0.0
    %6391 = vmatpush1.msra.mxu0 0.0
    %6392 = vmatprep.subr.mxu0 0.0
    %6393 = vmatpush1.msra.mxu0 0.0
    %6394 = vmatprep.subr.mxu0 0.0
    %6395 = vmatpush1.msra.mxu0 0.0
    %6396 = vmatprep.subr.mxu0 0.0
    %6397 = vmatpush1.msra.mxu0 0.0
    %6398 = vmatprep.subr.mxu0 0.0
    %6399 = vmatpush1.msra.mxu0 0.0
    %6400 = vmatprep.subr.mxu0 0.0
    %6401 = vmatpush1.msra.mxu0 0.0
    %6402 = vmatprep.subr.mxu0 0.0
    %6403 = vmatpush1.msra.mxu0 0.0
    %6404 = vmatprep.subr.mxu0 0.0
    %6405 = vmatpush1.msra.mxu0 0.0
    %6406 = vmatprep.subr.mxu0 0.0
    %6407 = vmatpush1.msra.mxu0 0.0
    %6408 = vmatprep.mubr.f32.mxu0 0.0
    %6409 = vmatmul.mubr.f32.gmra.mrb[0].mxu0 %v6202
    %v6410 = vpop.f32.mrb[0].mxu0
    %v6411 = vadd.f32 %v5010, %v6410
    %v6412 = vpop.f32.mrb[0].mxu0
    %6413 = vdwg.mxu0
    %v6414 = vadd.f32 %v4699, %v6271
    %v6415 = vxor.u32 %v6414, 2147483648
    %v6416 = vmul.f32 %v6415, 1.442695
    %v6417 = vpow.pop %v6416
    %v6418 = vadd.f32 %v6417, 1.0
    %v6419 = vrcp.pop %v6418
    %v6420 = vmul.f32 1.0, %v6419
    %v6421 = vadd.f32 %v4845, %v6341
    %v6422 = vxor.u32 %v6421, 2147483648
    %v6423 = vmul.f32 %v6422, 1.442695
    %v6424 = vpow.pop %v6423
    %v6425 = vadd.f32 %v6424, 1.0
    %v6426 = vrcp.pop %v6425
    %v6427 = vmul.f32 1.0, %v6426
    %v6428 = vmul.f32 %v6420, %v6411
    %v6429 = vadd.f32 %v4981, %v6428
    %v6430 = vtanh.pop %v6429
    %v6431 = vsub.f32 1.0, %v6427
    %v6432 = vmul.f32 %v6431, %v6430
    %v6433 = vmul.f32 %v6427, %v6200
    %v6434 = vadd.f32 %v6432, %v6433
    %v6436 = vsel %vm1146, %v6434, 0
    %6438 = vmatprep.subr.mxu0 0.0
    %6439 = vmatpush1.msra.mxu0 %v5017
    %6440 = vmatprep.subr.mxu0 0.0
    %6441 = vmatpush1.msra.mxu0 %v5018
    %6442 = vmatprep.subr.mxu0 0.0
    %6443 = vmatpush1.msra.mxu0 %v5019
    %6444 = vmatprep.subr.mxu0 0.0
    %6445 = vmatpush1.msra.mxu0 %v5020
    %6446 = vmatprep.subr.mxu0 0.0
    %6447 = vmatpush1.msra.mxu0 0.0
    %6448 = vmatprep.subr.mxu0 0.0
    %6449 = vmatpush1.msra.mxu0 0.0
    %6450 = vmatprep.subr.mxu0 0.0
    %6451 = vmatpush1.msra.mxu0 0.0
    %6452 = vmatprep.subr.mxu0 0.0
    %6453 = vmatpush1.msra.mxu0 0.0
    %6454 = vmatprep.subr.mxu0 0.0
    %6455 = vmatpush1.msra.mxu0 0.0
    %6456 = vmatprep.subr.mxu0 0.0
    %6457 = vmatpush1.msra.mxu0 0.0
    %6458 = vmatprep.subr.mxu0 0.0
    %6459 = vmatpush1.msra.mxu0 0.0
    %6460 = vmatprep.subr.mxu0 0.0
    %6461 = vmatpush1.msra.mxu0 0.0
    %6462 = vmatprep.subr.mxu0 0.0
    %6463 = vmatpush1.msra.mxu0 0.0
    %6464 = vmatprep.subr.mxu0 0.0
    %6465 = vmatpush1.msra.mxu0 0.0
    %6466 = vmatprep.subr.mxu0 0.0
    %6467 = vmatpush1.msra.mxu0 0.0
    %6468 = vmatprep.subr.mxu0 0.0
    %6469 = vmatpush1.msra.mxu0 0.0
    %6470 = vmatprep.subr.mxu0 0.0
    %6471 = vmatpush1.msra.mxu0 0.0
    %6472 = vmatprep.subr.mxu0 0.0
    %6473 = vmatpush1.msra.mxu0 0.0
    %6474 = vmatprep.subr.mxu0 0.0
    %6475 = vmatpush1.msra.mxu0 0.0
    %6476 = vmatprep.subr.mxu0 0.0
    %6477 = vmatpush1.msra.mxu0 0.0
    %6478 = vmatprep.subr.mxu0 0.0
    %6479 = vmatpush1.msra.mxu0 0.0
    %6480 = vmatprep.subr.mxu0 0.0
    %6481 = vmatpush1.msra.mxu0 0.0
    %6482 = vmatprep.subr.mxu0 0.0
    %6483 = vmatpush1.msra.mxu0 0.0
    %6484 = vmatprep.subr.mxu0 0.0
    %6485 = vmatpush1.msra.mxu0 0.0
    %6486 = vmatprep.subr.mxu0 0.0
    %6487 = vmatpush1.msra.mxu0 0.0
    %6488 = vmatprep.subr.mxu0 0.0
    %6489 = vmatpush1.msra.mxu0 0.0
    %6490 = vmatprep.subr.mxu0 0.0
    %6491 = vmatpush1.msra.mxu0 0.0
    %6492 = vmatprep.subr.mxu0 0.0
    %6493 = vmatpush1.msra.mxu0 0.0
    %6494 = vmatprep.subr.mxu0 0.0
    %6495 = vmatpush1.msra.mxu0 0.0
    %6496 = vmatprep.subr.mxu0 0.0
    %6497 = vmatpush1.msra.mxu0 0.0
    %6498 = vmatprep.subr.mxu0 0.0
    %6499 = vmatpush1.msra.mxu0 0.0
    %6500 = vmatprep.subr.mxu0 0.0
    %6501 = vmatpush1.msra.mxu0 0.0
    %6502 = vmatprep.mubr.f32.mxu0 0.0
    %6503 = vmatmul.mubr.f32.gmra.mrb[0].mxu0 %v6436
    %v6504 = vpop.f32.mrb[0].mxu0
    %v6505 = vadd.f32 0.0, %v6504
    %v6506 = vpop.f32.mrb[0].mxu0
    %6507 = vdwg.mxu0
    %6508 = vmatprep.subr.mxu0 0.0
    %6509 = vmatpush1.msra.mxu0 %v5095
    %6510 = vmatprep.subr.mxu0 0.0
    %6511 = vmatpush1.msra.mxu0 %v5096
    %6512 = vmatprep.subr.mxu0 0.0
    %6513 = vmatpush1.msra.mxu0 %v5097
    %6514 = vmatprep.subr.mxu0 0.0
    %6515 = vmatpush1.msra.mxu0 %v5098
    %6516 = vmatprep.subr.mxu0 0.0
    %6517 = vmatpush1.msra.mxu0 0.0
    %6518 = vmatprep.subr.mxu0 0.0
    %6519 = vmatpush1.msra.mxu0 0.0
    %6520 = vmatprep.subr.mxu0 0.0
    %6521 = vmatpush1.msra.mxu0 0.0
    %6522 = vmatprep.subr.mxu0 0.0
    %6523 = vmatpush1.msra.mxu0 0.0
    %6524 = vmatprep.subr.mxu0 0.0
    %6525 = vmatpush1.msra.mxu0 0.0
    %6526 = vmatprep.subr.mxu0 0.0
    %6527 = vmatpush1.msra.mxu0 0.0
    %6528 = vmatprep.subr.mxu0 0.0
    %6529 = vmatpush1.msra.mxu0 0.0
    %6530 = vmatprep.subr.mxu0 0.0
    %6531 = vmatpush1.msra.mxu0 0.0
    %6532 = vmatprep.subr.mxu0 0.0
    %6533 = vmatpush1.msra.mxu0 0.0
    %6534 = vmatprep.subr.mxu0 0.0
    %6535 = vmatpush1.msra.mxu0 0.0
    %6536 = vmatprep.subr.mxu0 0.0
    %6537 = vmatpush1.msra.mxu0 0.0
    %6538 = vmatprep.subr.mxu0 0.0
    %6539 = vmatpush1.msra.mxu0 0.0
    %6540 = vmatprep.subr.mxu0 0.0
    %6541 = vmatpush1.msra.mxu0 0.0
    %6542 = vmatprep.subr.mxu0 0.0
    %6543 = vmatpush1.msra.mxu0 0.0
    %6544 = vmatprep.subr.mxu0 0.0
    %6545 = vmatpush1.msra.mxu0 0.0
    %6546 = vmatprep.subr.mxu0 0.0
    %6547 = vmatpush1.msra.mxu0 0.0
    %6548 = vmatprep.subr.mxu0 0.0
    %6549 = vmatpush1.msra.mxu0 0.0
    %6550 = vmatprep.subr.mxu0 0.0
    %6551 = vmatpush1.msra.mxu0 0.0
    %6552 = vmatprep.subr.mxu0 0.0
    %6553 = vmatpush1.msra.mxu0 0.0
    %6554 = vmatprep.subr.mxu0 0.0
    %6555 = vmatpush1.msra.mxu0 0.0
    %6556 = vmatprep.subr.mxu0 0.0
    %6557 = vmatpush1.msra.mxu0 0.0
    %6558 = vmatprep.subr.mxu0 0.0
    %6559 = vmatpush1.msra.mxu0 0.0
    %6560 = vmatprep.subr.mxu0 0.0
    %6561 = vmatpush1.msra.mxu0 0.0
    %6562 = vmatprep.subr.mxu0 0.0
    %6563 = vmatpush1.msra.mxu0 0.0
    %6564 = vmatprep.subr.mxu0 0.0
    %6565 = vmatpush1.msra.mxu0 0.0
    %6566 = vmatprep.subr.mxu0 0.0
    %6567 = vmatpush1.msra.mxu0 0.0
    %6568 = vmatprep.subr.mxu0 0.0
    %6569 = vmatpush1.msra.mxu0 0.0
    %6570 = vmatprep.subr.mxu0 0.0
    %6571 = vmatpush1.msra.mxu0 0.0
    %6572 = vmatprep.mubr.f32.mxu0 0.0
    %6573 = vmatmul.mubr.f32.gmra.mrb[0].mxu0 %v6436
    %v6574 = vpop.f32.mrb[0].mxu0
    %v6575 = vadd.f32 0.0, %v6574
    %v6576 = vpop.f32.mrb[0].mxu0
    %6577 = vdwg.mxu0
    %6578 = vmatprep.subr.mxu0 0.0
    %6579 = vmatpush1.msra.mxu0 %v5170
    %6580 = vmatprep.subr.mxu0 0.0
    %6581 = vmatpush1.msra.mxu0 %v5171
    %6582 = vmatprep.subr.mxu0 0.0
    %6583 = vmatpush1.msra.mxu0 %v5172
    %6584 = vmatprep.subr.mxu0 0.0
    %6585 = vmatpush1.msra.mxu0 %v5173
    %6586 = vmatprep.subr.mxu0 0.0
    %6587 = vmatpush1.msra.mxu0 0.0
    %6588 = vmatprep.subr.mxu0 0.0
    %6589 = vmatpush1.msra.mxu0 0.0
    %6590 = vmatprep.subr.mxu0 0.0
    %6591 = vmatpush1.msra.mxu0 0.0
    %6592 = vmatprep.subr.mxu0 0.0
    %6593 = vmatpush1.msra.mxu0 0.0
    %6594 = vmatprep.subr.mxu0 0.0
    %6595 = vmatpush1.msra.mxu0 0.0
    %6596 = vmatprep.subr.mxu0 0.0
    %6597 = vmatpush1.msra.mxu0 0.0
    %6598 = vmatprep.subr.mxu0 0.0
    %6599 = vmatpush1.msra.mxu0 0.0
    %6600 = vmatprep.subr.mxu0 0.0
    %6601 = vmatpush1.msra.mxu0 0.0
    %6602 = vmatprep.subr.mxu0 0.0
    %6603 = vmatpush1.msra.mxu0 0.0
    %6604 = vmatprep.subr.mxu0 0.0
    %6605 = vmatpush1.msra.mxu0 0.0
    %6606 = vmatprep.subr.mxu0 0.0
    %6607 = vmatpush1.msra.mxu0 0.0
    %6608 = vmatprep.subr.mxu0 0.0
    %6609 = vmatpush1.msra.mxu0 0.0
    %6610 = vmatprep.subr.mxu0 0.0
    %6611 = vmatpush1.msra.mxu0 0.0
    %6612 = vmatprep.subr.mxu0 0.0
    %6613 = vmatpush1.msra.mxu0 0.0
    %6614 = vmatprep.subr.mxu0 0.0
    %6615 = vmatpush1.msra.mxu0 0.0
    %6616 = vmatprep.subr.mxu0 0.0
    %6617 = vmatpush1.msra.mxu0 0.0
    %6618 = vmatprep.subr.mxu0 0.0
    %6619 = vmatpush1.msra.mxu0 0.0
    %6620 = vmatprep.subr.mxu0 0.0
    %6621 = vmatpush1.msra.mxu0 0.0
    %6622 = vmatprep.subr.mxu0 0.0
    %6623 = vmatpush1.msra.mxu0 0.0
    %6624 = vmatprep.subr.mxu0 0.0
    %6625 = vmatpush1.msra.mxu0 0.0
    %6626 = vmatprep.subr.mxu0 0.0
    %6627 = vmatpush1.msra.mxu0 0.0
    %6628 = vmatprep.subr.mxu0 0.0
    %6629 = vmatpush1.msra.mxu0 0.0
    %6630 = vmatprep.subr.mxu0 0.0
    %6631 = vmatpush1.msra.mxu0 0.0
    %6632 = vmatprep.subr.mxu0 0.0
    %6633 = vmatpush1.msra.mxu0 0.0
    %6634 = vmatprep.subr.mxu0 0.0
    %6635 = vmatpush1.msra.mxu0 0.0
    %6636 = vmatprep.subr.mxu0 0.0
    %6637 = vmatpush1.msra.mxu0 0.0
    %6638 = vmatprep.subr.mxu0 0.0
    %6639 = vmatpush1.msra.mxu0 0.0
    %6640 = vmatprep.subr.mxu0 0.0
    %6641 = vmatpush1.msra.mxu0 0.0
    %6642 = vmatprep.mubr.f32.mxu0 0.0
    %6643 = vmatmul.mubr.f32.gmra.mrb[0].mxu0 %v6436
    %v6644 = vpop.f32.mrb[0].mxu0
    %v6645 = vadd.f32 %v5010, %v6644
    %v6646 = vpop.f32.mrb[0].mxu0
    %6647 = vdwg.mxu0
    %v6648 = vadd.f32 %v4701, %v6505
    %v6649 = vxor.u32 %v6648, 2147483648
    %v6650 = vmul.f32 %v6649, 1.442695
    %v6651 = vpow.pop %v6650
    %v6652 = vadd.f32 %v6651, 1.0
    %v6653 = vrcp.pop %v6652
    %v6654 = vmul.f32 1.0, %v6653
    %v6655 = vadd.f32 %v4847, %v6575
    %v6656 = vxor.u32 %v6655, 2147483648
    %v6657 = vmul.f32 %v6656, 1.442695
    %v6658 = vpow.pop %v6657
    %v6659 = vadd.f32 %v6658, 1.0
    %v6660 = vrcp.pop %v6659
    %v6661 = vmul.f32 1.0, %v6660
    %v6662 = vmul.f32 %v6654, %v6645
    %v6663 = vadd.f32 %v4983, %v6662
    %v6664 = vtanh.pop %v6663
    %v6665 = vsub.f32 1.0, %v6661
    %v6666 = vmul.f32 %v6665, %v6664
    %v6667 = vmul.f32 %v6661, %v6434
    %v6668 = vadd.f32 %v6666, %v6667
    %v6669 = vld [vmem:[%s14] sm:$0xff]
    %v6670 = vld [vmem:[%s14 + $0x8] sm:$0xff]
    %v6671 = vld [vmem:[%s14 + $0x10] sm:$0xff]
    %v6672 = vld [vmem:[%s14 + $0x18] sm:$0xff]
    %v6673 = vld [vmem:[%s14 + $0x20] sm:$0xff]
    %v6674 = vld [vmem:[%s14 + $0x28] sm:$0xff]
    %v6675 = vld [vmem:[%s14 + $0x30] sm:$0xff]
    %v6676 = vld [vmem:[%s14 + $0x38] sm:$0xff]
    %v6677 = vld [vmem:[%s16] sm:$0x1]
    %v6679 = vlaneseq
    %v6680 = vshrl.u32 %v6679, 7
    %v6681 = vsub.s32 0, %v6680
    %v6682 = vrot.slane %v6677, %v6681
    %v6684 = vrot.slane %v4559, 6
    %v6685 = vsel %vm4575, %v6684, 0
    %6687 = vmatprep.subr.mxu0 0.0
    %6688 = vmatpush1.msra.mxu0 %v6669
    %6689 = vmatprep.subr.mxu0 0.0
    %6690 = vmatpush1.msra.mxu0 %v6670
    %6691 = vmatprep.subr.mxu0 0.0
    %6692 = vmatpush1.msra.mxu0 %v6671
    %6693 = vmatprep.subr.mxu0 0.0
    %6694 = vmatpush1.msra.mxu0 %v6672
    %6695 = vmatprep.subr.mxu0 0.0
    %6696 = vmatpush1.msra.mxu0 %v6673
    %6697 = vmatprep.subr.mxu0 0.0
    %6698 = vmatpush1.msra.mxu0 %v6674
    %6699 = vmatprep.subr.mxu0 0.0
    %6700 = vmatpush1.msra.mxu0 %v6675
    %6701 = vmatprep.subr.mxu0 0.0
    %6702 = vmatpush1.msra.mxu0 %v6676
    %6703 = vmatprep.subr.mxu0 0.0
    %6704 = vmatpush1.msra.mxu0 0.0
    %6705 = vmatprep.subr.mxu0 0.0
    %6706 = vmatpush1.msra.mxu0 0.0
    %6707 = vmatprep.subr.mxu0 0.0
    %6708 = vmatpush1.msra.mxu0 0.0
    %6709 = vmatprep.subr.mxu0 0.0
    %6710 = vmatpush1.msra.mxu0 0.0
    %6711 = vmatprep.subr.mxu0 0.0
    %6712 = vmatpush1.msra.mxu0 0.0
    %6713 = vmatprep.subr.mxu0 0.0
    %6714 = vmatpush1.msra.mxu0 0.0
    %6715 = vmatprep.subr.mxu0 0.0
    %6716 = vmatpush1.msra.mxu0 0.0
    %6717 = vmatprep.subr.mxu0 0.0
    %6718 = vmatpush1.msra.mxu0 0.0
    %6719 = vmatprep.subr.mxu0 0.0
    %6720 = vmatpush1.msra.mxu0 0.0
    %6721 = vmatprep.subr.mxu0 0.0
    %6722 = vmatpush1.msra.mxu0 0.0
    %6723 = vmatprep.subr.mxu0 0.0
    %6724 = vmatpush1.msra.mxu0 0.0
    %6725 = vmatprep.subr.mxu0 0.0
    %6726 = vmatpush1.msra.mxu0 0.0
    %6727 = vmatprep.subr.mxu0 0.0
    %6728 = vmatpush1.msra.mxu0 0.0
    %6729 = vmatprep.subr.mxu0 0.0
    %6730 = vmatpush1.msra.mxu0 0.0
    %6731 = vmatprep.subr.mxu0 0.0
    %6732 = vmatpush1.msra.mxu0 0.0
    %6733 = vmatprep.subr.mxu0 0.0
    %6734 = vmatpush1.msra.mxu0 0.0
    %6735 = vmatprep.subr.mxu0 0.0
    %6736 = vmatpush1.msra.mxu0 0.0
    %6737 = vmatprep.subr.mxu0 0.0
    %6738 = vmatpush1.msra.mxu0 0.0
    %6739 = vmatprep.subr.mxu0 0.0
    %6740 = vmatpush1.msra.mxu0 0.0
    %6741 = vmatprep.subr.mxu0 0.0
    %6742 = vmatpush1.msra.mxu0 0.0
    %6743 = vmatprep.subr.mxu0 0.0
    %6744 = vmatpush1.msra.mxu0 0.0
    %6745 = vmatprep.subr.mxu0 0.0
    %6746 = vmatpush1.msra.mxu0 0.0
    %6747 = vmatprep.subr.mxu0 0.0
    %6748 = vmatpush1.msra.mxu0 0.0
    %6749 = vmatprep.subr.mxu0 0.0
    %6750 = vmatpush1.msra.mxu0 0.0
    %6751 = vmatprep.mubr.f32.mxu0 0.0
    %6752 = vmatmul.mubr.f32.gmra.mrb[0].mxu0 %v6685
    %v6753 = vpop.f32.mrb[0].mxu0
    %v6754 = vadd.f32 %v6682, %v6753
    %v6755 = vpop.f32.mrb[0].mxu0
    %6756 = vdwg.mxu0
    %v6757 = vld [vmem:[%s17] sm:$0x1]
    %v6759 = vlaneseq
    %v6760 = vshrl.u32 %v6759, 7
    %v6761 = vsub.s32 0, %v6760
    %v6762 = vrot.slane %v6757, %v6761
    %v6764 = vadd.f32 %v6754, %v6762
    %v6765 = vxor.u32 %v6764, 2147483648
    %v6766 = vmul.f32 %v6765, 1.442695
    %v6767 = vpow.pop %v6766
    %v6768 = vadd.f32 %v6767, 1.0
    %v6769 = vrcp.pop %v6768
    %v6770 = vmul.f32 1.0, %v6769
    %s6771 = scalar_lea.vmem %s14, 64
    %v6772 = vld [vmem:[%s6771] sm:$0xff]
    %v6773 = vld [vmem:[%s6771 + $0x8] sm:$0xff]
    %v6774 = vld [vmem:[%s6771 + $0x10] sm:$0xff]
    %v6775 = vld [vmem:[%s6771 + $0x18] sm:$0xff]
    %v6776 = vld [vmem:[%s6771 + $0x20] sm:$0xff]
    %v6777 = vld [vmem:[%s6771 + $0x28] sm:$0xff]
    %v6778 = vld [vmem:[%s6771 + $0x30] sm:$0xff]
    %v6779 = vld [vmem:[%s6771 + $0x38] sm:$0xff]
    %s6780 = scalar_lea.vmem %s16, 1
    %v6781 = vld [vmem:[%s6780] sm:$0x1]
    %v6783 = vlaneseq
    %v6784 = vshrl.u32 %v6783, 7
    %v6785 = vsub.s32 0, %v6784
    %v6786 = vrot.slane %v6781, %v6785
    %6788 = vmatprep.subr.mxu0 0.0
    %6789 = vmatpush1.msra.mxu0 %v6772
    %6790 = vmatprep.subr.mxu0 0.0
    %6791 = vmatpush1.msra.mxu0 %v6773
    %6792 = vmatprep.subr.mxu0 0.0
    %6793 = vmatpush1.msra.mxu0 %v6774
    %6794 = vmatprep.subr.mxu0 0.0
    %6795 = vmatpush1.msra.mxu0 %v6775
    %6796 = vmatprep.subr.mxu0 0.0
    %6797 = vmatpush1.msra.mxu0 %v6776
    %6798 = vmatprep.subr.mxu0 0.0
    %6799 = vmatpush1.msra.mxu0 %v6777
    %6800 = vmatprep.subr.mxu0 0.0
    %6801 = vmatpush1.msra.mxu0 %v6778
    %6802 = vmatprep.subr.mxu0 0.0
    %6803 = vmatpush1.msra.mxu0 %v6779
    %6804 = vmatprep.subr.mxu0 0.0
    %6805 = vmatpush1.msra.mxu0 0.0
    %6806 = vmatprep.subr.mxu0 0.0
    %6807 = vmatpush1.msra.mxu0 0.0
    %6808 = vmatprep.subr.mxu0 0.0
    %6809 = vmatpush1.msra.mxu0 0.0
    %6810 = vmatprep.subr.mxu0 0.0
    %6811 = vmatpush1.msra.mxu0 0.0
    %6812 = vmatprep.subr.mxu0 0.0
    %6813 = vmatpush1.msra.mxu0 0.0
    %6814 = vmatprep.subr.mxu0 0.0
    %6815 = vmatpush1.msra.mxu0 0.0
    %6816 = vmatprep.subr.mxu0 0.0
    %6817 = vmatpush1.msra.mxu0 0.0
    %6818 = vmatprep.subr.mxu0 0.0
    %6819 = vmatpush1.msra.mxu0 0.0
    %6820 = vmatprep.subr.mxu0 0.0
    %6821 = vmatpush1.msra.mxu0 0.0
    %6822 = vmatprep.subr.mxu0 0.0
    %6823 = vmatpush1.msra.mxu0 0.0
    %6824 = vmatprep.subr.mxu0 0.0
    %6825 = vmatpush1.msra.mxu0 0.0
    %6826 = vmatprep.subr.mxu0 0.0
    %6827 = vmatpush1.msra.mxu0 0.0
    %6828 = vmatprep.subr.mxu0 0.0
    %6829 = vmatpush1.msra.mxu0 0.0
    %6830 = vmatprep.subr.mxu0 0.0
    %6831 = vmatpush1.msra.mxu0 0.0
    %6832 = vmatprep.subr.mxu0 0.0
    %6833 = vmatpush1.msra.mxu0 0.0
    %6834 = vmatprep.subr.mxu0 0.0
    %6835 = vmatpush1.msra.mxu0 0.0
    %6836 = vmatprep.subr.mxu0 0.0
    %6837 = vmatpush1.msra.mxu0 0.0
    %6838 = vmatprep.subr.mxu0 0.0
    %6839 = vmatpush1.msra.mxu0 0.0
    %6840 = vmatprep.subr.mxu0 0.0
    %6841 = vmatpush1.msra.mxu0 0.0
    %6842 = vmatprep.subr.mxu0 0.0
    %6843 = vmatpush1.msra.mxu0 0.0
    %6844 = vmatprep.subr.mxu0 0.0
    %6845 = vmatpush1.msra.mxu0 0.0
    %6846 = vmatprep.subr.mxu0 0.0
    %6847 = vmatpush1.msra.mxu0 0.0
    %6848 = vmatprep.subr.mxu0 0.0
    %6849 = vmatpush1.msra.mxu0 0.0
    %6850 = vmatprep.subr.mxu0 0.0
    %6851 = vmatpush1.msra.mxu0 0.0
    %6852 = vmatprep.mubr.f32.mxu0 0.0
    %6853 = vmatmul.mubr.f32.gmra.mrb[0].mxu0 %v6685
    %v6854 = vpop.f32.mrb[0].mxu0
    %v6855 = vadd.f32 %v6786, %v6854
    %v6856 = vpop.f32.mrb[0].mxu0
    %6857 = vdwg.mxu0
    %s6858 = scalar_lea.vmem %s17, 1
    %v6859 = vld [vmem:[%s6858] sm:$0x1]
    %v6861 = vlaneseq
    %v6862 = vshrl.u32 %v6861, 7
    %v6863 = vsub.s32 0, %v6862
    %v6864 = vrot.slane %v6859, %v6863
    %v6866 = vadd.f32 %v6855, %v6864
    %v6867 = vxor.u32 %v6866, 2147483648
    %v6868 = vmul.f32 %v6867, 1.442695
    %v6869 = vpow.pop %v6868
    %v6870 = vadd.f32 %v6869, 1.0
    %v6871 = vrcp.pop %v6870
    %v6872 = vmul.f32 1.0, %v6871
    %s6873 = scalar_lea.vmem %s14, 128
    %v6874 = vld [vmem:[%s6873] sm:$0xff]
    %v6875 = vld [vmem:[%s6873 + $0x8] sm:$0xff]
    %v6876 = vld [vmem:[%s6873 + $0x10] sm:$0xff]
    %v6877 = vld [vmem:[%s6873 + $0x18] sm:$0xff]
    %v6878 = vld [vmem:[%s6873 + $0x20] sm:$0xff]
    %v6879 = vld [vmem:[%s6873 + $0x28] sm:$0xff]
    %v6880 = vld [vmem:[%s6873 + $0x30] sm:$0xff]
    %v6881 = vld [vmem:[%s6873 + $0x38] sm:$0xff]
    %s6882 = scalar_lea.vmem %s16, 2
    %v6883 = vld [vmem:[%s6882] sm:$0x1]
    %v6885 = vlaneseq
    %v6886 = vshrl.u32 %v6885, 7
    %v6887 = vsub.s32 0, %v6886
    %v6888 = vrot.slane %v6883, %v6887
    %6890 = vmatprep.subr.mxu0 0.0
    %6891 = vmatpush1.msra.mxu0 %v6874
    %6892 = vmatprep.subr.mxu0 0.0
    %6893 = vmatpush1.msra.mxu0 %v6875
    %6894 = vmatprep.subr.mxu0 0.0
    %6895 = vmatpush1.msra.mxu0 %v6876
    %6896 = vmatprep.subr.mxu0 0.0
    %6897 = vmatpush1.msra.mxu0 %v6877
    %6898 = vmatprep.subr.mxu0 0.0
    %6899 = vmatpush1.msra.mxu0 %v6878
    %6900 = vmatprep.subr.mxu0 0.0
    %6901 = vmatpush1.msra.mxu0 %v6879
    %6902 = vmatprep.subr.mxu0 0.0
    %6903 = vmatpush1.msra.mxu0 %v6880
    %6904 = vmatprep.subr.mxu0 0.0
    %6905 = vmatpush1.msra.mxu0 %v6881
    %6906 = vmatprep.subr.mxu0 0.0
    %6907 = vmatpush1.msra.mxu0 0.0
    %6908 = vmatprep.subr.mxu0 0.0
    %6909 = vmatpush1.msra.mxu0 0.0
    %6910 = vmatprep.subr.mxu0 0.0
    %6911 = vmatpush1.msra.mxu0 0.0
    %6912 = vmatprep.subr.mxu0 0.0
    %6913 = vmatpush1.msra.mxu0 0.0
    %6914 = vmatprep.subr.mxu0 0.0
    %6915 = vmatpush1.msra.mxu0 0.0
    %6916 = vmatprep.subr.mxu0 0.0
    %6917 = vmatpush1.msra.mxu0 0.0
    %6918 = vmatprep.subr.mxu0 0.0
    %6919 = vmatpush1.msra.mxu0 0.0
    %6920 = vmatprep.subr.mxu0 0.0
    %6921 = vmatpush1.msra.mxu0 0.0
    %6922 = vmatprep.subr.mxu0 0.0
    %6923 = vmatpush1.msra.mxu0 0.0
    %6924 = vmatprep.subr.mxu0 0.0
    %6925 = vmatpush1.msra.mxu0 0.0
    %6926 = vmatprep.subr.mxu0 0.0
    %6927 = vmatpush1.msra.mxu0 0.0
    %6928 = vmatprep.subr.mxu0 0.0
    %6929 = vmatpush1.msra.mxu0 0.0
    %6930 = vmatprep.subr.mxu0 0.0
    %6931 = vmatpush1.msra.mxu0 0.0
    %6932 = vmatprep.subr.mxu0 0.0
    %6933 = vmatpush1.msra.mxu0 0.0
    %6934 = vmatprep.subr.mxu0 0.0
    %6935 = vmatpush1.msra.mxu0 0.0
    %6936 = vmatprep.subr.mxu0 0.0
    %6937 = vmatpush1.msra.mxu0 0.0
    %6938 = vmatprep.subr.mxu0 0.0
    %6939 = vmatpush1.msra.mxu0 0.0
    %6940 = vmatprep.subr.mxu0 0.0
    %6941 = vmatpush1.msra.mxu0 0.0
    %6942 = vmatprep.subr.mxu0 0.0
    %6943 = vmatpush1.msra.mxu0 0.0
    %6944 = vmatprep.subr.mxu0 0.0
    %6945 = vmatpush1.msra.mxu0 0.0
    %6946 = vmatprep.subr.mxu0 0.0
    %6947 = vmatpush1.msra.mxu0 0.0
    %6948 = vmatprep.subr.mxu0 0.0
    %6949 = vmatpush1.msra.mxu0 0.0
    %6950 = vmatprep.subr.mxu0 0.0
    %6951 = vmatpush1.msra.mxu0 0.0
    %6952 = vmatprep.subr.mxu0 0.0
    %6953 = vmatpush1.msra.mxu0 0.0
    %6954 = vmatprep.mubr.f32.mxu0 0.0
    %6955 = vmatmul.mubr.f32.gmra.mrb[0].mxu0 %v6685
    %v6956 = vpop.f32.mrb[0].mxu0
    %v6957 = vadd.f32 %v6888, %v6956
    %v6958 = vpop.f32.mrb[0].mxu0
    %6959 = vdwg.mxu0
    %s6960 = scalar_lea.vmem %s17, 2
    %v6961 = vld [vmem:[%s6960] sm:$0x1]
    %v6963 = vlaneseq
    %v6964 = vshrl.u32 %v6963, 7
    %v6965 = vsub.s32 0, %v6964
    %v6966 = vrot.slane %v6961, %v6965
    %v6968 = vmul.f32 %v6770, %v6966
    %v6969 = vadd.f32 %v6957, %v6968
    %v6970 = vtanh.pop %v6969
    %v6971 = vsub.f32 1.0, %v6872
    %v6972 = vmul.f32 %v6971, %v6970
    %6974 = vrot.lane.b32.xlu0 %v6972, 32
    %v6975 = vpop.permute.xlu0 %6974
    %v6977 = vsel %vm1146, %v6668, %v6975
    %v6978 = vld [vmem:[%s18] sm:$0xff]
    %v6979 = vld [vmem:[%s18 + $0x8] sm:$0xff]
    %v6980 = vld [vmem:[%s18 + $0x10] sm:$0xff]
    %v6981 = vld [vmem:[%s18 + $0x18] sm:$0xff]
    %v6982 = vld [vmem:[%s18 + $0x20] sm:$0xff]
    %v6983 = vld [vmem:[%s18 + $0x28] sm:$0xff]
    %v6984 = vld [vmem:[%s18 + $0x30] sm:$0xff]
    %v6985 = vld [vmem:[%s18 + $0x38] sm:$0xff]
    %v6986 = vld [vmem:[%s19] sm:$0x1]
    %v6988 = vlaneseq
    %v6989 = vshrl.u32 %v6988, 7
    %v6990 = vsub.s32 0, %v6989
    %v6991 = vrot.slane %v6986, %v6990
    %v6994 = vsel %vm4575, %v6977, 0
    %6996 = vmatprep.subr.mxu0 0.0
    %6997 = vmatpush1.msra.mxu0 %v6978
    %6998 = vmatprep.subr.mxu0 0.0
    %6999 = vmatpush1.msra.mxu0 %v6979
    %7000 = vmatprep.subr.mxu0 0.0
    %7001 = vmatpush1.msra.mxu0 %v6980
    %7002 = vmatprep.subr.mxu0 0.0
    %7003 = vmatpush1.msra.mxu0 %v6981
    %7004 = vmatprep.subr.mxu0 0.0
    %7005 = vmatpush1.msra.mxu0 %v6982
    %7006 = vmatprep.subr.mxu0 0.0
    %7007 = vmatpush1.msra.mxu0 %v6983
    %7008 = vmatprep.subr.mxu0 0.0
    %7009 = vmatpush1.msra.mxu0 %v6984
    %7010 = vmatprep.subr.mxu0 0.0
    %7011 = vmatpush1.msra.mxu0 %v6985
    %7012 = vmatprep.subr.mxu0 0.0
    %7013 = vmatpush1.msra.mxu0 0.0
    %7014 = vmatprep.subr.mxu0 0.0
    %7015 = vmatpush1.msra.mxu0 0.0
    %7016 = vmatprep.subr.mxu0 0.0
    %7017 = vmatpush1.msra.mxu0 0.0
    %7018 = vmatprep.subr.mxu0 0.0
    %7019 = vmatpush1.msra.mxu0 0.0
    %7020 = vmatprep.subr.mxu0 0.0
    %7021 = vmatpush1.msra.mxu0 0.0
    %7022 = vmatprep.subr.mxu0 0.0
    %7023 = vmatpush1.msra.mxu0 0.0
    %7024 = vmatprep.subr.mxu0 0.0
    %7025 = vmatpush1.msra.mxu0 0.0
    %7026 = vmatprep.subr.mxu0 0.0
    %7027 = vmatpush1.msra.mxu0 0.0
    %7028 = vmatprep.subr.mxu0 0.0
    %7029 = vmatpush1.msra.mxu0 0.0
    %7030 = vmatprep.subr.mxu0 0.0
    %7031 = vmatpush1.msra.mxu0 0.0
    %7032 = vmatprep.subr.mxu0 0.0
    %7033 = vmatpush1.msra.mxu0 0.0
    %7034 = vmatprep.subr.mxu0 0.0
    %7035 = vmatpush1.msra.mxu0 0.0
    %7036 = vmatprep.subr.mxu0 0.0
    %7037 = vmatpush1.msra.mxu0 0.0
    %7038 = vmatprep.subr.mxu0 0.0
    %7039 = vmatpush1.msra.mxu0 0.0
    %7040 = vmatprep.subr.mxu0 0.0
    %7041 = vmatpush1.msra.mxu0 0.0
    %7042 = vmatprep.subr.mxu0 0.0
    %7043 = vmatpush1.msra.mxu0 0.0
    %7044 = vmatprep.subr.mxu0 0.0
    %7045 = vmatpush1.msra.mxu0 0.0
    %7046 = vmatprep.subr.mxu0 0.0
    %7047 = vmatpush1.msra.mxu0 0.0
    %7048 = vmatprep.subr.mxu0 0.0
    %7049 = vmatpush1.msra.mxu0 0.0
    %7050 = vmatprep.subr.mxu0 0.0
    %7051 = vmatpush1.msra.mxu0 0.0
    %7052 = vmatprep.subr.mxu0 0.0
    %7053 = vmatpush1.msra.mxu0 0.0
    %7054 = vmatprep.subr.mxu0 0.0
    %7055 = vmatpush1.msra.mxu0 0.0
    %7056 = vmatprep.subr.mxu0 0.0
    %7057 = vmatpush1.msra.mxu0 0.0
    %7058 = vmatprep.subr.mxu0 0.0
    %7059 = vmatpush1.msra.mxu0 0.0
    %7060 = vmatprep.mubr.f32.mxu0 0.0
    %7061 = vmatmul.mubr.f32.gmra.mrb[0].mxu0 %v6994
    %v7062 = vpop.f32.mrb[0].mxu0
    %v7063 = vadd.f32 %v6991, %v7062
    %v7064 = vpop.f32.mrb[0].mxu0
    %7065 = vdwg.mxu0
    %v7066 = vmax.f32 %v7063, 0.0
    %v7067 = vld [vmem:[%s20] sm:$0xff]
    %v7068 = vld [vmem:[%s20 + $0x8] sm:$0xff]
    %v7069 = vld [vmem:[%s20 + $0x10] sm:$0xff]
    %v7070 = vld [vmem:[%s20 + $0x18] sm:$0xff]
    %v7071 = vld [vmem:[%s21] sm:$0x1]
    %v7073 = vlaneseq
    %v7074 = vshrl.u32 %v7073, 7
    %v7075 = vsub.s32 0, %v7074
    %v7076 = vrot.slane %v7071, %v7075
    %v7079 = vsel %vm1146, %v7066, 0
    %7081 = vmatprep.subr.mxu0 0.0
    %7082 = vmatpush1.msra.mxu0 %v7067
    %7083 = vmatprep.subr.mxu0 0.0
    %7084 = vmatpush1.msra.mxu0 %v7068
    %7085 = vmatprep.subr.mxu0 0.0
    %7086 = vmatpush1.msra.mxu0 %v7069
    %7087 = vmatprep.subr.mxu0 0.0
    %7088 = vmatpush1.msra.mxu0 %v7070
    %7089 = vmatprep.subr.mxu0 0.0
    %7090 = vmatpush1.msra.mxu0 0.0
    %7091 = vmatprep.subr.mxu0 0.0
    %7092 = vmatpush1.msra.mxu0 0.0
    %7093 = vmatprep.subr.mxu0 0.0
    %7094 = vmatpush1.msra.mxu0 0.0
    %7095 = vmatprep.subr.mxu0 0.0
    %7096 = vmatpush1.msra.mxu0 0.0
    %7097 = vmatprep.subr.mxu0 0.0
    %7098 = vmatpush1.msra.mxu0 0.0
    %7099 = vmatprep.subr.mxu0 0.0
    %7100 = vmatpush1.msra.mxu0 0.0
    %7101 = vmatprep.subr.mxu0 0.0
    %7102 = vmatpush1.msra.mxu0 0.0
    %7103 = vmatprep.subr.mxu0 0.0
    %7104 = vmatpush1.msra.mxu0 0.0
    %7105 = vmatprep.subr.mxu0 0.0
    %7106 = vmatpush1.msra.mxu0 0.0
    %7107 = vmatprep.subr.mxu0 0.0
    %7108 = vmatpush1.msra.mxu0 0.0
    %7109 = vmatprep.subr.mxu0 0.0
    %7110 = vmatpush1.msra.mxu0 0.0
    %7111 = vmatprep.subr.mxu0 0.0
    %7112 = vmatpush1.msra.mxu0 0.0
    %7113 = vmatprep.subr.mxu0 0.0
    %7114 = vmatpush1.msra.mxu0 0.0
    %7115 = vmatprep.subr.mxu0 0.0
    %7116 = vmatpush1.msra.mxu0 0.0
    %7117 = vmatprep.subr.mxu0 0.0
    %7118 = vmatpush1.msra.mxu0 0.0
    %7119 = vmatprep.subr.mxu0 0.0
    %7120 = vmatpush1.msra.mxu0 0.0
    %7121 = vmatprep.subr.mxu0 0.0
    %7122 = vmatpush1.msra.mxu0 0.0
    %7123 = vmatprep.subr.mxu0 0.0
    %7124 = vmatpush1.msra.mxu0 0.0
    %7125 = vmatprep.subr.mxu0 0.0
    %7126 = vmatpush1.msra.mxu0 0.0
    %7127 = vmatprep.subr.mxu0 0.0
    %7128 = vmatpush1.msra.mxu0 0.0
    %7129 = vmatprep.subr.mxu0 0.0
    %7130 = vmatpush1.msra.mxu0 0.0
    %7131 = vmatprep.subr.mxu0 0.0
    %7132 = vmatpush1.msra.mxu0 0.0
    %7133 = vmatprep.subr.mxu0 0.0
    %7134 = vmatpush1.msra.mxu0 0.0
    %7135 = vmatprep.subr.mxu0 0.0
    %7136 = vmatpush1.msra.mxu0 0.0
    %7137 = vmatprep.subr.mxu0 0.0
    %7138 = vmatpush1.msra.mxu0 0.0
    %7139 = vmatprep.subr.mxu0 0.0
    %7140 = vmatpush1.msra.mxu0 0.0
    %7141 = vmatprep.subr.mxu0 0.0
    %7142 = vmatpush1.msra.mxu0 0.0
    %7143 = vmatprep.subr.mxu0 0.0
    %7144 = vmatpush1.msra.mxu0 0.0
    %7145 = vmatprep.mubr.f32.mxu0 0.0
    %7146 = vmatmul.mubr.f32.gmra.mrb[0].mxu0 %v7079
    %v7147 = vpop.f32.mrb[0].mxu0
    %v7148 = vadd.f32 %v7076, %v7147
    %v7149 = vpop.f32.mrb[0].mxu0
    %7150 = vdwg.mxu0
    %vm7151 = vcmask 25600
    %v7152 = vsel %vm7151, %v7148, -inf
    %7153 = vmax.xlane.f32.xlu0 %v7152
    %v7154 = vpop.xlane.xlu0 %7153
    %v7155 = vsub.f32 %v7148, %v7154
    %v7156 = vmul.f32 %v7155, 1.442695
    %v7157 = vpow.pop %v7156
    %v7158 = vsel %vm7151, %v7157, 0.0
    %7159 = vadd.xlane.f32.xlu0 %v7158
    %v7160 = vpop.xlane.xlu0 %7159
    %v7161 = vrcp.pop %v7160
    %v7162 = vmul.f32 %v7157, %v7161
    %7163 = vst.msk [vmem:[#allocation4] sm:$0x3] %vm7151, %v7162
    // Predicated region
    $region86: #{cls_model_forward.1} parent=1 // pred_check
      _
    $region87: #{cls_model_forward.1} parent=1 // pred_check_branch
      %7165 = sbr.rel (0) target = $region89
    $region88: #{cls_model_forward.1} parent=1 // pred_region
      %s7167 = ssub.s32 32, 32
      %7168 = vsyncadd [#allocation5], %s7167
      %s7170 = sshll.u32 [#allocation4], 4
      %s7171 = int_to_ptr.vmem [resolvable:$true] %s7170
      %7173 = dma.vmem_to_hbm [thread:$0]  %s7171, 32, %s22, [#allocation5]
    $region89: #{cls_model_forward.1} parent=1 // pred_fallthru
      _
    // Predicated region
    $region90: #{cls_model_forward.1} parent=1 // pred_check
      _
    $region91: #{cls_model_forward.1} parent=1 // pred_check_branch
      %7175 = sbr.rel (0) target = $region93
    $region92: #{cls_model_forward.1} parent=1 // pred_region
      %7176 = dma.done [#allocation5], 32
    $region93: #{cls_model_forward.1} parent=1 // pred_fallthru
      _
    %7177 = vsyncpa [#allocation5], 1

</llo_original>
